<compile_context>
chip_gen: v7x
topology: tpu7x:2x2x1
jax: 0.10.0
libtpu: 0.0.40
codegen_flags: <defaults>
</compile_context>

<pallas_src>
import functools

import jax
import jax.numpy as jnp
from jax.experimental import pallas as pl
from jax.experimental.pallas import tpu as pltpu

NUM_GROUPS = 32      # ldm Normalize(): GroupNorm(32, C, eps=1e-6, affine=True)
GN_EPS = 1e-6


# ----------------------------- spatial self-attention kernel -----------------------------
def _spatial_attn_kernel(group_size, x_ref, gamma_ref, beta_ref, gmat_ref,
                         wq_ref, bq_ref, wk_ref, bk_ref, wv_ref, bv_ref,
                         wo_ref, bo_ref, o_ref):
    x = x_ref[...].astype(jnp.float32)                      # (BT_blk, S, C)
    bt, s, c = x.shape
    inv_s = 1.0 / s

    # GroupNorm statistics: pure VPU/XLU reductions over the spatial axis (no MXU).
    mean_c = jnp.sum(x, axis=1, keepdims=True) * inv_s      # (BT, 1, C)
    msq_c = jnp.sum(x * x, axis=1, keepdims=True) * inv_s   # (BT, 1, C)
    if group_size == 1:
        # GroupNorm(32, C=32): per-group == per-channel, no group mixing needed.
        gmean, gmsq = mean_c, msq_c
    else:
        # Group mixing via one batched (2*BT, C)x(C, C) matmul (never M=1).
        stats = jnp.concatenate([mean_c[:, 0, :], msq_c[:, 0, :]], axis=0)
        gstats = jnp.dot(stats, gmat_ref[...], preferred_element_type=jnp.float32)
        gmean = gstats[:bt, :][:, None, :]
        gmsq = gstats[bt:, :][:, None, :]
    var = jnp.maximum(gmsq - gmean * gmean, 0.0)             # clamp: E[x^2]-m^2 can dip < 0
    xn = (x - gmean) * jax.lax.rsqrt(var + GN_EPS)
    xn = xn * gamma_ref[...] + beta_ref[...]

    # 1x1 convs == per-pixel linear over channels; bf16 operands, f32 accumulation.
    xn2 = xn.reshape(bt * s, c).astype(jnp.bfloat16)
    q = jnp.dot(xn2, wq_ref[...], preferred_element_type=jnp.float32) + bq_ref[...]
    k = jnp.dot(xn2, wk_ref[...], preferred_element_type=jnp.float32) + bk_ref[...]
    v = jnp.dot(xn2, wv_ref[...], preferred_element_type=jnp.float32) + bv_ref[...]

    scale = 1.0 / jnp.sqrt(jnp.float32(c))
    qb = (q * scale).reshape(bt, s, c).astype(jnp.bfloat16)
    kb = k.reshape(bt, s, c).astype(jnp.bfloat16)
    vb = v.reshape(bt, s, c).astype(jnp.bfloat16)

    sc = jnp.einsum('bic,bjc->bij', qb, kb,
                    preferred_element_type=jnp.float32)      # (BT, S, S) f32
    sc = sc - jnp.max(sc, axis=-1, keepdims=True)
    p = jnp.exp(sc)
    p = (p * pl.reciprocal(jnp.sum(p, axis=-1, keepdims=True),
                           approx=True)).astype(jnp.bfloat16)
    ctx = jnp.einsum('bij,bjc->bic', p, vb,
                     preferred_element_type=jnp.float32)     # (BT, S, C) f32

    h = jnp.dot(ctx.reshape(bt * s, c).astype(jnp.bfloat16), wo_ref[...],
                preferred_element_type=jnp.float32) + bo_ref[...]
    o_ref[...] = (x + h.reshape(bt, s, c)).astype(o_ref.dtype)   # residual


# ----------------------------- axial (temporal) attention math -----------------------------
def _axial_heads(xt, wq_ref, wk_ref, wv_ref, wfc_ref, bfc_ref, n_head, d_k):
    """xt: (S_blk, T, C) f32.  Per-head weights (H, C, d_k) / fc (H, d_k, C) in bf16.
    Returns (S_blk, T, C) f32.  No channel concat: fc outputs are accumulated per head."""
    s, t, c = xt.shape
    x2 = xt.reshape(s * t, c).astype(jnp.bfloat16)
    scale = 1.0 / jnp.sqrt(jnp.float32(d_k))

    y = jnp.zeros((s * t, c), jnp.float32)
    for h in range(n_head):                                   # static, n_head is tiny
        q = jnp.dot(x2, wq_ref[h], preferred_element_type=jnp.float32)
        k = jnp.dot(x2, wk_ref[h], preferred_element_type=jnp.float32)
        v = jnp.dot(x2, wv_ref[h], preferred_element_type=jnp.float32)
        qb = (q.reshape(s, t, d_k) * scale).astype(jnp.bfloat16)
        kb = k.reshape(s, t, d_k).astype(jnp.bfloat16)
        vb = v.reshape(s, t, d_k).astype(jnp.bfloat16)

        sc = jnp.einsum('std,sud->stu', qb, kb,
                        preferred_element_type=jnp.float32)   # (S_blk, T, T), batched over S
        sc = sc - jnp.max(sc, axis=-1, keepdims=True)
        p = jnp.exp(sc)
        p = (p * pl.reciprocal(jnp.sum(p, axis=-1, keepdims=True),
                               approx=True)).astype(jnp.bfloat16)
        ctx = jnp.einsum('stu,sud->std', p, vb,
                         preferred_element_type=jnp.float32)  # (S_blk, T, d_k)
        y = y + jnp.dot(ctx.reshape(s * t, d_k).astype(jnp.bfloat16), wfc_ref[h],
                        preferred_element_type=jnp.float32)
    y = y + bfc_ref[...]
    return y.reshape(s, t, c)


def _temporal_attn_kernel_fused(n_head, d_k, x_ref, s_ref, wq_ref, wk_ref, wv_ref,
                                wfc_ref, bfc_ref, o_ref):
    # x_ref / s_ref / o_ref: (T, S_blk, C) in the shared (B, T, S, C) layout.
    xb = x_ref[...].astype(jnp.float32)                       # (T, S_blk, C)
    xt = pltpu.einshape("tsc->stc", xb)                       # (S_blk, T, C), lane dim fixed
    y = _axial_heads(xt, wq_ref, wk_ref, wv_ref, wfc_ref, bfc_ref, n_head, d_k)
    yt = pltpu.einshape("stc->tsc", y)                        # back to (T, S_blk, C)
    # fuse the final s + t sum (s already carries the spatial residual x)
    o_ref[...] = (yt + s_ref[...]).astype(o_ref.dtype)


def _temporal_attn_kernel_plain(n_head, d_k, x_ref, wq_ref, wk_ref, wv_ref,
                                wfc_ref, bfc_ref, o_ref):
    # Fallback path: block already arrives as (S_blk, T, C); add done in the wrapper.
    xt = x_ref[...].astype(jnp.float32)
    o_ref[...] = _axial_heads(xt, wq_ref, wk_ref, wv_ref, wfc_ref,
                              bfc_ref, n_head, d_k).astype(o_ref.dtype)


# ----------------------------- block-size selection (VMEM-budget aware) -----------------------------
def _pick_bt_block(bt_total, s, c, cap=8, budget=8 * 1024 * 1024):
    # rough per-slab VMEM bytes: f32+bf16 scores + activations (conservative, v7x-safe)
    per_slab = 6 * s * s + 24 * s * c + 64 * c
    max_blk = max(1, min(cap, bt_total, budget // max(per_slab, 1)))
    if bt_total >= 2:                       # keep >= 2 grid steps for the 2-TC chips
        max_blk = min(max_blk, max(1, bt_total // 2))
    blk = 1
    for d in range(1, max_blk + 1):
        if bt_total % d == 0:
            blk = d
    return blk


def _pick_s_block(s, t, b):
    cap = max(1, 1024 // max(t, 1))         # ~1k projection rows per step
    blk = 1
    for d in range(1, min(s, cap) + 1):
        if s % d == 0:
            blk = d
    if b * (s // blk) < 2:                  # keep >= 2 total grid steps when possible
        for d in range(blk - 1, 0, -1):
            if s % d == 0 and (s // d) >= 2:
                blk = d
                break
    return blk


def _bcast_spec(shape):
    nd = len(shape)
    return pl.BlockSpec(shape, lambda *args: (0,) * nd)


# ----------------------------- wrapper -----------------------------
def divided_space_time_attention(x, params, *, fuse_temporal=True):
    """x: (B, C, T, H, W) float32. Returns (B, C, T, H, W)."""
    B, C, T, H, W = x.shape
    S = H * W
    n_head = params['n_head']
    d_k = C // n_head
    group_size = C // NUM_GROUPS
    bf = jnp.bfloat16

    # single layout transform NCTHW -> (B*T, S, C); (b, t) is the spatial-attention batch
    xs = jnp.transpose(x, (0, 2, 3, 4, 1)).reshape(B * T, S, C)

    # ---- spatial branch ----
    BT = B * T
    BT_blk = _pick_bt_block(BT, S, C)
    s_out = pl.pallas_call(
        functools.partial(_spatial_attn_kernel, group_size),
        out_shape=jax.ShapeDtypeStruct((BT, S, C), jnp.float32),
        grid=(BT // BT_blk,),
        in_specs=[
            pl.BlockSpec((BT_blk, S, C), lambda i: (i, 0, 0)),
            _bcast_spec((1, C)), _bcast_spec((1, C)), _bcast_spec((C, C)),
            _bcast_spec((C, C)), _bcast_spec((1, C)),          # wq, bq
            _bcast_spec((C, C)), _bcast_spec((1, C)),          # wk, bk
            _bcast_spec((C, C)), _bcast_spec((1, C)),          # wv, bv
            _bcast_spec((C, C)), _bcast_spec((1, C)),          # w_proj, b_proj
        ],
        out_specs=pl.BlockSpec((BT_blk, S, C), lambda i: (i, 0, 0)),
        compiler_params=pltpu.CompilerParams(dimension_semantics=("parallel",)),
    )(xs, params['gn_gamma'], params['gn_beta'], params['gmat'],
      params['wq_s'].astype(bf), params['bq_s'],
      params['wk_s'].astype(bf), params['bk_s'],
      params['wv_s'].astype(bf), params['bv_s'],
      params['wo_s'].astype(bf), params['bo_s'])

    # ---- temporal (axial over T) branch ----
    # per-head weight split done once in the wrapper (removes in-kernel lane slicing/concat)
    wq_h = jnp.transpose(params['wq_t'].reshape(C, n_head, d_k), (1, 0, 2)).astype(bf)
    wk_h = jnp.transpose(params['wk_t'].reshape(C, n_head, d_k), (1, 0, 2)).astype(bf)
    wv_h = jnp.transpose(params['wv_t'].reshape(C, n_head, d_k), (1, 0, 2)).astype(bf)
    wfc_h = params['wfc_t'].reshape(n_head, d_k, C).astype(bf)
    S_blk = _pick_s_block(S, T, B)

    if fuse_temporal:
        # fused path: same (B, T, S, C) layout as the spatial branch, residual add in-kernel
        xs4 = xs.reshape(B, T, S, C)
        s4 = s_out.reshape(B, T, S, C)
        y4 = pl.pallas_call(
            functools.partial(_temporal_attn_kernel_fused, n_head, d_k),
            out_shape=jax.ShapeDtypeStruct((B, T, S, C), jnp.float32),
            grid=(B, S // S_blk),
            in_specs=[
                pl.BlockSpec((None, T, S_blk, C), lambda b, si: (b, 0, si, 0)),
                pl.BlockSpec((None, T, S_blk, C), lambda b, si: (b, 0, si, 0)),
                _bcast_spec((n_head, C, d_k)), _bcast_spec((n_head, C, d_k)),
                _bcast_spec((n_head, C, d_k)),
                _bcast_spec((n_head, d_k, C)), _bcast_spec((1, C)),
            ],
            out_specs=pl.BlockSpec((None, T, S_blk, C), lambda b, si: (b, 0, si, 0)),
            compiler_params=pltpu.CompilerParams(
                dimension_semantics=("parallel", "parallel")),
        )(xs4, s4, wq_h, wk_h, wv_h, wfc_h, params['bfc_t'])
    else:
        # fallback path (extra HBM transpose, wrapper-side add) — only used if the fused
        # kernel fails to lower on this toolchain.
        xt = jnp.transpose(x, (0, 3, 4, 2, 1)).reshape(B, S, T, C)
        t_out = pl.pallas_call(
            functools.partial(_temporal_attn_kernel_plain, n_head, d_k),
            out_shape=jax.ShapeDtypeStruct((B, S, T, C), jnp.float32),
            grid=(B, S // S_blk),
            in_specs=[
                pl.BlockSpec((None, S_blk, T, C), lambda b, si: (b, si, 0, 0)),
                _bcast_spec((n_head, C, d_k)), _bcast_spec((n_head, C, d_k)),
                _bcast_spec((n_head, C, d_k)),
                _bcast_spec((n_head, d_k, C)), _bcast_spec((1, C)),
            ],
            out_specs=pl.BlockSpec((None, S_blk, T, C), lambda b, si: (b, si, 0, 0)),
            compiler_params=pltpu.CompilerParams(
                dimension_semantics=("parallel", "parallel")),
        )(xt, wq_h, wk_h, wv_h, wfc_h, params['bfc_t'])
        y4 = s_out.reshape(B, T, S, C) + jnp.transpose(t_out, (0, 2, 1, 3))

    # single inverse layout transform back to NCTHW
    return jnp.transpose(y4.reshape(B, T, H, W, C), (0, 4, 1, 2, 3))


# ----------------------------- deterministic parameter init -----------------------------
def init_params(key, in_channels, n_head=2, num_groups=NUM_GROUPS):
    C = in_channels
    assert C % num_groups == 0 and C % n_head == 0
    ks = jax.random.split(key, 12)
    std = 1.0 / jnp.sqrt(jnp.float32(C))

    def w(k):      # pre-transposed (C_in, C_out)
        return jax.random.normal(k, (C, C), jnp.float32) * std

    def b(k):
        return jax.random.normal(k, (1, C), jnp.float32) * 0.02

    gs = C // num_groups
    gidx = jnp.arange(C) // gs
    gmat = (gidx[:, None] == gidx[None, :]).astype(jnp.float32) / gs

    return dict(
        n_head=n_head,
        gn_gamma=jnp.ones((1, C), jnp.float32),
        gn_beta=jnp.zeros((1, C), jnp.float32),
        gmat=gmat,
        wq_s=w(ks[0]), bq_s=b(ks[1]),
        wk_s=w(ks[2]), bk_s=b(ks[3]),
        wv_s=w(ks[4]), bv_s=b(ks[5]),
        wo_s=w(ks[6]), bo_s=b(ks[7]),
        wq_t=w(ks[8]), wk_t=w(ks[9]), wv_t=w(ks[10]),
        wfc_t=w(ks[11]), bfc_t=jnp.zeros((1, C), jnp.float32),
    )


# ----------------------------- pure-JAX reference (matching precision policy) -----------------------------
def _reference(x, params):
    """Mirrors the kernels' mixed precision: bf16 matmul operands, f32 accumulation,
    f32 GroupNorm stats / softmax.  (Differences vs the kernel: exact divide instead of
    the EUP approx reciprocal, and accumulation order.)"""
    B, C, T, H, W = x.shape
    S = H * W
    n_head = params['n_head']
    d_k = C // n_head
    bf, f32 = jnp.bfloat16, jnp.float32

    def mm(a, w_):
        return jnp.dot(a.astype(bf), w_.astype(bf), preferred_element_type=f32)

    # spatial
    xs = jnp.transpose(x, (0, 2, 3, 4, 1)).reshape(B * T, S, C)
    mean = jnp.mean(xs, axis=1, keepdims=True)
    msq = jnp.mean(xs * xs, axis=1, keepdims=True)
    if C // NUM_GROUPS > 1:
        mean_g = mean @ params['gmat']
        msq_g = msq @ params['gmat']
    else:
        mean_g, msq_g = mean, msq
    var = jnp.maximum(msq_g - mean_g * mean_g, 0.0)
    xn = (xs - mean_g) * jax.lax.rsqrt(var + GN_EPS) * params['gn_gamma'] + params['gn_beta']
    xn2 = xn.reshape(B * T * S, C)
    q = (mm(xn2, params['wq_s']) + params['bq_s']).reshape(B * T, S, C)
    k = (mm(xn2, params['wk_s']) + params['bk_s']).reshape(B * T, S, C)
    v = (mm(xn2, params['wv_s']) + params['bv_s']).reshape(B * T, S, C)
    scale = 1.0 / jnp.sqrt(jnp.float32(C))
    sc = jnp.einsum('bic,bjc->bij', (q * scale).astype(bf), k.astype(bf),
                    preferred_element_type=f32)
    sc = sc - jnp.max(sc, axis=-1, keepdims=True)
    p = jnp.exp(sc)
    p = p / jnp.sum(p, axis=-1, keepdims=True)
    ctx = jnp.einsum('bij,bjc->bic', p.astype(bf), v.astype(bf), preferred_element_type=f32)
    hsp = mm(ctx.reshape(B * T * S, C), params['wo_s']) + params['bo_s']
    s_out = xs + hsp.reshape(B * T, S, C)

    # temporal (axial over T)
    xr = jnp.transpose(xs.reshape(B, T, S, C), (0, 2, 1, 3))     # (B, S, T, C)
    x2 = xr.reshape(B * S * T, C)
    scale_t = 1.0 / jnp.sqrt(jnp.float32(d_k))
    y = jnp.zeros((B * S * T, C), f32)
    for h in range(n_head):
        lo = h * d_k
        qh = mm(x2, params['wq_t'][:, lo:lo + d_k]).reshape(B, S, T, d_k)
        kh = mm(x2, params['wk_t'][:, lo:lo + d_k]).reshape(B, S, T, d_k)
        vh = mm(x2, params['wv_t'][:, lo:lo + d_k]).reshape(B, S, T, d_k)
        sct = jnp.einsum('bstd,bsud->bstu', (qh * scale_t).astype(bf), kh.astype(bf),
                         preferred_element_type=f32)
        sct = sct - jnp.max(sct, axis=-1, keepdims=True)
        pt = jnp.exp(sct)
        pt = pt / jnp.sum(pt, axis=-1, keepdims=True)
        ctx_t = jnp.einsum('bstu,bsud->bstd', pt.astype(bf), vh.astype(bf),
                           preferred_element_type=f32)
        y = y + mm(ctx_t.reshape(B * S * T, d_k), params['wfc_t'][lo:lo + d_k, :])
    y = y + params['bfc_t']
    t_out = jnp.transpose(y.reshape(B, S, T, C), (0, 2, 1, 3))   # (B, T, S, C)

    out = s_out.reshape(B, T, S, C) + t_out
    return jnp.transpose(out.reshape(B, T, H, W, C), (0, 4, 1, 2, 3))


if __name__ == "__main__":
    key = jax.random.PRNGKey(0)
    kx, kp = jax.random.split(key)
    B, C, T, H, W = 2, 32, 8, 8, 8          # in_channels=32 so GroupNorm(32, C) is valid
    x = jax.random.normal(kx, (B, C, T, H, W), jnp.float32)
    params = init_params(kp, C, n_head=2)

    try:
        out = jax.block_until_ready(divided_space_time_attention(x, params, fuse_temporal=True))
    except Exception:
        # safety net: fall back to the unfused temporal layout if the fused kernel
        # does not lower on this toolchain
        out = jax.block_until_ready(divided_space_time_attention(x, params, fuse_temporal=False))

    assert out.shape == (B, C, T, H, W) and out.dtype == jnp.float32

    ref = jax.block_until_ready(_reference(x, params))
    err = float(jnp.max(jnp.abs(out - ref)))
    # tolerance budget: EUP approx reciprocal + bf16-operand accumulation-order differences
    if err > 3e-2:
        raise AssertionError(f"Pallas kernel mismatch vs JAX reference: max abs err {err}")
    print("KERNEL_OK")
</pallas_src>

<mosaic_0001>
module attributes {stable_mosaic.version = 11 : i64} {
  func.func @_spatial_attn_kernel(%arg0: i32, %arg1: memref<8x64x32xf32, #tpu.memory_space<vmem>>, %arg2: memref<1x32xf32, #tpu.memory_space<vmem>>, %arg3: memref<1x32xf32, #tpu.memory_space<vmem>>, %arg4: memref<32x32xf32, #tpu.memory_space<vmem>>, %arg5: memref<32x32xbf16, #tpu.memory_space<vmem>>, %arg6: memref<1x32xf32, #tpu.memory_space<vmem>>, %arg7: memref<32x32xbf16, #tpu.memory_space<vmem>>, %arg8: memref<1x32xf32, #tpu.memory_space<vmem>>, %arg9: memref<32x32xbf16, #tpu.memory_space<vmem>>, %arg10: memref<1x32xf32, #tpu.memory_space<vmem>>, %arg11: memref<32x32xbf16, #tpu.memory_space<vmem>>, %arg12: memref<1x32xf32, #tpu.memory_space<vmem>>, %arg13: memref<8x64x32xf32, #tpu.memory_space<vmem>>) attributes {dimension_semantics = [#tpu.dimension_semantics<parallel>], iteration_bounds = array<i64: 2>, scalar_prefetch = 0 : i64, scratch_operands = 0 : i64, tpu.core_type = #tpu.core_type<tc>, window_params = [{transform_indices = @transform_0, window_bounds = array<i64: 8, 64, 32>}, {pipeline_mode = #tpu.pipeline_mode<synchronous>, transform_indices = @transform_1, window_bounds = array<i64: 1, 32>}, {pipeline_mode = #tpu.pipeline_mode<synchronous>, transform_indices = @transform_2, window_bounds = array<i64: 1, 32>}, {pipeline_mode = #tpu.pipeline_mode<synchronous>, transform_indices = @transform_3, window_bounds = array<i64: 32, 32>}, {pipeline_mode = #tpu.pipeline_mode<synchronous>, transform_indices = @transform_4, window_bounds = array<i64: 32, 32>}, {pipeline_mode = #tpu.pipeline_mode<synchronous>, transform_indices = @transform_5, window_bounds = array<i64: 1, 32>}, {pipeline_mode = #tpu.pipeline_mode<synchronous>, transform_indices = @transform_6, window_bounds = array<i64: 32, 32>}, {pipeline_mode = #tpu.pipeline_mode<synchronous>, transform_indices = @transform_7, window_bounds = array<i64: 1, 32>}, {pipeline_mode = #tpu.pipeline_mode<synchronous>, transform_indices = @transform_8, window_bounds = array<i64: 32, 32>}, {pipeline_mode = #tpu.pipeline_mode<synchronous>, transform_indices = @transform_9, window_bounds = array<i64: 1, 32>}, {pipeline_mode = #tpu.pipeline_mode<synchronous>, transform_indices = @transform_10, window_bounds = array<i64: 32, 32>}, {pipeline_mode = #tpu.pipeline_mode<synchronous>, transform_indices = @transform_11, window_bounds = array<i64: 1, 32>}, {transform_indices = @transform_12, window_bounds = array<i64: 8, 64, 32>}]} {
    %c0 = arith.constant 0 : index
    %c0_0 = arith.constant 0 : index
    %c0_1 = arith.constant 0 : index
    %0 = vector.load %arg1[%c0, %c0_0, %c0_1] : memref<8x64x32xf32, #tpu.memory_space<vmem>>, vector<8x64x32xf32>
    %cst = arith.constant dense<0.000000e+00> : vector<8x32xf32>
    %1 = vector.multi_reduction <add>, %0, %cst [1] : vector<8x64x32xf32> to vector<8x32xf32>
    %2 = vector.shape_cast %1 : vector<8x32xf32> to vector<8x1x32xf32>
    %cst_2 = arith.constant 1.562500e-02 : f32
    %3 = vector.broadcast %cst_2 : f32 to vector<8x1x32xf32>
    %4 = arith.mulf %2, %3 : vector<8x1x32xf32>
    %5 = arith.mulf %0, %0 : vector<8x64x32xf32>
    %cst_3 = arith.constant dense<0.000000e+00> : vector<8x32xf32>
    %6 = vector.multi_reduction <add>, %5, %cst_3 [1] : vector<8x64x32xf32> to vector<8x32xf32>
    %7 = vector.shape_cast %6 : vector<8x32xf32> to vector<8x1x32xf32>
    %cst_4 = arith.constant 1.562500e-02 : f32
    %8 = vector.broadcast %cst_4 : f32 to vector<8x1x32xf32>
    %9 = arith.mulf %7, %8 : vector<8x1x32xf32>
    %10 = arith.mulf %4, %4 : vector<8x1x32xf32>
    %11 = arith.subf %9, %10 : vector<8x1x32xf32>
    %cst_5 = arith.constant 0.000000e+00 : f32
    %12 = vector.broadcast %cst_5 : f32 to vector<8x1x32xf32>
    %13 = arith.maximumf %11, %12 : vector<8x1x32xf32>
    %14 = vector.broadcast %4 : vector<8x1x32xf32> to vector<8x64x32xf32>
    %15 = arith.subf %0, %14 : vector<8x64x32xf32>
    %cst_6 = arith.constant 9.99999997E-7 : f32
    %16 = vector.broadcast %cst_6 : f32 to vector<8x1x32xf32>
    %17 = arith.addf %13, %16 : vector<8x1x32xf32>
    %18 = math.rsqrt %17 : vector<8x1x32xf32>
    %19 = vector.broadcast %18 : vector<8x1x32xf32> to vector<8x64x32xf32>
    %20 = arith.mulf %15, %19 : vector<8x64x32xf32>
    %c0_7 = arith.constant 0 : index
    %c0_8 = arith.constant 0 : index
    %21 = vector.load %arg2[%c0_7, %c0_8] : memref<1x32xf32, #tpu.memory_space<vmem>>, vector<1x32xf32>
    %22 = vector.shape_cast %21 : vector<1x32xf32> to vector<1x1x32xf32>
    %23 = vector.broadcast %22 : vector<1x1x32xf32> to vector<8x64x32xf32>
    %24 = arith.mulf %20, %23 : vector<8x64x32xf32>
    %c0_9 = arith.constant 0 : index
    %c0_10 = arith.constant 0 : index
    %25 = vector.load %arg3[%c0_9, %c0_10] : memref<1x32xf32, #tpu.memory_space<vmem>>, vector<1x32xf32>
    %26 = vector.shape_cast %25 : vector<1x32xf32> to vector<1x1x32xf32>
    %27 = vector.broadcast %26 : vector<1x1x32xf32> to vector<8x64x32xf32>
    %28 = arith.addf %24, %27 : vector<8x64x32xf32>
    %29 = vector.shape_cast %28 : vector<8x64x32xf32> to vector<512x32xf32>
    %30 = arith.truncf %29 : vector<512x32xf32> to vector<512x32xbf16>
    %c0_11 = arith.constant 0 : index
    %c0_12 = arith.constant 0 : index
    %31 = vector.load %arg5[%c0_11, %c0_12] : memref<32x32xbf16, #tpu.memory_space<vmem>>, vector<32x32xbf16>
    %cst_13 = arith.constant dense<0.000000e+00> : vector<512x32xf32>
    %32 = tpu.matmul %30, %31, %cst_13 {dimension_numbers = #tpu.dot_dimension_numbers<[1], [0], [0], [1], [0, 0, 1, 1], [], []>} : vector<512x32xbf16>, vector<32x32xbf16>, vector<512x32xf32> -> vector<512x32xf32>
    %c0_14 = arith.constant 0 : index
    %c0_15 = arith.constant 0 : index
    %33 = vector.load %arg6[%c0_14, %c0_15] : memref<1x32xf32, #tpu.memory_space<vmem>>, vector<1x32xf32>
    %34 = vector.broadcast %33 : vector<1x32xf32> to vector<512x32xf32>
    %35 = arith.addf %32, %34 : vector<512x32xf32>
    %c0_16 = arith.constant 0 : index
    %c0_17 = arith.constant 0 : index
    %36 = vector.load %arg7[%c0_16, %c0_17] : memref<32x32xbf16, #tpu.memory_space<vmem>>, vector<32x32xbf16>
    %cst_18 = arith.constant dense<0.000000e+00> : vector<512x32xf32>
    %37 = tpu.matmul %30, %36, %cst_18 {dimension_numbers = #tpu.dot_dimension_numbers<[1], [0], [0], [1], [0, 0, 1, 1], [], []>} : vector<512x32xbf16>, vector<32x32xbf16>, vector<512x32xf32> -> vector<512x32xf32>
    %c0_19 = arith.constant 0 : index
    %c0_20 = arith.constant 0 : index
    %38 = vector.load %arg8[%c0_19, %c0_20] : memref<1x32xf32, #tpu.memory_space<vmem>>, vector<1x32xf32>
    %39 = vector.broadcast %38 : vector<1x32xf32> to vector<512x32xf32>
    %40 = arith.addf %37, %39 : vector<512x32xf32>
    %c0_21 = arith.constant 0 : index
    %c0_22 = arith.constant 0 : index
    %41 = vector.load %arg9[%c0_21, %c0_22] : memref<32x32xbf16, #tpu.memory_space<vmem>>, vector<32x32xbf16>
    %cst_23 = arith.constant dense<0.000000e+00> : vector<512x32xf32>
    %42 = tpu.matmul %30, %41, %cst_23 {dimension_numbers = #tpu.dot_dimension_numbers<[1], [0], [0], [1], [0, 0, 1, 1], [], []>} : vector<512x32xbf16>, vector<32x32xbf16>, vector<512x32xf32> -> vector<512x32xf32>
    %c0_24 = arith.constant 0 : index
    %c0_25 = arith.constant 0 : index
    %43 = vector.load %arg10[%c0_24, %c0_25] : memref<1x32xf32, #tpu.memory_space<vmem>>, vector<1x32xf32>
    %44 = vector.broadcast %43 : vector<1x32xf32> to vector<512x32xf32>
    %45 = arith.addf %42, %44 : vector<512x32xf32>
    %cst_26 = arith.constant 3.200000e+01 : f32
    %46 = math.sqrt %cst_26 : f32
    %cst_27 = arith.constant 1.000000e+00 : f32
    %47 = arith.divf %cst_27, %46 : f32
    %48 = vector.broadcast %47 : f32 to vector<512x32xf32>
    %49 = arith.mulf %35, %48 : vector<512x32xf32>
    %50 = vector.shape_cast %49 : vector<512x32xf32> to vector<8x64x32xf32>
    %51 = arith.truncf %50 : vector<8x64x32xf32> to vector<8x64x32xbf16>
    %52 = vector.shape_cast %40 : vector<512x32xf32> to vector<8x64x32xf32>
    %53 = arith.truncf %52 : vector<8x64x32xf32> to vector<8x64x32xbf16>
    %54 = vector.shape_cast %45 : vector<512x32xf32> to vector<8x64x32xf32>
    %55 = arith.truncf %54 : vector<8x64x32xf32> to vector<8x64x32xbf16>
    "tpu.trace_start"() <{level = 10 : i32, message = "bic,bjc->bij"}> : () -> ()
    %cst_28 = arith.constant dense<0.000000e+00> : vector<8x64x64xf32>
    %56 = tpu.matmul %51, %53, %cst_28 {dimension_numbers = #tpu.dot_dimension_numbers<[2], [2], [1], [1], [0, 0, 0, 1, 1, 1], [0], [0]>} : vector<8x64x32xbf16>, vector<8x64x32xbf16>, vector<8x64x64xf32> -> vector<8x64x64xf32>
    "tpu.trace_stop"() : () -> ()
    %cst_29 = arith.constant dense<0xFF800000> : vector<8x64xf32>
    %57 = vector.multi_reduction <maximumf>, %56, %cst_29 [2] : vector<8x64x64xf32> to vector<8x64xf32>
    %58 = vector.shape_cast %57 : vector<8x64xf32> to vector<8x64x1xf32>
    %59 = vector.broadcast %58 : vector<8x64x1xf32> to vector<8x64x64xf32>
    %60 = arith.subf %56, %59 : vector<8x64x64xf32>
    %61 = math.exp %60 : vector<8x64x64xf32>
    %cst_30 = arith.constant dense<0.000000e+00> : vector<8x64xf32>
    %62 = vector.multi_reduction <add>, %61, %cst_30 [2] : vector<8x64x64xf32> to vector<8x64xf32>
    %63 = vector.shape_cast %62 : vector<8x64xf32> to vector<8x64x1xf32>
    %64 = tpu.reciprocal %63 {approx = true} : vector<8x64x1xf32> -> vector<8x64x1xf32>
    %65 = vector.broadcast %64 : vector<8x64x1xf32> to vector<8x64x64xf32>
    %66 = arith.mulf %61, %65 : vector<8x64x64xf32>
    %67 = arith.truncf %66 : vector<8x64x64xf32> to vector<8x64x64xbf16>
    "tpu.trace_start"() <{level = 10 : i32, message = "bij,bjc->bic"}> : () -> ()
    %cst_31 = arith.constant dense<0.000000e+00> : vector<8x64x32xf32>
    %68 = tpu.matmul %67, %55, %cst_31 {dimension_numbers = #tpu.dot_dimension_numbers<[2], [1], [1], [2], [0, 0, 0, 1, 1, 2], [0], [0]>} : vector<8x64x64xbf16>, vector<8x64x32xbf16>, vector<8x64x32xf32> -> vector<8x64x32xf32>
    "tpu.trace_stop"() : () -> ()
    %69 = vector.shape_cast %68 : vector<8x64x32xf32> to vector<512x32xf32>
    %70 = arith.truncf %69 : vector<512x32xf32> to vector<512x32xbf16>
    %c0_32 = arith.constant 0 : index
    %c0_33 = arith.constant 0 : index
    %71 = vector.load %arg11[%c0_32, %c0_33] : memref<32x32xbf16, #tpu.memory_space<vmem>>, vector<32x32xbf16>
    %cst_34 = arith.constant dense<0.000000e+00> : vector<512x32xf32>
    %72 = tpu.matmul %70, %71, %cst_34 {dimension_numbers = #tpu.dot_dimension_numbers<[1], [0], [0], [1], [0, 0, 1, 1], [], []>} : vector<512x32xbf16>, vector<32x32xbf16>, vector<512x32xf32> -> vector<512x32xf32>
    %c0_35 = arith.constant 0 : index
    %c0_36 = arith.constant 0 : index
    %73 = vector.load %arg12[%c0_35, %c0_36] : memref<1x32xf32, #tpu.memory_space<vmem>>, vector<1x32xf32>
    %74 = vector.broadcast %73 : vector<1x32xf32> to vector<512x32xf32>
    %75 = arith.addf %72, %74 : vector<512x32xf32>
    %76 = vector.shape_cast %75 : vector<512x32xf32> to vector<8x64x32xf32>
    %77 = arith.addf %0, %76 : vector<8x64x32xf32>
    %c0_37 = arith.constant 0 : index
    %c0_38 = arith.constant 0 : index
    %c0_39 = arith.constant 0 : index
    %78 = vector.load %arg13[%c0_37, %c0_38, %c0_39] : memref<8x64x32xf32, #tpu.memory_space<vmem>>, vector<8x64x32xf32>
    tpu.vector_store %arg13[%c0_37, %c0_38, %c0_39], %77 {strides = array<i32>} : memref<8x64x32xf32, #tpu.memory_space<vmem>>, vector<8x64x32xf32>,
    return
  }
  func.func @transform_0(%arg0: i32) -> (i32, i32, i32) {
    %c0_i32 = arith.constant 0 : i32
    %c0_i32_0 = arith.constant 0 : i32
    %c0_i32_1 = arith.constant 0 : i32
    return %arg0, %c0_i32, %c0_i32_0 : i32, i32, i32
  }
  func.func @transform_1(%arg0: i32) -> (i32, i32) {
    %c0_i32 = arith.constant 0 : i32
    %c0_i32_0 = arith.constant 0 : i32
    %c0_i32_1 = arith.constant 0 : i32
    return %c0_i32, %c0_i32_0 : i32, i32
  }
  func.func @transform_2(%arg0: i32) -> (i32, i32) {
    %c0_i32 = arith.constant 0 : i32
    %c0_i32_0 = arith.constant 0 : i32
    %c0_i32_1 = arith.constant 0 : i32
    return %c0_i32, %c0_i32_0 : i32, i32
  }
  func.func @transform_3(%arg0: i32) -> (i32, i32) {
    %c0_i32 = arith.constant 0 : i32
    %c0_i32_0 = arith.constant 0 : i32
    %c0_i32_1 = arith.constant 0 : i32
    return %c0_i32, %c0_i32_0 : i32, i32
  }
  func.func @transform_4(%arg0: i32) -> (i32, i32) {
    %c0_i32 = arith.constant 0 : i32
    %c0_i32_0 = arith.constant 0 : i32
    %c0_i32_1 = arith.constant 0 : i32
    return %c0_i32, %c0_i32_0 : i32, i32
  }
  func.func @transform_5(%arg0: i32) -> (i32, i32) {
    %c0_i32 = arith.constant 0 : i32
    %c0_i32_0 = arith.constant 0 : i32
    %c0_i32_1 = arith.constant 0 : i32
    return %c0_i32, %c0_i32_0 : i32, i32
  }
  func.func @transform_6(%arg0: i32) -> (i32, i32) {
    %c0_i32 = arith.constant 0 : i32
    %c0_i32_0 = arith.constant 0 : i32
    %c0_i32_1 = arith.constant 0 : i32
    return %c0_i32, %c0_i32_0 : i32, i32
  }
  func.func @transform_7(%arg0: i32) -> (i32, i32) {
    %c0_i32 = arith.constant 0 : i32
    %c0_i32_0 = arith.constant 0 : i32
    %c0_i32_1 = arith.constant 0 : i32
    return %c0_i32, %c0_i32_0 : i32, i32
  }
  func.func @transform_8(%arg0: i32) -> (i32, i32) {
    %c0_i32 = arith.constant 0 : i32
    %c0_i32_0 = arith.constant 0 : i32
    %c0_i32_1 = arith.constant 0 : i32
    return %c0_i32, %c0_i32_0 : i32, i32
  }
  func.func @transform_9(%arg0: i32) -> (i32, i32) {
    %c0_i32 = arith.constant 0 : i32
    %c0_i32_0 = arith.constant 0 : i32
    %c0_i32_1 = arith.constant 0 : i32
    return %c0_i32, %c0_i32_0 : i32, i32
  }
  func.func @transform_10(%arg0: i32) -> (i32, i32) {
    %c0_i32 = arith.constant 0 : i32
    %c0_i32_0 = arith.constant 0 : i32
    %c0_i32_1 = arith.constant 0 : i32
    return %c0_i32, %c0_i32_0 : i32, i32
  }
  func.func @transform_11(%arg0: i32) -> (i32, i32) {
    %c0_i32 = arith.constant 0 : i32
    %c0_i32_0 = arith.constant 0 : i32
    %c0_i32_1 = arith.constant 0 : i32
    return %c0_i32, %c0_i32_0 : i32, i32
  }
  func.func @transform_12(%arg0: i32) -> (i32, i32, i32) {
    %c0_i32 = arith.constant 0 : i32
    %c0_i32_0 = arith.constant 0 : i32
    %c0_i32_1 = arith.constant 0 : i32
    return %arg0, %c0_i32, %c0_i32_0 : i32, i32, i32
  }
}

module attributes {stable_mosaic.version = 11 : i64} {
  func.func @_spatial_attn_kernel(%arg0: i32, %arg1: memref<8x64x32xf32, #tpu.memory_space<vmem>>, %arg2: memref<1x32xf32, #tpu.memory_space<vmem>>, %arg3: memref<1x32xf32, #tpu.memory_space<vmem>>, %arg4: memref<32x32xf32, #tpu.memory_space<vmem>>, %arg5: memref<32x32xbf16, #tpu.memory_space<vmem>>, %arg6: memref<1x32xf32, #tpu.memory_space<vmem>>, %arg7: memref<32x32xbf16, #tpu.memory_space<vmem>>, %arg8: memref<1x32xf32, #tpu.memory_space<vmem>>, %arg9: memref<32x32xbf16, #tpu.memory_space<vmem>>, %arg10: memref<1x32xf32, #tpu.memory_space<vmem>>, %arg11: memref<32x32xbf16, #tpu.memory_space<vmem>>, %arg12: memref<1x32xf32, #tpu.memory_space<vmem>>, %arg13: memref<8x64x32xf32, #tpu.memory_space<vmem>>) attributes {dimension_semantics = [#tpu.dimension_semantics<parallel>], iteration_bounds = array<i64: 2>, scalar_prefetch = 0 : i64, scratch_operands = 0 : i64, tpu.core_type = #tpu.core_type<tc>, window_params = [{transform_indices = @transform_0, window_bounds = array<i64: 8, 64, 32>}, {pipeline_mode = #tpu.pipeline_mode<synchronous>, transform_indices = @transform_1, window_bounds = array<i64: 1, 32>}, {pipeline_mode = #tpu.pipeline_mode<synchronous>, transform_indices = @transform_2, window_bounds = array<i64: 1, 32>}, {pipeline_mode = #tpu.pipeline_mode<synchronous>, transform_indices = @transform_3, window_bounds = array<i64: 32, 32>}, {pipeline_mode = #tpu.pipeline_mode<synchronous>, transform_indices = @transform_4, window_bounds = array<i64: 32, 32>}, {pipeline_mode = #tpu.pipeline_mode<synchronous>, transform_indices = @transform_5, window_bounds = array<i64: 1, 32>}, {pipeline_mode = #tpu.pipeline_mode<synchronous>, transform_indices = @transform_6, window_bounds = array<i64: 32, 32>}, {pipeline_mode = #tpu.pipeline_mode<synchronous>, transform_indices = @transform_7, window_bounds = array<i64: 1, 32>}, {pipeline_mode = #tpu.pipeline_mode<synchronous>, transform_indices = @transform_8, window_bounds = array<i64: 32, 32>}, {pipeline_mode = #tpu.pipeline_mode<synchronous>, transform_indices = @transform_9, window_bounds = array<i64: 1, 32>}, {pipeline_mode = #tpu.pipeline_mode<synchronous>, transform_indices = @transform_10, window_bounds = array<i64: 32, 32>}, {pipeline_mode = #tpu.pipeline_mode<synchronous>, transform_indices = @transform_11, window_bounds = array<i64: 1, 32>}, {transform_indices = @transform_12, window_bounds = array<i64: 8, 64, 32>}]} {
    %c0 = arith.constant 0 : index
    %c0_0 = arith.constant 0 : index
    %c0_1 = arith.constant 0 : index
    %0 = vector.load %arg1[%c0, %c0_0, %c0_1] : memref<8x64x32xf32, #tpu.memory_space<vmem>>, vector<8x64x32xf32>
    %cst = arith.constant dense<0.000000e+00> : vector<8x32xf32>
    %1 = vector.multi_reduction <add>, %0, %cst [1] : vector<8x64x32xf32> to vector<8x32xf32>
    %2 = vector.shape_cast %1 : vector<8x32xf32> to vector<8x1x32xf32>
    %cst_2 = arith.constant 1.562500e-02 : f32
    %3 = vector.broadcast %cst_2 : f32 to vector<8x1x32xf32>
    %4 = arith.mulf %2, %3 : vector<8x1x32xf32>
    %5 = arith.mulf %0, %0 : vector<8x64x32xf32>
    %cst_3 = arith.constant dense<0.000000e+00> : vector<8x32xf32>
    %6 = vector.multi_reduction <add>, %5, %cst_3 [1] : vector<8x64x32xf32> to vector<8x32xf32>
    %7 = vector.shape_cast %6 : vector<8x32xf32> to vector<8x1x32xf32>
    %cst_4 = arith.constant 1.562500e-02 : f32
    %8 = vector.broadcast %cst_4 : f32 to vector<8x1x32xf32>
    %9 = arith.mulf %7, %8 : vector<8x1x32xf32>
    %10 = arith.mulf %4, %4 : vector<8x1x32xf32>
    %11 = arith.subf %9, %10 : vector<8x1x32xf32>
    %cst_5 = arith.constant 0.000000e+00 : f32
    %12 = vector.broadcast %cst_5 : f32 to vector<8x1x32xf32>
    %13 = arith.maximumf %11, %12 : vector<8x1x32xf32>
    %14 = vector.broadcast %4 : vector<8x1x32xf32> to vector<8x64x32xf32>
    %15 = arith.subf %0, %14 : vector<8x64x32xf32>
    %cst_6 = arith.constant 9.99999997E-7 : f32
    %16 = vector.broadcast %cst_6 : f32 to vector<8x1x32xf32>
    %17 = arith.addf %13, %16 : vector<8x1x32xf32>
    %18 = math.rsqrt %17 : vector<8x1x32xf32>
    %19 = vector.broadcast %18 : vector<8x1x32xf32> to vector<8x64x32xf32>
    %20 = arith.mulf %15, %19 : vector<8x64x32xf32>
    %c0_7 = arith.constant 0 : index
    %c0_8 = arith.constant 0 : index
    %21 = vector.load %arg2[%c0_7, %c0_8] : memref<1x32xf32, #tpu.memory_space<vmem>>, vector<1x32xf32>
    %22 = vector.shape_cast %21 : vector<1x32xf32> to vector<1x1x32xf32>
    %23 = vector.broadcast %22 : vector<1x1x32xf32> to vector<8x64x32xf32>
    %24 = arith.mulf %20, %23 : vector<8x64x32xf32>
    %c0_9 = arith.constant 0 : index
    %c0_10 = arith.constant 0 : index
    %25 = vector.load %arg3[%c0_9, %c0_10] : memref<1x32xf32, #tpu.memory_space<vmem>>, vector<1x32xf32>
    %26 = vector.shape_cast %25 : vector<1x32xf32> to vector<1x1x32xf32>
    %27 = vector.broadcast %26 : vector<1x1x32xf32> to vector<8x64x32xf32>
    %28 = arith.addf %24, %27 : vector<8x64x32xf32>
    %29 = vector.shape_cast %28 : vector<8x64x32xf32> to vector<512x32xf32>
    %30 = arith.truncf %29 : vector<512x32xf32> to vector<512x32xbf16>
    %c0_11 = arith.constant 0 : index
    %c0_12 = arith.constant 0 : index
    %31 = vector.load %arg5[%c0_11, %c0_12] : memref<32x32xbf16, #tpu.memory_space<vmem>>, vector<32x32xbf16>
    %cst_13 = arith.constant dense<0.000000e+00> : vector<512x32xf32>
    %32 = tpu.matmul %30, %31, %cst_13 {dimension_numbers = #tpu.dot_dimension_numbers<[1], [0], [0], [1], [0, 0, 1, 1], [], []>} : vector<512x32xbf16>, vector<32x32xbf16>, vector<512x32xf32> -> vector<512x32xf32>
    %c0_14 = arith.constant 0 : index
    %c0_15 = arith.constant 0 : index
    %33 = vector.load %arg6[%c0_14, %c0_15] : memref<1x32xf32, #tpu.memory_space<vmem>>, vector<1x32xf32>
    %34 = vector.broadcast %33 : vector<1x32xf32> to vector<512x32xf32>
    %35 = arith.addf %32, %34 : vector<512x32xf32>
    %c0_16 = arith.constant 0 : index
    %c0_17 = arith.constant 0 : index
    %36 = vector.load %arg7[%c0_16, %c0_17] : memref<32x32xbf16, #tpu.memory_space<vmem>>, vector<32x32xbf16>
    %cst_18 = arith.constant dense<0.000000e+00> : vector<512x32xf32>
    %37 = tpu.matmul %30, %36, %cst_18 {dimension_numbers = #tpu.dot_dimension_numbers<[1], [0], [0], [1], [0, 0, 1, 1], [], []>} : vector<512x32xbf16>, vector<32x32xbf16>, vector<512x32xf32> -> vector<512x32xf32>
    %c0_19 = arith.constant 0 : index
    %c0_20 = arith.constant 0 : index
    %38 = vector.load %arg8[%c0_19, %c0_20] : memref<1x32xf32, #tpu.memory_space<vmem>>, vector<1x32xf32>
    %39 = vector.broadcast %38 : vector<1x32xf32> to vector<512x32xf32>
    %40 = arith.addf %37, %39 : vector<512x32xf32>
    %c0_21 = arith.constant 0 : index
    %c0_22 = arith.constant 0 : index
    %41 = vector.load %arg9[%c0_21, %c0_22] : memref<32x32xbf16, #tpu.memory_space<vmem>>, vector<32x32xbf16>
    %cst_23 = arith.constant dense<0.000000e+00> : vector<512x32xf32>
    %42 = tpu.matmul %30, %41, %cst_23 {dimension_numbers = #tpu.dot_dimension_numbers<[1], [0], [0], [1], [0, 0, 1, 1], [], []>} : vector<512x32xbf16>, vector<32x32xbf16>, vector<512x32xf32> -> vector<512x32xf32>
    %c0_24 = arith.constant 0 : index
    %c0_25 = arith.constant 0 : index
    %43 = vector.load %arg10[%c0_24, %c0_25] : memref<1x32xf32, #tpu.memory_space<vmem>>, vector<1x32xf32>
    %44 = vector.broadcast %43 : vector<1x32xf32> to vector<512x32xf32>
    %45 = arith.addf %42, %44 : vector<512x32xf32>
    %cst_26 = arith.constant 3.200000e+01 : f32
    %46 = math.sqrt %cst_26 : f32
    %cst_27 = arith.constant 1.000000e+00 : f32
    %47 = arith.divf %cst_27, %46 : f32
    %48 = vector.broadcast %47 : f32 to vector<512x32xf32>
    %49 = arith.mulf %35, %48 : vector<512x32xf32>
    %50 = vector.shape_cast %49 : vector<512x32xf32> to vector<8x64x32xf32>
    %51 = arith.truncf %50 : vector<8x64x32xf32> to vector<8x64x32xbf16>
    %52 = vector.shape_cast %40 : vector<512x32xf32> to vector<8x64x32xf32>
    %53 = arith.truncf %52 : vector<8x64x32xf32> to vector<8x64x32xbf16>
    %54 = vector.shape_cast %45 : vector<512x32xf32> to vector<8x64x32xf32>
    %55 = arith.truncf %54 : vector<8x64x32xf32> to vector<8x64x32xbf16>
    "tpu.trace_start"() <{level = 10 : i32, message = "bic,bjc->bij"}> : () -> ()
    %cst_28 = arith.constant dense<0.000000e+00> : vector<8x64x64xf32>
    %56 = tpu.matmul %51, %53, %cst_28 {dimension_numbers = #tpu.dot_dimension_numbers<[2], [2], [1], [1], [0, 0, 0, 1, 1, 1], [0], [0]>} : vector<8x64x32xbf16>, vector<8x64x32xbf16>, vector<8x64x64xf32> -> vector<8x64x64xf32>
    "tpu.trace_stop"() : () -> ()
    %cst_29 = arith.constant dense<0xFF800000> : vector<8x64xf32>
    %57 = vector.multi_reduction <maximumf>, %56, %cst_29 [2] : vector<8x64x64xf32> to vector<8x64xf32>
    %58 = vector.shape_cast %57 : vector<8x64xf32> to vector<8x64x1xf32>
    %59 = vector.broadcast %58 : vector<8x64x1xf32> to vector<8x64x64xf32>
    %60 = arith.subf %56, %59 : vector<8x64x64xf32>
    %61 = math.exp %60 : vector<8x64x64xf32>
    %cst_30 = arith.constant dense<0.000000e+00> : vector<8x64xf32>
    %62 = vector.multi_reduction <add>, %61, %cst_30 [2] : vector<8x64x64xf32> to vector<8x64xf32>
    %63 = vector.shape_cast %62 : vector<8x64xf32> to vector<8x64x1xf32>
    %64 = tpu.reciprocal %63 {approx = true} : vector<8x64x1xf32> -> vector<8x64x1xf32>
    %65 = vector.broadcast %64 : vector<8x64x1xf32> to vector<8x64x64xf32>
    %66 = arith.mulf %61, %65 : vector<8x64x64xf32>
    %67 = arith.truncf %66 : vector<8x64x64xf32> to vector<8x64x64xbf16>
    "tpu.trace_start"() <{level = 10 : i32, message = "bij,bjc->bic"}> : () -> ()
    %cst_31 = arith.constant dense<0.000000e+00> : vector<8x64x32xf32>
    %68 = tpu.matmul %67, %55, %cst_31 {dimension_numbers = #tpu.dot_dimension_numbers<[2], [1], [1], [2], [0, 0, 0, 1, 1, 2], [0], [0]>} : vector<8x64x64xbf16>, vector<8x64x32xbf16>, vector<8x64x32xf32> -> vector<8x64x32xf32>
    "tpu.trace_stop"() : () -> ()
    %69 = vector.shape_cast %68 : vector<8x64x32xf32> to vector<512x32xf32>
    %70 = arith.truncf %69 : vector<512x32xf32> to vector<512x32xbf16>
    %c0_32 = arith.constant 0 : index
    %c0_33 = arith.constant 0 : index
    %71 = vector.load %arg11[%c0_32, %c0_33] : memref<32x32xbf16, #tpu.memory_space<vmem>>, vector<32x32xbf16>
    %cst_34 = arith.constant dense<0.000000e+00> : vector<512x32xf32>
    %72 = tpu.matmul %70, %71, %cst_34 {dimension_numbers = #tpu.dot_dimension_numbers<[1], [0], [0], [1], [0, 0, 1, 1], [], []>} : vector<512x32xbf16>, vector<32x32xbf16>, vector<512x32xf32> -> vector<512x32xf32>
    %c0_35 = arith.constant 0 : index
    %c0_36 = arith.constant 0 : index
    %73 = vector.load %arg12[%c0_35, %c0_36] : memref<1x32xf32, #tpu.memory_space<vmem>>, vector<1x32xf32>
    %74 = vector.broadcast %73 : vector<1x32xf32> to vector<512x32xf32>
    %75 = arith.addf %72, %74 : vector<512x32xf32>
    %76 = vector.shape_cast %75 : vector<512x32xf32> to vector<8x64x32xf32>
    %77 = arith.addf %0, %76 : vector<8x64x32xf32>
    %c0_37 = arith.constant 0 : index
    %c0_38 = arith.constant 0 : index
    %c0_39 = arith.constant 0 : index
    %78 = vector.load %arg13[%c0_37, %c0_38, %c0_39] : memref<8x64x32xf32, #tpu.memory_space<vmem>>, vector<8x64x32xf32>
    tpu.vector_store %arg13[%c0_37, %c0_38, %c0_39], %77 {strides = array<i32>} : memref<8x64x32xf32, #tpu.memory_space<vmem>>, vector<8x64x32xf32>,
    return
  }
  func.func @transform_0(%arg0: i32) -> (i32, i32, i32) {
    %c0_i32 = arith.constant 0 : i32
    %c0_i32_0 = arith.constant 0 : i32
    %c0_i32_1 = arith.constant 0 : i32
    return %arg0, %c0_i32, %c0_i32_0 : i32, i32, i32
  }
  func.func @transform_1(%arg0: i32) -> (i32, i32) {
    %c0_i32 = arith.constant 0 : i32
    %c0_i32_0 = arith.constant 0 : i32
    %c0_i32_1 = arith.constant 0 : i32
    return %c0_i32, %c0_i32_0 : i32, i32
  }
  func.func @transform_2(%arg0: i32) -> (i32, i32) {
    %c0_i32 = arith.constant 0 : i32
    %c0_i32_0 = arith.constant 0 : i32
    %c0_i32_1 = arith.constant 0 : i32
    return %c0_i32, %c0_i32_0 : i32, i32
  }
  func.func @transform_3(%arg0: i32) -> (i32, i32) {
    %c0_i32 = arith.constant 0 : i32
    %c0_i32_0 = arith.constant 0 : i32
    %c0_i32_1 = arith.constant 0 : i32
    return %c0_i32, %c0_i32_0 : i32, i32
  }
  func.func @transform_4(%arg0: i32) -> (i32, i32) {
    %c0_i32 = arith.constant 0 : i32
    %c0_i32_0 = arith.constant 0 : i32
    %c0_i32_1 = arith.constant 0 : i32
    return %c0_i32, %c0_i32_0 : i32, i32
  }
  func.func @transform_5(%arg0: i32) -> (i32, i32) {
    %c0_i32 = arith.constant 0 : i32
    %c0_i32_0 = arith.constant 0 : i32
    %c0_i32_1 = arith.constant 0 : i32
    return %c0_i32, %c0_i32_0 : i32, i32
  }
  func.func @transform_6(%arg0: i32) -> (i32, i32) {
    %c0_i32 = arith.constant 0 : i32
    %c0_i32_0 = arith.constant 0 : i32
    %c0_i32_1 = arith.constant 0 : i32
    return %c0_i32, %c0_i32_0 : i32, i32
  }
  func.func @transform_7(%arg0: i32) -> (i32, i32) {
    %c0_i32 = arith.constant 0 : i32
    %c0_i32_0 = arith.constant 0 : i32
    %c0_i32_1 = arith.constant 0 : i32
    return %c0_i32, %c0_i32_0 : i32, i32
  }
  func.func @transform_8(%arg0: i32) -> (i32, i32) {
    %c0_i32 = arith.constant 0 : i32
    %c0_i32_0 = arith.constant 0 : i32
    %c0_i32_1 = arith.constant 0 : i32
    return %c0_i32, %c0_i32_0 : i32, i32
  }
  func.func @transform_9(%arg0: i32) -> (i32, i32) {
    %c0_i32 = arith.constant 0 : i32
    %c0_i32_0 = arith.constant 0 : i32
    %c0_i32_1 = arith.constant 0 : i32
    return %c0_i32, %c0_i32_0 : i32, i32
  }
  func.func @transform_10(%arg0: i32) -> (i32, i32) {
    %c0_i32 = arith.constant 0 : i32
    %c0_i32_0 = arith.constant 0 : i32
    %c0_i32_1 = arith.constant 0 : i32
    return %c0_i32, %c0_i32_0 : i32, i32
  }
  func.func @transform_11(%arg0: i32) -> (i32, i32) {
    %c0_i32 = arith.constant 0 : i32
    %c0_i32_0 = arith.constant 0 : i32
    %c0_i32_1 = arith.constant 0 : i32
    return %c0_i32, %c0_i32_0 : i32, i32
  }
  func.func @transform_12(%arg0: i32) -> (i32, i32, i32) {
    %c0_i32 = arith.constant 0 : i32
    %c0_i32_0 = arith.constant 0 : i32
    %c0_i32_1 = arith.constant 0 : i32
    return %arg0, %c0_i32, %c0_i32_0 : i32, i32, i32
  }
}

</mosaic_0001>

<llo_original>
// kernel: tpu_custom_call.1
$region0: #{tpu_custom_call.1}
  #allocation0 [shape = 'u32[]', space=smem, size = 0x4, offset = 0x4, fixed_abs, tag = 'smem constant byte address 0x4 - core index']
  #allocation1 [shape = 'u32[144,128]{1,0:T(1,128)}', space=vmem, size = 0x12000, scoped, tag = 'internal scratch']
  %s0 = inlined_call_operand.vmem [shape: f32[16,64,32], index: 0, kind: input, shape index: {}]
  %s1 = inlined_call_operand.vmem [shape: f32[1,32], index: 1, kind: input, shape index: {}]
  %s2 = inlined_call_operand.vmem [shape: f32[1,32], index: 2, kind: input, shape index: {}]
  %s3 = inlined_call_operand.vmem [shape: f32[32,32], index: 3, kind: input, shape index: {}]
  %s4 = inlined_call_operand.vmem [shape: bf16[32,32], index: 4, kind: input, shape index: {}]
  %s5 = inlined_call_operand.vmem [shape: f32[1,32], index: 5, kind: input, shape index: {}]
  %s6 = inlined_call_operand.vmem [shape: bf16[32,32], index: 6, kind: input, shape index: {}]
  %s7 = inlined_call_operand.vmem [shape: f32[1,32], index: 7, kind: input, shape index: {}]
  %s8 = inlined_call_operand.vmem [shape: bf16[32,32], index: 8, kind: input, shape index: {}]
  %s9 = inlined_call_operand.vmem [shape: f32[1,32], index: 9, kind: input, shape index: {}]
  %s10 = inlined_call_operand.vmem [shape: bf16[32,32], index: 10, kind: input, shape index: {}]
  %s11 = inlined_call_operand.vmem [shape: f32[1,32], index: 11, kind: input, shape index: {}]
  %s12 = inlined_call_operand.vmem [shape: f32[16,64,32], index: 12, kind: output, shape index: {}]
  %s13 = sld [smem:[#allocation0]]
  $region81: #{tpu_custom_call.1} parent=0
    _
  %s15 = ssub.s32 1, %s13
  %s16 = scalar_select 0, %s15, %s13
  loop: start=0, step=1, limit=4
  $region2: #{tpu_custom_call.1} parent=0 // loop_pre_header
    _
  $region3: #{tpu_custom_call.1} parent=0 // loop_header
    %s18 = sphi 0, %s22
    %p19 = scmp.ge.s32.totalorder %s18, 4
    %s28 = sphi 0, %s30
    %s31 = sphi 0, %s28
    %s32 = sphi 0, %s31
    %s48 = sphi 0, %s32
    %s52 = sphi 0, %s52
    %s54 = sphi 0, %s52
    %s55 = sphi 0, %s54
    %s69 = sphi 0, %s55
    %s73 = sphi 0, %s73
    %s75 = sphi 0, %s73
    %s76 = sphi 0, %s75
    %s90 = sphi 0, %s76
    %s94 = sphi 0, %s94
    %s96 = sphi 0, %s94
    %s97 = sphi 0, %s96
    %s111 = sphi 0, %s97
    %s115 = sphi 0, %s115
    %s117 = sphi 0, %s115
    %s118 = sphi 0, %s117
    %s132 = sphi 0, %s118
    %s136 = sphi 0, %s136
    %s138 = sphi 0, %s136
    %s139 = sphi 0, %s138
    %s153 = sphi 0, %s139
    %s157 = sphi 0, %s157
    %s159 = sphi 0, %s157
    %s160 = sphi 0, %s159
    %s174 = sphi 0, %s160
    %s178 = sphi 0, %s178
    %s180 = sphi 0, %s178
    %s181 = sphi 0, %s180
    %s195 = sphi 0, %s181
    %s199 = sphi 0, %s199
    %s201 = sphi 0, %s199
    %s202 = sphi 0, %s201
    %s216 = sphi 0, %s202
    %s220 = sphi 0, %s220
    %s222 = sphi 0, %s220
    %s223 = sphi 0, %s222
    %s237 = sphi 0, %s223
    %s241 = sphi 0, %s241
    %s243 = sphi 0, %s241
    %s244 = sphi 0, %s243
    %s258 = sphi 0, %s244
    %s262 = sphi 0, %s262
    %s264 = sphi 0, %s262
    %s265 = sphi 0, %s264
    %s279 = sphi 0, %s265
    %s285 = sphi 0, %s287
    %s288 = sphi 0, %s285
    %s289 = sphi 0, %s288
    %s305 = sphi 0, %s289
  $region4: #{tpu_custom_call.1} parent=0 // loop_header_branch
    %21 = sbr.rel (%p19) target = $region8
  $region5: #{tpu_custom_call.1} parent=0 // loop_body
    %s23 = ssub.s32 %s18, 1
    %s24 = ssub.s32 %s18, 2
    %s25 = sadd.s32 %s18, 1
    %s26 = ssub.s32 %s18, %s25
    %p27 = scmp.eq.s32.totalorder %s26, 0
    %s29 = sadd.s32 %s28, 1
    %s30 = scalar_select %p27, %s28, %s29
    %p33 = pneg %p27
    %p34 = scmp.eq.s32.totalorder %s18, 1
    %p35 = por %p33, %p34
    %p36 = scmp.ne.s32.totalorder %s28, %s31
    %p37 = scmp.eq.s32.totalorder %s18, 0
    %p38 = por %p36, %p37
    %p39 = scmp.ne.s32.totalorder %s28, %s31
    %p40 = scmp.eq.s32.totalorder %s23, 1
    %p41 = por %p39, %p40
    %p42 = scmp.ne.s32.totalorder %s31, %s32
    %p43 = scmp.eq.s32.totalorder %s23, 0
    %p44 = por %p42, %p43
    %p45 = scmp.ne.s32.totalorder %s31, %s32
    %p46 = scmp.eq.s32.totalorder %s24, 1
    %p47 = por %p45, %p46
    %p49 = scmp.ne.s32.totalorder %s32, %s48
    %p50 = scmp.eq.s32.totalorder %s24, 0
    %p51 = por %p49, %p50
    %s53 = sadd.s32 %s52, 1
    %p56 = scmp.eq.s32.totalorder %s18, 1
    %p57 = scmp.ne.s32.totalorder %s52, %s54
    %p58 = scmp.eq.s32.totalorder %s18, 0
    %p59 = por %p57, %p58
    %p60 = scmp.ne.s32.totalorder %s52, %s54
    %p61 = scmp.eq.s32.totalorder %s23, 1
    %p62 = por %p60, %p61
    %p63 = scmp.ne.s32.totalorder %s54, %s55
    %p64 = scmp.eq.s32.totalorder %s23, 0
    %p65 = por %p63, %p64
    %p66 = scmp.ne.s32.totalorder %s54, %s55
    %p67 = scmp.eq.s32.totalorder %s24, 1
    %p68 = por %p66, %p67
    %p70 = scmp.ne.s32.totalorder %s55, %s69
    %p71 = scmp.eq.s32.totalorder %s24, 0
    %p72 = por %p70, %p71
    %s74 = sadd.s32 %s73, 1
    %p77 = scmp.eq.s32.totalorder %s18, 1
    %p78 = scmp.ne.s32.totalorder %s73, %s75
    %p79 = scmp.eq.s32.totalorder %s18, 0
    %p80 = por %p78, %p79
    %p81 = scmp.ne.s32.totalorder %s73, %s75
    %p82 = scmp.eq.s32.totalorder %s23, 1
    %p83 = por %p81, %p82
    %p84 = scmp.ne.s32.totalorder %s75, %s76
    %p85 = scmp.eq.s32.totalorder %s23, 0
    %p86 = por %p84, %p85
    %p87 = scmp.ne.s32.totalorder %s75, %s76
    %p88 = scmp.eq.s32.totalorder %s24, 1
    %p89 = por %p87, %p88
    %p91 = scmp.ne.s32.totalorder %s76, %s90
    %p92 = scmp.eq.s32.totalorder %s24, 0
    %p93 = por %p91, %p92
    %s95 = sadd.s32 %s94, 1
    %p98 = scmp.eq.s32.totalorder %s18, 1
    %p99 = scmp.ne.s32.totalorder %s94, %s96
    %p100 = scmp.eq.s32.totalorder %s18, 0
    %p101 = por %p99, %p100
    %p102 = scmp.ne.s32.totalorder %s94, %s96
    %p103 = scmp.eq.s32.totalorder %s23, 1
    %p104 = por %p102, %p103
    %p105 = scmp.ne.s32.totalorder %s96, %s97
    %p106 = scmp.eq.s32.totalorder %s23, 0
    %p107 = por %p105, %p106
    %p108 = scmp.ne.s32.totalorder %s96, %s97
    %p109 = scmp.eq.s32.totalorder %s24, 1
    %p110 = por %p108, %p109
    %p112 = scmp.ne.s32.totalorder %s97, %s111
    %p113 = scmp.eq.s32.totalorder %s24, 0
    %p114 = por %p112, %p113
    %s116 = sadd.s32 %s115, 1
    %p119 = scmp.eq.s32.totalorder %s18, 1
    %p120 = scmp.ne.s32.totalorder %s115, %s117
    %p121 = scmp.eq.s32.totalorder %s18, 0
    %p122 = por %p120, %p121
    %p123 = scmp.ne.s32.totalorder %s115, %s117
    %p124 = scmp.eq.s32.totalorder %s23, 1
    %p125 = por %p123, %p124
    %p126 = scmp.ne.s32.totalorder %s117, %s118
    %p127 = scmp.eq.s32.totalorder %s23, 0
    %p128 = por %p126, %p127
    %p129 = scmp.ne.s32.totalorder %s117, %s118
    %p130 = scmp.eq.s32.totalorder %s24, 1
    %p131 = por %p129, %p130
    %p133 = scmp.ne.s32.totalorder %s118, %s132
    %p134 = scmp.eq.s32.totalorder %s24, 0
    %p135 = por %p133, %p134
    %s137 = sadd.s32 %s136, 1
    %p140 = scmp.eq.s32.totalorder %s18, 1
    %p141 = scmp.ne.s32.totalorder %s136, %s138
    %p142 = scmp.eq.s32.totalorder %s18, 0
    %p143 = por %p141, %p142
    %p144 = scmp.ne.s32.totalorder %s136, %s138
    %p145 = scmp.eq.s32.totalorder %s23, 1
    %p146 = por %p144, %p145
    %p147 = scmp.ne.s32.totalorder %s138, %s139
    %p148 = scmp.eq.s32.totalorder %s23, 0
    %p149 = por %p147, %p148
    %p150 = scmp.ne.s32.totalorder %s138, %s139
    %p151 = scmp.eq.s32.totalorder %s24, 1
    %p152 = por %p150, %p151
    %p154 = scmp.ne.s32.totalorder %s139, %s153
    %p155 = scmp.eq.s32.totalorder %s24, 0
    %p156 = por %p154, %p155
    %s158 = sadd.s32 %s157, 1
    %p161 = scmp.eq.s32.totalorder %s18, 1
    %p162 = scmp.ne.s32.totalorder %s157, %s159
    %p163 = scmp.eq.s32.totalorder %s18, 0
    %p164 = por %p162, %p163
    %p165 = scmp.ne.s32.totalorder %s157, %s159
    %p166 = scmp.eq.s32.totalorder %s23, 1
    %p167 = por %p165, %p166
    %p168 = scmp.ne.s32.totalorder %s159, %s160
    %p169 = scmp.eq.s32.totalorder %s23, 0
    %p170 = por %p168, %p169
    %p171 = scmp.ne.s32.totalorder %s159, %s160
    %p172 = scmp.eq.s32.totalorder %s24, 1
    %p173 = por %p171, %p172
    %p175 = scmp.ne.s32.totalorder %s160, %s174
    %p176 = scmp.eq.s32.totalorder %s24, 0
    %p177 = por %p175, %p176
    %s179 = sadd.s32 %s178, 1
    %p182 = scmp.eq.s32.totalorder %s18, 1
    %p183 = scmp.ne.s32.totalorder %s178, %s180
    %p184 = scmp.eq.s32.totalorder %s18, 0
    %p185 = por %p183, %p184
    %p186 = scmp.ne.s32.totalorder %s178, %s180
    %p187 = scmp.eq.s32.totalorder %s23, 1
    %p188 = por %p186, %p187
    %p189 = scmp.ne.s32.totalorder %s180, %s181
    %p190 = scmp.eq.s32.totalorder %s23, 0
    %p191 = por %p189, %p190
    %p192 = scmp.ne.s32.totalorder %s180, %s181
    %p193 = scmp.eq.s32.totalorder %s24, 1
    %p194 = por %p192, %p193
    %p196 = scmp.ne.s32.totalorder %s181, %s195
    %p197 = scmp.eq.s32.totalorder %s24, 0
    %p198 = por %p196, %p197
    %s200 = sadd.s32 %s199, 1
    %p203 = scmp.eq.s32.totalorder %s18, 1
    %p204 = scmp.ne.s32.totalorder %s199, %s201
    %p205 = scmp.eq.s32.totalorder %s18, 0
    %p206 = por %p204, %p205
    %p207 = scmp.ne.s32.totalorder %s199, %s201
    %p208 = scmp.eq.s32.totalorder %s23, 1
    %p209 = por %p207, %p208
    %p210 = scmp.ne.s32.totalorder %s201, %s202
    %p211 = scmp.eq.s32.totalorder %s23, 0
    %p212 = por %p210, %p211
    %p213 = scmp.ne.s32.totalorder %s201, %s202
    %p214 = scmp.eq.s32.totalorder %s24, 1
    %p215 = por %p213, %p214
    %p217 = scmp.ne.s32.totalorder %s202, %s216
    %p218 = scmp.eq.s32.totalorder %s24, 0
    %p219 = por %p217, %p218
    %s221 = sadd.s32 %s220, 1
    %p224 = scmp.eq.s32.totalorder %s18, 1
    %p225 = scmp.ne.s32.totalorder %s220, %s222
    %p226 = scmp.eq.s32.totalorder %s18, 0
    %p227 = por %p225, %p226
    %p228 = scmp.ne.s32.totalorder %s220, %s222
    %p229 = scmp.eq.s32.totalorder %s23, 1
    %p230 = por %p228, %p229
    %p231 = scmp.ne.s32.totalorder %s222, %s223
    %p232 = scmp.eq.s32.totalorder %s23, 0
    %p233 = por %p231, %p232
    %p234 = scmp.ne.s32.totalorder %s222, %s223
    %p235 = scmp.eq.s32.totalorder %s24, 1
    %p236 = por %p234, %p235
    %p238 = scmp.ne.s32.totalorder %s223, %s237
    %p239 = scmp.eq.s32.totalorder %s24, 0
    %p240 = por %p238, %p239
    %s242 = sadd.s32 %s241, 1
    %p245 = scmp.eq.s32.totalorder %s18, 1
    %p246 = scmp.ne.s32.totalorder %s241, %s243
    %p247 = scmp.eq.s32.totalorder %s18, 0
    %p248 = por %p246, %p247
    %p249 = scmp.ne.s32.totalorder %s241, %s243
    %p250 = scmp.eq.s32.totalorder %s23, 1
    %p251 = por %p249, %p250
    %p252 = scmp.ne.s32.totalorder %s243, %s244
    %p253 = scmp.eq.s32.totalorder %s23, 0
    %p254 = por %p252, %p253
    %p255 = scmp.ne.s32.totalorder %s243, %s244
    %p256 = scmp.eq.s32.totalorder %s24, 1
    %p257 = por %p255, %p256
    %p259 = scmp.ne.s32.totalorder %s244, %s258
    %p260 = scmp.eq.s32.totalorder %s24, 0
    %p261 = por %p259, %p260
    %s263 = sadd.s32 %s262, 1
    %p266 = scmp.eq.s32.totalorder %s18, 1
    %p267 = scmp.ne.s32.totalorder %s262, %s264
    %p268 = scmp.eq.s32.totalorder %s18, 0
    %p269 = por %p267, %p268
    %p270 = scmp.ne.s32.totalorder %s262, %s264
    %p271 = scmp.eq.s32.totalorder %s23, 1
    %p272 = por %p270, %p271
    %p273 = scmp.ne.s32.totalorder %s264, %s265
    %p274 = scmp.eq.s32.totalorder %s23, 0
    %p275 = por %p273, %p274
    %p276 = scmp.ne.s32.totalorder %s264, %s265
    %p277 = scmp.eq.s32.totalorder %s24, 1
    %p278 = por %p276, %p277
    %p280 = scmp.ne.s32.totalorder %s265, %s279
    %p281 = scmp.eq.s32.totalorder %s24, 0
    %p282 = por %p280, %p281
    %s283 = ssub.s32 %s18, %s25
    %p284 = scmp.eq.s32.totalorder %s283, 0
    %s286 = sadd.s32 %s285, 1
    %s287 = scalar_select %p284, %s285, %s286
    %p290 = pneg %p284
    %p291 = scmp.eq.s32.totalorder %s18, 1
    %p292 = por %p290, %p291
    %p293 = scmp.ne.s32.totalorder %s285, %s288
    %p294 = scmp.eq.s32.totalorder %s18, 0
    %p295 = por %p293, %p294
    %p296 = scmp.ne.s32.totalorder %s285, %s288
    %p297 = scmp.eq.s32.totalorder %s23, 1
    %p298 = por %p296, %p297
    %p299 = scmp.ne.s32.totalorder %s288, %s289
    %p300 = scmp.eq.s32.totalorder %s23, 0
    %p301 = por %p299, %p300
    %p302 = scmp.ne.s32.totalorder %s288, %s289
    %p303 = scmp.eq.s32.totalorder %s24, 1
    %p304 = por %p302, %p303
    %p306 = scmp.ne.s32.totalorder %s289, %s305
    %p307 = scmp.eq.s32.totalorder %s24, 0
    %p308 = por %p306, %p307
    %p309 = scmp.le.s32.totalorder 1, %s18
    %p310 = scmp.lt.s32.totalorder %s18, 3
    %p311 = pnand %p309, %p310
    %p312 = pneg %p311
    // Predicated region
    $region9: #{tpu_custom_call.1} parent=5 // pred_check
      _
    $region10: #{tpu_custom_call.1} parent=5 // pred_check_branch
      %314 = sbr.rel (%p311) target = $region12
    $region11: #{tpu_custom_call.1} parent=5 // pred_region
      %s315 = ssub.s32 %s18, 1
      // Predicated region
      $region13: #{tpu_custom_call.1} parent=11 // pred_check
        %p316 = pneg %p65
      $region14: #{tpu_custom_call.1} parent=11 // pred_check_branch
        %318 = sbr.rel (%p316) target = $region16
      $region15: #{tpu_custom_call.1} parent=11 // pred_region
        _
      $region16: #{tpu_custom_call.1} parent=11 // pred_fallthru
        _
      // Predicated region
      $region17: #{tpu_custom_call.1} parent=11 // pred_check
        %p319 = pneg %p86
      $region18: #{tpu_custom_call.1} parent=11 // pred_check_branch
        %321 = sbr.rel (%p319) target = $region20
      $region19: #{tpu_custom_call.1} parent=11 // pred_region
        _
      $region20: #{tpu_custom_call.1} parent=11 // pred_fallthru
        _
      // Predicated region
      $region21: #{tpu_custom_call.1} parent=11 // pred_check
        %p322 = pneg %p107
      $region22: #{tpu_custom_call.1} parent=11 // pred_check_branch
        %324 = sbr.rel (%p322) target = $region24
      $region23: #{tpu_custom_call.1} parent=11 // pred_region
        _
      $region24: #{tpu_custom_call.1} parent=11 // pred_fallthru
        _
      // Predicated region
      $region25: #{tpu_custom_call.1} parent=11 // pred_check
        %p325 = pneg %p128
      $region26: #{tpu_custom_call.1} parent=11 // pred_check_branch
        %327 = sbr.rel (%p325) target = $region28
      $region27: #{tpu_custom_call.1} parent=11 // pred_region
        _
      $region28: #{tpu_custom_call.1} parent=11 // pred_fallthru
        _
      // Predicated region
      $region29: #{tpu_custom_call.1} parent=11 // pred_check
        %p328 = pneg %p149
      $region30: #{tpu_custom_call.1} parent=11 // pred_check_branch
        %330 = sbr.rel (%p328) target = $region32
      $region31: #{tpu_custom_call.1} parent=11 // pred_region
        _
      $region32: #{tpu_custom_call.1} parent=11 // pred_fallthru
        _
      // Predicated region
      $region33: #{tpu_custom_call.1} parent=11 // pred_check
        %p331 = pneg %p170
      $region34: #{tpu_custom_call.1} parent=11 // pred_check_branch
        %333 = sbr.rel (%p331) target = $region36
      $region35: #{tpu_custom_call.1} parent=11 // pred_region
        _
      $region36: #{tpu_custom_call.1} parent=11 // pred_fallthru
        _
      // Predicated region
      $region37: #{tpu_custom_call.1} parent=11 // pred_check
        %p334 = pneg %p191
      $region38: #{tpu_custom_call.1} parent=11 // pred_check_branch
        %336 = sbr.rel (%p334) target = $region40
      $region39: #{tpu_custom_call.1} parent=11 // pred_region
        _
      $region40: #{tpu_custom_call.1} parent=11 // pred_fallthru
        _
      // Predicated region
      $region41: #{tpu_custom_call.1} parent=11 // pred_check
        %p337 = pneg %p212
      $region42: #{tpu_custom_call.1} parent=11 // pred_check_branch
        %339 = sbr.rel (%p337) target = $region44
      $region43: #{tpu_custom_call.1} parent=11 // pred_region
        _
      $region44: #{tpu_custom_call.1} parent=11 // pred_fallthru
        _
      // Predicated region
      $region45: #{tpu_custom_call.1} parent=11 // pred_check
        %p340 = pneg %p233
      $region46: #{tpu_custom_call.1} parent=11 // pred_check_branch
        %342 = sbr.rel (%p340) target = $region48
      $region47: #{tpu_custom_call.1} parent=11 // pred_region
        _
      $region48: #{tpu_custom_call.1} parent=11 // pred_fallthru
        _
      // Predicated region
      $region49: #{tpu_custom_call.1} parent=11 // pred_check
        %p343 = pneg %p254
      $region50: #{tpu_custom_call.1} parent=11 // pred_check_branch
        %345 = sbr.rel (%p343) target = $region52
      $region51: #{tpu_custom_call.1} parent=11 // pred_region
        _
      $region52: #{tpu_custom_call.1} parent=11 // pred_fallthru
        _
      // Predicated region
      $region53: #{tpu_custom_call.1} parent=11 // pred_check
        %p346 = pneg %p275
      $region54: #{tpu_custom_call.1} parent=11 // pred_check_branch
        %348 = sbr.rel (%p346) target = $region56
      $region55: #{tpu_custom_call.1} parent=11 // pred_region
        _
      $region56: #{tpu_custom_call.1} parent=11 // pred_fallthru
        _
    $region12: #{tpu_custom_call.1} parent=5 // pred_fallthru
      _
    %p349 = scmp.lt.s32.totalorder %s18, 2
    // Predicated region
    $region57: #{tpu_custom_call.1} parent=5 // pred_check
      %p350 = pneg %p349
    $region58: #{tpu_custom_call.1} parent=5 // pred_check_branch
      %352 = sbr.rel (%p350) target = $region60
    $region59: #{tpu_custom_call.1} parent=5 // pred_region
      // Predicated region
      $region61: #{tpu_custom_call.1} parent=59 // pred_check
        %p353 = pneg %p38
      $region62: #{tpu_custom_call.1} parent=59 // pred_check_branch
        %355 = sbr.rel (%p353) target = $region64
      $region63: #{tpu_custom_call.1} parent=59 // pred_region
        %s356 = smul.u32 8, %s18
        %p357 = scmp.lt.s32.totalorder %s356, 15
        %s358 = scalar_select %p357, %s356, 15
        %s359 = smul.addr %s358, 8
        %s360 = smul.addr %s359, 8
        %s361 = scalar_lea.vmem %s0, %s360
        %s362 = smul.u32 8, %s18
      $region64: #{tpu_custom_call.1} parent=59 // pred_fallthru
        _
    $region60: #{tpu_custom_call.1} parent=5 // pred_fallthru
      _
    %p363 = scmp.le.s32.totalorder 1, %s18
    %p364 = scmp.lt.s32.totalorder %s18, 3
    %p365 = pnand %p363, %p364
    %p366 = pneg %p365
    // Predicated region
    $region65: #{tpu_custom_call.1} parent=5 // pred_check
      _
    $region66: #{tpu_custom_call.1} parent=5 // pred_check_branch
      %368 = sbr.rel (%p365) target = $region68
    $region67: #{tpu_custom_call.1} parent=5 // pred_region
      %s369 = ssub.s32 %s18, 1
      %s370 = smul.u32 8, %s23
      %p371 = scmp.lt.s32.totalorder %s370, 15
      %s372 = scalar_select %p371, %s370, 15
      %s373 = smul.addr %s372, 8
      %s374 = smul.addr %s373, 8
      %s375 = scalar_lea.vmem %s0, %s374
      %p376 = pneg %p44
      %p377 = pneg %p41
      %p378 = pneg %p65
      %p379 = pneg %p62
      %p380 = pneg %p86
      %p381 = pneg %p83
      %p382 = pneg %p107
      %p383 = pneg %p104
      %p384 = pneg %p128
      %p385 = pneg %p125
      %p386 = pneg %p149
      %p387 = pneg %p146
      %p388 = pneg %p170
      %p389 = pneg %p167
      %p390 = pneg %p191
      %p391 = pneg %p188
      %p392 = pneg %p212
      %p393 = pneg %p209
      %p394 = pneg %p233
      %p395 = pneg %p230
      %p396 = pneg %p254
      %p397 = pneg %p251
      %p398 = pneg %p275
      %p399 = pneg %p272
      %p400 = pneg %p301
      %p401 = pneg %p298
      %s402 = smul.u32 8, %s23
      %p403 = scmp.lt.s32.totalorder %s402, 15
      %s404 = scalar_select %p403, %s402, 15
      %s405 = smul.addr %s404, 8
      %s406 = smul.addr %s405, 8
      %s407 = scalar_lea.vmem %s12, %s406
      %s408 = smul.u32 8, %s23
      %p409 = scmp.lt.s32.totalorder %s408, 15
      %s410 = scalar_select %p409, %s408, 15
      %s411 = smul.addr %s410, 8
      %s412 = smul.addr %s411, 8
      %s413 = scalar_lea.vmem %s0, %s412
      %s414 = smul.u32 8, %s23
      %s415 = smul.u32 8, %s23
      %p416 = scmp.lt.s32.totalorder %s415, 15
      %s417 = scalar_select %p416, %s415, 15
      %s418 = smul.addr %s417, 8
      %s419 = smul.addr %s418, 8
      %s420 = scalar_lea.vmem %s12, %s419
      %s421 = smul.u32 8, %s23
      %v423 = vld [vmem:[%s413] sm:$0xff]
      %v424 = vld [vmem:[%s413 + $0x8] sm:$0xff]
      %v425 = vld [vmem:[%s413 + $0x10] sm:$0xff]
      %v426 = vld [vmem:[%s413 + $0x18] sm:$0xff]
      %v427 = vld [vmem:[%s413 + $0x20] sm:$0xff]
      %v428 = vld [vmem:[%s413 + $0x28] sm:$0xff]
      %v429 = vld [vmem:[%s413 + $0x30] sm:$0xff]
      %v430 = vld [vmem:[%s413 + $0x38] sm:$0xff]
      %v431 = vld [vmem:[%s413 + $0x40] sm:$0xff]
      %v432 = vld [vmem:[%s413 + $0x48] sm:$0xff]
      %v433 = vld [vmem:[%s413 + $0x50] sm:$0xff]
      %v434 = vld [vmem:[%s413 + $0x58] sm:$0xff]
      %v435 = vld [vmem:[%s413 + $0x60] sm:$0xff]
      %v436 = vld [vmem:[%s413 + $0x68] sm:$0xff]
      %v437 = vld [vmem:[%s413 + $0x70] sm:$0xff]
      %v438 = vld [vmem:[%s413 + $0x78] sm:$0xff]
      %v439 = vld [vmem:[%s413 + $0x80] sm:$0xff]
      %v440 = vld [vmem:[%s413 + $0x88] sm:$0xff]
      %v441 = vld [vmem:[%s413 + $0x90] sm:$0xff]
      %v442 = vld [vmem:[%s413 + $0x98] sm:$0xff]
      %v443 = vld [vmem:[%s413 + $0xa0] sm:$0xff]
      %v444 = vld [vmem:[%s413 + $0xa8] sm:$0xff]
      %v445 = vld [vmem:[%s413 + $0xb0] sm:$0xff]
      %v446 = vld [vmem:[%s413 + $0xb8] sm:$0xff]
      %v447 = vld [vmem:[%s413 + $0xc0] sm:$0xff]
      %v448 = vld [vmem:[%s413 + $0xc8] sm:$0xff]
      %v449 = vld [vmem:[%s413 + $0xd0] sm:$0xff]
      %v450 = vld [vmem:[%s413 + $0xd8] sm:$0xff]
      %v451 = vld [vmem:[%s413 + $0xe0] sm:$0xff]
      %v452 = vld [vmem:[%s413 + $0xe8] sm:$0xff]
      %v453 = vld [vmem:[%s413 + $0xf0] sm:$0xff]
      %v454 = vld [vmem:[%s413 + $0xf8] sm:$0xff]
      %v455 = vld [vmem:[%s413 + $0x100] sm:$0xff]
      %v456 = vld [vmem:[%s413 + $0x108] sm:$0xff]
      %v457 = vld [vmem:[%s413 + $0x110] sm:$0xff]
      %v458 = vld [vmem:[%s413 + $0x118] sm:$0xff]
      %v459 = vld [vmem:[%s413 + $0x120] sm:$0xff]
      %v460 = vld [vmem:[%s413 + $0x128] sm:$0xff]
      %v461 = vld [vmem:[%s413 + $0x130] sm:$0xff]
      %v462 = vld [vmem:[%s413 + $0x138] sm:$0xff]
      %v463 = vld [vmem:[%s413 + $0x140] sm:$0xff]
      %v464 = vld [vmem:[%s413 + $0x148] sm:$0xff]
      %v465 = vld [vmem:[%s413 + $0x150] sm:$0xff]
      %v466 = vld [vmem:[%s413 + $0x158] sm:$0xff]
      %v467 = vld [vmem:[%s413 + $0x160] sm:$0xff]
      %v468 = vld [vmem:[%s413 + $0x168] sm:$0xff]
      %v469 = vld [vmem:[%s413 + $0x170] sm:$0xff]
      %v470 = vld [vmem:[%s413 + $0x178] sm:$0xff]
      %v471 = vld [vmem:[%s413 + $0x180] sm:$0xff]
      %v472 = vld [vmem:[%s413 + $0x188] sm:$0xff]
      %v473 = vld [vmem:[%s413 + $0x190] sm:$0xff]
      %v474 = vld [vmem:[%s413 + $0x198] sm:$0xff]
      %v475 = vld [vmem:[%s413 + $0x1a0] sm:$0xff]
      %v476 = vld [vmem:[%s413 + $0x1a8] sm:$0xff]
      %v477 = vld [vmem:[%s413 + $0x1b0] sm:$0xff]
      %v478 = vld [vmem:[%s413 + $0x1b8] sm:$0xff]
      %v479 = vld [vmem:[%s413 + $0x1c0] sm:$0xff]
      %v480 = vld [vmem:[%s413 + $0x1c8] sm:$0xff]
      %v481 = vld [vmem:[%s413 + $0x1d0] sm:$0xff]
      %v482 = vld [vmem:[%s413 + $0x1d8] sm:$0xff]
      %v483 = vld [vmem:[%s413 + $0x1e0] sm:$0xff]
      %v484 = vld [vmem:[%s413 + $0x1e8] sm:$0xff]
      %v485 = vld [vmem:[%s413 + $0x1f0] sm:$0xff]
      %v486 = vld [vmem:[%s413 + $0x1f8] sm:$0xff]
      %vm487 = vcmask 261120
      %v488 = vsel %vm487, %v423, 0.0
      %v489 = vsel %vm487, %v424, 0.0
      %v490 = vadd.f32 %v488, %v489
      %v491 = vsel %vm487, %v425, 0.0
      %v492 = vadd.f32 %v490, %v491
      %v493 = vsel %vm487, %v426, 0.0
      %v494 = vadd.f32 %v492, %v493
      %v495 = vsel %vm487, %v427, 0.0
      %v496 = vadd.f32 %v494, %v495
      %v497 = vsel %vm487, %v428, 0.0
      %v498 = vadd.f32 %v496, %v497
      %v499 = vsel %vm487, %v429, 0.0
      %v500 = vadd.f32 %v498, %v499
      %v501 = vsel %vm487, %v430, 0.0
      %v502 = vadd.f32 %v500, %v501
      %v503 = vrot.slane %v502, 4
      %v504 = vadd.f32 %v502, %v503
      %v505 = vrot.slane %v504, 2
      %v506 = vadd.f32 %v504, %v505
      %v507 = vrot.slane %v506, 1
      %v508 = vadd.f32 %v506, %v507
      %v509 = vsel %vm487, %v431, 0.0
      %v510 = vsel %vm487, %v432, 0.0
      %v511 = vadd.f32 %v509, %v510
      %v512 = vsel %vm487, %v433, 0.0
      %v513 = vadd.f32 %v511, %v512
      %v514 = vsel %vm487, %v434, 0.0
      %v515 = vadd.f32 %v513, %v514
      %v516 = vsel %vm487, %v435, 0.0
      %v517 = vadd.f32 %v515, %v516
      %v518 = vsel %vm487, %v436, 0.0
      %v519 = vadd.f32 %v517, %v518
      %v520 = vsel %vm487, %v437, 0.0
      %v521 = vadd.f32 %v519, %v520
      %v522 = vsel %vm487, %v438, 0.0
      %v523 = vadd.f32 %v521, %v522
      %v524 = vrot.slane %v523, 4
      %v525 = vadd.f32 %v523, %v524
      %v526 = vrot.slane %v525, 2
      %v527 = vadd.f32 %v525, %v526
      %v528 = vrot.slane %v527, 1
      %v529 = vadd.f32 %v527, %v528
      %v530 = vsel %vm487, %v439, 0.0
      %v531 = vsel %vm487, %v440, 0.0
      %v532 = vadd.f32 %v530, %v531
      %v533 = vsel %vm487, %v441, 0.0
      %v534 = vadd.f32 %v532, %v533
      %v535 = vsel %vm487, %v442, 0.0
      %v536 = vadd.f32 %v534, %v535
      %v537 = vsel %vm487, %v443, 0.0
      %v538 = vadd.f32 %v536, %v537
      %v539 = vsel %vm487, %v444, 0.0
      %v540 = vadd.f32 %v538, %v539
      %v541 = vsel %vm487, %v445, 0.0
      %v542 = vadd.f32 %v540, %v541
      %v543 = vsel %vm487, %v446, 0.0
      %v544 = vadd.f32 %v542, %v543
      %v545 = vrot.slane %v544, 4
      %v546 = vadd.f32 %v544, %v545
      %v547 = vrot.slane %v546, 2
      %v548 = vadd.f32 %v546, %v547
      %v549 = vrot.slane %v548, 1
      %v550 = vadd.f32 %v548, %v549
      %v551 = vsel %vm487, %v447, 0.0
      %v552 = vsel %vm487, %v448, 0.0
      %v553 = vadd.f32 %v551, %v552
      %v554 = vsel %vm487, %v449, 0.0
      %v555 = vadd.f32 %v553, %v554
      %v556 = vsel %vm487, %v450, 0.0
      %v557 = vadd.f32 %v555, %v556
      %v558 = vsel %vm487, %v451, 0.0
      %v559 = vadd.f32 %v557, %v558
      %v560 = vsel %vm487, %v452, 0.0
      %v561 = vadd.f32 %v559, %v560
      %v562 = vsel %vm487, %v453, 0.0
      %v563 = vadd.f32 %v561, %v562
      %v564 = vsel %vm487, %v454, 0.0
      %v565 = vadd.f32 %v563, %v564
      %v566 = vrot.slane %v565, 4
      %v567 = vadd.f32 %v565, %v566
      %v568 = vrot.slane %v567, 2
      %v569 = vadd.f32 %v567, %v568
      %v570 = vrot.slane %v569, 1
      %v571 = vadd.f32 %v569, %v570
      %v572 = vsel %vm487, %v455, 0.0
      %v573 = vsel %vm487, %v456, 0.0
      %v574 = vadd.f32 %v572, %v573
      %v575 = vsel %vm487, %v457, 0.0
      %v576 = vadd.f32 %v574, %v575
      %v577 = vsel %vm487, %v458, 0.0
      %v578 = vadd.f32 %v576, %v577
      %v579 = vsel %vm487, %v459, 0.0
      %v580 = vadd.f32 %v578, %v579
      %v581 = vsel %vm487, %v460, 0.0
      %v582 = vadd.f32 %v580, %v581
      %v583 = vsel %vm487, %v461, 0.0
      %v584 = vadd.f32 %v582, %v583
      %v585 = vsel %vm487, %v462, 0.0
      %v586 = vadd.f32 %v584, %v585
      %v587 = vrot.slane %v586, 4
      %v588 = vadd.f32 %v586, %v587
      %v589 = vrot.slane %v588, 2
      %v590 = vadd.f32 %v588, %v589
      %v591 = vrot.slane %v590, 1
      %v592 = vadd.f32 %v590, %v591
      %v593 = vsel %vm487, %v463, 0.0
      %v594 = vsel %vm487, %v464, 0.0
      %v595 = vadd.f32 %v593, %v594
      %v596 = vsel %vm487, %v465, 0.0
      %v597 = vadd.f32 %v595, %v596
      %v598 = vsel %vm487, %v466, 0.0
      %v599 = vadd.f32 %v597, %v598
      %v600 = vsel %vm487, %v467, 0.0
      %v601 = vadd.f32 %v599, %v600
      %v602 = vsel %vm487, %v468, 0.0
      %v603 = vadd.f32 %v601, %v602
      %v604 = vsel %vm487, %v469, 0.0
      %v605 = vadd.f32 %v603, %v604
      %v606 = vsel %vm487, %v470, 0.0
      %v607 = vadd.f32 %v605, %v606
      %v608 = vrot.slane %v607, 4
      %v609 = vadd.f32 %v607, %v608
      %v610 = vrot.slane %v609, 2
      %v611 = vadd.f32 %v609, %v610
      %v612 = vrot.slane %v611, 1
      %v613 = vadd.f32 %v611, %v612
      %v614 = vsel %vm487, %v471, 0.0
      %v615 = vsel %vm487, %v472, 0.0
      %v616 = vadd.f32 %v614, %v615
      %v617 = vsel %vm487, %v473, 0.0
      %v618 = vadd.f32 %v616, %v617
      %v619 = vsel %vm487, %v474, 0.0
      %v620 = vadd.f32 %v618, %v619
      %v621 = vsel %vm487, %v475, 0.0
      %v622 = vadd.f32 %v620, %v621
      %v623 = vsel %vm487, %v476, 0.0
      %v624 = vadd.f32 %v622, %v623
      %v625 = vsel %vm487, %v477, 0.0
      %v626 = vadd.f32 %v624, %v625
      %v627 = vsel %vm487, %v478, 0.0
      %v628 = vadd.f32 %v626, %v627
      %v629 = vrot.slane %v628, 4
      %v630 = vadd.f32 %v628, %v629
      %v631 = vrot.slane %v630, 2
      %v632 = vadd.f32 %v630, %v631
      %v633 = vrot.slane %v632, 1
      %v634 = vadd.f32 %v632, %v633
      %v635 = vsel %vm487, %v479, 0.0
      %v636 = vsel %vm487, %v480, 0.0
      %v637 = vadd.f32 %v635, %v636
      %v638 = vsel %vm487, %v481, 0.0
      %v639 = vadd.f32 %v637, %v638
      %v640 = vsel %vm487, %v482, 0.0
      %v641 = vadd.f32 %v639, %v640
      %v642 = vsel %vm487, %v483, 0.0
      %v643 = vadd.f32 %v641, %v642
      %v644 = vsel %vm487, %v484, 0.0
      %v645 = vadd.f32 %v643, %v644
      %v646 = vsel %vm487, %v485, 0.0
      %v647 = vadd.f32 %v645, %v646
      %v648 = vsel %vm487, %v486, 0.0
      %v649 = vadd.f32 %v647, %v648
      %v650 = vrot.slane %v649, 4
      %v651 = vadd.f32 %v649, %v650
      %v652 = vrot.slane %v651, 2
      %v653 = vadd.f32 %v651, %v652
      %v654 = vrot.slane %v653, 1
      %v655 = vadd.f32 %v653, %v654
      %v656 = vmul.f32 %v508, 0.015625
      %v657 = vmul.f32 %v529, 0.015625
      %v658 = vmul.f32 %v550, 0.015625
      %v659 = vmul.f32 %v571, 0.015625
      %v660 = vmul.f32 %v592, 0.015625
      %v661 = vmul.f32 %v613, 0.015625
      %v662 = vmul.f32 %v634, 0.015625
      %v663 = vmul.f32 %v655, 0.015625
      %v664 = vmul.f32 %v423, %v423
      %v665 = vmul.f32 %v424, %v424
      %v666 = vmul.f32 %v425, %v425
      %v667 = vmul.f32 %v426, %v426
      %v668 = vmul.f32 %v427, %v427
      %v669 = vmul.f32 %v428, %v428
      %v670 = vmul.f32 %v429, %v429
      %v671 = vmul.f32 %v430, %v430
      %v672 = vmul.f32 %v431, %v431
      %v673 = vmul.f32 %v432, %v432
      %v674 = vmul.f32 %v433, %v433
      %v675 = vmul.f32 %v434, %v434
      %v676 = vmul.f32 %v435, %v435
      %v677 = vmul.f32 %v436, %v436
      %v678 = vmul.f32 %v437, %v437
      %v679 = vmul.f32 %v438, %v438
      %v680 = vmul.f32 %v439, %v439
      %v681 = vmul.f32 %v440, %v440
      %v682 = vmul.f32 %v441, %v441
      %v683 = vmul.f32 %v442, %v442
      %v684 = vmul.f32 %v443, %v443
      %v685 = vmul.f32 %v444, %v444
      %v686 = vmul.f32 %v445, %v445
      %v687 = vmul.f32 %v446, %v446
      %v688 = vmul.f32 %v447, %v447
      %v689 = vmul.f32 %v448, %v448
      %v690 = vmul.f32 %v449, %v449
      %v691 = vmul.f32 %v450, %v450
      %v692 = vmul.f32 %v451, %v451
      %v693 = vmul.f32 %v452, %v452
      %v694 = vmul.f32 %v453, %v453
      %v695 = vmul.f32 %v454, %v454
      %v696 = vmul.f32 %v455, %v455
      %v697 = vmul.f32 %v456, %v456
      %v698 = vmul.f32 %v457, %v457
      %v699 = vmul.f32 %v458, %v458
      %v700 = vmul.f32 %v459, %v459
      %v701 = vmul.f32 %v460, %v460
      %v702 = vmul.f32 %v461, %v461
      %v703 = vmul.f32 %v462, %v462
      %v704 = vmul.f32 %v463, %v463
      %v705 = vmul.f32 %v464, %v464
      %v706 = vmul.f32 %v465, %v465
      %v707 = vmul.f32 %v466, %v466
      %v708 = vmul.f32 %v467, %v467
      %v709 = vmul.f32 %v468, %v468
      %v710 = vmul.f32 %v469, %v469
      %v711 = vmul.f32 %v470, %v470
      %v712 = vmul.f32 %v471, %v471
      %v713 = vmul.f32 %v472, %v472
      %v714 = vmul.f32 %v473, %v473
      %v715 = vmul.f32 %v474, %v474
      %v716 = vmul.f32 %v475, %v475
      %v717 = vmul.f32 %v476, %v476
      %v718 = vmul.f32 %v477, %v477
      %v719 = vmul.f32 %v478, %v478
      %v720 = vmul.f32 %v479, %v479
      %v721 = vmul.f32 %v480, %v480
      %v722 = vmul.f32 %v481, %v481
      %v723 = vmul.f32 %v482, %v482
      %v724 = vmul.f32 %v483, %v483
      %v725 = vmul.f32 %v484, %v484
      %v726 = vmul.f32 %v485, %v485
      %v727 = vmul.f32 %v486, %v486
      %v728 = vsel %vm487, %v664, 0.0
      %v729 = vsel %vm487, %v665, 0.0
      %v730 = vadd.f32 %v728, %v729
      %v731 = vsel %vm487, %v666, 0.0
      %v732 = vadd.f32 %v730, %v731
      %v733 = vsel %vm487, %v667, 0.0
      %v734 = vadd.f32 %v732, %v733
      %v735 = vsel %vm487, %v668, 0.0
      %v736 = vadd.f32 %v734, %v735
      %v737 = vsel %vm487, %v669, 0.0
      %v738 = vadd.f32 %v736, %v737
      %v739 = vsel %vm487, %v670, 0.0
      %v740 = vadd.f32 %v738, %v739
      %v741 = vsel %vm487, %v671, 0.0
      %v742 = vadd.f32 %v740, %v741
      %v743 = vrot.slane %v742, 4
      %v744 = vadd.f32 %v742, %v743
      %v745 = vrot.slane %v744, 2
      %v746 = vadd.f32 %v744, %v745
      %v747 = vrot.slane %v746, 1
      %v748 = vadd.f32 %v746, %v747
      %v749 = vsel %vm487, %v672, 0.0
      %v750 = vsel %vm487, %v673, 0.0
      %v751 = vadd.f32 %v749, %v750
      %v752 = vsel %vm487, %v674, 0.0
      %v753 = vadd.f32 %v751, %v752
      %v754 = vsel %vm487, %v675, 0.0
      %v755 = vadd.f32 %v753, %v754
      %v756 = vsel %vm487, %v676, 0.0
      %v757 = vadd.f32 %v755, %v756
      %v758 = vsel %vm487, %v677, 0.0
      %v759 = vadd.f32 %v757, %v758
      %v760 = vsel %vm487, %v678, 0.0
      %v761 = vadd.f32 %v759, %v760
      %v762 = vsel %vm487, %v679, 0.0
      %v763 = vadd.f32 %v761, %v762
      %v764 = vrot.slane %v763, 4
      %v765 = vadd.f32 %v763, %v764
      %v766 = vrot.slane %v765, 2
      %v767 = vadd.f32 %v765, %v766
      %v768 = vrot.slane %v767, 1
      %v769 = vadd.f32 %v767, %v768
      %v770 = vsel %vm487, %v680, 0.0
      %v771 = vsel %vm487, %v681, 0.0
      %v772 = vadd.f32 %v770, %v771
      %v773 = vsel %vm487, %v682, 0.0
      %v774 = vadd.f32 %v772, %v773
      %v775 = vsel %vm487, %v683, 0.0
      %v776 = vadd.f32 %v774, %v775
      %v777 = vsel %vm487, %v684, 0.0
      %v778 = vadd.f32 %v776, %v777
      %v779 = vsel %vm487, %v685, 0.0
      %v780 = vadd.f32 %v778, %v779
      %v781 = vsel %vm487, %v686, 0.0
      %v782 = vadd.f32 %v780, %v781
      %v783 = vsel %vm487, %v687, 0.0
      %v784 = vadd.f32 %v782, %v783
      %v785 = vrot.slane %v784, 4
      %v786 = vadd.f32 %v784, %v785
      %v787 = vrot.slane %v786, 2
      %v788 = vadd.f32 %v786, %v787
      %v789 = vrot.slane %v788, 1
      %v790 = vadd.f32 %v788, %v789
      %v791 = vsel %vm487, %v688, 0.0
      %v792 = vsel %vm487, %v689, 0.0
      %v793 = vadd.f32 %v791, %v792
      %v794 = vsel %vm487, %v690, 0.0
      %v795 = vadd.f32 %v793, %v794
      %v796 = vsel %vm487, %v691, 0.0
      %v797 = vadd.f32 %v795, %v796
      %v798 = vsel %vm487, %v692, 0.0
      %v799 = vadd.f32 %v797, %v798
      %v800 = vsel %vm487, %v693, 0.0
      %v801 = vadd.f32 %v799, %v800
      %v802 = vsel %vm487, %v694, 0.0
      %v803 = vadd.f32 %v801, %v802
      %v804 = vsel %vm487, %v695, 0.0
      %v805 = vadd.f32 %v803, %v804
      %v806 = vrot.slane %v805, 4
      %v807 = vadd.f32 %v805, %v806
      %v808 = vrot.slane %v807, 2
      %v809 = vadd.f32 %v807, %v808
      %v810 = vrot.slane %v809, 1
      %v811 = vadd.f32 %v809, %v810
      %v812 = vsel %vm487, %v696, 0.0
      %v813 = vsel %vm487, %v697, 0.0
      %v814 = vadd.f32 %v812, %v813
      %v815 = vsel %vm487, %v698, 0.0
      %v816 = vadd.f32 %v814, %v815
      %v817 = vsel %vm487, %v699, 0.0
      %v818 = vadd.f32 %v816, %v817
      %v819 = vsel %vm487, %v700, 0.0
      %v820 = vadd.f32 %v818, %v819
      %v821 = vsel %vm487, %v701, 0.0
      %v822 = vadd.f32 %v820, %v821
      %v823 = vsel %vm487, %v702, 0.0
      %v824 = vadd.f32 %v822, %v823
      %v825 = vsel %vm487, %v703, 0.0
      %v826 = vadd.f32 %v824, %v825
      %v827 = vrot.slane %v826, 4
      %v828 = vadd.f32 %v826, %v827
      %v829 = vrot.slane %v828, 2
      %v830 = vadd.f32 %v828, %v829
      %v831 = vrot.slane %v830, 1
      %v832 = vadd.f32 %v830, %v831
      %v833 = vsel %vm487, %v704, 0.0
      %v834 = vsel %vm487, %v705, 0.0
      %v835 = vadd.f32 %v833, %v834
      %v836 = vsel %vm487, %v706, 0.0
      %v837 = vadd.f32 %v835, %v836
      %v838 = vsel %vm487, %v707, 0.0
      %v839 = vadd.f32 %v837, %v838
      %v840 = vsel %vm487, %v708, 0.0
      %v841 = vadd.f32 %v839, %v840
      %v842 = vsel %vm487, %v709, 0.0
      %v843 = vadd.f32 %v841, %v842
      %v844 = vsel %vm487, %v710, 0.0
      %v845 = vadd.f32 %v843, %v844
      %v846 = vsel %vm487, %v711, 0.0
      %v847 = vadd.f32 %v845, %v846
      %v848 = vrot.slane %v847, 4
      %v849 = vadd.f32 %v847, %v848
      %v850 = vrot.slane %v849, 2
      %v851 = vadd.f32 %v849, %v850
      %v852 = vrot.slane %v851, 1
      %v853 = vadd.f32 %v851, %v852
      %v854 = vsel %vm487, %v712, 0.0
      %v855 = vsel %vm487, %v713, 0.0
      %v856 = vadd.f32 %v854, %v855
      %v857 = vsel %vm487, %v714, 0.0
      %v858 = vadd.f32 %v856, %v857
      %v859 = vsel %vm487, %v715, 0.0
      %v860 = vadd.f32 %v858, %v859
      %v861 = vsel %vm487, %v716, 0.0
      %v862 = vadd.f32 %v860, %v861
      %v863 = vsel %vm487, %v717, 0.0
      %v864 = vadd.f32 %v862, %v863
      %v865 = vsel %vm487, %v718, 0.0
      %v866 = vadd.f32 %v864, %v865
      %v867 = vsel %vm487, %v719, 0.0
      %v868 = vadd.f32 %v866, %v867
      %v869 = vrot.slane %v868, 4
      %v870 = vadd.f32 %v868, %v869
      %v871 = vrot.slane %v870, 2
      %v872 = vadd.f32 %v870, %v871
      %v873 = vrot.slane %v872, 1
      %v874 = vadd.f32 %v872, %v873
      %v875 = vsel %vm487, %v720, 0.0
      %v876 = vsel %vm487, %v721, 0.0
      %v877 = vadd.f32 %v875, %v876
      %v878 = vsel %vm487, %v722, 0.0
      %v879 = vadd.f32 %v877, %v878
      %v880 = vsel %vm487, %v723, 0.0
      %v881 = vadd.f32 %v879, %v880
      %v882 = vsel %vm487, %v724, 0.0
      %v883 = vadd.f32 %v881, %v882
      %v884 = vsel %vm487, %v725, 0.0
      %v885 = vadd.f32 %v883, %v884
      %v886 = vsel %vm487, %v726, 0.0
      %v887 = vadd.f32 %v885, %v886
      %v888 = vsel %vm487, %v727, 0.0
      %v889 = vadd.f32 %v887, %v888
      %v890 = vrot.slane %v889, 4
      %v891 = vadd.f32 %v889, %v890
      %v892 = vrot.slane %v891, 2
      %v893 = vadd.f32 %v891, %v892
      %v894 = vrot.slane %v893, 1
      %v895 = vadd.f32 %v893, %v894
      %v896 = vmul.f32 %v748, 0.015625
      %v897 = vmul.f32 %v769, 0.015625
      %v898 = vmul.f32 %v790, 0.015625
      %v899 = vmul.f32 %v811, 0.015625
      %v900 = vmul.f32 %v832, 0.015625
      %v901 = vmul.f32 %v853, 0.015625
      %v902 = vmul.f32 %v874, 0.015625
      %v903 = vmul.f32 %v895, 0.015625
      %v904 = vmul.f32 %v656, %v656
      %v905 = vmul.f32 %v657, %v657
      %v906 = vmul.f32 %v658, %v658
      %v907 = vmul.f32 %v659, %v659
      %v908 = vmul.f32 %v660, %v660
      %v909 = vmul.f32 %v661, %v661
      %v910 = vmul.f32 %v662, %v662
      %v911 = vmul.f32 %v663, %v663
      %v912 = vsub.f32 %v896, %v904
      %v913 = vsub.f32 %v897, %v905
      %v914 = vsub.f32 %v898, %v906
      %v915 = vsub.f32 %v899, %v907
      %v916 = vsub.f32 %v900, %v908
      %v917 = vsub.f32 %v901, %v909
      %v918 = vsub.f32 %v902, %v910
      %v919 = vsub.f32 %v903, %v911
      %v920 = vmax.f32 %v912, 0.0
      %v921 = vmax.f32 %v913, 0.0
      %v922 = vmax.f32 %v914, 0.0
      %v923 = vmax.f32 %v915, 0.0
      %v924 = vmax.f32 %v916, 0.0
      %v925 = vmax.f32 %v917, 0.0
      %v926 = vmax.f32 %v918, 0.0
      %v927 = vmax.f32 %v919, 0.0
      %v928 = vsub.f32 %v423, %v656
      %v929 = vsub.f32 %v424, %v656
      %v930 = vsub.f32 %v425, %v656
      %v931 = vsub.f32 %v426, %v656
      %v932 = vsub.f32 %v427, %v656
      %v933 = vsub.f32 %v428, %v656
      %v934 = vsub.f32 %v429, %v656
      %v935 = vsub.f32 %v430, %v656
      %v936 = vsub.f32 %v431, %v657
      %v937 = vsub.f32 %v432, %v657
      %v938 = vsub.f32 %v433, %v657
      %v939 = vsub.f32 %v434, %v657
      %v940 = vsub.f32 %v435, %v657
      %v941 = vsub.f32 %v436, %v657
      %v942 = vsub.f32 %v437, %v657
      %v943 = vsub.f32 %v438, %v657
      %v944 = vsub.f32 %v439, %v658
      %v945 = vsub.f32 %v440, %v658
      %v946 = vsub.f32 %v441, %v658
      %v947 = vsub.f32 %v442, %v658
      %v948 = vsub.f32 %v443, %v658
      %v949 = vsub.f32 %v444, %v658
      %v950 = vsub.f32 %v445, %v658
      %v951 = vsub.f32 %v446, %v658
      %v952 = vsub.f32 %v447, %v659
      %v953 = vsub.f32 %v448, %v659
      %v954 = vsub.f32 %v449, %v659
      %v955 = vsub.f32 %v450, %v659
      %v956 = vsub.f32 %v451, %v659
      %v957 = vsub.f32 %v452, %v659
      %v958 = vsub.f32 %v453, %v659
      %v959 = vsub.f32 %v454, %v659
      %v960 = vsub.f32 %v455, %v660
      %v961 = vsub.f32 %v456, %v660
      %v962 = vsub.f32 %v457, %v660
      %v963 = vsub.f32 %v458, %v660
      %v964 = vsub.f32 %v459, %v660
      %v965 = vsub.f32 %v460, %v660
      %v966 = vsub.f32 %v461, %v660
      %v967 = vsub.f32 %v462, %v660
      %v968 = vsub.f32 %v463, %v661
      %v969 = vsub.f32 %v464, %v661
      %v970 = vsub.f32 %v465, %v661
      %v971 = vsub.f32 %v466, %v661
      %v972 = vsub.f32 %v467, %v661
      %v973 = vsub.f32 %v468, %v661
      %v974 = vsub.f32 %v469, %v661
      %v975 = vsub.f32 %v470, %v661
      %v976 = vsub.f32 %v471, %v662
      %v977 = vsub.f32 %v472, %v662
      %v978 = vsub.f32 %v473, %v662
      %v979 = vsub.f32 %v474, %v662
      %v980 = vsub.f32 %v475, %v662
      %v981 = vsub.f32 %v476, %v662
      %v982 = vsub.f32 %v477, %v662
      %v983 = vsub.f32 %v478, %v662
      %v984 = vsub.f32 %v479, %v663
      %v985 = vsub.f32 %v480, %v663
      %v986 = vsub.f32 %v481, %v663
      %v987 = vsub.f32 %v482, %v663
      %v988 = vsub.f32 %v483, %v663
      %v989 = vsub.f32 %v484, %v663
      %v990 = vsub.f32 %v485, %v663
      %v991 = vsub.f32 %v486, %v663
      %v992 = vadd.f32 %v920, 1e-06
      %v993 = vadd.f32 %v921, 1e-06
      %v994 = vadd.f32 %v922, 1e-06
      %v995 = vadd.f32 %v923, 1e-06
      %v996 = vadd.f32 %v924, 1e-06
      %v997 = vadd.f32 %v925, 1e-06
      %v998 = vadd.f32 %v926, 1e-06
      %v999 = vadd.f32 %v927, 1e-06
      %v1000 = vrsqrt.pop %v992
      %v1001 = vrsqrt.pop %v993
      %v1002 = vrsqrt.pop %v994
      %v1003 = vrsqrt.pop %v995
      %v1004 = vrsqrt.pop %v996
      %v1005 = vrsqrt.pop %v997
      %v1006 = vrsqrt.pop %v998
      %v1007 = vrsqrt.pop %v999
      %v1008 = vmul.f32 %v928, %v1000
      %v1009 = vmul.f32 %v929, %v1000
      %v1010 = vmul.f32 %v930, %v1000
      %v1011 = vmul.f32 %v931, %v1000
      %v1012 = vmul.f32 %v932, %v1000
      %v1013 = vmul.f32 %v933, %v1000
      %v1014 = vmul.f32 %v934, %v1000
      %v1015 = vmul.f32 %v935, %v1000
      %v1016 = vmul.f32 %v936, %v1001
      %v1017 = vmul.f32 %v937, %v1001
      %v1018 = vmul.f32 %v938, %v1001
      %v1019 = vmul.f32 %v939, %v1001
      %v1020 = vmul.f32 %v940, %v1001
      %v1021 = vmul.f32 %v941, %v1001
      %v1022 = vmul.f32 %v942, %v1001
      %v1023 = vmul.f32 %v943, %v1001
      %v1024 = vmul.f32 %v944, %v1002
      %v1025 = vmul.f32 %v945, %v1002
      %v1026 = vmul.f32 %v946, %v1002
      %v1027 = vmul.f32 %v947, %v1002
      %v1028 = vmul.f32 %v948, %v1002
      %v1029 = vmul.f32 %v949, %v1002
      %v1030 = vmul.f32 %v950, %v1002
      %v1031 = vmul.f32 %v951, %v1002
      %v1032 = vmul.f32 %v952, %v1003
      %v1033 = vmul.f32 %v953, %v1003
      %v1034 = vmul.f32 %v954, %v1003
      %v1035 = vmul.f32 %v955, %v1003
      %v1036 = vmul.f32 %v956, %v1003
      %v1037 = vmul.f32 %v957, %v1003
      %v1038 = vmul.f32 %v958, %v1003
      %v1039 = vmul.f32 %v959, %v1003
      %v1040 = vmul.f32 %v960, %v1004
      %v1041 = vmul.f32 %v961, %v1004
      %v1042 = vmul.f32 %v962, %v1004
      %v1043 = vmul.f32 %v963, %v1004
      %v1044 = vmul.f32 %v964, %v1004
      %v1045 = vmul.f32 %v965, %v1004
      %v1046 = vmul.f32 %v966, %v1004
      %v1047 = vmul.f32 %v967, %v1004
      %v1048 = vmul.f32 %v968, %v1005
      %v1049 = vmul.f32 %v969, %v1005
      %v1050 = vmul.f32 %v970, %v1005
      %v1051 = vmul.f32 %v971, %v1005
      %v1052 = vmul.f32 %v972, %v1005
      %v1053 = vmul.f32 %v973, %v1005
      %v1054 = vmul.f32 %v974, %v1005
      %v1055 = vmul.f32 %v975, %v1005
      %v1056 = vmul.f32 %v976, %v1006
      %v1057 = vmul.f32 %v977, %v1006
      %v1058 = vmul.f32 %v978, %v1006
      %v1059 = vmul.f32 %v979, %v1006
      %v1060 = vmul.f32 %v980, %v1006
      %v1061 = vmul.f32 %v981, %v1006
      %v1062 = vmul.f32 %v982, %v1006
      %v1063 = vmul.f32 %v983, %v1006
      %v1064 = vmul.f32 %v984, %v1007
      %v1065 = vmul.f32 %v985, %v1007
      %v1066 = vmul.f32 %v986, %v1007
      %v1067 = vmul.f32 %v987, %v1007
      %v1068 = vmul.f32 %v988, %v1007
      %v1069 = vmul.f32 %v989, %v1007
      %v1070 = vmul.f32 %v990, %v1007
      %v1071 = vmul.f32 %v991, %v1007
      %v1072 = vld [vmem:[%s1] sm:$0x1]
      %v1074 = vlaneseq
      %v1075 = vshrl.u32 %v1074, 7
      %v1076 = vsub.s32 0, %v1075
      %v1077 = vrot.slane %v1072, %v1076
      %v1079 = vmul.f32 %v1008, %v1077
      %v1080 = vmul.f32 %v1009, %v1077
      %v1081 = vmul.f32 %v1010, %v1077
      %v1082 = vmul.f32 %v1011, %v1077
      %v1083 = vmul.f32 %v1012, %v1077
      %v1084 = vmul.f32 %v1013, %v1077
      %v1085 = vmul.f32 %v1014, %v1077
      %v1086 = vmul.f32 %v1015, %v1077
      %v1087 = vmul.f32 %v1016, %v1077
      %v1088 = vmul.f32 %v1017, %v1077
      %v1089 = vmul.f32 %v1018, %v1077
      %v1090 = vmul.f32 %v1019, %v1077
      %v1091 = vmul.f32 %v1020, %v1077
      %v1092 = vmul.f32 %v1021, %v1077
      %v1093 = vmul.f32 %v1022, %v1077
      %v1094 = vmul.f32 %v1023, %v1077
      %v1095 = vmul.f32 %v1024, %v1077
      %v1096 = vmul.f32 %v1025, %v1077
      %v1097 = vmul.f32 %v1026, %v1077
      %v1098 = vmul.f32 %v1027, %v1077
      %v1099 = vmul.f32 %v1028, %v1077
      %v1100 = vmul.f32 %v1029, %v1077
      %v1101 = vmul.f32 %v1030, %v1077
      %v1102 = vmul.f32 %v1031, %v1077
      %v1103 = vmul.f32 %v1032, %v1077
      %v1104 = vmul.f32 %v1033, %v1077
      %v1105 = vmul.f32 %v1034, %v1077
      %v1106 = vmul.f32 %v1035, %v1077
      %v1107 = vmul.f32 %v1036, %v1077
      %v1108 = vmul.f32 %v1037, %v1077
      %v1109 = vmul.f32 %v1038, %v1077
      %v1110 = vmul.f32 %v1039, %v1077
      %v1111 = vmul.f32 %v1040, %v1077
      %v1112 = vmul.f32 %v1041, %v1077
      %v1113 = vmul.f32 %v1042, %v1077
      %v1114 = vmul.f32 %v1043, %v1077
      %v1115 = vmul.f32 %v1044, %v1077
      %v1116 = vmul.f32 %v1045, %v1077
      %v1117 = vmul.f32 %v1046, %v1077
      %v1118 = vmul.f32 %v1047, %v1077
      %v1119 = vmul.f32 %v1048, %v1077
      %v1120 = vmul.f32 %v1049, %v1077
      %v1121 = vmul.f32 %v1050, %v1077
      %v1122 = vmul.f32 %v1051, %v1077
      %v1123 = vmul.f32 %v1052, %v1077
      %v1124 = vmul.f32 %v1053, %v1077
      %v1125 = vmul.f32 %v1054, %v1077
      %v1126 = vmul.f32 %v1055, %v1077
      %v1127 = vmul.f32 %v1056, %v1077
      %v1128 = vmul.f32 %v1057, %v1077
      %v1129 = vmul.f32 %v1058, %v1077
      %v1130 = vmul.f32 %v1059, %v1077
      %v1131 = vmul.f32 %v1060, %v1077
      %v1132 = vmul.f32 %v1061, %v1077
      %v1133 = vmul.f32 %v1062, %v1077
      %v1134 = vmul.f32 %v1063, %v1077
      %v1135 = vmul.f32 %v1064, %v1077
      %v1136 = vmul.f32 %v1065, %v1077
      %v1137 = vmul.f32 %v1066, %v1077
      %v1138 = vmul.f32 %v1067, %v1077
      %v1139 = vmul.f32 %v1068, %v1077
      %v1140 = vmul.f32 %v1069, %v1077
      %v1141 = vmul.f32 %v1070, %v1077
      %v1142 = vmul.f32 %v1071, %v1077
      %v1143 = vld [vmem:[%s2] sm:$0x1]
      %v1145 = vlaneseq
      %v1146 = vshrl.u32 %v1145, 7
      %v1147 = vsub.s32 0, %v1146
      %v1148 = vrot.slane %v1143, %v1147
      %v1150 = vadd.f32 %v1079, %v1148
      %v1151 = vadd.f32 %v1080, %v1148
      %v1152 = vadd.f32 %v1081, %v1148
      %v1153 = vadd.f32 %v1082, %v1148
      %v1154 = vadd.f32 %v1083, %v1148
      %v1155 = vadd.f32 %v1084, %v1148
      %v1156 = vadd.f32 %v1085, %v1148
      %v1157 = vadd.f32 %v1086, %v1148
      %v1158 = vadd.f32 %v1087, %v1148
      %v1159 = vadd.f32 %v1088, %v1148
      %v1160 = vadd.f32 %v1089, %v1148
      %v1161 = vadd.f32 %v1090, %v1148
      %v1162 = vadd.f32 %v1091, %v1148
      %v1163 = vadd.f32 %v1092, %v1148
      %v1164 = vadd.f32 %v1093, %v1148
      %v1165 = vadd.f32 %v1094, %v1148
      %v1166 = vadd.f32 %v1095, %v1148
      %v1167 = vadd.f32 %v1096, %v1148
      %v1168 = vadd.f32 %v1097, %v1148
      %v1169 = vadd.f32 %v1098, %v1148
      %v1170 = vadd.f32 %v1099, %v1148
      %v1171 = vadd.f32 %v1100, %v1148
      %v1172 = vadd.f32 %v1101, %v1148
      %v1173 = vadd.f32 %v1102, %v1148
      %v1174 = vadd.f32 %v1103, %v1148
      %v1175 = vadd.f32 %v1104, %v1148
      %v1176 = vadd.f32 %v1105, %v1148
      %v1177 = vadd.f32 %v1106, %v1148
      %v1178 = vadd.f32 %v1107, %v1148
      %v1179 = vadd.f32 %v1108, %v1148
      %v1180 = vadd.f32 %v1109, %v1148
      %v1181 = vadd.f32 %v1110, %v1148
      %v1182 = vadd.f32 %v1111, %v1148
      %v1183 = vadd.f32 %v1112, %v1148
      %v1184 = vadd.f32 %v1113, %v1148
      %v1185 = vadd.f32 %v1114, %v1148
      %v1186 = vadd.f32 %v1115, %v1148
      %v1187 = vadd.f32 %v1116, %v1148
      %v1188 = vadd.f32 %v1117, %v1148
      %v1189 = vadd.f32 %v1118, %v1148
      %v1190 = vadd.f32 %v1119, %v1148
      %v1191 = vadd.f32 %v1120, %v1148
      %v1192 = vadd.f32 %v1121, %v1148
      %v1193 = vadd.f32 %v1122, %v1148
      %v1194 = vadd.f32 %v1123, %v1148
      %v1195 = vadd.f32 %v1124, %v1148
      %v1196 = vadd.f32 %v1125, %v1148
      %v1197 = vadd.f32 %v1126, %v1148
      %v1198 = vadd.f32 %v1127, %v1148
      %v1199 = vadd.f32 %v1128, %v1148
      %v1200 = vadd.f32 %v1129, %v1148
      %v1201 = vadd.f32 %v1130, %v1148
      %v1202 = vadd.f32 %v1131, %v1148
      %v1203 = vadd.f32 %v1132, %v1148
      %v1204 = vadd.f32 %v1133, %v1148
      %v1205 = vadd.f32 %v1134, %v1148
      %v1206 = vadd.f32 %v1135, %v1148
      %v1207 = vadd.f32 %v1136, %v1148
      %v1208 = vadd.f32 %v1137, %v1148
      %v1209 = vadd.f32 %v1138, %v1148
      %v1210 = vadd.f32 %v1139, %v1148
      %v1211 = vadd.f32 %v1140, %v1148
      %v1212 = vadd.f32 %v1141, %v1148
      %v1213 = vadd.f32 %v1142, %v1148
      %v1214 = vpack.c.bf16 %v1151, %v1150
      %v1215 = vpack.c.bf16 %v1153, %v1152
      %v1216 = vpack.c.bf16 %v1155, %v1154
      %v1217 = vpack.c.bf16 %v1157, %v1156
      %v1218 = vpack.c.bf16 %v1159, %v1158
      %v1219 = vpack.c.bf16 %v1161, %v1160
      %v1220 = vpack.c.bf16 %v1163, %v1162
      %v1221 = vpack.c.bf16 %v1165, %v1164
      %v1222 = vpack.c.bf16 %v1167, %v1166
      %v1223 = vpack.c.bf16 %v1169, %v1168
      %v1224 = vpack.c.bf16 %v1171, %v1170
      %v1225 = vpack.c.bf16 %v1173, %v1172
      %v1226 = vpack.c.bf16 %v1175, %v1174
      %v1227 = vpack.c.bf16 %v1177, %v1176
      %v1228 = vpack.c.bf16 %v1179, %v1178
      %v1229 = vpack.c.bf16 %v1181, %v1180
      %v1230 = vpack.c.bf16 %v1183, %v1182
      %v1231 = vpack.c.bf16 %v1185, %v1184
      %v1232 = vpack.c.bf16 %v1187, %v1186
      %v1233 = vpack.c.bf16 %v1189, %v1188
      %v1234 = vpack.c.bf16 %v1191, %v1190
      %v1235 = vpack.c.bf16 %v1193, %v1192
      %v1236 = vpack.c.bf16 %v1195, %v1194
      %v1237 = vpack.c.bf16 %v1197, %v1196
      %v1238 = vpack.c.bf16 %v1199, %v1198
      %v1239 = vpack.c.bf16 %v1201, %v1200
      %v1240 = vpack.c.bf16 %v1203, %v1202
      %v1241 = vpack.c.bf16 %v1205, %v1204
      %v1242 = vpack.c.bf16 %v1207, %v1206
      %v1243 = vpack.c.bf16 %v1209, %v1208
      %v1244 = vpack.c.bf16 %v1211, %v1210
      %v1245 = vpack.c.bf16 %v1213, %v1212
      %v1246 = vld [vmem:[%s4] sm:$0xf]
      %v1247 = vld [vmem:[%s4 + $0x4] sm:$0xf]
      %v1248 = vld [vmem:[%s4 + $0x8] sm:$0xf]
      %v1249 = vld [vmem:[%s4 + $0xc] sm:$0xf]
      %v1250 = vld [vmem:[%s5] sm:$0x1]
      %v1252 = vlaneseq
      %v1253 = vshrl.u32 %v1252, 7
      %v1254 = vsub.s32 0, %v1253
      %v1255 = vrot.slane %v1250, %v1254
      %v1261 = vunpack.c.l.b16 %v1246
      %v1262 = vunpack.c.l.b16 %v1247
      %v1263 = vunpack.c.l.b16 %v1248
      %v1264 = vunpack.c.l.b16 %v1249
      %v1265 = vpack.c.b16 %v1262, %v1261
      %v1266 = vpack.c.b16 %v1264, %v1263
      %v1270 = vsel %vm487, %v1214, 0
      %v1273 = vsel %vm487, %v1215, 0
      %v1276 = vsel %vm487, %v1216, 0
      %v1279 = vsel %vm487, %v1217, 0
      %v1282 = vsel %vm487, %v1218, 0
      %v1285 = vsel %vm487, %v1219, 0
      %v1288 = vsel %vm487, %v1220, 0
      %v1291 = vsel %vm487, %v1221, 0
      %v1294 = vsel %vm487, %v1222, 0
      %v1297 = vsel %vm487, %v1223, 0
      %v1300 = vsel %vm487, %v1224, 0
      %v1303 = vsel %vm487, %v1225, 0
      %v1306 = vsel %vm487, %v1226, 0
      %v1309 = vsel %vm487, %v1227, 0
      %v1312 = vsel %vm487, %v1228, 0
      %v1315 = vsel %vm487, %v1229, 0
      %v1318 = vsel %vm487, %v1230, 0
      %v1321 = vsel %vm487, %v1231, 0
      %v1324 = vsel %vm487, %v1232, 0
      %v1327 = vsel %vm487, %v1233, 0
      %v1330 = vsel %vm487, %v1234, 0
      %v1333 = vsel %vm487, %v1235, 0
      %v1336 = vsel %vm487, %v1236, 0
      %v1339 = vsel %vm487, %v1237, 0
      %v1342 = vsel %vm487, %v1238, 0
      %v1345 = vsel %vm487, %v1239, 0
      %v1348 = vsel %vm487, %v1240, 0
      %v1351 = vsel %vm487, %v1241, 0
      %v1354 = vsel %vm487, %v1242, 0
      %v1357 = vsel %vm487, %v1243, 0
      %v1360 = vsel %vm487, %v1244, 0
      %v1363 = vsel %vm487, %v1245, 0
      %1365 = vmatprep.subr.bf16.mxu0 0
      %1366 = vmatpush1.bf16.msra.mxu0 %v1265
      %1367 = vmatprep.subr.bf16.mxu0 0
      %1368 = vmatpush1.bf16.msra.mxu0 %v1266
      %1369 = vmatprep.subr.bf16.mxu0 0
      %1370 = vmatpush1.bf16.msra.mxu0 0
      %1371 = vmatprep.subr.bf16.mxu0 0
      %1372 = vmatpush1.bf16.msra.mxu0 0
      %1373 = vmatprep.subr.bf16.mxu0 0
      %1374 = vmatpush1.bf16.msra.mxu0 0
      %1375 = vmatprep.subr.bf16.mxu0 0
      %1376 = vmatpush1.bf16.msra.mxu0 0
      %1377 = vmatprep.subr.bf16.mxu0 0
      %1378 = vmatpush1.bf16.msra.mxu0 0
      %1379 = vmatprep.subr.bf16.mxu0 0
      %1380 = vmatpush1.bf16.msra.mxu0 0
      %1381 = vmatprep.subr.bf16.mxu0 0
      %1382 = vmatpush1.bf16.msra.mxu0 0
      %1383 = vmatprep.subr.bf16.mxu0 0
      %1384 = vmatpush1.bf16.msra.mxu0 0
      %1385 = vmatprep.subr.bf16.mxu0 0
      %1386 = vmatpush1.bf16.msra.mxu0 0
      %1387 = vmatprep.subr.bf16.mxu0 0
      %1388 = vmatpush1.bf16.msra.mxu0 0
      %1389 = vmatprep.subr.bf16.mxu0 0
      %1390 = vmatpush1.bf16.msra.mxu0 0
      %1391 = vmatprep.subr.bf16.mxu0 0
      %1392 = vmatpush1.bf16.msra.mxu0 0
      %1393 = vmatprep.subr.bf16.mxu0 0
      %1394 = vmatpush1.bf16.msra.mxu0 0
      %1395 = vmatprep.subr.bf16.mxu0 0
      %1396 = vmatpush1.bf16.msra.mxu0 0
      %1397 = vmatprep.mubr.bf16.mxu0 0
      %1398 = vmatmul.mubr.bf16.gmra.mrb[0].mxu0 %v1270
      %v1399 = vpop.f32.mrb[0].mxu0
      %v1400 = vadd.f32 %v1255, %v1399
      %v1401 = vpop.f32.mrb[0].mxu0
      %v1402 = vpop.f32.mrb[0].mxu0
      %v1403 = vadd.f32 %v1255, %v1402
      %v1404 = vpop.f32.mrb[0].mxu0
      %1405 = vmatprep.mubr.bf16.mxu0 0
      %1406 = vmatmul.mubr.bf16.gmra.mrb[0].mxu0 %v1273
      %v1407 = vpop.f32.mrb[0].mxu0
      %v1408 = vadd.f32 %v1255, %v1407
      %v1409 = vpop.f32.mrb[0].mxu0
      %v1410 = vpop.f32.mrb[0].mxu0
      %v1411 = vadd.f32 %v1255, %v1410
      %v1412 = vpop.f32.mrb[0].mxu0
      %1413 = vmatprep.mubr.bf16.mxu0 0
      %1414 = vmatmul.mubr.bf16.gmra.mrb[0].mxu0 %v1276
      %v1415 = vpop.f32.mrb[0].mxu0
      %v1416 = vadd.f32 %v1255, %v1415
      %v1417 = vpop.f32.mrb[0].mxu0
      %v1418 = vpop.f32.mrb[0].mxu0
      %v1419 = vadd.f32 %v1255, %v1418
      %v1420 = vpop.f32.mrb[0].mxu0
      %1421 = vmatprep.mubr.bf16.mxu0 0
      %1422 = vmatmul.mubr.bf16.gmra.mrb[0].mxu0 %v1279
      %v1423 = vpop.f32.mrb[0].mxu0
      %v1424 = vadd.f32 %v1255, %v1423
      %v1425 = vpop.f32.mrb[0].mxu0
      %v1426 = vpop.f32.mrb[0].mxu0
      %v1427 = vadd.f32 %v1255, %v1426
      %v1428 = vpop.f32.mrb[0].mxu0
      %1429 = vmatprep.mubr.bf16.mxu0 0
      %1430 = vmatmul.mubr.bf16.gmra.mrb[0].mxu0 %v1282
      %v1431 = vpop.f32.mrb[0].mxu0
      %v1432 = vadd.f32 %v1255, %v1431
      %v1433 = vpop.f32.mrb[0].mxu0
      %v1434 = vpop.f32.mrb[0].mxu0
      %v1435 = vadd.f32 %v1255, %v1434
      %v1436 = vpop.f32.mrb[0].mxu0
      %1437 = vmatprep.mubr.bf16.mxu0 0
      %1438 = vmatmul.mubr.bf16.gmra.mrb[0].mxu0 %v1285
      %v1439 = vpop.f32.mrb[0].mxu0
      %v1440 = vadd.f32 %v1255, %v1439
      %v1441 = vpop.f32.mrb[0].mxu0
      %v1442 = vpop.f32.mrb[0].mxu0
      %v1443 = vadd.f32 %v1255, %v1442
      %v1444 = vpop.f32.mrb[0].mxu0
      %1445 = vmatprep.mubr.bf16.mxu0 0
      %1446 = vmatmul.mubr.bf16.gmra.mrb[0].mxu0 %v1288
      %v1447 = vpop.f32.mrb[0].mxu0
      %v1448 = vadd.f32 %v1255, %v1447
      %v1449 = vpop.f32.mrb[0].mxu0
      %v1450 = vpop.f32.mrb[0].mxu0
      %v1451 = vadd.f32 %v1255, %v1450
      %v1452 = vpop.f32.mrb[0].mxu0
      %1453 = vmatprep.mubr.bf16.mxu0 0
      %1454 = vmatmul.mubr.bf16.gmra.mrb[0].mxu0 %v1291
      %v1455 = vpop.f32.mrb[0].mxu0
      %v1456 = vadd.f32 %v1255, %v1455
      %v1457 = vpop.f32.mrb[0].mxu0
      %v1458 = vpop.f32.mrb[0].mxu0
      %v1459 = vadd.f32 %v1255, %v1458
      %v1460 = vpop.f32.mrb[0].mxu0
      %1461 = vmatprep.mubr.bf16.mxu0 0
      %1462 = vmatmul.mubr.bf16.gmra.mrb[0].mxu0 %v1294
      %v1463 = vpop.f32.mrb[0].mxu0
      %v1464 = vadd.f32 %v1255, %v1463
      %v1465 = vpop.f32.mrb[0].mxu0
      %v1466 = vpop.f32.mrb[0].mxu0
      %v1467 = vadd.f32 %v1255, %v1466
      %v1468 = vpop.f32.mrb[0].mxu0
      %1469 = vmatprep.mubr.bf16.mxu0 0
      %1470 = vmatmul.mubr.bf16.gmra.mrb[0].mxu0 %v1297
      %v1471 = vpop.f32.mrb[0].mxu0
      %v1472 = vadd.f32 %v1255, %v1471
      %v1473 = vpop.f32.mrb[0].mxu0
      %v1474 = vpop.f32.mrb[0].mxu0
      %v1475 = vadd.f32 %v1255, %v1474
      %v1476 = vpop.f32.mrb[0].mxu0
      %1477 = vmatprep.mubr.bf16.mxu0 0
      %1478 = vmatmul.mubr.bf16.gmra.mrb[0].mxu0 %v1300
      %v1479 = vpop.f32.mrb[0].mxu0
      %v1480 = vadd.f32 %v1255, %v1479
      %v1481 = vpop.f32.mrb[0].mxu0
      %v1482 = vpop.f32.mrb[0].mxu0
      %v1483 = vadd.f32 %v1255, %v1482
      %v1484 = vpop.f32.mrb[0].mxu0
      %1485 = vmatprep.mubr.bf16.mxu0 0
      %1486 = vmatmul.mubr.bf16.gmra.mrb[0].mxu0 %v1303
      %v1487 = vpop.f32.mrb[0].mxu0
      %v1488 = vadd.f32 %v1255, %v1487
      %v1489 = vpop.f32.mrb[0].mxu0
      %v1490 = vpop.f32.mrb[0].mxu0
      %v1491 = vadd.f32 %v1255, %v1490
      %v1492 = vpop.f32.mrb[0].mxu0
      %1493 = vmatprep.mubr.bf16.mxu0 0
      %1494 = vmatmul.mubr.bf16.gmra.mrb[0].mxu0 %v1306
      %v1495 = vpop.f32.mrb[0].mxu0
      %v1496 = vadd.f32 %v1255, %v1495
      %v1497 = vpop.f32.mrb[0].mxu0
      %v1498 = vpop.f32.mrb[0].mxu0
      %v1499 = vadd.f32 %v1255, %v1498
      %v1500 = vpop.f32.mrb[0].mxu0
      %1501 = vmatprep.mubr.bf16.mxu0 0
      %1502 = vmatmul.mubr.bf16.gmra.mrb[0].mxu0 %v1309
      %v1503 = vpop.f32.mrb[0].mxu0
      %v1504 = vadd.f32 %v1255, %v1503
      %v1505 = vpop.f32.mrb[0].mxu0
      %v1506 = vpop.f32.mrb[0].mxu0
      %v1507 = vadd.f32 %v1255, %v1506
      %v1508 = vpop.f32.mrb[0].mxu0
      %1509 = vmatprep.mubr.bf16.mxu0 0
      %1510 = vmatmul.mubr.bf16.gmra.mrb[0].mxu0 %v1312
      %v1511 = vpop.f32.mrb[0].mxu0
      %v1512 = vadd.f32 %v1255, %v1511
      %v1513 = vpop.f32.mrb[0].mxu0
      %v1514 = vpop.f32.mrb[0].mxu0
      %v1515 = vadd.f32 %v1255, %v1514
      %v1516 = vpop.f32.mrb[0].mxu0
      %1517 = vmatprep.mubr.bf16.mxu0 0
      %1518 = vmatmul.mubr.bf16.gmra.mrb[0].mxu0 %v1315
      %v1519 = vpop.f32.mrb[0].mxu0
      %v1520 = vadd.f32 %v1255, %v1519
      %v1521 = vpop.f32.mrb[0].mxu0
      %v1522 = vpop.f32.mrb[0].mxu0
      %v1523 = vadd.f32 %v1255, %v1522
      %v1524 = vpop.f32.mrb[0].mxu0
      %1525 = vmatprep.mubr.bf16.mxu0 0
      %1526 = vmatmul.mubr.bf16.gmra.mrb[0].mxu0 %v1318
      %v1527 = vpop.f32.mrb[0].mxu0
      %v1528 = vadd.f32 %v1255, %v1527
      %v1529 = vpop.f32.mrb[0].mxu0
      %v1530 = vpop.f32.mrb[0].mxu0
      %v1531 = vadd.f32 %v1255, %v1530
      %v1532 = vpop.f32.mrb[0].mxu0
      %1533 = vmatprep.mubr.bf16.mxu0 0
      %1534 = vmatmul.mubr.bf16.gmra.mrb[0].mxu0 %v1321
      %v1535 = vpop.f32.mrb[0].mxu0
      %v1536 = vadd.f32 %v1255, %v1535
      %v1537 = vpop.f32.mrb[0].mxu0
      %v1538 = vpop.f32.mrb[0].mxu0
      %v1539 = vadd.f32 %v1255, %v1538
      %v1540 = vpop.f32.mrb[0].mxu0
      %1541 = vmatprep.mubr.bf16.mxu0 0
      %1542 = vmatmul.mubr.bf16.gmra.mrb[0].mxu0 %v1324
      %v1543 = vpop.f32.mrb[0].mxu0
      %v1544 = vadd.f32 %v1255, %v1543
      %v1545 = vpop.f32.mrb[0].mxu0
      %v1546 = vpop.f32.mrb[0].mxu0
      %v1547 = vadd.f32 %v1255, %v1546
      %v1548 = vpop.f32.mrb[0].mxu0
      %1549 = vmatprep.mubr.bf16.mxu0 0
      %1550 = vmatmul.mubr.bf16.gmra.mrb[0].mxu0 %v1327
      %v1551 = vpop.f32.mrb[0].mxu0
      %v1552 = vadd.f32 %v1255, %v1551
      %v1553 = vpop.f32.mrb[0].mxu0
      %v1554 = vpop.f32.mrb[0].mxu0
      %v1555 = vadd.f32 %v1255, %v1554
      %v1556 = vpop.f32.mrb[0].mxu0
      %1557 = vmatprep.mubr.bf16.mxu0 0
      %1558 = vmatmul.mubr.bf16.gmra.mrb[0].mxu0 %v1330
      %v1559 = vpop.f32.mrb[0].mxu0
      %v1560 = vadd.f32 %v1255, %v1559
      %v1561 = vpop.f32.mrb[0].mxu0
      %v1562 = vpop.f32.mrb[0].mxu0
      %v1563 = vadd.f32 %v1255, %v1562
      %v1564 = vpop.f32.mrb[0].mxu0
      %1565 = vmatprep.mubr.bf16.mxu0 0
      %1566 = vmatmul.mubr.bf16.gmra.mrb[0].mxu0 %v1333
      %v1567 = vpop.f32.mrb[0].mxu0
      %v1568 = vadd.f32 %v1255, %v1567
      %v1569 = vpop.f32.mrb[0].mxu0
      %v1570 = vpop.f32.mrb[0].mxu0
      %v1571 = vadd.f32 %v1255, %v1570
      %v1572 = vpop.f32.mrb[0].mxu0
      %1573 = vmatprep.mubr.bf16.mxu0 0
      %1574 = vmatmul.mubr.bf16.gmra.mrb[0].mxu0 %v1336
      %v1575 = vpop.f32.mrb[0].mxu0
      %v1576 = vadd.f32 %v1255, %v1575
      %v1577 = vpop.f32.mrb[0].mxu0
      %v1578 = vpop.f32.mrb[0].mxu0
      %v1579 = vadd.f32 %v1255, %v1578
      %v1580 = vpop.f32.mrb[0].mxu0
      %1581 = vmatprep.mubr.bf16.mxu0 0
      %1582 = vmatmul.mubr.bf16.gmra.mrb[0].mxu0 %v1339
      %v1583 = vpop.f32.mrb[0].mxu0
      %v1584 = vadd.f32 %v1255, %v1583
      %v1585 = vpop.f32.mrb[0].mxu0
      %v1586 = vpop.f32.mrb[0].mxu0
      %v1587 = vadd.f32 %v1255, %v1586
      %v1588 = vpop.f32.mrb[0].mxu0
      %1589 = vmatprep.mubr.bf16.mxu0 0
      %1590 = vmatmul.mubr.bf16.gmra.mrb[0].mxu0 %v1342
      %v1591 = vpop.f32.mrb[0].mxu0
      %v1592 = vadd.f32 %v1255, %v1591
      %v1593 = vpop.f32.mrb[0].mxu0
      %v1594 = vpop.f32.mrb[0].mxu0
      %v1595 = vadd.f32 %v1255, %v1594
      %v1596 = vpop.f32.mrb[0].mxu0
      %1597 = vmatprep.mubr.bf16.mxu0 0
      %1598 = vmatmul.mubr.bf16.gmra.mrb[0].mxu0 %v1345
      %v1599 = vpop.f32.mrb[0].mxu0
      %v1600 = vadd.f32 %v1255, %v1599
      %v1601 = vpop.f32.mrb[0].mxu0
      %v1602 = vpop.f32.mrb[0].mxu0
      %v1603 = vadd.f32 %v1255, %v1602
      %v1604 = vpop.f32.mrb[0].mxu0
      %1605 = vmatprep.mubr.bf16.mxu0 0
      %1606 = vmatmul.mubr.bf16.gmra.mrb[0].mxu0 %v1348
      %v1607 = vpop.f32.mrb[0].mxu0
      %v1608 = vadd.f32 %v1255, %v1607
      %v1609 = vpop.f32.mrb[0].mxu0
      %v1610 = vpop.f32.mrb[0].mxu0
      %v1611 = vadd.f32 %v1255, %v1610
      %v1612 = vpop.f32.mrb[0].mxu0
      %1613 = vmatprep.mubr.bf16.mxu0 0
      %1614 = vmatmul.mubr.bf16.gmra.mrb[0].mxu0 %v1351
      %v1615 = vpop.f32.mrb[0].mxu0
      %v1616 = vadd.f32 %v1255, %v1615
      %v1617 = vpop.f32.mrb[0].mxu0
      %v1618 = vpop.f32.mrb[0].mxu0
      %v1619 = vadd.f32 %v1255, %v1618
      %v1620 = vpop.f32.mrb[0].mxu0
      %1621 = vmatprep.mubr.bf16.mxu0 0
      %1622 = vmatmul.mubr.bf16.gmra.mrb[0].mxu0 %v1354
      %v1623 = vpop.f32.mrb[0].mxu0
      %v1624 = vadd.f32 %v1255, %v1623
      %v1625 = vpop.f32.mrb[0].mxu0
      %v1626 = vpop.f32.mrb[0].mxu0
      %v1627 = vadd.f32 %v1255, %v1626
      %v1628 = vpop.f32.mrb[0].mxu0
      %1629 = vmatprep.mubr.bf16.mxu0 0
      %1630 = vmatmul.mubr.bf16.gmra.mrb[0].mxu0 %v1357
      %v1631 = vpop.f32.mrb[0].mxu0
      %v1632 = vadd.f32 %v1255, %v1631
      %v1633 = vpop.f32.mrb[0].mxu0
      %v1634 = vpop.f32.mrb[0].mxu0
      %v1635 = vadd.f32 %v1255, %v1634
      %v1636 = vpop.f32.mrb[0].mxu0
      %1637 = vmatprep.mubr.bf16.mxu0 0
      %1638 = vmatmul.mubr.bf16.gmra.mrb[0].mxu0 %v1360
      %v1639 = vpop.f32.mrb[0].mxu0
      %v1640 = vadd.f32 %v1255, %v1639
      %v1641 = vpop.f32.mrb[0].mxu0
      %v1642 = vpop.f32.mrb[0].mxu0
      %v1643 = vadd.f32 %v1255, %v1642
      %v1644 = vpop.f32.mrb[0].mxu0
      %1645 = vmatprep.mubr.bf16.mxu0 0
      %1646 = vmatmul.mubr.bf16.gmra.mrb[0].mxu0 %v1363
      %v1647 = vpop.f32.mrb[0].mxu0
      %v1648 = vadd.f32 %v1255, %v1647
      %v1649 = vpop.f32.mrb[0].mxu0
      %v1650 = vpop.f32.mrb[0].mxu0
      %v1651 = vadd.f32 %v1255, %v1650
      %v1652 = vpop.f32.mrb[0].mxu0
      %1653 = vdwg.mxu0
      %v1654 = vld [vmem:[%s6] sm:$0xf]
      %v1655 = vld [vmem:[%s6 + $0x4] sm:$0xf]
      %v1656 = vld [vmem:[%s6 + $0x8] sm:$0xf]
      %v1657 = vld [vmem:[%s6 + $0xc] sm:$0xf]
      %v1658 = vld [vmem:[%s7] sm:$0x1]
      %v1660 = vlaneseq
      %v1661 = vshrl.u32 %v1660, 7
      %v1662 = vsub.s32 0, %v1661
      %v1663 = vrot.slane %v1658, %v1662
      %v1669 = vunpack.c.l.b16 %v1654
      %v1670 = vunpack.c.l.b16 %v1655
      %v1671 = vunpack.c.l.b16 %v1656
      %v1672 = vunpack.c.l.b16 %v1657
      %v1673 = vpack.c.b16 %v1670, %v1669
      %v1674 = vpack.c.b16 %v1672, %v1671
      %1677 = vmatprep.subr.bf16.mxu0 0
      %1678 = vmatpush1.bf16.msra.mxu0 %v1673
      %1679 = vmatprep.subr.bf16.mxu0 0
      %1680 = vmatpush1.bf16.msra.mxu0 %v1674
      %1681 = vmatprep.subr.bf16.mxu0 0
      %1682 = vmatpush1.bf16.msra.mxu0 0
      %1683 = vmatprep.subr.bf16.mxu0 0
      %1684 = vmatpush1.bf16.msra.mxu0 0
      %1685 = vmatprep.subr.bf16.mxu0 0
      %1686 = vmatpush1.bf16.msra.mxu0 0
      %1687 = vmatprep.subr.bf16.mxu0 0
      %1688 = vmatpush1.bf16.msra.mxu0 0
      %1689 = vmatprep.subr.bf16.mxu0 0
      %1690 = vmatpush1.bf16.msra.mxu0 0
      %1691 = vmatprep.subr.bf16.mxu0 0
      %1692 = vmatpush1.bf16.msra.mxu0 0
      %1693 = vmatprep.subr.bf16.mxu0 0
      %1694 = vmatpush1.bf16.msra.mxu0 0
      %1695 = vmatprep.subr.bf16.mxu0 0
      %1696 = vmatpush1.bf16.msra.mxu0 0
      %1697 = vmatprep.subr.bf16.mxu0 0
      %1698 = vmatpush1.bf16.msra.mxu0 0
      %1699 = vmatprep.subr.bf16.mxu0 0
      %1700 = vmatpush1.bf16.msra.mxu0 0
      %1701 = vmatprep.subr.bf16.mxu0 0
      %1702 = vmatpush1.bf16.msra.mxu0 0
      %1703 = vmatprep.subr.bf16.mxu0 0
      %1704 = vmatpush1.bf16.msra.mxu0 0
      %1705 = vmatprep.subr.bf16.mxu0 0
      %1706 = vmatpush1.bf16.msra.mxu0 0
      %1707 = vmatprep.subr.bf16.mxu0 0
      %1708 = vmatpush1.bf16.msra.mxu0 0
      %1709 = vmatprep.mubr.bf16.mxu0 0
      %1710 = vmatmul.mubr.bf16.gmra.mrb[0].mxu0 %v1270
      %v1711 = vpop.f32.mrb[0].mxu0
      %v1712 = vadd.f32 %v1663, %v1711
      %v1713 = vpop.f32.mrb[0].mxu0
      %v1714 = vpop.f32.mrb[0].mxu0
      %v1715 = vadd.f32 %v1663, %v1714
      %v1716 = vpop.f32.mrb[0].mxu0
      %1717 = vmatprep.mubr.bf16.mxu0 0
      %1718 = vmatmul.mubr.bf16.gmra.mrb[0].mxu0 %v1273
      %v1719 = vpop.f32.mrb[0].mxu0
      %v1720 = vadd.f32 %v1663, %v1719
      %v1721 = vpop.f32.mrb[0].mxu0
      %v1722 = vpop.f32.mrb[0].mxu0
      %v1723 = vadd.f32 %v1663, %v1722
      %v1724 = vpop.f32.mrb[0].mxu0
      %1725 = vmatprep.mubr.bf16.mxu0 0
      %1726 = vmatmul.mubr.bf16.gmra.mrb[0].mxu0 %v1276
      %v1727 = vpop.f32.mrb[0].mxu0
      %v1728 = vadd.f32 %v1663, %v1727
      %v1729 = vpop.f32.mrb[0].mxu0
      %v1730 = vpop.f32.mrb[0].mxu0
      %v1731 = vadd.f32 %v1663, %v1730
      %v1732 = vpop.f32.mrb[0].mxu0
      %1733 = vmatprep.mubr.bf16.mxu0 0
      %1734 = vmatmul.mubr.bf16.gmra.mrb[0].mxu0 %v1279
      %v1735 = vpop.f32.mrb[0].mxu0
      %v1736 = vadd.f32 %v1663, %v1735
      %v1737 = vpop.f32.mrb[0].mxu0
      %v1738 = vpop.f32.mrb[0].mxu0
      %v1739 = vadd.f32 %v1663, %v1738
      %v1740 = vpop.f32.mrb[0].mxu0
      %1741 = vmatprep.mubr.bf16.mxu0 0
      %1742 = vmatmul.mubr.bf16.gmra.mrb[0].mxu0 %v1282
      %v1743 = vpop.f32.mrb[0].mxu0
      %v1744 = vadd.f32 %v1663, %v1743
      %v1745 = vpop.f32.mrb[0].mxu0
      %v1746 = vpop.f32.mrb[0].mxu0
      %v1747 = vadd.f32 %v1663, %v1746
      %v1748 = vpop.f32.mrb[0].mxu0
      %1749 = vmatprep.mubr.bf16.mxu0 0
      %1750 = vmatmul.mubr.bf16.gmra.mrb[0].mxu0 %v1285
      %v1751 = vpop.f32.mrb[0].mxu0
      %v1752 = vadd.f32 %v1663, %v1751
      %v1753 = vpop.f32.mrb[0].mxu0
      %v1754 = vpop.f32.mrb[0].mxu0
      %v1755 = vadd.f32 %v1663, %v1754
      %v1756 = vpop.f32.mrb[0].mxu0
      %1757 = vmatprep.mubr.bf16.mxu0 0
      %1758 = vmatmul.mubr.bf16.gmra.mrb[0].mxu0 %v1288
      %v1759 = vpop.f32.mrb[0].mxu0
      %v1760 = vadd.f32 %v1663, %v1759
      %v1761 = vpop.f32.mrb[0].mxu0
      %v1762 = vpop.f32.mrb[0].mxu0
      %v1763 = vadd.f32 %v1663, %v1762
      %v1764 = vpop.f32.mrb[0].mxu0
      %1765 = vmatprep.mubr.bf16.mxu0 0
      %1766 = vmatmul.mubr.bf16.gmra.mrb[0].mxu0 %v1291
      %v1767 = vpop.f32.mrb[0].mxu0
      %v1768 = vadd.f32 %v1663, %v1767
      %v1769 = vpop.f32.mrb[0].mxu0
      %v1770 = vpop.f32.mrb[0].mxu0
      %v1771 = vadd.f32 %v1663, %v1770
      %v1772 = vpop.f32.mrb[0].mxu0
      %1773 = vmatprep.mubr.bf16.mxu0 0
      %1774 = vmatmul.mubr.bf16.gmra.mrb[0].mxu0 %v1294
      %v1775 = vpop.f32.mrb[0].mxu0
      %v1776 = vadd.f32 %v1663, %v1775
      %v1777 = vpop.f32.mrb[0].mxu0
      %v1778 = vpop.f32.mrb[0].mxu0
      %v1779 = vadd.f32 %v1663, %v1778
      %v1780 = vpop.f32.mrb[0].mxu0
      %1781 = vmatprep.mubr.bf16.mxu0 0
      %1782 = vmatmul.mubr.bf16.gmra.mrb[0].mxu0 %v1297
      %v1783 = vpop.f32.mrb[0].mxu0
      %v1784 = vadd.f32 %v1663, %v1783
      %v1785 = vpop.f32.mrb[0].mxu0
      %v1786 = vpop.f32.mrb[0].mxu0
      %v1787 = vadd.f32 %v1663, %v1786
      %v1788 = vpop.f32.mrb[0].mxu0
      %1789 = vmatprep.mubr.bf16.mxu0 0
      %1790 = vmatmul.mubr.bf16.gmra.mrb[0].mxu0 %v1300
      %v1791 = vpop.f32.mrb[0].mxu0
      %v1792 = vadd.f32 %v1663, %v1791
      %v1793 = vpop.f32.mrb[0].mxu0
      %v1794 = vpop.f32.mrb[0].mxu0
      %v1795 = vadd.f32 %v1663, %v1794
      %v1796 = vpop.f32.mrb[0].mxu0
      %1797 = vmatprep.mubr.bf16.mxu0 0
      %1798 = vmatmul.mubr.bf16.gmra.mrb[0].mxu0 %v1303
      %v1799 = vpop.f32.mrb[0].mxu0
      %v1800 = vadd.f32 %v1663, %v1799
      %v1801 = vpop.f32.mrb[0].mxu0
      %v1802 = vpop.f32.mrb[0].mxu0
      %v1803 = vadd.f32 %v1663, %v1802
      %v1804 = vpop.f32.mrb[0].mxu0
      %1805 = vmatprep.mubr.bf16.mxu0 0
      %1806 = vmatmul.mubr.bf16.gmra.mrb[0].mxu0 %v1306
      %v1807 = vpop.f32.mrb[0].mxu0
      %v1808 = vadd.f32 %v1663, %v1807
      %v1809 = vpop.f32.mrb[0].mxu0
      %v1810 = vpop.f32.mrb[0].mxu0
      %v1811 = vadd.f32 %v1663, %v1810
      %v1812 = vpop.f32.mrb[0].mxu0
      %1813 = vmatprep.mubr.bf16.mxu0 0
      %1814 = vmatmul.mubr.bf16.gmra.mrb[0].mxu0 %v1309
      %v1815 = vpop.f32.mrb[0].mxu0
      %v1816 = vadd.f32 %v1663, %v1815
      %v1817 = vpop.f32.mrb[0].mxu0
      %v1818 = vpop.f32.mrb[0].mxu0
      %v1819 = vadd.f32 %v1663, %v1818
      %v1820 = vpop.f32.mrb[0].mxu0
      %1821 = vmatprep.mubr.bf16.mxu0 0
      %1822 = vmatmul.mubr.bf16.gmra.mrb[0].mxu0 %v1312
      %v1823 = vpop.f32.mrb[0].mxu0
      %v1824 = vadd.f32 %v1663, %v1823
      %v1825 = vpop.f32.mrb[0].mxu0
      %v1826 = vpop.f32.mrb[0].mxu0
      %v1827 = vadd.f32 %v1663, %v1826
      %v1828 = vpop.f32.mrb[0].mxu0
      %1829 = vmatprep.mubr.bf16.mxu0 0
      %1830 = vmatmul.mubr.bf16.gmra.mrb[0].mxu0 %v1315
      %v1831 = vpop.f32.mrb[0].mxu0
      %v1832 = vadd.f32 %v1663, %v1831
      %v1833 = vpop.f32.mrb[0].mxu0
      %v1834 = vpop.f32.mrb[0].mxu0
      %v1835 = vadd.f32 %v1663, %v1834
      %v1836 = vpop.f32.mrb[0].mxu0
      %1837 = vmatprep.mubr.bf16.mxu0 0
      %1838 = vmatmul.mubr.bf16.gmra.mrb[0].mxu0 %v1318
      %v1839 = vpop.f32.mrb[0].mxu0
      %v1840 = vadd.f32 %v1663, %v1839
      %v1841 = vpop.f32.mrb[0].mxu0
      %v1842 = vpop.f32.mrb[0].mxu0
      %v1843 = vadd.f32 %v1663, %v1842
      %v1844 = vpop.f32.mrb[0].mxu0
      %1845 = vmatprep.mubr.bf16.mxu0 0
      %1846 = vmatmul.mubr.bf16.gmra.mrb[0].mxu0 %v1321
      %v1847 = vpop.f32.mrb[0].mxu0
      %v1848 = vadd.f32 %v1663, %v1847
      %v1849 = vpop.f32.mrb[0].mxu0
      %v1850 = vpop.f32.mrb[0].mxu0
      %v1851 = vadd.f32 %v1663, %v1850
      %v1852 = vpop.f32.mrb[0].mxu0
      %1853 = vmatprep.mubr.bf16.mxu0 0
      %1854 = vmatmul.mubr.bf16.gmra.mrb[0].mxu0 %v1324
      %v1855 = vpop.f32.mrb[0].mxu0
      %v1856 = vadd.f32 %v1663, %v1855
      %v1857 = vpop.f32.mrb[0].mxu0
      %v1858 = vpop.f32.mrb[0].mxu0
      %v1859 = vadd.f32 %v1663, %v1858
      %v1860 = vpop.f32.mrb[0].mxu0
      %1861 = vmatprep.mubr.bf16.mxu0 0
      %1862 = vmatmul.mubr.bf16.gmra.mrb[0].mxu0 %v1327
      %v1863 = vpop.f32.mrb[0].mxu0
      %v1864 = vadd.f32 %v1663, %v1863
      %v1865 = vpop.f32.mrb[0].mxu0
      %v1866 = vpop.f32.mrb[0].mxu0
      %v1867 = vadd.f32 %v1663, %v1866
      %v1868 = vpop.f32.mrb[0].mxu0
      %1869 = vmatprep.mubr.bf16.mxu0 0
      %1870 = vmatmul.mubr.bf16.gmra.mrb[0].mxu0 %v1330
      %v1871 = vpop.f32.mrb[0].mxu0
      %v1872 = vadd.f32 %v1663, %v1871
      %v1873 = vpop.f32.mrb[0].mxu0
      %v1874 = vpop.f32.mrb[0].mxu0
      %v1875 = vadd.f32 %v1663, %v1874
      %v1876 = vpop.f32.mrb[0].mxu0
      %1877 = vmatprep.mubr.bf16.mxu0 0
      %1878 = vmatmul.mubr.bf16.gmra.mrb[0].mxu0 %v1333
      %v1879 = vpop.f32.mrb[0].mxu0
      %v1880 = vadd.f32 %v1663, %v1879
      %v1881 = vpop.f32.mrb[0].mxu0
      %v1882 = vpop.f32.mrb[0].mxu0
      %v1883 = vadd.f32 %v1663, %v1882
      %v1884 = vpop.f32.mrb[0].mxu0
      %1885 = vmatprep.mubr.bf16.mxu0 0
      %1886 = vmatmul.mubr.bf16.gmra.mrb[0].mxu0 %v1336
      %v1887 = vpop.f32.mrb[0].mxu0
      %v1888 = vadd.f32 %v1663, %v1887
      %v1889 = vpop.f32.mrb[0].mxu0
      %v1890 = vpop.f32.mrb[0].mxu0
      %v1891 = vadd.f32 %v1663, %v1890
      %v1892 = vpop.f32.mrb[0].mxu0
      %1893 = vmatprep.mubr.bf16.mxu0 0
      %1894 = vmatmul.mubr.bf16.gmra.mrb[0].mxu0 %v1339
      %v1895 = vpop.f32.mrb[0].mxu0
      %v1896 = vadd.f32 %v1663, %v1895
      %v1897 = vpop.f32.mrb[0].mxu0
      %v1898 = vpop.f32.mrb[0].mxu0
      %v1899 = vadd.f32 %v1663, %v1898
      %v1900 = vpop.f32.mrb[0].mxu0
      %1901 = vmatprep.mubr.bf16.mxu0 0
      %1902 = vmatmul.mubr.bf16.gmra.mrb[0].mxu0 %v1342
      %v1903 = vpop.f32.mrb[0].mxu0
      %v1904 = vadd.f32 %v1663, %v1903
      %v1905 = vpop.f32.mrb[0].mxu0
      %v1906 = vpop.f32.mrb[0].mxu0
      %v1907 = vadd.f32 %v1663, %v1906
      %v1908 = vpop.f32.mrb[0].mxu0
      %1909 = vmatprep.mubr.bf16.mxu0 0
      %1910 = vmatmul.mubr.bf16.gmra.mrb[0].mxu0 %v1345
      %v1911 = vpop.f32.mrb[0].mxu0
      %v1912 = vadd.f32 %v1663, %v1911
      %v1913 = vpop.f32.mrb[0].mxu0
      %v1914 = vpop.f32.mrb[0].mxu0
      %v1915 = vadd.f32 %v1663, %v1914
      %v1916 = vpop.f32.mrb[0].mxu0
      %1917 = vmatprep.mubr.bf16.mxu0 0
      %1918 = vmatmul.mubr.bf16.gmra.mrb[0].mxu0 %v1348
      %v1919 = vpop.f32.mrb[0].mxu0
      %v1920 = vadd.f32 %v1663, %v1919
      %v1921 = vpop.f32.mrb[0].mxu0
      %v1922 = vpop.f32.mrb[0].mxu0
      %v1923 = vadd.f32 %v1663, %v1922
      %v1924 = vpop.f32.mrb[0].mxu0
      %1925 = vmatprep.mubr.bf16.mxu0 0
      %1926 = vmatmul.mubr.bf16.gmra.mrb[0].mxu0 %v1351
      %v1927 = vpop.f32.mrb[0].mxu0
      %v1928 = vadd.f32 %v1663, %v1927
      %v1929 = vpop.f32.mrb[0].mxu0
      %v1930 = vpop.f32.mrb[0].mxu0
      %v1931 = vadd.f32 %v1663, %v1930
      %v1932 = vpop.f32.mrb[0].mxu0
      %1933 = vmatprep.mubr.bf16.mxu0 0
      %1934 = vmatmul.mubr.bf16.gmra.mrb[0].mxu0 %v1354
      %v1935 = vpop.f32.mrb[0].mxu0
      %v1936 = vadd.f32 %v1663, %v1935
      %v1937 = vpop.f32.mrb[0].mxu0
      %v1938 = vpop.f32.mrb[0].mxu0
      %v1939 = vadd.f32 %v1663, %v1938
      %v1940 = vpop.f32.mrb[0].mxu0
      %1941 = vmatprep.mubr.bf16.mxu0 0
      %1942 = vmatmul.mubr.bf16.gmra.mrb[0].mxu0 %v1357
      %v1943 = vpop.f32.mrb[0].mxu0
      %v1944 = vadd.f32 %v1663, %v1943
      %v1945 = vpop.f32.mrb[0].mxu0
      %v1946 = vpop.f32.mrb[0].mxu0
      %v1947 = vadd.f32 %v1663, %v1946
      %v1948 = vpop.f32.mrb[0].mxu0
      %1949 = vmatprep.mubr.bf16.mxu0 0
      %1950 = vmatmul.mubr.bf16.gmra.mrb[0].mxu0 %v1360
      %v1951 = vpop.f32.mrb[0].mxu0
      %v1952 = vadd.f32 %v1663, %v1951
      %v1953 = vpop.f32.mrb[0].mxu0
      %v1954 = vpop.f32.mrb[0].mxu0
      %v1955 = vadd.f32 %v1663, %v1954
      %v1956 = vpop.f32.mrb[0].mxu0
      %1957 = vmatprep.mubr.bf16.mxu0 0
      %1958 = vmatmul.mubr.bf16.gmra.mrb[0].mxu0 %v1363
      %v1959 = vpop.f32.mrb[0].mxu0
      %v1960 = vadd.f32 %v1663, %v1959
      %v1961 = vpop.f32.mrb[0].mxu0
      %v1962 = vpop.f32.mrb[0].mxu0
      %v1963 = vadd.f32 %v1663, %v1962
      %v1964 = vpop.f32.mrb[0].mxu0
      %1965 = vdwg.mxu0
      %v1966 = vld [vmem:[%s8] sm:$0xf]
      %v1967 = vld [vmem:[%s8 + $0x4] sm:$0xf]
      %v1968 = vld [vmem:[%s8 + $0x8] sm:$0xf]
      %v1969 = vld [vmem:[%s8 + $0xc] sm:$0xf]
      %v1970 = vld [vmem:[%s9] sm:$0x1]
      %v1972 = vlaneseq
      %v1973 = vshrl.u32 %v1972, 7
      %v1974 = vsub.s32 0, %v1973
      %v1975 = vrot.slane %v1970, %v1974
      %v1981 = vunpack.c.l.b16 %v1966
      %v1982 = vunpack.c.l.b16 %v1967
      %v1983 = vunpack.c.l.b16 %v1968
      %v1984 = vunpack.c.l.b16 %v1969
      %v1985 = vpack.c.b16 %v1982, %v1981
      %v1986 = vpack.c.b16 %v1984, %v1983
      %1989 = vmatprep.subr.bf16.mxu0 0
      %1990 = vmatpush1.bf16.msra.mxu0 %v1985
      %1991 = vmatprep.subr.bf16.mxu0 0
      %1992 = vmatpush1.bf16.msra.mxu0 %v1986
      %1993 = vmatprep.subr.bf16.mxu0 0
      %1994 = vmatpush1.bf16.msra.mxu0 0
      %1995 = vmatprep.subr.bf16.mxu0 0
      %1996 = vmatpush1.bf16.msra.mxu0 0
      %1997 = vmatprep.subr.bf16.mxu0 0
      %1998 = vmatpush1.bf16.msra.mxu0 0
      %1999 = vmatprep.subr.bf16.mxu0 0
      %2000 = vmatpush1.bf16.msra.mxu0 0
      %2001 = vmatprep.subr.bf16.mxu0 0
      %2002 = vmatpush1.bf16.msra.mxu0 0
      %2003 = vmatprep.subr.bf16.mxu0 0
      %2004 = vmatpush1.bf16.msra.mxu0 0
      %2005 = vmatprep.subr.bf16.mxu0 0
      %2006 = vmatpush1.bf16.msra.mxu0 0
      %2007 = vmatprep.subr.bf16.mxu0 0
      %2008 = vmatpush1.bf16.msra.mxu0 0
      %2009 = vmatprep.subr.bf16.mxu0 0
      %2010 = vmatpush1.bf16.msra.mxu0 0
      %2011 = vmatprep.subr.bf16.mxu0 0
      %2012 = vmatpush1.bf16.msra.mxu0 0
      %2013 = vmatprep.subr.bf16.mxu0 0
      %2014 = vmatpush1.bf16.msra.mxu0 0
      %2015 = vmatprep.subr.bf16.mxu0 0
      %2016 = vmatpush1.bf16.msra.mxu0 0
      %2017 = vmatprep.subr.bf16.mxu0 0
      %2018 = vmatpush1.bf16.msra.mxu0 0
      %2019 = vmatprep.subr.bf16.mxu0 0
      %2020 = vmatpush1.bf16.msra.mxu0 0
      %2021 = vmatprep.mubr.bf16.mxu0 0
      %2022 = vmatmul.mubr.bf16.gmra.mrb[0].mxu0 %v1270
      %v2023 = vpop.f32.mrb[0].mxu0
      %v2024 = vadd.f32 %v1975, %v2023
      %v2025 = vpop.f32.mrb[0].mxu0
      %v2026 = vpop.f32.mrb[0].mxu0
      %v2027 = vadd.f32 %v1975, %v2026
      %v2028 = vpop.f32.mrb[0].mxu0
      %2029 = vmatprep.mubr.bf16.mxu0 0
      %2030 = vmatmul.mubr.bf16.gmra.mrb[0].mxu0 %v1273
      %v2031 = vpop.f32.mrb[0].mxu0
      %v2032 = vadd.f32 %v1975, %v2031
      %v2033 = vpop.f32.mrb[0].mxu0
      %v2034 = vpop.f32.mrb[0].mxu0
      %v2035 = vadd.f32 %v1975, %v2034
      %v2036 = vpop.f32.mrb[0].mxu0
      %2037 = vmatprep.mubr.bf16.mxu0 0
      %2038 = vmatmul.mubr.bf16.gmra.mrb[0].mxu0 %v1276
      %v2039 = vpop.f32.mrb[0].mxu0
      %v2040 = vadd.f32 %v1975, %v2039
      %v2041 = vpop.f32.mrb[0].mxu0
      %v2042 = vpop.f32.mrb[0].mxu0
      %v2043 = vadd.f32 %v1975, %v2042
      %v2044 = vpop.f32.mrb[0].mxu0
      %2045 = vmatprep.mubr.bf16.mxu0 0
      %2046 = vmatmul.mubr.bf16.gmra.mrb[0].mxu0 %v1279
      %v2047 = vpop.f32.mrb[0].mxu0
      %v2048 = vadd.f32 %v1975, %v2047
      %v2049 = vpop.f32.mrb[0].mxu0
      %v2050 = vpop.f32.mrb[0].mxu0
      %v2051 = vadd.f32 %v1975, %v2050
      %v2052 = vpop.f32.mrb[0].mxu0
      %2053 = vmatprep.mubr.bf16.mxu0 0
      %2054 = vmatmul.mubr.bf16.gmra.mrb[0].mxu0 %v1282
      %v2055 = vpop.f32.mrb[0].mxu0
      %v2056 = vadd.f32 %v1975, %v2055
      %v2057 = vpop.f32.mrb[0].mxu0
      %v2058 = vpop.f32.mrb[0].mxu0
      %v2059 = vadd.f32 %v1975, %v2058
      %v2060 = vpop.f32.mrb[0].mxu0
      %2061 = vmatprep.mubr.bf16.mxu0 0
      %2062 = vmatmul.mubr.bf16.gmra.mrb[0].mxu0 %v1285
      %v2063 = vpop.f32.mrb[0].mxu0
      %v2064 = vadd.f32 %v1975, %v2063
      %v2065 = vpop.f32.mrb[0].mxu0
      %v2066 = vpop.f32.mrb[0].mxu0
      %v2067 = vadd.f32 %v1975, %v2066
      %v2068 = vpop.f32.mrb[0].mxu0
      %2069 = vmatprep.mubr.bf16.mxu0 0
      %2070 = vmatmul.mubr.bf16.gmra.mrb[0].mxu0 %v1288
      %v2071 = vpop.f32.mrb[0].mxu0
      %v2072 = vadd.f32 %v1975, %v2071
      %v2073 = vpop.f32.mrb[0].mxu0
      %v2074 = vpop.f32.mrb[0].mxu0
      %v2075 = vadd.f32 %v1975, %v2074
      %v2076 = vpop.f32.mrb[0].mxu0
      %2077 = vmatprep.mubr.bf16.mxu0 0
      %2078 = vmatmul.mubr.bf16.gmra.mrb[0].mxu0 %v1291
      %v2079 = vpop.f32.mrb[0].mxu0
      %v2080 = vadd.f32 %v1975, %v2079
      %v2081 = vpop.f32.mrb[0].mxu0
      %v2082 = vpop.f32.mrb[0].mxu0
      %v2083 = vadd.f32 %v1975, %v2082
      %v2084 = vpop.f32.mrb[0].mxu0
      %2085 = vmatprep.mubr.bf16.mxu0 0
      %2086 = vmatmul.mubr.bf16.gmra.mrb[0].mxu0 %v1294
      %v2087 = vpop.f32.mrb[0].mxu0
      %v2088 = vadd.f32 %v1975, %v2087
      %v2089 = vpop.f32.mrb[0].mxu0
      %v2090 = vpop.f32.mrb[0].mxu0
      %v2091 = vadd.f32 %v1975, %v2090
      %v2092 = vpop.f32.mrb[0].mxu0
      %2093 = vmatprep.mubr.bf16.mxu0 0
      %2094 = vmatmul.mubr.bf16.gmra.mrb[0].mxu0 %v1297
      %v2095 = vpop.f32.mrb[0].mxu0
      %v2096 = vadd.f32 %v1975, %v2095
      %v2097 = vpop.f32.mrb[0].mxu0
      %v2098 = vpop.f32.mrb[0].mxu0
      %v2099 = vadd.f32 %v1975, %v2098
      %v2100 = vpop.f32.mrb[0].mxu0
      %2101 = vmatprep.mubr.bf16.mxu0 0
      %2102 = vmatmul.mubr.bf16.gmra.mrb[0].mxu0 %v1300
      %v2103 = vpop.f32.mrb[0].mxu0
      %v2104 = vadd.f32 %v1975, %v2103
      %v2105 = vpop.f32.mrb[0].mxu0
      %v2106 = vpop.f32.mrb[0].mxu0
      %v2107 = vadd.f32 %v1975, %v2106
      %v2108 = vpop.f32.mrb[0].mxu0
      %2109 = vmatprep.mubr.bf16.mxu0 0
      %2110 = vmatmul.mubr.bf16.gmra.mrb[0].mxu0 %v1303
      %v2111 = vpop.f32.mrb[0].mxu0
      %v2112 = vadd.f32 %v1975, %v2111
      %v2113 = vpop.f32.mrb[0].mxu0
      %v2114 = vpop.f32.mrb[0].mxu0
      %v2115 = vadd.f32 %v1975, %v2114
      %v2116 = vpop.f32.mrb[0].mxu0
      %2117 = vmatprep.mubr.bf16.mxu0 0
      %2118 = vmatmul.mubr.bf16.gmra.mrb[0].mxu0 %v1306
      %v2119 = vpop.f32.mrb[0].mxu0
      %v2120 = vadd.f32 %v1975, %v2119
      %v2121 = vpop.f32.mrb[0].mxu0
      %v2122 = vpop.f32.mrb[0].mxu0
      %v2123 = vadd.f32 %v1975, %v2122
      %v2124 = vpop.f32.mrb[0].mxu0
      %2125 = vmatprep.mubr.bf16.mxu0 0
      %2126 = vmatmul.mubr.bf16.gmra.mrb[0].mxu0 %v1309
      %v2127 = vpop.f32.mrb[0].mxu0
      %v2128 = vadd.f32 %v1975, %v2127
      %v2129 = vpop.f32.mrb[0].mxu0
      %v2130 = vpop.f32.mrb[0].mxu0
      %v2131 = vadd.f32 %v1975, %v2130
      %v2132 = vpop.f32.mrb[0].mxu0
      %2133 = vmatprep.mubr.bf16.mxu0 0
      %2134 = vmatmul.mubr.bf16.gmra.mrb[0].mxu0 %v1312
      %v2135 = vpop.f32.mrb[0].mxu0
      %v2136 = vadd.f32 %v1975, %v2135
      %v2137 = vpop.f32.mrb[0].mxu0
      %v2138 = vpop.f32.mrb[0].mxu0
      %v2139 = vadd.f32 %v1975, %v2138
      %v2140 = vpop.f32.mrb[0].mxu0
      %2141 = vmatprep.mubr.bf16.mxu0 0
      %2142 = vmatmul.mubr.bf16.gmra.mrb[0].mxu0 %v1315
      %v2143 = vpop.f32.mrb[0].mxu0
      %v2144 = vadd.f32 %v1975, %v2143
      %v2145 = vpop.f32.mrb[0].mxu0
      %v2146 = vpop.f32.mrb[0].mxu0
      %v2147 = vadd.f32 %v1975, %v2146
      %v2148 = vpop.f32.mrb[0].mxu0
      %2149 = vmatprep.mubr.bf16.mxu0 0
      %2150 = vmatmul.mubr.bf16.gmra.mrb[0].mxu0 %v1318
      %v2151 = vpop.f32.mrb[0].mxu0
      %v2152 = vadd.f32 %v1975, %v2151
      %v2153 = vpop.f32.mrb[0].mxu0
      %v2154 = vpop.f32.mrb[0].mxu0
      %v2155 = vadd.f32 %v1975, %v2154
      %v2156 = vpop.f32.mrb[0].mxu0
      %2157 = vmatprep.mubr.bf16.mxu0 0
      %2158 = vmatmul.mubr.bf16.gmra.mrb[0].mxu0 %v1321
      %v2159 = vpop.f32.mrb[0].mxu0
      %v2160 = vadd.f32 %v1975, %v2159
      %v2161 = vpop.f32.mrb[0].mxu0
      %v2162 = vpop.f32.mrb[0].mxu0
      %v2163 = vadd.f32 %v1975, %v2162
      %v2164 = vpop.f32.mrb[0].mxu0
      %2165 = vmatprep.mubr.bf16.mxu0 0
      %2166 = vmatmul.mubr.bf16.gmra.mrb[0].mxu0 %v1324
      %v2167 = vpop.f32.mrb[0].mxu0
      %v2168 = vadd.f32 %v1975, %v2167
      %v2169 = vpop.f32.mrb[0].mxu0
      %v2170 = vpop.f32.mrb[0].mxu0
      %v2171 = vadd.f32 %v1975, %v2170
      %v2172 = vpop.f32.mrb[0].mxu0
      %2173 = vmatprep.mubr.bf16.mxu0 0
      %2174 = vmatmul.mubr.bf16.gmra.mrb[0].mxu0 %v1327
      %v2175 = vpop.f32.mrb[0].mxu0
      %v2176 = vadd.f32 %v1975, %v2175
      %v2177 = vpop.f32.mrb[0].mxu0
      %v2178 = vpop.f32.mrb[0].mxu0
      %v2179 = vadd.f32 %v1975, %v2178
      %v2180 = vpop.f32.mrb[0].mxu0
      %2181 = vmatprep.mubr.bf16.mxu0 0
      %2182 = vmatmul.mubr.bf16.gmra.mrb[0].mxu0 %v1330
      %v2183 = vpop.f32.mrb[0].mxu0
      %v2184 = vadd.f32 %v1975, %v2183
      %v2185 = vpop.f32.mrb[0].mxu0
      %v2186 = vpop.f32.mrb[0].mxu0
      %v2187 = vadd.f32 %v1975, %v2186
      %v2188 = vpop.f32.mrb[0].mxu0
      %2189 = vmatprep.mubr.bf16.mxu0 0
      %2190 = vmatmul.mubr.bf16.gmra.mrb[0].mxu0 %v1333
      %v2191 = vpop.f32.mrb[0].mxu0
      %v2192 = vadd.f32 %v1975, %v2191
      %v2193 = vpop.f32.mrb[0].mxu0
      %v2194 = vpop.f32.mrb[0].mxu0
      %v2195 = vadd.f32 %v1975, %v2194
      %v2196 = vpop.f32.mrb[0].mxu0
      %2197 = vmatprep.mubr.bf16.mxu0 0
      %2198 = vmatmul.mubr.bf16.gmra.mrb[0].mxu0 %v1336
      %v2199 = vpop.f32.mrb[0].mxu0
      %v2200 = vadd.f32 %v1975, %v2199
      %v2201 = vpop.f32.mrb[0].mxu0
      %v2202 = vpop.f32.mrb[0].mxu0
      %v2203 = vadd.f32 %v1975, %v2202
      %v2204 = vpop.f32.mrb[0].mxu0
      %2205 = vmatprep.mubr.bf16.mxu0 0
      %2206 = vmatmul.mubr.bf16.gmra.mrb[0].mxu0 %v1339
      %v2207 = vpop.f32.mrb[0].mxu0
      %v2208 = vadd.f32 %v1975, %v2207
      %v2209 = vpop.f32.mrb[0].mxu0
      %v2210 = vpop.f32.mrb[0].mxu0
      %v2211 = vadd.f32 %v1975, %v2210
      %v2212 = vpop.f32.mrb[0].mxu0
      %2213 = vmatprep.mubr.bf16.mxu0 0
      %2214 = vmatmul.mubr.bf16.gmra.mrb[0].mxu0 %v1342
      %v2215 = vpop.f32.mrb[0].mxu0
      %v2216 = vadd.f32 %v1975, %v2215
      %v2217 = vpop.f32.mrb[0].mxu0
      %v2218 = vpop.f32.mrb[0].mxu0
      %v2219 = vadd.f32 %v1975, %v2218
      %v2220 = vpop.f32.mrb[0].mxu0
      %2221 = vmatprep.mubr.bf16.mxu0 0
      %2222 = vmatmul.mubr.bf16.gmra.mrb[0].mxu0 %v1345
      %v2223 = vpop.f32.mrb[0].mxu0
      %v2224 = vadd.f32 %v1975, %v2223
      %v2225 = vpop.f32.mrb[0].mxu0
      %v2226 = vpop.f32.mrb[0].mxu0
      %v2227 = vadd.f32 %v1975, %v2226
      %v2228 = vpop.f32.mrb[0].mxu0
      %2229 = vmatprep.mubr.bf16.mxu0 0
      %2230 = vmatmul.mubr.bf16.gmra.mrb[0].mxu0 %v1348
      %v2231 = vpop.f32.mrb[0].mxu0
      %v2232 = vadd.f32 %v1975, %v2231
      %v2233 = vpop.f32.mrb[0].mxu0
      %v2234 = vpop.f32.mrb[0].mxu0
      %v2235 = vadd.f32 %v1975, %v2234
      %v2236 = vpop.f32.mrb[0].mxu0
      %2237 = vmatprep.mubr.bf16.mxu0 0
      %2238 = vmatmul.mubr.bf16.gmra.mrb[0].mxu0 %v1351
      %v2239 = vpop.f32.mrb[0].mxu0
      %v2240 = vadd.f32 %v1975, %v2239
      %v2241 = vpop.f32.mrb[0].mxu0
      %v2242 = vpop.f32.mrb[0].mxu0
      %v2243 = vadd.f32 %v1975, %v2242
      %v2244 = vpop.f32.mrb[0].mxu0
      %2245 = vmatprep.mubr.bf16.mxu0 0
      %2246 = vmatmul.mubr.bf16.gmra.mrb[0].mxu0 %v1354
      %v2247 = vpop.f32.mrb[0].mxu0
      %v2248 = vadd.f32 %v1975, %v2247
      %v2249 = vpop.f32.mrb[0].mxu0
      %v2250 = vpop.f32.mrb[0].mxu0
      %v2251 = vadd.f32 %v1975, %v2250
      %v2252 = vpop.f32.mrb[0].mxu0
      %2253 = vmatprep.mubr.bf16.mxu0 0
      %2254 = vmatmul.mubr.bf16.gmra.mrb[0].mxu0 %v1357
      %v2255 = vpop.f32.mrb[0].mxu0
      %v2256 = vadd.f32 %v1975, %v2255
      %v2257 = vpop.f32.mrb[0].mxu0
      %v2258 = vpop.f32.mrb[0].mxu0
      %v2259 = vadd.f32 %v1975, %v2258
      %v2260 = vpop.f32.mrb[0].mxu0
      %2261 = vmatprep.mubr.bf16.mxu0 0
      %2262 = vmatmul.mubr.bf16.gmra.mrb[0].mxu0 %v1360
      %v2263 = vpop.f32.mrb[0].mxu0
      %v2264 = vadd.f32 %v1975, %v2263
      %v2265 = vpop.f32.mrb[0].mxu0
      %v2266 = vpop.f32.mrb[0].mxu0
      %v2267 = vadd.f32 %v1975, %v2266
      %v2268 = vpop.f32.mrb[0].mxu0
      %2269 = vmatprep.mubr.bf16.mxu0 0
      %2270 = vmatmul.mubr.bf16.gmra.mrb[0].mxu0 %v1363
      %v2271 = vpop.f32.mrb[0].mxu0
      %v2272 = vadd.f32 %v1975, %v2271
      %v2273 = vpop.f32.mrb[0].mxu0
      %v2274 = vpop.f32.mrb[0].mxu0
      %v2275 = vadd.f32 %v1975, %v2274
      %v2276 = vpop.f32.mrb[0].mxu0
      %2277 = vdwg.mxu0
      %v2278 = vmul.f32 %v1400, 0.17677669
      %v2279 = vmul.f32 %v1403, 0.17677669
      %v2280 = vmul.f32 %v1408, 0.17677669
      %v2281 = vmul.f32 %v1411, 0.17677669
      %v2282 = vmul.f32 %v1416, 0.17677669
      %v2283 = vmul.f32 %v1419, 0.17677669
      %v2284 = vmul.f32 %v1424, 0.17677669
      %v2285 = vmul.f32 %v1427, 0.17677669
      %v2286 = vmul.f32 %v1432, 0.17677669
      %v2287 = vmul.f32 %v1435, 0.17677669
      %v2288 = vmul.f32 %v1440, 0.17677669
      %v2289 = vmul.f32 %v1443, 0.17677669
      %v2290 = vmul.f32 %v1448, 0.17677669
      %v2291 = vmul.f32 %v1451, 0.17677669
      %v2292 = vmul.f32 %v1456, 0.17677669
      %v2293 = vmul.f32 %v1459, 0.17677669
      %v2294 = vmul.f32 %v1464, 0.17677669
      %v2295 = vmul.f32 %v1467, 0.17677669
      %v2296 = vmul.f32 %v1472, 0.17677669
      %v2297 = vmul.f32 %v1475, 0.17677669
      %v2298 = vmul.f32 %v1480, 0.17677669
      %v2299 = vmul.f32 %v1483, 0.17677669
      %v2300 = vmul.f32 %v1488, 0.17677669
      %v2301 = vmul.f32 %v1491, 0.17677669
      %v2302 = vmul.f32 %v1496, 0.17677669
      %v2303 = vmul.f32 %v1499, 0.17677669
      %v2304 = vmul.f32 %v1504, 0.17677669
      %v2305 = vmul.f32 %v1507, 0.17677669
      %v2306 = vmul.f32 %v1512, 0.17677669
      %v2307 = vmul.f32 %v1515, 0.17677669
      %v2308 = vmul.f32 %v1520, 0.17677669
      %v2309 = vmul.f32 %v1523, 0.17677669
      %v2310 = vmul.f32 %v1528, 0.17677669
      %v2311 = vmul.f32 %v1531, 0.17677669
      %v2312 = vmul.f32 %v1536, 0.17677669
      %v2313 = vmul.f32 %v1539, 0.17677669
      %v2314 = vmul.f32 %v1544, 0.17677669
      %v2315 = vmul.f32 %v1547, 0.17677669
      %v2316 = vmul.f32 %v1552, 0.17677669
      %v2317 = vmul.f32 %v1555, 0.17677669
      %v2318 = vmul.f32 %v1560, 0.17677669
      %v2319 = vmul.f32 %v1563, 0.17677669
      %v2320 = vmul.f32 %v1568, 0.17677669
      %v2321 = vmul.f32 %v1571, 0.17677669
      %v2322 = vmul.f32 %v1576, 0.17677669
      %v2323 = vmul.f32 %v1579, 0.17677669
      %v2324 = vmul.f32 %v1584, 0.17677669
      %v2325 = vmul.f32 %v1587, 0.17677669
      %v2326 = vmul.f32 %v1592, 0.17677669
      %v2327 = vmul.f32 %v1595, 0.17677669
      %v2328 = vmul.f32 %v1600, 0.17677669
      %v2329 = vmul.f32 %v1603, 0.17677669
      %v2330 = vmul.f32 %v1608, 0.17677669
      %v2331 = vmul.f32 %v1611, 0.17677669
      %v2332 = vmul.f32 %v1616, 0.17677669
      %v2333 = vmul.f32 %v1619, 0.17677669
      %v2334 = vmul.f32 %v1624, 0.17677669
      %v2335 = vmul.f32 %v1627, 0.17677669
      %v2336 = vmul.f32 %v1632, 0.17677669
      %v2337 = vmul.f32 %v1635, 0.17677669
      %v2338 = vmul.f32 %v1640, 0.17677669
      %v2339 = vmul.f32 %v1643, 0.17677669
      %v2340 = vmul.f32 %v1648, 0.17677669
      %v2341 = vmul.f32 %v1651, 0.17677669
      %v2342 = vpack.c.bf16 %v2279, %v2278
      %v2343 = vpack.c.bf16 %v2281, %v2280
      %v2344 = vpack.c.bf16 %v2283, %v2282
      %v2345 = vpack.c.bf16 %v2285, %v2284
      %v2346 = vpack.c.bf16 %v2287, %v2286
      %v2347 = vpack.c.bf16 %v2289, %v2288
      %v2348 = vpack.c.bf16 %v2291, %v2290
      %v2349 = vpack.c.bf16 %v2293, %v2292
      %v2350 = vpack.c.bf16 %v2295, %v2294
      %v2351 = vpack.c.bf16 %v2297, %v2296
      %v2352 = vpack.c.bf16 %v2299, %v2298
      %v2353 = vpack.c.bf16 %v2301, %v2300
      %v2354 = vpack.c.bf16 %v2303, %v2302
      %v2355 = vpack.c.bf16 %v2305, %v2304
      %v2356 = vpack.c.bf16 %v2307, %v2306
      %v2357 = vpack.c.bf16 %v2309, %v2308
      %v2358 = vpack.c.bf16 %v2311, %v2310
      %v2359 = vpack.c.bf16 %v2313, %v2312
      %v2360 = vpack.c.bf16 %v2315, %v2314
      %v2361 = vpack.c.bf16 %v2317, %v2316
      %v2362 = vpack.c.bf16 %v2319, %v2318
      %v2363 = vpack.c.bf16 %v2321, %v2320
      %v2364 = vpack.c.bf16 %v2323, %v2322
      %v2365 = vpack.c.bf16 %v2325, %v2324
      %v2366 = vpack.c.bf16 %v2327, %v2326
      %v2367 = vpack.c.bf16 %v2329, %v2328
      %v2368 = vpack.c.bf16 %v2331, %v2330
      %v2369 = vpack.c.bf16 %v2333, %v2332
      %v2370 = vpack.c.bf16 %v2335, %v2334
      %v2371 = vpack.c.bf16 %v2337, %v2336
      %v2372 = vpack.c.bf16 %v2339, %v2338
      %v2373 = vpack.c.bf16 %v2341, %v2340
      %v2374 = vpack.c.bf16 %v1715, %v1712
      %v2375 = vpack.c.bf16 %v1723, %v1720
      %v2376 = vpack.c.bf16 %v1731, %v1728
      %v2377 = vpack.c.bf16 %v1739, %v1736
      %v2378 = vpack.c.bf16 %v1747, %v1744
      %v2379 = vpack.c.bf16 %v1755, %v1752
      %v2380 = vpack.c.bf16 %v1763, %v1760
      %v2381 = vpack.c.bf16 %v1771, %v1768
      %v2382 = vpack.c.bf16 %v1779, %v1776
      %v2383 = vpack.c.bf16 %v1787, %v1784
      %v2384 = vpack.c.bf16 %v1795, %v1792
      %v2385 = vpack.c.bf16 %v1803, %v1800
      %v2386 = vpack.c.bf16 %v1811, %v1808
      %v2387 = vpack.c.bf16 %v1819, %v1816
      %v2388 = vpack.c.bf16 %v1827, %v1824
      %v2389 = vpack.c.bf16 %v1835, %v1832
      %v2390 = vpack.c.bf16 %v1843, %v1840
      %v2391 = vpack.c.bf16 %v1851, %v1848
      %v2392 = vpack.c.bf16 %v1859, %v1856
      %v2393 = vpack.c.bf16 %v1867, %v1864
      %v2394 = vpack.c.bf16 %v1875, %v1872
      %v2395 = vpack.c.bf16 %v1883, %v1880
      %v2396 = vpack.c.bf16 %v1891, %v1888
      %v2397 = vpack.c.bf16 %v1899, %v1896
      %v2398 = vpack.c.bf16 %v1907, %v1904
      %v2399 = vpack.c.bf16 %v1915, %v1912
      %v2400 = vpack.c.bf16 %v1923, %v1920
      %v2401 = vpack.c.bf16 %v1931, %v1928
      %v2402 = vpack.c.bf16 %v1939, %v1936
      %v2403 = vpack.c.bf16 %v1947, %v1944
      %v2404 = vpack.c.bf16 %v1955, %v1952
      %v2405 = vpack.c.bf16 %v1963, %v1960
      %v2406 = vpack.c.bf16 %v2027, %v2024
      %v2407 = vpack.c.bf16 %v2035, %v2032
      %v2408 = vpack.c.bf16 %v2043, %v2040
      %v2409 = vpack.c.bf16 %v2051, %v2048
      %v2410 = vpack.c.bf16 %v2059, %v2056
      %v2411 = vpack.c.bf16 %v2067, %v2064
      %v2412 = vpack.c.bf16 %v2075, %v2072
      %v2413 = vpack.c.bf16 %v2083, %v2080
      %v2414 = vpack.c.bf16 %v2091, %v2088
      %v2415 = vpack.c.bf16 %v2099, %v2096
      %v2416 = vpack.c.bf16 %v2107, %v2104
      %v2417 = vpack.c.bf16 %v2115, %v2112
      %v2418 = vpack.c.bf16 %v2123, %v2120
      %v2419 = vpack.c.bf16 %v2131, %v2128
      %v2420 = vpack.c.bf16 %v2139, %v2136
      %v2421 = vpack.c.bf16 %v2147, %v2144
      %v2422 = vpack.c.bf16 %v2155, %v2152
      %v2423 = vpack.c.bf16 %v2163, %v2160
      %v2424 = vpack.c.bf16 %v2171, %v2168
      %v2425 = vpack.c.bf16 %v2179, %v2176
      %v2426 = vpack.c.bf16 %v2187, %v2184
      %v2427 = vpack.c.bf16 %v2195, %v2192
      %v2428 = vpack.c.bf16 %v2203, %v2200
      %v2429 = vpack.c.bf16 %v2211, %v2208
      %v2430 = vpack.c.bf16 %v2219, %v2216
      %v2431 = vpack.c.bf16 %v2227, %v2224
      %v2432 = vpack.c.bf16 %v2235, %v2232
      %v2433 = vpack.c.bf16 %v2243, %v2240
      %v2434 = vpack.c.bf16 %v2251, %v2248
      %v2435 = vpack.c.bf16 %v2259, %v2256
      %v2436 = vpack.c.bf16 %v2267, %v2264
      %v2437 = vpack.c.bf16 %v2275, %v2272
      %v2439 = vsel %vm487, %v2342, 0
      %v2442 = vsel %vm487, %v2343, 0
      %v2445 = vsel %vm487, %v2344, 0
      %v2448 = vsel %vm487, %v2345, 0
      %v2451 = vsel %vm487, %v2374, 0
      %v2454 = vsel %vm487, %v2375, 0
      %v2457 = vsel %vm487, %v2376, 0
      %v2460 = vsel %vm487, %v2377, 0
      %2462 = vmatprep.subr.bf16.mxu0 0
      %2463 = vmatpush1.bf16.xpose.msra.mxu0 %v2451
      %2464 = vmatprep.subr.bf16.mxu0 0
      %2465 = vmatpush1.bf16.xpose.msra.mxu0 %v2454
      %2466 = vmatprep.subr.bf16.mxu0 0
      %2467 = vmatpush1.bf16.xpose.msra.mxu0 %v2457
      %2468 = vmatprep.subr.bf16.mxu0 0
      %2469 = vmatpush1.bf16.xpose.msra.mxu0 %v2460
      %2470 = vmatprep.subr.bf16.mxu0 0
      %2471 = vmatpush1.bf16.xpose.msra.mxu0 0
      %2472 = vmatprep.subr.bf16.mxu0 0
      %2473 = vmatpush1.bf16.xpose.msra.mxu0 0
      %2474 = vmatprep.subr.bf16.mxu0 0
      %2475 = vmatpush1.bf16.xpose.msra.mxu0 0
      %2476 = vmatprep.subr.bf16.mxu0 0
      %2477 = vmatpush1.bf16.xpose.msra.mxu0 0
      %2478 = vmatprep.subr.bf16.mxu0 0
      %2479 = vmatpush1.bf16.xpose.msra.mxu0 0
      %2480 = vmatprep.subr.bf16.mxu0 0
      %2481 = vmatpush1.bf16.xpose.msra.mxu0 0
      %2482 = vmatprep.subr.bf16.mxu0 0
      %2483 = vmatpush1.bf16.xpose.msra.mxu0 0
      %2484 = vmatprep.subr.bf16.mxu0 0
      %2485 = vmatpush1.bf16.xpose.msra.mxu0 0
      %2486 = vmatprep.subr.bf16.mxu0 0
      %2487 = vmatpush1.bf16.xpose.msra.mxu0 0
      %2488 = vmatprep.subr.bf16.mxu0 0
      %2489 = vmatpush1.bf16.xpose.msra.mxu0 0
      %2490 = vmatprep.subr.bf16.mxu0 0
      %2491 = vmatpush1.bf16.xpose.msra.mxu0 0
      %2492 = vmatprep.subr.bf16.mxu0 0
      %2493 = vmatpush1.bf16.xpose.msra.mxu0 0
      %2494 = vmatprep.mubr.bf16.mxu0 0
      %2495 = vmatmul.mubr.bf16.gmra.mrb[0].mxu0 %v2439
      %v2496 = vpop.f32.mrb[0].mxu0
      %v2497 = vadd.f32 0.0, %v2496
      %v2498 = vpop.f32.mrb[0].mxu0
      %v2499 = vpop.f32.mrb[0].mxu0
      %v2500 = vadd.f32 0.0, %v2499
      %v2501 = vpop.f32.mrb[0].mxu0
      %2502 = vmatprep.mubr.bf16.mxu0 0
      %2503 = vmatmul.mubr.bf16.gmra.mrb[0].mxu0 %v2442
      %v2504 = vpop.f32.mrb[0].mxu0
      %v2505 = vadd.f32 0.0, %v2504
      %v2506 = vpop.f32.mrb[0].mxu0
      %v2507 = vpop.f32.mrb[0].mxu0
      %v2508 = vadd.f32 0.0, %v2507
      %v2509 = vpop.f32.mrb[0].mxu0
      %2510 = vmatprep.mubr.bf16.mxu0 0
      %2511 = vmatmul.mubr.bf16.gmra.mrb[0].mxu0 %v2445
      %v2512 = vpop.f32.mrb[0].mxu0
      %v2513 = vadd.f32 0.0, %v2512
      %v2514 = vpop.f32.mrb[0].mxu0
      %v2515 = vpop.f32.mrb[0].mxu0
      %v2516 = vadd.f32 0.0, %v2515
      %v2517 = vpop.f32.mrb[0].mxu0
      %2518 = vmatprep.mubr.bf16.mxu0 0
      %2519 = vmatmul.mubr.bf16.gmra.mrb[0].mxu0 %v2448
      %v2520 = vpop.f32.mrb[0].mxu0
      %v2521 = vadd.f32 0.0, %v2520
      %v2522 = vpop.f32.mrb[0].mxu0
      %v2523 = vpop.f32.mrb[0].mxu0
      %v2524 = vadd.f32 0.0, %v2523
      %v2525 = vpop.f32.mrb[0].mxu0
      %2526 = vdwg.mxu0
      %v2528 = vsel %vm487, %v2346, 0
      %v2531 = vsel %vm487, %v2347, 0
      %v2534 = vsel %vm487, %v2348, 0
      %v2537 = vsel %vm487, %v2349, 0
      %v2540 = vsel %vm487, %v2378, 0
      %v2543 = vsel %vm487, %v2379, 0
      %v2546 = vsel %vm487, %v2380, 0
      %v2549 = vsel %vm487, %v2381, 0
      %2551 = vmatprep.subr.bf16.mxu0 0
      %2552 = vmatpush1.bf16.xpose.msra.mxu0 %v2540
      %2553 = vmatprep.subr.bf16.mxu0 0
      %2554 = vmatpush1.bf16.xpose.msra.mxu0 %v2543
      %2555 = vmatprep.subr.bf16.mxu0 0
      %2556 = vmatpush1.bf16.xpose.msra.mxu0 %v2546
      %2557 = vmatprep.subr.bf16.mxu0 0
      %2558 = vmatpush1.bf16.xpose.msra.mxu0 %v2549
      %2559 = vmatprep.subr.bf16.mxu0 0
      %2560 = vmatpush1.bf16.xpose.msra.mxu0 0
      %2561 = vmatprep.subr.bf16.mxu0 0
      %2562 = vmatpush1.bf16.xpose.msra.mxu0 0
      %2563 = vmatprep.subr.bf16.mxu0 0
      %2564 = vmatpush1.bf16.xpose.msra.mxu0 0
      %2565 = vmatprep.subr.bf16.mxu0 0
      %2566 = vmatpush1.bf16.xpose.msra.mxu0 0
      %2567 = vmatprep.subr.bf16.mxu0 0
      %2568 = vmatpush1.bf16.xpose.msra.mxu0 0
      %2569 = vmatprep.subr.bf16.mxu0 0
      %2570 = vmatpush1.bf16.xpose.msra.mxu0 0
      %2571 = vmatprep.subr.bf16.mxu0 0
      %2572 = vmatpush1.bf16.xpose.msra.mxu0 0
      %2573 = vmatprep.subr.bf16.mxu0 0
      %2574 = vmatpush1.bf16.xpose.msra.mxu0 0
      %2575 = vmatprep.subr.bf16.mxu0 0
      %2576 = vmatpush1.bf16.xpose.msra.mxu0 0
      %2577 = vmatprep.subr.bf16.mxu0 0
      %2578 = vmatpush1.bf16.xpose.msra.mxu0 0
      %2579 = vmatprep.subr.bf16.mxu0 0
      %2580 = vmatpush1.bf16.xpose.msra.mxu0 0
      %2581 = vmatprep.subr.bf16.mxu0 0
      %2582 = vmatpush1.bf16.xpose.msra.mxu0 0
      %2583 = vmatprep.mubr.bf16.mxu0 0
      %2584 = vmatmul.mubr.bf16.gmra.mrb[0].mxu0 %v2528
      %v2585 = vpop.f32.mrb[0].mxu0
      %v2586 = vadd.f32 0.0, %v2585
      %v2587 = vpop.f32.mrb[0].mxu0
      %v2588 = vpop.f32.mrb[0].mxu0
      %v2589 = vadd.f32 0.0, %v2588
      %v2590 = vpop.f32.mrb[0].mxu0
      %2591 = vmatprep.mubr.bf16.mxu0 0
      %2592 = vmatmul.mubr.bf16.gmra.mrb[0].mxu0 %v2531
      %v2593 = vpop.f32.mrb[0].mxu0
      %v2594 = vadd.f32 0.0, %v2593
      %v2595 = vpop.f32.mrb[0].mxu0
      %v2596 = vpop.f32.mrb[0].mxu0
      %v2597 = vadd.f32 0.0, %v2596
      %v2598 = vpop.f32.mrb[0].mxu0
      %2599 = vmatprep.mubr.bf16.mxu0 0
      %2600 = vmatmul.mubr.bf16.gmra.mrb[0].mxu0 %v2534
      %v2601 = vpop.f32.mrb[0].mxu0
      %v2602 = vadd.f32 0.0, %v2601
      %v2603 = vpop.f32.mrb[0].mxu0
      %v2604 = vpop.f32.mrb[0].mxu0
      %v2605 = vadd.f32 0.0, %v2604
      %v2606 = vpop.f32.mrb[0].mxu0
      %2607 = vmatprep.mubr.bf16.mxu0 0
      %2608 = vmatmul.mubr.bf16.gmra.mrb[0].mxu0 %v2537
      %v2609 = vpop.f32.mrb[0].mxu0
      %v2610 = vadd.f32 0.0, %v2609
      %v2611 = vpop.f32.mrb[0].mxu0
      %v2612 = vpop.f32.mrb[0].mxu0
      %v2613 = vadd.f32 0.0, %v2612
      %v2614 = vpop.f32.mrb[0].mxu0
      %2615 = vdwg.mxu0
      %v2617 = vsel %vm487, %v2350, 0
      %v2620 = vsel %vm487, %v2351, 0
      %v2623 = vsel %vm487, %v2352, 0
      %v2626 = vsel %vm487, %v2353, 0
      %v2629 = vsel %vm487, %v2382, 0
      %v2632 = vsel %vm487, %v2383, 0
      %v2635 = vsel %vm487, %v2384, 0
      %v2638 = vsel %vm487, %v2385, 0
      %2640 = vmatprep.subr.bf16.mxu0 0
      %2641 = vmatpush1.bf16.xpose.msra.mxu0 %v2629
      %2642 = vmatprep.subr.bf16.mxu0 0
      %2643 = vmatpush1.bf16.xpose.msra.mxu0 %v2632
      %2644 = vmatprep.subr.bf16.mxu0 0
      %2645 = vmatpush1.bf16.xpose.msra.mxu0 %v2635
      %2646 = vmatprep.subr.bf16.mxu0 0
      %2647 = vmatpush1.bf16.xpose.msra.mxu0 %v2638
      %2648 = vmatprep.subr.bf16.mxu0 0
      %2649 = vmatpush1.bf16.xpose.msra.mxu0 0
      %2650 = vmatprep.subr.bf16.mxu0 0
      %2651 = vmatpush1.bf16.xpose.msra.mxu0 0
      %2652 = vmatprep.subr.bf16.mxu0 0
      %2653 = vmatpush1.bf16.xpose.msra.mxu0 0
      %2654 = vmatprep.subr.bf16.mxu0 0
      %2655 = vmatpush1.bf16.xpose.msra.mxu0 0
      %2656 = vmatprep.subr.bf16.mxu0 0
      %2657 = vmatpush1.bf16.xpose.msra.mxu0 0
      %2658 = vmatprep.subr.bf16.mxu0 0
      %2659 = vmatpush1.bf16.xpose.msra.mxu0 0
      %2660 = vmatprep.subr.bf16.mxu0 0
      %2661 = vmatpush1.bf16.xpose.msra.mxu0 0
      %2662 = vmatprep.subr.bf16.mxu0 0
      %2663 = vmatpush1.bf16.xpose.msra.mxu0 0
      %2664 = vmatprep.subr.bf16.mxu0 0
      %2665 = vmatpush1.bf16.xpose.msra.mxu0 0
      %2666 = vmatprep.subr.bf16.mxu0 0
      %2667 = vmatpush1.bf16.xpose.msra.mxu0 0
      %2668 = vmatprep.subr.bf16.mxu0 0
      %2669 = vmatpush1.bf16.xpose.msra.mxu0 0
      %2670 = vmatprep.subr.bf16.mxu0 0
      %2671 = vmatpush1.bf16.xpose.msra.mxu0 0
      %2672 = vmatprep.mubr.bf16.mxu0 0
      %2673 = vmatmul.mubr.bf16.gmra.mrb[0].mxu0 %v2617
      %v2674 = vpop.f32.mrb[0].mxu0
      %v2675 = vadd.f32 0.0, %v2674
      %v2676 = vpop.f32.mrb[0].mxu0
      %v2677 = vpop.f32.mrb[0].mxu0
      %v2678 = vadd.f32 0.0, %v2677
      %v2679 = vpop.f32.mrb[0].mxu0
      %2680 = vmatprep.mubr.bf16.mxu0 0
      %2681 = vmatmul.mubr.bf16.gmra.mrb[0].mxu0 %v2620
      %v2682 = vpop.f32.mrb[0].mxu0
      %v2683 = vadd.f32 0.0, %v2682
      %v2684 = vpop.f32.mrb[0].mxu0
      %v2685 = vpop.f32.mrb[0].mxu0
      %v2686 = vadd.f32 0.0, %v2685
      %v2687 = vpop.f32.mrb[0].mxu0
      %2688 = vmatprep.mubr.bf16.mxu0 0
      %2689 = vmatmul.mubr.bf16.gmra.mrb[0].mxu0 %v2623
      %v2690 = vpop.f32.mrb[0].mxu0
      %v2691 = vadd.f32 0.0, %v2690
      %v2692 = vpop.f32.mrb[0].mxu0
      %v2693 = vpop.f32.mrb[0].mxu0
      %v2694 = vadd.f32 0.0, %v2693
      %v2695 = vpop.f32.mrb[0].mxu0
      %2696 = vmatprep.mubr.bf16.mxu0 0
      %2697 = vmatmul.mubr.bf16.gmra.mrb[0].mxu0 %v2626
      %v2698 = vpop.f32.mrb[0].mxu0
      %v2699 = vadd.f32 0.0, %v2698
      %v2700 = vpop.f32.mrb[0].mxu0
      %v2701 = vpop.f32.mrb[0].mxu0
      %v2702 = vadd.f32 0.0, %v2701
      %v2703 = vpop.f32.mrb[0].mxu0
      %2704 = vdwg.mxu0
      %v2706 = vsel %vm487, %v2354, 0
      %v2709 = vsel %vm487, %v2355, 0
      %v2712 = vsel %vm487, %v2356, 0
      %v2715 = vsel %vm487, %v2357, 0
      %v2718 = vsel %vm487, %v2386, 0
      %v2721 = vsel %vm487, %v2387, 0
      %v2724 = vsel %vm487, %v2388, 0
      %v2727 = vsel %vm487, %v2389, 0
      %2729 = vmatprep.subr.bf16.mxu0 0
      %2730 = vmatpush1.bf16.xpose.msra.mxu0 %v2718
      %2731 = vmatprep.subr.bf16.mxu0 0
      %2732 = vmatpush1.bf16.xpose.msra.mxu0 %v2721
      %2733 = vmatprep.subr.bf16.mxu0 0
      %2734 = vmatpush1.bf16.xpose.msra.mxu0 %v2724
      %2735 = vmatprep.subr.bf16.mxu0 0
      %2736 = vmatpush1.bf16.xpose.msra.mxu0 %v2727
      %2737 = vmatprep.subr.bf16.mxu0 0
      %2738 = vmatpush1.bf16.xpose.msra.mxu0 0
      %2739 = vmatprep.subr.bf16.mxu0 0
      %2740 = vmatpush1.bf16.xpose.msra.mxu0 0
      %2741 = vmatprep.subr.bf16.mxu0 0
      %2742 = vmatpush1.bf16.xpose.msra.mxu0 0
      %2743 = vmatprep.subr.bf16.mxu0 0
      %2744 = vmatpush1.bf16.xpose.msra.mxu0 0
      %2745 = vmatprep.subr.bf16.mxu0 0
      %2746 = vmatpush1.bf16.xpose.msra.mxu0 0
      %2747 = vmatprep.subr.bf16.mxu0 0
      %2748 = vmatpush1.bf16.xpose.msra.mxu0 0
      %2749 = vmatprep.subr.bf16.mxu0 0
      %2750 = vmatpush1.bf16.xpose.msra.mxu0 0
      %2751 = vmatprep.subr.bf16.mxu0 0
      %2752 = vmatpush1.bf16.xpose.msra.mxu0 0
      %2753 = vmatprep.subr.bf16.mxu0 0
      %2754 = vmatpush1.bf16.xpose.msra.mxu0 0
      %2755 = vmatprep.subr.bf16.mxu0 0
      %2756 = vmatpush1.bf16.xpose.msra.mxu0 0
      %2757 = vmatprep.subr.bf16.mxu0 0
      %2758 = vmatpush1.bf16.xpose.msra.mxu0 0
      %2759 = vmatprep.subr.bf16.mxu0 0
      %2760 = vmatpush1.bf16.xpose.msra.mxu0 0
      %2761 = vmatprep.mubr.bf16.mxu0 0
      %2762 = vmatmul.mubr.bf16.gmra.mrb[0].mxu0 %v2706
      %v2763 = vpop.f32.mrb[0].mxu0
      %v2764 = vadd.f32 0.0, %v2763
      %v2765 = vpop.f32.mrb[0].mxu0
      %v2766 = vpop.f32.mrb[0].mxu0
      %v2767 = vadd.f32 0.0, %v2766
      %v2768 = vpop.f32.mrb[0].mxu0
      %2769 = vmatprep.mubr.bf16.mxu0 0
      %2770 = vmatmul.mubr.bf16.gmra.mrb[0].mxu0 %v2709
      %v2771 = vpop.f32.mrb[0].mxu0
      %v2772 = vadd.f32 0.0, %v2771
      %v2773 = vpop.f32.mrb[0].mxu0
      %v2774 = vpop.f32.mrb[0].mxu0
      %v2775 = vadd.f32 0.0, %v2774
      %v2776 = vpop.f32.mrb[0].mxu0
      %2777 = vmatprep.mubr.bf16.mxu0 0
      %2778 = vmatmul.mubr.bf16.gmra.mrb[0].mxu0 %v2712
      %v2779 = vpop.f32.mrb[0].mxu0
      %v2780 = vadd.f32 0.0, %v2779
      %v2781 = vpop.f32.mrb[0].mxu0
      %v2782 = vpop.f32.mrb[0].mxu0
      %v2783 = vadd.f32 0.0, %v2782
      %v2784 = vpop.f32.mrb[0].mxu0
      %2785 = vmatprep.mubr.bf16.mxu0 0
      %2786 = vmatmul.mubr.bf16.gmra.mrb[0].mxu0 %v2715
      %v2787 = vpop.f32.mrb[0].mxu0
      %v2788 = vadd.f32 0.0, %v2787
      %v2789 = vpop.f32.mrb[0].mxu0
      %v2790 = vpop.f32.mrb[0].mxu0
      %v2791 = vadd.f32 0.0, %v2790
      %v2792 = vpop.f32.mrb[0].mxu0
      %2793 = vdwg.mxu0
      %v2795 = vsel %vm487, %v2358, 0
      %v2798 = vsel %vm487, %v2359, 0
      %v2801 = vsel %vm487, %v2360, 0
      %v2804 = vsel %vm487, %v2361, 0
      %v2807 = vsel %vm487, %v2390, 0
      %v2810 = vsel %vm487, %v2391, 0
      %v2813 = vsel %vm487, %v2392, 0
      %v2816 = vsel %vm487, %v2393, 0
      %2818 = vmatprep.subr.bf16.mxu0 0
      %2819 = vmatpush1.bf16.xpose.msra.mxu0 %v2807
      %2820 = vmatprep.subr.bf16.mxu0 0
      %2821 = vmatpush1.bf16.xpose.msra.mxu0 %v2810
      %2822 = vmatprep.subr.bf16.mxu0 0
      %2823 = vmatpush1.bf16.xpose.msra.mxu0 %v2813
      %2824 = vmatprep.subr.bf16.mxu0 0
      %2825 = vmatpush1.bf16.xpose.msra.mxu0 %v2816
      %2826 = vmatprep.subr.bf16.mxu0 0
      %2827 = vmatpush1.bf16.xpose.msra.mxu0 0
      %2828 = vmatprep.subr.bf16.mxu0 0
      %2829 = vmatpush1.bf16.xpose.msra.mxu0 0
      %2830 = vmatprep.subr.bf16.mxu0 0
      %2831 = vmatpush1.bf16.xpose.msra.mxu0 0
      %2832 = vmatprep.subr.bf16.mxu0 0
      %2833 = vmatpush1.bf16.xpose.msra.mxu0 0
      %2834 = vmatprep.subr.bf16.mxu0 0
      %2835 = vmatpush1.bf16.xpose.msra.mxu0 0
      %2836 = vmatprep.subr.bf16.mxu0 0
      %2837 = vmatpush1.bf16.xpose.msra.mxu0 0
      %2838 = vmatprep.subr.bf16.mxu0 0
      %2839 = vmatpush1.bf16.xpose.msra.mxu0 0
      %2840 = vmatprep.subr.bf16.mxu0 0
      %2841 = vmatpush1.bf16.xpose.msra.mxu0 0
      %2842 = vmatprep.subr.bf16.mxu0 0
      %2843 = vmatpush1.bf16.xpose.msra.mxu0 0
      %2844 = vmatprep.subr.bf16.mxu0 0
      %2845 = vmatpush1.bf16.xpose.msra.mxu0 0
      %2846 = vmatprep.subr.bf16.mxu0 0
      %2847 = vmatpush1.bf16.xpose.msra.mxu0 0
      %2848 = vmatprep.subr.bf16.mxu0 0
      %2849 = vmatpush1.bf16.xpose.msra.mxu0 0
      %2850 = vmatprep.mubr.bf16.mxu0 0
      %2851 = vmatmul.mubr.bf16.gmra.mrb[0].mxu0 %v2795
      %v2852 = vpop.f32.mrb[0].mxu0
      %v2853 = vadd.f32 0.0, %v2852
      %v2854 = vpop.f32.mrb[0].mxu0
      %v2855 = vpop.f32.mrb[0].mxu0
      %v2856 = vadd.f32 0.0, %v2855
      %v2857 = vpop.f32.mrb[0].mxu0
      %2858 = vmatprep.mubr.bf16.mxu0 0
      %2859 = vmatmul.mubr.bf16.gmra.mrb[0].mxu0 %v2798
      %v2860 = vpop.f32.mrb[0].mxu0
      %v2861 = vadd.f32 0.0, %v2860
      %v2862 = vpop.f32.mrb[0].mxu0
      %v2863 = vpop.f32.mrb[0].mxu0
      %v2864 = vadd.f32 0.0, %v2863
      %v2865 = vpop.f32.mrb[0].mxu0
      %2866 = vmatprep.mubr.bf16.mxu0 0
      %2867 = vmatmul.mubr.bf16.gmra.mrb[0].mxu0 %v2801
      %v2868 = vpop.f32.mrb[0].mxu0
      %v2869 = vadd.f32 0.0, %v2868
      %v2870 = vpop.f32.mrb[0].mxu0
      %v2871 = vpop.f32.mrb[0].mxu0
      %v2872 = vadd.f32 0.0, %v2871
      %v2873 = vpop.f32.mrb[0].mxu0
      %2874 = vmatprep.mubr.bf16.mxu0 0
      %2875 = vmatmul.mubr.bf16.gmra.mrb[0].mxu0 %v2804
      %v2876 = vpop.f32.mrb[0].mxu0
      %v2877 = vadd.f32 0.0, %v2876
      %v2878 = vpop.f32.mrb[0].mxu0
      %v2879 = vpop.f32.mrb[0].mxu0
      %v2880 = vadd.f32 0.0, %v2879
      %v2881 = vpop.f32.mrb[0].mxu0
      %2882 = vdwg.mxu0
      %v2884 = vsel %vm487, %v2362, 0
      %v2887 = vsel %vm487, %v2363, 0
      %v2890 = vsel %vm487, %v2364, 0
      %v2893 = vsel %vm487, %v2365, 0
      %v2896 = vsel %vm487, %v2394, 0
      %v2899 = vsel %vm487, %v2395, 0
      %v2902 = vsel %vm487, %v2396, 0
      %v2905 = vsel %vm487, %v2397, 0
      %2907 = vmatprep.subr.bf16.mxu0 0
      %2908 = vmatpush1.bf16.xpose.msra.mxu0 %v2896
      %2909 = vmatprep.subr.bf16.mxu0 0
      %2910 = vmatpush1.bf16.xpose.msra.mxu0 %v2899
      %2911 = vmatprep.subr.bf16.mxu0 0
      %2912 = vmatpush1.bf16.xpose.msra.mxu0 %v2902
      %2913 = vmatprep.subr.bf16.mxu0 0
      %2914 = vmatpush1.bf16.xpose.msra.mxu0 %v2905
      %2915 = vmatprep.subr.bf16.mxu0 0
      %2916 = vmatpush1.bf16.xpose.msra.mxu0 0
      %2917 = vmatprep.subr.bf16.mxu0 0
      %2918 = vmatpush1.bf16.xpose.msra.mxu0 0
      %2919 = vmatprep.subr.bf16.mxu0 0
      %2920 = vmatpush1.bf16.xpose.msra.mxu0 0
      %2921 = vmatprep.subr.bf16.mxu0 0
      %2922 = vmatpush1.bf16.xpose.msra.mxu0 0
      %2923 = vmatprep.subr.bf16.mxu0 0
      %2924 = vmatpush1.bf16.xpose.msra.mxu0 0
      %2925 = vmatprep.subr.bf16.mxu0 0
      %2926 = vmatpush1.bf16.xpose.msra.mxu0 0
      %2927 = vmatprep.subr.bf16.mxu0 0
      %2928 = vmatpush1.bf16.xpose.msra.mxu0 0
      %2929 = vmatprep.subr.bf16.mxu0 0
      %2930 = vmatpush1.bf16.xpose.msra.mxu0 0
      %2931 = vmatprep.subr.bf16.mxu0 0
      %2932 = vmatpush1.bf16.xpose.msra.mxu0 0
      %2933 = vmatprep.subr.bf16.mxu0 0
      %2934 = vmatpush1.bf16.xpose.msra.mxu0 0
      %2935 = vmatprep.subr.bf16.mxu0 0
      %2936 = vmatpush1.bf16.xpose.msra.mxu0 0
      %2937 = vmatprep.subr.bf16.mxu0 0
      %2938 = vmatpush1.bf16.xpose.msra.mxu0 0
      %2939 = vmatprep.mubr.bf16.mxu0 0
      %2940 = vmatmul.mubr.bf16.gmra.mrb[0].mxu0 %v2884
      %v2941 = vpop.f32.mrb[0].mxu0
      %v2942 = vadd.f32 0.0, %v2941
      %v2943 = vpop.f32.mrb[0].mxu0
      %v2944 = vpop.f32.mrb[0].mxu0
      %v2945 = vadd.f32 0.0, %v2944
      %v2946 = vpop.f32.mrb[0].mxu0
      %2947 = vmatprep.mubr.bf16.mxu0 0
      %2948 = vmatmul.mubr.bf16.gmra.mrb[0].mxu0 %v2887
      %v2949 = vpop.f32.mrb[0].mxu0
      %v2950 = vadd.f32 0.0, %v2949
      %v2951 = vpop.f32.mrb[0].mxu0
      %v2952 = vpop.f32.mrb[0].mxu0
      %v2953 = vadd.f32 0.0, %v2952
      %v2954 = vpop.f32.mrb[0].mxu0
      %2955 = vmatprep.mubr.bf16.mxu0 0
      %2956 = vmatmul.mubr.bf16.gmra.mrb[0].mxu0 %v2890
      %v2957 = vpop.f32.mrb[0].mxu0
      %v2958 = vadd.f32 0.0, %v2957
      %v2959 = vpop.f32.mrb[0].mxu0
      %v2960 = vpop.f32.mrb[0].mxu0
      %v2961 = vadd.f32 0.0, %v2960
      %v2962 = vpop.f32.mrb[0].mxu0
      %2963 = vmatprep.mubr.bf16.mxu0 0
      %2964 = vmatmul.mubr.bf16.gmra.mrb[0].mxu0 %v2893
      %v2965 = vpop.f32.mrb[0].mxu0
      %v2966 = vadd.f32 0.0, %v2965
      %v2967 = vpop.f32.mrb[0].mxu0
      %v2968 = vpop.f32.mrb[0].mxu0
      %v2969 = vadd.f32 0.0, %v2968
      %v2970 = vpop.f32.mrb[0].mxu0
      %2971 = vdwg.mxu0
      %v2973 = vsel %vm487, %v2366, 0
      %v2976 = vsel %vm487, %v2367, 0
      %v2979 = vsel %vm487, %v2368, 0
      %v2982 = vsel %vm487, %v2369, 0
      %v2985 = vsel %vm487, %v2398, 0
      %v2988 = vsel %vm487, %v2399, 0
      %v2991 = vsel %vm487, %v2400, 0
      %v2994 = vsel %vm487, %v2401, 0
      %2996 = vmatprep.subr.bf16.mxu0 0
      %2997 = vmatpush1.bf16.xpose.msra.mxu0 %v2985
      %2998 = vmatprep.subr.bf16.mxu0 0
      %2999 = vmatpush1.bf16.xpose.msra.mxu0 %v2988
      %3000 = vmatprep.subr.bf16.mxu0 0
      %3001 = vmatpush1.bf16.xpose.msra.mxu0 %v2991
      %3002 = vmatprep.subr.bf16.mxu0 0
      %3003 = vmatpush1.bf16.xpose.msra.mxu0 %v2994
      %3004 = vmatprep.subr.bf16.mxu0 0
      %3005 = vmatpush1.bf16.xpose.msra.mxu0 0
      %3006 = vmatprep.subr.bf16.mxu0 0
      %3007 = vmatpush1.bf16.xpose.msra.mxu0 0
      %3008 = vmatprep.subr.bf16.mxu0 0
      %3009 = vmatpush1.bf16.xpose.msra.mxu0 0
      %3010 = vmatprep.subr.bf16.mxu0 0
      %3011 = vmatpush1.bf16.xpose.msra.mxu0 0
      %3012 = vmatprep.subr.bf16.mxu0 0
      %3013 = vmatpush1.bf16.xpose.msra.mxu0 0
      %3014 = vmatprep.subr.bf16.mxu0 0
      %3015 = vmatpush1.bf16.xpose.msra.mxu0 0
      %3016 = vmatprep.subr.bf16.mxu0 0
      %3017 = vmatpush1.bf16.xpose.msra.mxu0 0
      %3018 = vmatprep.subr.bf16.mxu0 0
      %3019 = vmatpush1.bf16.xpose.msra.mxu0 0
      %3020 = vmatprep.subr.bf16.mxu0 0
      %3021 = vmatpush1.bf16.xpose.msra.mxu0 0
      %3022 = vmatprep.subr.bf16.mxu0 0
      %3023 = vmatpush1.bf16.xpose.msra.mxu0 0
      %3024 = vmatprep.subr.bf16.mxu0 0
      %3025 = vmatpush1.bf16.xpose.msra.mxu0 0
      %3026 = vmatprep.subr.bf16.mxu0 0
      %3027 = vmatpush1.bf16.xpose.msra.mxu0 0
      %3028 = vmatprep.mubr.bf16.mxu0 0
      %3029 = vmatmul.mubr.bf16.gmra.mrb[0].mxu0 %v2973
      %v3030 = vpop.f32.mrb[0].mxu0
      %v3031 = vadd.f32 0.0, %v3030
      %v3032 = vpop.f32.mrb[0].mxu0
      %v3033 = vpop.f32.mrb[0].mxu0
      %v3034 = vadd.f32 0.0, %v3033
      %v3035 = vpop.f32.mrb[0].mxu0
      %3036 = vmatprep.mubr.bf16.mxu0 0
      %3037 = vmatmul.mubr.bf16.gmra.mrb[0].mxu0 %v2976
      %v3038 = vpop.f32.mrb[0].mxu0
      %v3039 = vadd.f32 0.0, %v3038
      %v3040 = vpop.f32.mrb[0].mxu0
      %v3041 = vpop.f32.mrb[0].mxu0
      %v3042 = vadd.f32 0.0, %v3041
      %v3043 = vpop.f32.mrb[0].mxu0
      %3044 = vmatprep.mubr.bf16.mxu0 0
      %3045 = vmatmul.mubr.bf16.gmra.mrb[0].mxu0 %v2979
      %v3046 = vpop.f32.mrb[0].mxu0
      %v3047 = vadd.f32 0.0, %v3046
      %v3048 = vpop.f32.mrb[0].mxu0
      %v3049 = vpop.f32.mrb[0].mxu0
      %v3050 = vadd.f32 0.0, %v3049
      %v3051 = vpop.f32.mrb[0].mxu0
      %3052 = vmatprep.mubr.bf16.mxu0 0
      %3053 = vmatmul.mubr.bf16.gmra.mrb[0].mxu0 %v2982
      %v3054 = vpop.f32.mrb[0].mxu0
      %v3055 = vadd.f32 0.0, %v3054
      %v3056 = vpop.f32.mrb[0].mxu0
      %v3057 = vpop.f32.mrb[0].mxu0
      %v3058 = vadd.f32 0.0, %v3057
      %v3059 = vpop.f32.mrb[0].mxu0
      %3060 = vdwg.mxu0
      %v3062 = vsel %vm487, %v2370, 0
      %v3065 = vsel %vm487, %v2371, 0
      %v3068 = vsel %vm487, %v2372, 0
      %v3071 = vsel %vm487, %v2373, 0
      %v3074 = vsel %vm487, %v2402, 0
      %v3077 = vsel %vm487, %v2403, 0
      %v3080 = vsel %vm487, %v2404, 0
      %v3083 = vsel %vm487, %v2405, 0
      %3085 = vmatprep.subr.bf16.mxu0 0
      %3086 = vmatpush1.bf16.xpose.msra.mxu0 %v3074
      %3087 = vmatprep.subr.bf16.mxu0 0
      %3088 = vmatpush1.bf16.xpose.msra.mxu0 %v3077
      %3089 = vmatprep.subr.bf16.mxu0 0
      %3090 = vmatpush1.bf16.xpose.msra.mxu0 %v3080
      %3091 = vmatprep.subr.bf16.mxu0 0
      %3092 = vmatpush1.bf16.xpose.msra.mxu0 %v3083
      %3093 = vmatprep.subr.bf16.mxu0 0
      %3094 = vmatpush1.bf16.xpose.msra.mxu0 0
      %3095 = vmatprep.subr.bf16.mxu0 0
      %3096 = vmatpush1.bf16.xpose.msra.mxu0 0
      %3097 = vmatprep.subr.bf16.mxu0 0
      %3098 = vmatpush1.bf16.xpose.msra.mxu0 0
      %3099 = vmatprep.subr.bf16.mxu0 0
      %3100 = vmatpush1.bf16.xpose.msra.mxu0 0
      %3101 = vmatprep.subr.bf16.mxu0 0
      %3102 = vmatpush1.bf16.xpose.msra.mxu0 0
      %3103 = vmatprep.subr.bf16.mxu0 0
      %3104 = vmatpush1.bf16.xpose.msra.mxu0 0
      %3105 = vmatprep.subr.bf16.mxu0 0
      %3106 = vmatpush1.bf16.xpose.msra.mxu0 0
      %3107 = vmatprep.subr.bf16.mxu0 0
      %3108 = vmatpush1.bf16.xpose.msra.mxu0 0
      %3109 = vmatprep.subr.bf16.mxu0 0
      %3110 = vmatpush1.bf16.xpose.msra.mxu0 0
      %3111 = vmatprep.subr.bf16.mxu0 0
      %3112 = vmatpush1.bf16.xpose.msra.mxu0 0
      %3113 = vmatprep.subr.bf16.mxu0 0
      %3114 = vmatpush1.bf16.xpose.msra.mxu0 0
      %3115 = vmatprep.subr.bf16.mxu0 0
      %3116 = vmatpush1.bf16.xpose.msra.mxu0 0
      %3117 = vmatprep.mubr.bf16.mxu0 0
      %3118 = vmatmul.mubr.bf16.gmra.mrb[0].mxu0 %v3062
      %v3119 = vpop.f32.mrb[0].mxu0
      %v3120 = vadd.f32 0.0, %v3119
      %v3121 = vpop.f32.mrb[0].mxu0
      %v3122 = vpop.f32.mrb[0].mxu0
      %v3123 = vadd.f32 0.0, %v3122
      %v3124 = vpop.f32.mrb[0].mxu0
      %3125 = vmatprep.mubr.bf16.mxu0 0
      %3126 = vmatmul.mubr.bf16.gmra.mrb[0].mxu0 %v3065
      %v3127 = vpop.f32.mrb[0].mxu0
      %v3128 = vadd.f32 0.0, %v3127
      %v3129 = vpop.f32.mrb[0].mxu0
      %v3130 = vpop.f32.mrb[0].mxu0
      %v3131 = vadd.f32 0.0, %v3130
      %v3132 = vpop.f32.mrb[0].mxu0
      %3133 = vmatprep.mubr.bf16.mxu0 0
      %3134 = vmatmul.mubr.bf16.gmra.mrb[0].mxu0 %v3068
      %v3135 = vpop.f32.mrb[0].mxu0
      %v3136 = vadd.f32 0.0, %v3135
      %v3137 = vpop.f32.mrb[0].mxu0
      %v3138 = vpop.f32.mrb[0].mxu0
      %v3139 = vadd.f32 0.0, %v3138
      %v3140 = vpop.f32.mrb[0].mxu0
      %3141 = vmatprep.mubr.bf16.mxu0 0
      %3142 = vmatmul.mubr.bf16.gmra.mrb[0].mxu0 %v3071
      %v3143 = vpop.f32.mrb[0].mxu0
      %v3144 = vadd.f32 0.0, %v3143
      %v3145 = vpop.f32.mrb[0].mxu0
      %v3146 = vpop.f32.mrb[0].mxu0
      %v3147 = vadd.f32 0.0, %v3146
      %v3148 = vpop.f32.mrb[0].mxu0
      %3149 = vdwg.mxu0
      %vm3150 = vcmask 523264
      %v3151 = vsel %vm3150, %v2497, -inf
      %3152 = vmax.xlane.f32.xlu0 %v3151
      %v3153 = vpop.xlane.xlu0 %3152
      %v3154 = vsel %vm3150, %v2500, -inf
      %3155 = vmax.xlane.f32.xlu0 %v3154
      %v3156 = vpop.xlane.xlu0 %3155
      %v3157 = vsel %vm3150, %v2505, -inf
      %3158 = vmax.xlane.f32.xlu0 %v3157
      %v3159 = vpop.xlane.xlu0 %3158
      %v3160 = vsel %vm3150, %v2508, -inf
      %3161 = vmax.xlane.f32.xlu0 %v3160
      %v3162 = vpop.xlane.xlu0 %3161
      %v3163 = vsel %vm3150, %v2513, -inf
      %3164 = vmax.xlane.f32.xlu0 %v3163
      %v3165 = vpop.xlane.xlu0 %3164
      %v3166 = vsel %vm3150, %v2516, -inf
      %3167 = vmax.xlane.f32.xlu0 %v3166
      %v3168 = vpop.xlane.xlu0 %3167
      %v3169 = vsel %vm3150, %v2521, -inf
      %3170 = vmax.xlane.f32.xlu0 %v3169
      %v3171 = vpop.xlane.xlu0 %3170
      %v3172 = vsel %vm3150, %v2524, -inf
      %3173 = vmax.xlane.f32.xlu0 %v3172
      %v3174 = vpop.xlane.xlu0 %3173
      %v3175 = vsel %vm3150, %v2586, -inf
      %3176 = vmax.xlane.f32.xlu0 %v3175
      %v3177 = vpop.xlane.xlu0 %3176
      %v3178 = vsel %vm3150, %v2589, -inf
      %3179 = vmax.xlane.f32.xlu0 %v3178
      %v3180 = vpop.xlane.xlu0 %3179
      %v3181 = vsel %vm3150, %v2594, -inf
      %3182 = vmax.xlane.f32.xlu0 %v3181
      %v3183 = vpop.xlane.xlu0 %3182
      %v3184 = vsel %vm3150, %v2597, -inf
      %3185 = vmax.xlane.f32.xlu0 %v3184
      %v3186 = vpop.xlane.xlu0 %3185
      %v3187 = vsel %vm3150, %v2602, -inf
      %3188 = vmax.xlane.f32.xlu0 %v3187
      %v3189 = vpop.xlane.xlu0 %3188
      %v3190 = vsel %vm3150, %v2605, -inf
      %3191 = vmax.xlane.f32.xlu0 %v3190
      %v3192 = vpop.xlane.xlu0 %3191
      %v3193 = vsel %vm3150, %v2610, -inf
      %3194 = vmax.xlane.f32.xlu0 %v3193
      %v3195 = vpop.xlane.xlu0 %3194
      %v3196 = vsel %vm3150, %v2613, -inf
      %3197 = vmax.xlane.f32.xlu0 %v3196
      %v3198 = vpop.xlane.xlu0 %3197
      %v3199 = vsel %vm3150, %v2675, -inf
      %3200 = vmax.xlane.f32.xlu0 %v3199
      %v3201 = vpop.xlane.xlu0 %3200
      %v3202 = vsel %vm3150, %v2678, -inf
      %3203 = vmax.xlane.f32.xlu0 %v3202
      %v3204 = vpop.xlane.xlu0 %3203
      %v3205 = vsel %vm3150, %v2683, -inf
      %3206 = vmax.xlane.f32.xlu0 %v3205
      %v3207 = vpop.xlane.xlu0 %3206
      %v3208 = vsel %vm3150, %v2686, -inf
      %3209 = vmax.xlane.f32.xlu0 %v3208
      %v3210 = vpop.xlane.xlu0 %3209
      %v3211 = vsel %vm3150, %v2691, -inf
      %3212 = vmax.xlane.f32.xlu0 %v3211
      %v3213 = vpop.xlane.xlu0 %3212
      %v3214 = vsel %vm3150, %v2694, -inf
      %3215 = vmax.xlane.f32.xlu0 %v3214
      %v3216 = vpop.xlane.xlu0 %3215
      %v3217 = vsel %vm3150, %v2699, -inf
      %3218 = vmax.xlane.f32.xlu0 %v3217
      %v3219 = vpop.xlane.xlu0 %3218
      %v3220 = vsel %vm3150, %v2702, -inf
      %3221 = vmax.xlane.f32.xlu0 %v3220
      %v3222 = vpop.xlane.xlu0 %3221
      %v3223 = vsel %vm3150, %v2764, -inf
      %3224 = vmax.xlane.f32.xlu0 %v3223
      %v3225 = vpop.xlane.xlu0 %3224
      %v3226 = vsel %vm3150, %v2767, -inf
      %3227 = vmax.xlane.f32.xlu0 %v3226
      %v3228 = vpop.xlane.xlu0 %3227
      %v3229 = vsel %vm3150, %v2772, -inf
      %3230 = vmax.xlane.f32.xlu0 %v3229
      %v3231 = vpop.xlane.xlu0 %3230
      %v3232 = vsel %vm3150, %v2775, -inf
      %3233 = vmax.xlane.f32.xlu0 %v3232
      %v3234 = vpop.xlane.xlu0 %3233
      %v3235 = vsel %vm3150, %v2780, -inf
      %3236 = vmax.xlane.f32.xlu0 %v3235
      %v3237 = vpop.xlane.xlu0 %3236
      %v3238 = vsel %vm3150, %v2783, -inf
      %3239 = vmax.xlane.f32.xlu0 %v3238
      %v3240 = vpop.xlane.xlu0 %3239
      %v3241 = vsel %vm3150, %v2788, -inf
      %3242 = vmax.xlane.f32.xlu0 %v3241
      %v3243 = vpop.xlane.xlu0 %3242
      %v3244 = vsel %vm3150, %v2791, -inf
      %3245 = vmax.xlane.f32.xlu0 %v3244
      %v3246 = vpop.xlane.xlu0 %3245
      %v3247 = vsel %vm3150, %v2853, -inf
      %3248 = vmax.xlane.f32.xlu0 %v3247
      %v3249 = vpop.xlane.xlu0 %3248
      %v3250 = vsel %vm3150, %v2856, -inf
      %3251 = vmax.xlane.f32.xlu0 %v3250
      %v3252 = vpop.xlane.xlu0 %3251
      %v3253 = vsel %vm3150, %v2861, -inf
      %3254 = vmax.xlane.f32.xlu0 %v3253
      %v3255 = vpop.xlane.xlu0 %3254
      %v3256 = vsel %vm3150, %v2864, -inf
      %3257 = vmax.xlane.f32.xlu0 %v3256
      %v3258 = vpop.xlane.xlu0 %3257
      %v3259 = vsel %vm3150, %v2869, -inf
      %3260 = vmax.xlane.f32.xlu0 %v3259
      %v3261 = vpop.xlane.xlu0 %3260
      %v3262 = vsel %vm3150, %v2872, -inf
      %3263 = vmax.xlane.f32.xlu0 %v3262
      %v3264 = vpop.xlane.xlu0 %3263
      %v3265 = vsel %vm3150, %v2877, -inf
      %3266 = vmax.xlane.f32.xlu0 %v3265
      %v3267 = vpop.xlane.xlu0 %3266
      %v3268 = vsel %vm3150, %v2880, -inf
      %3269 = vmax.xlane.f32.xlu0 %v3268
      %v3270 = vpop.xlane.xlu0 %3269
      %v3271 = vsel %vm3150, %v2942, -inf
      %3272 = vmax.xlane.f32.xlu0 %v3271
      %v3273 = vpop.xlane.xlu0 %3272
      %v3274 = vsel %vm3150, %v2945, -inf
      %3275 = vmax.xlane.f32.xlu0 %v3274
      %v3276 = vpop.xlane.xlu0 %3275
      %v3277 = vsel %vm3150, %v2950, -inf
      %3278 = vmax.xlane.f32.xlu0 %v3277
      %v3279 = vpop.xlane.xlu0 %3278
      %v3280 = vsel %vm3150, %v2953, -inf
      %3281 = vmax.xlane.f32.xlu0 %v3280
      %v3282 = vpop.xlane.xlu0 %3281
      %v3283 = vsel %vm3150, %v2958, -inf
      %3284 = vmax.xlane.f32.xlu0 %v3283
      %v3285 = vpop.xlane.xlu0 %3284
      %v3286 = vsel %vm3150, %v2961, -inf
      %3287 = vmax.xlane.f32.xlu0 %v3286
      %v3288 = vpop.xlane.xlu0 %3287
      %v3289 = vsel %vm3150, %v2966, -inf
      %3290 = vmax.xlane.f32.xlu0 %v3289
      %v3291 = vpop.xlane.xlu0 %3290
      %v3292 = vsel %vm3150, %v2969, -inf
      %3293 = vmax.xlane.f32.xlu0 %v3292
      %v3294 = vpop.xlane.xlu0 %3293
      %v3295 = vsel %vm3150, %v3031, -inf
      %3296 = vmax.xlane.f32.xlu0 %v3295
      %v3297 = vpop.xlane.xlu0 %3296
      %v3298 = vsel %vm3150, %v3034, -inf
      %3299 = vmax.xlane.f32.xlu0 %v3298
      %v3300 = vpop.xlane.xlu0 %3299
      %v3301 = vsel %vm3150, %v3039, -inf
      %3302 = vmax.xlane.f32.xlu0 %v3301
      %v3303 = vpop.xlane.xlu0 %3302
      %v3304 = vsel %vm3150, %v3042, -inf
      %3305 = vmax.xlane.f32.xlu0 %v3304
      %v3306 = vpop.xlane.xlu0 %3305
      %v3307 = vsel %vm3150, %v3047, -inf
      %3308 = vmax.xlane.f32.xlu0 %v3307
      %v3309 = vpop.xlane.xlu0 %3308
      %v3310 = vsel %vm3150, %v3050, -inf
      %3311 = vmax.xlane.f32.xlu0 %v3310
      %v3312 = vpop.xlane.xlu0 %3311
      %v3313 = vsel %vm3150, %v3055, -inf
      %3314 = vmax.xlane.f32.xlu0 %v3313
      %v3315 = vpop.xlane.xlu0 %3314
      %v3316 = vsel %vm3150, %v3058, -inf
      %3317 = vmax.xlane.f32.xlu0 %v3316
      %v3318 = vpop.xlane.xlu0 %3317
      %v3319 = vsel %vm3150, %v3120, -inf
      %3320 = vmax.xlane.f32.xlu0 %v3319
      %v3321 = vpop.xlane.xlu0 %3320
      %v3322 = vsel %vm3150, %v3123, -inf
      %3323 = vmax.xlane.f32.xlu0 %v3322
      %v3324 = vpop.xlane.xlu0 %3323
      %v3325 = vsel %vm3150, %v3128, -inf
      %3326 = vmax.xlane.f32.xlu0 %v3325
      %v3327 = vpop.xlane.xlu0 %3326
      %v3328 = vsel %vm3150, %v3131, -inf
      %3329 = vmax.xlane.f32.xlu0 %v3328
      %v3330 = vpop.xlane.xlu0 %3329
      %v3331 = vsel %vm3150, %v3136, -inf
      %3332 = vmax.xlane.f32.xlu0 %v3331
      %v3333 = vpop.xlane.xlu0 %3332
      %v3334 = vsel %vm3150, %v3139, -inf
      %3335 = vmax.xlane.f32.xlu0 %v3334
      %v3336 = vpop.xlane.xlu0 %3335
      %v3337 = vsel %vm3150, %v3144, -inf
      %3338 = vmax.xlane.f32.xlu0 %v3337
      %v3339 = vpop.xlane.xlu0 %3338
      %v3340 = vsel %vm3150, %v3147, -inf
      %3341 = vmax.xlane.f32.xlu0 %v3340
      %v3342 = vpop.xlane.xlu0 %3341
      %v3343 = vsub.f32 %v2497, %v3153
      %v3344 = vsub.f32 %v2500, %v3156
      %v3345 = vsub.f32 %v2505, %v3159
      %v3346 = vsub.f32 %v2508, %v3162
      %v3347 = vsub.f32 %v2513, %v3165
      %v3348 = vsub.f32 %v2516, %v3168
      %v3349 = vsub.f32 %v2521, %v3171
      %v3350 = vsub.f32 %v2524, %v3174
      %v3351 = vsub.f32 %v2586, %v3177
      %v3352 = vsub.f32 %v2589, %v3180
      %v3353 = vsub.f32 %v2594, %v3183
      %v3354 = vsub.f32 %v2597, %v3186
      %v3355 = vsub.f32 %v2602, %v3189
      %v3356 = vsub.f32 %v2605, %v3192
      %v3357 = vsub.f32 %v2610, %v3195
      %v3358 = vsub.f32 %v2613, %v3198
      %v3359 = vsub.f32 %v2675, %v3201
      %v3360 = vsub.f32 %v2678, %v3204
      %v3361 = vsub.f32 %v2683, %v3207
      %v3362 = vsub.f32 %v2686, %v3210
      %v3363 = vsub.f32 %v2691, %v3213
      %v3364 = vsub.f32 %v2694, %v3216
      %v3365 = vsub.f32 %v2699, %v3219
      %v3366 = vsub.f32 %v2702, %v3222
      %v3367 = vsub.f32 %v2764, %v3225
      %v3368 = vsub.f32 %v2767, %v3228
      %v3369 = vsub.f32 %v2772, %v3231
      %v3370 = vsub.f32 %v2775, %v3234
      %v3371 = vsub.f32 %v2780, %v3237
      %v3372 = vsub.f32 %v2783, %v3240
      %v3373 = vsub.f32 %v2788, %v3243
      %v3374 = vsub.f32 %v2791, %v3246
      %v3375 = vsub.f32 %v2853, %v3249
      %v3376 = vsub.f32 %v2856, %v3252
      %v3377 = vsub.f32 %v2861, %v3255
      %v3378 = vsub.f32 %v2864, %v3258
      %v3379 = vsub.f32 %v2869, %v3261
      %v3380 = vsub.f32 %v2872, %v3264
      %v3381 = vsub.f32 %v2877, %v3267
      %v3382 = vsub.f32 %v2880, %v3270
      %v3383 = vsub.f32 %v2942, %v3273
      %v3384 = vsub.f32 %v2945, %v3276
      %v3385 = vsub.f32 %v2950, %v3279
      %v3386 = vsub.f32 %v2953, %v3282
      %v3387 = vsub.f32 %v2958, %v3285
      %v3388 = vsub.f32 %v2961, %v3288
      %v3389 = vsub.f32 %v2966, %v3291
      %v3390 = vsub.f32 %v2969, %v3294
      %v3391 = vsub.f32 %v3031, %v3297
      %v3392 = vsub.f32 %v3034, %v3300
      %v3393 = vsub.f32 %v3039, %v3303
      %v3394 = vsub.f32 %v3042, %v3306
      %v3395 = vsub.f32 %v3047, %v3309
      %v3396 = vsub.f32 %v3050, %v3312
      %v3397 = vsub.f32 %v3055, %v3315
      %v3398 = vsub.f32 %v3058, %v3318
      %v3399 = vsub.f32 %v3120, %v3321
      %v3400 = vsub.f32 %v3123, %v3324
      %v3401 = vsub.f32 %v3128, %v3327
      %v3402 = vsub.f32 %v3131, %v3330
      %v3403 = vsub.f32 %v3136, %v3333
      %v3404 = vsub.f32 %v3139, %v3336
      %v3405 = vsub.f32 %v3144, %v3339
      %v3406 = vsub.f32 %v3147, %v3342
      %v3407 = vmul.f32 %v3343, 1.442695
      %v3408 = vpow.pop %v3407
      %v3409 = vmul.f32 %v3344, 1.442695
      %v3410 = vpow.pop %v3409
      %v3411 = vmul.f32 %v3345, 1.442695
      %v3412 = vpow.pop %v3411
      %v3413 = vmul.f32 %v3346, 1.442695
      %v3414 = vpow.pop %v3413
      %v3415 = vmul.f32 %v3347, 1.442695
      %v3416 = vpow.pop %v3415
      %v3417 = vmul.f32 %v3348, 1.442695
      %v3418 = vpow.pop %v3417
      %v3419 = vmul.f32 %v3349, 1.442695
      %v3420 = vpow.pop %v3419
      %v3421 = vmul.f32 %v3350, 1.442695
      %v3422 = vpow.pop %v3421
      %v3423 = vmul.f32 %v3351, 1.442695
      %v3424 = vpow.pop %v3423
      %v3425 = vmul.f32 %v3352, 1.442695
      %v3426 = vpow.pop %v3425
      %v3427 = vmul.f32 %v3353, 1.442695
      %v3428 = vpow.pop %v3427
      %v3429 = vmul.f32 %v3354, 1.442695
      %v3430 = vpow.pop %v3429
      %v3431 = vmul.f32 %v3355, 1.442695
      %v3432 = vpow.pop %v3431
      %v3433 = vmul.f32 %v3356, 1.442695
      %v3434 = vpow.pop %v3433
      %v3435 = vmul.f32 %v3357, 1.442695
      %v3436 = vpow.pop %v3435
      %v3437 = vmul.f32 %v3358, 1.442695
      %v3438 = vpow.pop %v3437
      %v3439 = vmul.f32 %v3359, 1.442695
      %v3440 = vpow.pop %v3439
      %v3441 = vmul.f32 %v3360, 1.442695
      %v3442 = vpow.pop %v3441
      %v3443 = vmul.f32 %v3361, 1.442695
      %v3444 = vpow.pop %v3443
      %v3445 = vmul.f32 %v3362, 1.442695
      %v3446 = vpow.pop %v3445
      %v3447 = vmul.f32 %v3363, 1.442695
      %v3448 = vpow.pop %v3447
      %v3449 = vmul.f32 %v3364, 1.442695
      %v3450 = vpow.pop %v3449
      %v3451 = vmul.f32 %v3365, 1.442695
      %v3452 = vpow.pop %v3451
      %v3453 = vmul.f32 %v3366, 1.442695
      %v3454 = vpow.pop %v3453
      %v3455 = vmul.f32 %v3367, 1.442695
      %v3456 = vpow.pop %v3455
      %v3457 = vmul.f32 %v3368, 1.442695
      %v3458 = vpow.pop %v3457
      %v3459 = vmul.f32 %v3369, 1.442695
      %v3460 = vpow.pop %v3459
      %v3461 = vmul.f32 %v3370, 1.442695
      %v3462 = vpow.pop %v3461
      %v3463 = vmul.f32 %v3371, 1.442695
      %v3464 = vpow.pop %v3463
      %v3465 = vmul.f32 %v3372, 1.442695
      %v3466 = vpow.pop %v3465
      %v3467 = vmul.f32 %v3373, 1.442695
      %v3468 = vpow.pop %v3467
      %v3469 = vmul.f32 %v3374, 1.442695
      %v3470 = vpow.pop %v3469
      %v3471 = vmul.f32 %v3375, 1.442695
      %v3472 = vpow.pop %v3471
      %v3473 = vmul.f32 %v3376, 1.442695
      %v3474 = vpow.pop %v3473
      %v3475 = vmul.f32 %v3377, 1.442695
      %v3476 = vpow.pop %v3475
      %v3477 = vmul.f32 %v3378, 1.442695
      %v3478 = vpow.pop %v3477
      %v3479 = vmul.f32 %v3379, 1.442695
      %v3480 = vpow.pop %v3479
      %v3481 = vmul.f32 %v3380, 1.442695
      %v3482 = vpow.pop %v3481
      %v3483 = vmul.f32 %v3381, 1.442695
      %v3484 = vpow.pop %v3483
      %v3485 = vmul.f32 %v3382, 1.442695
      %v3486 = vpow.pop %v3485
      %v3487 = vmul.f32 %v3383, 1.442695
      %v3488 = vpow.pop %v3487
      %v3489 = vmul.f32 %v3384, 1.442695
      %v3490 = vpow.pop %v3489
      %v3491 = vmul.f32 %v3385, 1.442695
      %v3492 = vpow.pop %v3491
      %v3493 = vmul.f32 %v3386, 1.442695
      %v3494 = vpow.pop %v3493
      %v3495 = vmul.f32 %v3387, 1.442695
      %v3496 = vpow.pop %v3495
      %v3497 = vmul.f32 %v3388, 1.442695
      %v3498 = vpow.pop %v3497
      %v3499 = vmul.f32 %v3389, 1.442695
      %v3500 = vpow.pop %v3499
      %v3501 = vmul.f32 %v3390, 1.442695
      %v3502 = vpow.pop %v3501
      %v3503 = vmul.f32 %v3391, 1.442695
      %v3504 = vpow.pop %v3503
      %v3505 = vmul.f32 %v3392, 1.442695
      %v3506 = vpow.pop %v3505
      %v3507 = vmul.f32 %v3393, 1.442695
      %v3508 = vpow.pop %v3507
      %v3509 = vmul.f32 %v3394, 1.442695
      %v3510 = vpow.pop %v3509
      %v3511 = vmul.f32 %v3395, 1.442695
      %v3512 = vpow.pop %v3511
      %v3513 = vmul.f32 %v3396, 1.442695
      %v3514 = vpow.pop %v3513
      %v3515 = vmul.f32 %v3397, 1.442695
      %v3516 = vpow.pop %v3515
      %v3517 = vmul.f32 %v3398, 1.442695
      %v3518 = vpow.pop %v3517
      %v3519 = vmul.f32 %v3399, 1.442695
      %v3520 = vpow.pop %v3519
      %v3521 = vmul.f32 %v3400, 1.442695
      %v3522 = vpow.pop %v3521
      %v3523 = vmul.f32 %v3401, 1.442695
      %v3524 = vpow.pop %v3523
      %v3525 = vmul.f32 %v3402, 1.442695
      %v3526 = vpow.pop %v3525
      %v3527 = vmul.f32 %v3403, 1.442695
      %v3528 = vpow.pop %v3527
      %v3529 = vmul.f32 %v3404, 1.442695
      %v3530 = vpow.pop %v3529
      %v3531 = vmul.f32 %v3405, 1.442695
      %v3532 = vpow.pop %v3531
      %v3533 = vmul.f32 %v3406, 1.442695
      %v3534 = vpow.pop %v3533
      %v3535 = vsel %vm3150, %v3408, 0.0
      %3536 = vadd.xlane.f32.xlu0 %v3535
      %v3537 = vpop.xlane.xlu0 %3536
      %v3538 = vsel %vm3150, %v3410, 0.0
      %3539 = vadd.xlane.f32.xlu0 %v3538
      %v3540 = vpop.xlane.xlu0 %3539
      %v3541 = vsel %vm3150, %v3412, 0.0
      %3542 = vadd.xlane.f32.xlu0 %v3541
      %v3543 = vpop.xlane.xlu0 %3542
      %v3544 = vsel %vm3150, %v3414, 0.0
      %3545 = vadd.xlane.f32.xlu0 %v3544
      %v3546 = vpop.xlane.xlu0 %3545
      %v3547 = vsel %vm3150, %v3416, 0.0
      %3548 = vadd.xlane.f32.xlu0 %v3547
      %v3549 = vpop.xlane.xlu0 %3548
      %v3550 = vsel %vm3150, %v3418, 0.0
      %3551 = vadd.xlane.f32.xlu0 %v3550
      %v3552 = vpop.xlane.xlu0 %3551
      %v3553 = vsel %vm3150, %v3420, 0.0
      %3554 = vadd.xlane.f32.xlu0 %v3553
      %v3555 = vpop.xlane.xlu0 %3554
      %v3556 = vsel %vm3150, %v3422, 0.0
      %3557 = vadd.xlane.f32.xlu0 %v3556
      %v3558 = vpop.xlane.xlu0 %3557
      %v3559 = vsel %vm3150, %v3424, 0.0
      %3560 = vadd.xlane.f32.xlu0 %v3559
      %v3561 = vpop.xlane.xlu0 %3560
      %v3562 = vsel %vm3150, %v3426, 0.0
      %3563 = vadd.xlane.f32.xlu0 %v3562
      %v3564 = vpop.xlane.xlu0 %3563
      %v3565 = vsel %vm3150, %v3428, 0.0
      %3566 = vadd.xlane.f32.xlu0 %v3565
      %v3567 = vpop.xlane.xlu0 %3566
      %v3568 = vsel %vm3150, %v3430, 0.0
      %3569 = vadd.xlane.f32.xlu0 %v3568
      %v3570 = vpop.xlane.xlu0 %3569
      %v3571 = vsel %vm3150, %v3432, 0.0
      %3572 = vadd.xlane.f32.xlu0 %v3571
      %v3573 = vpop.xlane.xlu0 %3572
      %v3574 = vsel %vm3150, %v3434, 0.0
      %3575 = vadd.xlane.f32.xlu0 %v3574
      %v3576 = vpop.xlane.xlu0 %3575
      %v3577 = vsel %vm3150, %v3436, 0.0
      %3578 = vadd.xlane.f32.xlu0 %v3577
      %v3579 = vpop.xlane.xlu0 %3578
      %v3580 = vsel %vm3150, %v3438, 0.0
      %3581 = vadd.xlane.f32.xlu0 %v3580
      %v3582 = vpop.xlane.xlu0 %3581
      %v3583 = vsel %vm3150, %v3440, 0.0
      %3584 = vadd.xlane.f32.xlu0 %v3583
      %v3585 = vpop.xlane.xlu0 %3584
      %v3586 = vsel %vm3150, %v3442, 0.0
      %3587 = vadd.xlane.f32.xlu0 %v3586
      %v3588 = vpop.xlane.xlu0 %3587
      %v3589 = vsel %vm3150, %v3444, 0.0
      %3590 = vadd.xlane.f32.xlu0 %v3589
      %v3591 = vpop.xlane.xlu0 %3590
      %v3592 = vsel %vm3150, %v3446, 0.0
      %3593 = vadd.xlane.f32.xlu0 %v3592
      %v3594 = vpop.xlane.xlu0 %3593
      %v3595 = vsel %vm3150, %v3448, 0.0
      %3596 = vadd.xlane.f32.xlu0 %v3595
      %v3597 = vpop.xlane.xlu0 %3596
      %v3598 = vsel %vm3150, %v3450, 0.0
      %3599 = vadd.xlane.f32.xlu0 %v3598
      %v3600 = vpop.xlane.xlu0 %3599
      %v3601 = vsel %vm3150, %v3452, 0.0
      %3602 = vadd.xlane.f32.xlu0 %v3601
      %v3603 = vpop.xlane.xlu0 %3602
      %v3604 = vsel %vm3150, %v3454, 0.0
      %3605 = vadd.xlane.f32.xlu0 %v3604
      %v3606 = vpop.xlane.xlu0 %3605
      %v3607 = vsel %vm3150, %v3456, 0.0
      %3608 = vadd.xlane.f32.xlu0 %v3607
      %v3609 = vpop.xlane.xlu0 %3608
      %v3610 = vsel %vm3150, %v3458, 0.0
      %3611 = vadd.xlane.f32.xlu0 %v3610
      %v3612 = vpop.xlane.xlu0 %3611
      %v3613 = vsel %vm3150, %v3460, 0.0
      %3614 = vadd.xlane.f32.xlu0 %v3613
      %v3615 = vpop.xlane.xlu0 %3614
      %v3616 = vsel %vm3150, %v3462, 0.0
      %3617 = vadd.xlane.f32.xlu0 %v3616
      %v3618 = vpop.xlane.xlu0 %3617
      %v3619 = vsel %vm3150, %v3464, 0.0
      %3620 = vadd.xlane.f32.xlu0 %v3619
      %v3621 = vpop.xlane.xlu0 %3620
      %v3622 = vsel %vm3150, %v3466, 0.0
      %3623 = vadd.xlane.f32.xlu0 %v3622
      %v3624 = vpop.xlane.xlu0 %3623
      %v3625 = vsel %vm3150, %v3468, 0.0
      %3626 = vadd.xlane.f32.xlu0 %v3625
      %v3627 = vpop.xlane.xlu0 %3626
      %v3628 = vsel %vm3150, %v3470, 0.0
      %3629 = vadd.xlane.f32.xlu0 %v3628
      %v3630 = vpop.xlane.xlu0 %3629
      %v3631 = vsel %vm3150, %v3472, 0.0
      %3632 = vadd.xlane.f32.xlu0 %v3631
      %v3633 = vpop.xlane.xlu0 %3632
      %v3634 = vsel %vm3150, %v3474, 0.0
      %3635 = vadd.xlane.f32.xlu0 %v3634
      %v3636 = vpop.xlane.xlu0 %3635
      %v3637 = vsel %vm3150, %v3476, 0.0
      %3638 = vadd.xlane.f32.xlu0 %v3637
      %v3639 = vpop.xlane.xlu0 %3638
      %v3640 = vsel %vm3150, %v3478, 0.0
      %3641 = vadd.xlane.f32.xlu0 %v3640
      %v3642 = vpop.xlane.xlu0 %3641
      %v3643 = vsel %vm3150, %v3480, 0.0
      %3644 = vadd.xlane.f32.xlu0 %v3643
      %v3645 = vpop.xlane.xlu0 %3644
      %v3646 = vsel %vm3150, %v3482, 0.0
      %3647 = vadd.xlane.f32.xlu0 %v3646
      %v3648 = vpop.xlane.xlu0 %3647
      %v3649 = vsel %vm3150, %v3484, 0.0
      %3650 = vadd.xlane.f32.xlu0 %v3649
      %v3651 = vpop.xlane.xlu0 %3650
      %v3652 = vsel %vm3150, %v3486, 0.0
      %3653 = vadd.xlane.f32.xlu0 %v3652
      %v3654 = vpop.xlane.xlu0 %3653
      %v3655 = vsel %vm3150, %v3488, 0.0
      %3656 = vadd.xlane.f32.xlu0 %v3655
      %v3657 = vpop.xlane.xlu0 %3656
      %v3658 = vsel %vm3150, %v3490, 0.0
      %3659 = vadd.xlane.f32.xlu0 %v3658
      %v3660 = vpop.xlane.xlu0 %3659
      %v3661 = vsel %vm3150, %v3492, 0.0
      %3662 = vadd.xlane.f32.xlu0 %v3661
      %v3663 = vpop.xlane.xlu0 %3662
      %v3664 = vsel %vm3150, %v3494, 0.0
      %3665 = vadd.xlane.f32.xlu0 %v3664
      %v3666 = vpop.xlane.xlu0 %3665
      %v3667 = vsel %vm3150, %v3496, 0.0
      %3668 = vadd.xlane.f32.xlu0 %v3667
      %v3669 = vpop.xlane.xlu0 %3668
      %v3670 = vsel %vm3150, %v3498, 0.0
      %3671 = vadd.xlane.f32.xlu0 %v3670
      %v3672 = vpop.xlane.xlu0 %3671
      %v3673 = vsel %vm3150, %v3500, 0.0
      %3674 = vadd.xlane.f32.xlu0 %v3673
      %v3675 = vpop.xlane.xlu0 %3674
      %v3676 = vsel %vm3150, %v3502, 0.0
      %3677 = vadd.xlane.f32.xlu0 %v3676
      %v3678 = vpop.xlane.xlu0 %3677
      %v3679 = vsel %vm3150, %v3504, 0.0
      %3680 = vadd.xlane.f32.xlu0 %v3679
      %v3681 = vpop.xlane.xlu0 %3680
      %v3682 = vsel %vm3150, %v3506, 0.0
      %3683 = vadd.xlane.f32.xlu0 %v3682
      %v3684 = vpop.xlane.xlu0 %3683
      %v3685 = vsel %vm3150, %v3508, 0.0
      %3686 = vadd.xlane.f32.xlu0 %v3685
      %v3687 = vpop.xlane.xlu0 %3686
      %v3688 = vsel %vm3150, %v3510, 0.0
      %3689 = vadd.xlane.f32.xlu0 %v3688
      %v3690 = vpop.xlane.xlu0 %3689
      %v3691 = vsel %vm3150, %v3512, 0.0
      %3692 = vadd.xlane.f32.xlu0 %v3691
      %v3693 = vpop.xlane.xlu0 %3692
      %v3694 = vsel %vm3150, %v3514, 0.0
      %3695 = vadd.xlane.f32.xlu0 %v3694
      %v3696 = vpop.xlane.xlu0 %3695
      %v3697 = vsel %vm3150, %v3516, 0.0
      %3698 = vadd.xlane.f32.xlu0 %v3697
      %v3699 = vpop.xlane.xlu0 %3698
      %v3700 = vsel %vm3150, %v3518, 0.0
      %3701 = vadd.xlane.f32.xlu0 %v3700
      %v3702 = vpop.xlane.xlu0 %3701
      %v3703 = vsel %vm3150, %v3520, 0.0
      %3704 = vadd.xlane.f32.xlu0 %v3703
      %v3705 = vpop.xlane.xlu0 %3704
      %v3706 = vsel %vm3150, %v3522, 0.0
      %3707 = vadd.xlane.f32.xlu0 %v3706
      %v3708 = vpop.xlane.xlu0 %3707
      %v3709 = vsel %vm3150, %v3524, 0.0
      %3710 = vadd.xlane.f32.xlu0 %v3709
      %v3711 = vpop.xlane.xlu0 %3710
      %v3712 = vsel %vm3150, %v3526, 0.0
      %3713 = vadd.xlane.f32.xlu0 %v3712
      %v3714 = vpop.xlane.xlu0 %3713
      %v3715 = vsel %vm3150, %v3528, 0.0
      %3716 = vadd.xlane.f32.xlu0 %v3715
      %v3717 = vpop.xlane.xlu0 %3716
      %v3718 = vsel %vm3150, %v3530, 0.0
      %3719 = vadd.xlane.f32.xlu0 %v3718
      %v3720 = vpop.xlane.xlu0 %3719
      %v3721 = vsel %vm3150, %v3532, 0.0
      %3722 = vadd.xlane.f32.xlu0 %v3721
      %v3723 = vpop.xlane.xlu0 %3722
      %v3724 = vsel %vm3150, %v3534, 0.0
      %3725 = vadd.xlane.f32.xlu0 %v3724
      %v3726 = vpop.xlane.xlu0 %3725
      %v3727 = vrcp.pop %v3537
      %v3728 = vrcp.pop %v3540
      %v3729 = vrcp.pop %v3543
      %v3730 = vrcp.pop %v3546
      %v3731 = vrcp.pop %v3549
      %v3732 = vrcp.pop %v3552
      %v3733 = vrcp.pop %v3555
      %v3734 = vrcp.pop %v3558
      %v3735 = vrcp.pop %v3561
      %v3736 = vrcp.pop %v3564
      %v3737 = vrcp.pop %v3567
      %v3738 = vrcp.pop %v3570
      %v3739 = vrcp.pop %v3573
      %v3740 = vrcp.pop %v3576
      %v3741 = vrcp.pop %v3579
      %v3742 = vrcp.pop %v3582
      %v3743 = vrcp.pop %v3585
      %v3744 = vrcp.pop %v3588
      %v3745 = vrcp.pop %v3591
      %v3746 = vrcp.pop %v3594
      %v3747 = vrcp.pop %v3597
      %v3748 = vrcp.pop %v3600
      %v3749 = vrcp.pop %v3603
      %v3750 = vrcp.pop %v3606
      %v3751 = vrcp.pop %v3609
      %v3752 = vrcp.pop %v3612
      %v3753 = vrcp.pop %v3615
      %v3754 = vrcp.pop %v3618
      %v3755 = vrcp.pop %v3621
      %v3756 = vrcp.pop %v3624
      %v3757 = vrcp.pop %v3627
      %v3758 = vrcp.pop %v3630
      %v3759 = vrcp.pop %v3633
      %v3760 = vrcp.pop %v3636
      %v3761 = vrcp.pop %v3639
      %v3762 = vrcp.pop %v3642
      %v3763 = vrcp.pop %v3645
      %v3764 = vrcp.pop %v3648
      %v3765 = vrcp.pop %v3651
      %v3766 = vrcp.pop %v3654
      %v3767 = vrcp.pop %v3657
      %v3768 = vrcp.pop %v3660
      %v3769 = vrcp.pop %v3663
      %v3770 = vrcp.pop %v3666
      %v3771 = vrcp.pop %v3669
      %v3772 = vrcp.pop %v3672
      %v3773 = vrcp.pop %v3675
      %v3774 = vrcp.pop %v3678
      %v3775 = vrcp.pop %v3681
      %v3776 = vrcp.pop %v3684
      %v3777 = vrcp.pop %v3687
      %v3778 = vrcp.pop %v3690
      %v3779 = vrcp.pop %v3693
      %v3780 = vrcp.pop %v3696
      %v3781 = vrcp.pop %v3699
      %v3782 = vrcp.pop %v3702
      %v3783 = vrcp.pop %v3705
      %v3784 = vrcp.pop %v3708
      %v3785 = vrcp.pop %v3711
      %v3786 = vrcp.pop %v3714
      %v3787 = vrcp.pop %v3717
      %v3788 = vrcp.pop %v3720
      %v3789 = vrcp.pop %v3723
      %v3790 = vrcp.pop %v3726
      %v3791 = vmul.f32 %v3408, %v3727
      %v3792 = vmul.f32 %v3410, %v3728
      %v3793 = vmul.f32 %v3412, %v3729
      %v3794 = vmul.f32 %v3414, %v3730
      %v3795 = vmul.f32 %v3416, %v3731
      %v3796 = vmul.f32 %v3418, %v3732
      %v3797 = vmul.f32 %v3420, %v3733
      %v3798 = vmul.f32 %v3422, %v3734
      %v3799 = vmul.f32 %v3424, %v3735
      %v3800 = vmul.f32 %v3426, %v3736
      %v3801 = vmul.f32 %v3428, %v3737
      %v3802 = vmul.f32 %v3430, %v3738
      %v3803 = vmul.f32 %v3432, %v3739
      %v3804 = vmul.f32 %v3434, %v3740
      %v3805 = vmul.f32 %v3436, %v3741
      %v3806 = vmul.f32 %v3438, %v3742
      %v3807 = vmul.f32 %v3440, %v3743
      %v3808 = vmul.f32 %v3442, %v3744
      %v3809 = vmul.f32 %v3444, %v3745
      %v3810 = vmul.f32 %v3446, %v3746
      %v3811 = vmul.f32 %v3448, %v3747
      %v3812 = vmul.f32 %v3450, %v3748
      %v3813 = vmul.f32 %v3452, %v3749
      %v3814 = vmul.f32 %v3454, %v3750
      %v3815 = vmul.f32 %v3456, %v3751
      %v3816 = vmul.f32 %v3458, %v3752
      %v3817 = vmul.f32 %v3460, %v3753
      %v3818 = vmul.f32 %v3462, %v3754
      %v3819 = vmul.f32 %v3464, %v3755
      %v3820 = vmul.f32 %v3466, %v3756
      %v3821 = vmul.f32 %v3468, %v3757
      %v3822 = vmul.f32 %v3470, %v3758
      %v3823 = vmul.f32 %v3472, %v3759
      %v3824 = vmul.f32 %v3474, %v3760
      %v3825 = vmul.f32 %v3476, %v3761
      %v3826 = vmul.f32 %v3478, %v3762
      %v3827 = vmul.f32 %v3480, %v3763
      %v3828 = vmul.f32 %v3482, %v3764
      %v3829 = vmul.f32 %v3484, %v3765
      %v3830 = vmul.f32 %v3486, %v3766
      %v3831 = vmul.f32 %v3488, %v3767
      %v3832 = vmul.f32 %v3490, %v3768
      %v3833 = vmul.f32 %v3492, %v3769
      %v3834 = vmul.f32 %v3494, %v3770
      %v3835 = vmul.f32 %v3496, %v3771
      %v3836 = vmul.f32 %v3498, %v3772
      %v3837 = vmul.f32 %v3500, %v3773
      %v3838 = vmul.f32 %v3502, %v3774
      %v3839 = vmul.f32 %v3504, %v3775
      %v3840 = vmul.f32 %v3506, %v3776
      %v3841 = vmul.f32 %v3508, %v3777
      %v3842 = vmul.f32 %v3510, %v3778
      %v3843 = vmul.f32 %v3512, %v3779
      %v3844 = vmul.f32 %v3514, %v3780
      %v3845 = vmul.f32 %v3516, %v3781
      %v3846 = vmul.f32 %v3518, %v3782
      %v3847 = vmul.f32 %v3520, %v3783
      %v3848 = vmul.f32 %v3522, %v3784
      %v3849 = vmul.f32 %v3524, %v3785
      %v3850 = vmul.f32 %v3526, %v3786
      %v3851 = vmul.f32 %v3528, %v3787
      %v3852 = vmul.f32 %v3530, %v3788
      %v3853 = vmul.f32 %v3532, %v3789
      %v3854 = vmul.f32 %v3534, %v3790
      %v3855 = vpack.c.bf16 %v3792, %v3791
      %v3856 = vpack.c.bf16 %v3794, %v3793
      %v3857 = vpack.c.bf16 %v3796, %v3795
      %v3858 = vpack.c.bf16 %v3798, %v3797
      %v3859 = vpack.c.bf16 %v3800, %v3799
      %v3860 = vpack.c.bf16 %v3802, %v3801
      %v3861 = vpack.c.bf16 %v3804, %v3803
      %v3862 = vpack.c.bf16 %v3806, %v3805
      %v3863 = vpack.c.bf16 %v3808, %v3807
      %v3864 = vpack.c.bf16 %v3810, %v3809
      %v3865 = vpack.c.bf16 %v3812, %v3811
      %v3866 = vpack.c.bf16 %v3814, %v3813
      %v3867 = vpack.c.bf16 %v3816, %v3815
      %v3868 = vpack.c.bf16 %v3818, %v3817
      %v3869 = vpack.c.bf16 %v3820, %v3819
      %v3870 = vpack.c.bf16 %v3822, %v3821
      %v3871 = vpack.c.bf16 %v3824, %v3823
      %v3872 = vpack.c.bf16 %v3826, %v3825
      %v3873 = vpack.c.bf16 %v3828, %v3827
      %v3874 = vpack.c.bf16 %v3830, %v3829
      %v3875 = vpack.c.bf16 %v3832, %v3831
      %v3876 = vpack.c.bf16 %v3834, %v3833
      %v3877 = vpack.c.bf16 %v3836, %v3835
      %v3878 = vpack.c.bf16 %v3838, %v3837
      %v3879 = vpack.c.bf16 %v3840, %v3839
      %v3880 = vpack.c.bf16 %v3842, %v3841
      %v3881 = vpack.c.bf16 %v3844, %v3843
      %v3882 = vpack.c.bf16 %v3846, %v3845
      %v3883 = vpack.c.bf16 %v3848, %v3847
      %v3884 = vpack.c.bf16 %v3850, %v3849
      %v3885 = vpack.c.bf16 %v3852, %v3851
      %v3886 = vpack.c.bf16 %v3854, %v3853
      %v3888 = vsel %vm3150, %v3855, 0
      %v3891 = vsel %vm3150, %v3856, 0
      %v3894 = vsel %vm3150, %v3857, 0
      %v3897 = vsel %vm3150, %v3858, 0
      %3899 = vmatprep.subr.bf16.mxu0 0
      %3900 = vmatpush1.bf16.msra.mxu0 %v2406
      %3901 = vmatprep.subr.bf16.mxu0 0
      %3902 = vmatpush1.bf16.msra.mxu0 %v2407
      %3903 = vmatprep.subr.bf16.mxu0 0
      %3904 = vmatpush1.bf16.msra.mxu0 %v2408
      %3905 = vmatprep.subr.bf16.mxu0 0
      %3906 = vmatpush1.bf16.msra.mxu0 %v2409
      %3907 = vmatprep.subr.bf16.mxu0 0
      %3908 = vmatpush1.bf16.msra.mxu0 0
      %3909 = vmatprep.subr.bf16.mxu0 0
      %3910 = vmatpush1.bf16.msra.mxu0 0
      %3911 = vmatprep.subr.bf16.mxu0 0
      %3912 = vmatpush1.bf16.msra.mxu0 0
      %3913 = vmatprep.subr.bf16.mxu0 0
      %3914 = vmatpush1.bf16.msra.mxu0 0
      %3915 = vmatprep.subr.bf16.mxu0 0
      %3916 = vmatpush1.bf16.msra.mxu0 0
      %3917 = vmatprep.subr.bf16.mxu0 0
      %3918 = vmatpush1.bf16.msra.mxu0 0
      %3919 = vmatprep.subr.bf16.mxu0 0
      %3920 = vmatpush1.bf16.msra.mxu0 0
      %3921 = vmatprep.subr.bf16.mxu0 0
      %3922 = vmatpush1.bf16.msra.mxu0 0
      %3923 = vmatprep.subr.bf16.mxu0 0
      %3924 = vmatpush1.bf16.msra.mxu0 0
      %3925 = vmatprep.subr.bf16.mxu0 0
      %3926 = vmatpush1.bf16.msra.mxu0 0
      %3927 = vmatprep.subr.bf16.mxu0 0
      %3928 = vmatpush1.bf16.msra.mxu0 0
      %3929 = vmatprep.subr.bf16.mxu0 0
      %3930 = vmatpush1.bf16.msra.mxu0 0
      %3931 = vmatprep.mubr.bf16.mxu0 0
      %3932 = vmatmul.mubr.bf16.gmra.mrb[0].mxu0 %v3888
      %v3933 = vpop.f32.mrb[0].mxu0
      %v3934 = vadd.f32 0.0, %v3933
      %v3935 = vpop.f32.mrb[0].mxu0
      %v3936 = vpop.f32.mrb[0].mxu0
      %v3937 = vadd.f32 0.0, %v3936
      %v3938 = vpop.f32.mrb[0].mxu0
      %3939 = vmatprep.mubr.bf16.mxu0 0
      %3940 = vmatmul.mubr.bf16.gmra.mrb[0].mxu0 %v3891
      %v3941 = vpop.f32.mrb[0].mxu0
      %v3942 = vadd.f32 0.0, %v3941
      %v3943 = vpop.f32.mrb[0].mxu0
      %v3944 = vpop.f32.mrb[0].mxu0
      %v3945 = vadd.f32 0.0, %v3944
      %v3946 = vpop.f32.mrb[0].mxu0
      %3947 = vmatprep.mubr.bf16.mxu0 0
      %3948 = vmatmul.mubr.bf16.gmra.mrb[0].mxu0 %v3894
      %v3949 = vpop.f32.mrb[0].mxu0
      %v3950 = vadd.f32 0.0, %v3949
      %v3951 = vpop.f32.mrb[0].mxu0
      %v3952 = vpop.f32.mrb[0].mxu0
      %v3953 = vadd.f32 0.0, %v3952
      %v3954 = vpop.f32.mrb[0].mxu0
      %3955 = vmatprep.mubr.bf16.mxu0 0
      %3956 = vmatmul.mubr.bf16.gmra.mrb[0].mxu0 %v3897
      %v3957 = vpop.f32.mrb[0].mxu0
      %v3958 = vadd.f32 0.0, %v3957
      %v3959 = vpop.f32.mrb[0].mxu0
      %v3960 = vpop.f32.mrb[0].mxu0
      %v3961 = vadd.f32 0.0, %v3960
      %v3962 = vpop.f32.mrb[0].mxu0
      %3963 = vdwg.mxu0
      %v3965 = vsel %vm3150, %v3859, 0
      %v3968 = vsel %vm3150, %v3860, 0
      %v3971 = vsel %vm3150, %v3861, 0
      %v3974 = vsel %vm3150, %v3862, 0
      %3976 = vmatprep.subr.bf16.mxu0 0
      %3977 = vmatpush1.bf16.msra.mxu0 %v2410
      %3978 = vmatprep.subr.bf16.mxu0 0
      %3979 = vmatpush1.bf16.msra.mxu0 %v2411
      %3980 = vmatprep.subr.bf16.mxu0 0
      %3981 = vmatpush1.bf16.msra.mxu0 %v2412
      %3982 = vmatprep.subr.bf16.mxu0 0
      %3983 = vmatpush1.bf16.msra.mxu0 %v2413
      %3984 = vmatprep.subr.bf16.mxu0 0
      %3985 = vmatpush1.bf16.msra.mxu0 0
      %3986 = vmatprep.subr.bf16.mxu0 0
      %3987 = vmatpush1.bf16.msra.mxu0 0
      %3988 = vmatprep.subr.bf16.mxu0 0
      %3989 = vmatpush1.bf16.msra.mxu0 0
      %3990 = vmatprep.subr.bf16.mxu0 0
      %3991 = vmatpush1.bf16.msra.mxu0 0
      %3992 = vmatprep.subr.bf16.mxu0 0
      %3993 = vmatpush1.bf16.msra.mxu0 0
      %3994 = vmatprep.subr.bf16.mxu0 0
      %3995 = vmatpush1.bf16.msra.mxu0 0
      %3996 = vmatprep.subr.bf16.mxu0 0
      %3997 = vmatpush1.bf16.msra.mxu0 0
      %3998 = vmatprep.subr.bf16.mxu0 0
      %3999 = vmatpush1.bf16.msra.mxu0 0
      %4000 = vmatprep.subr.bf16.mxu0 0
      %4001 = vmatpush1.bf16.msra.mxu0 0
      %4002 = vmatprep.subr.bf16.mxu0 0
      %4003 = vmatpush1.bf16.msra.mxu0 0
      %4004 = vmatprep.subr.bf16.mxu0 0
      %4005 = vmatpush1.bf16.msra.mxu0 0
      %4006 = vmatprep.subr.bf16.mxu0 0
      %4007 = vmatpush1.bf16.msra.mxu0 0
      %4008 = vmatprep.mubr.bf16.mxu0 0
      %4009 = vmatmul.mubr.bf16.gmra.mrb[0].mxu0 %v3965
      %v4010 = vpop.f32.mrb[0].mxu0
      %v4011 = vadd.f32 0.0, %v4010
      %v4012 = vpop.f32.mrb[0].mxu0
      %v4013 = vpop.f32.mrb[0].mxu0
      %v4014 = vadd.f32 0.0, %v4013
      %v4015 = vpop.f32.mrb[0].mxu0
      %4016 = vmatprep.mubr.bf16.mxu0 0
      %4017 = vmatmul.mubr.bf16.gmra.mrb[0].mxu0 %v3968
      %v4018 = vpop.f32.mrb[0].mxu0
      %v4019 = vadd.f32 0.0, %v4018
      %v4020 = vpop.f32.mrb[0].mxu0
      %v4021 = vpop.f32.mrb[0].mxu0
      %v4022 = vadd.f32 0.0, %v4021
      %v4023 = vpop.f32.mrb[0].mxu0
      %4024 = vmatprep.mubr.bf16.mxu0 0
      %4025 = vmatmul.mubr.bf16.gmra.mrb[0].mxu0 %v3971
      %v4026 = vpop.f32.mrb[0].mxu0
      %v4027 = vadd.f32 0.0, %v4026
      %v4028 = vpop.f32.mrb[0].mxu0
      %v4029 = vpop.f32.mrb[0].mxu0
      %v4030 = vadd.f32 0.0, %v4029
      %v4031 = vpop.f32.mrb[0].mxu0
      %4032 = vmatprep.mubr.bf16.mxu0 0
      %4033 = vmatmul.mubr.bf16.gmra.mrb[0].mxu0 %v3974
      %v4034 = vpop.f32.mrb[0].mxu0
      %v4035 = vadd.f32 0.0, %v4034
      %v4036 = vpop.f32.mrb[0].mxu0
      %v4037 = vpop.f32.mrb[0].mxu0
      %v4038 = vadd.f32 0.0, %v4037
      %v4039 = vpop.f32.mrb[0].mxu0
      %4040 = vdwg.mxu0
      %v4042 = vsel %vm3150, %v3863, 0
      %v4045 = vsel %vm3150, %v3864, 0
      %v4048 = vsel %vm3150, %v3865, 0
      %v4051 = vsel %vm3150, %v3866, 0
      %4053 = vmatprep.subr.bf16.mxu0 0
      %4054 = vmatpush1.bf16.msra.mxu0 %v2414
      %4055 = vmatprep.subr.bf16.mxu0 0
      %4056 = vmatpush1.bf16.msra.mxu0 %v2415
      %4057 = vmatprep.subr.bf16.mxu0 0
      %4058 = vmatpush1.bf16.msra.mxu0 %v2416
      %4059 = vmatprep.subr.bf16.mxu0 0
      %4060 = vmatpush1.bf16.msra.mxu0 %v2417
      %4061 = vmatprep.subr.bf16.mxu0 0
      %4062 = vmatpush1.bf16.msra.mxu0 0
      %4063 = vmatprep.subr.bf16.mxu0 0
      %4064 = vmatpush1.bf16.msra.mxu0 0
      %4065 = vmatprep.subr.bf16.mxu0 0
      %4066 = vmatpush1.bf16.msra.mxu0 0
      %4067 = vmatprep.subr.bf16.mxu0 0
      %4068 = vmatpush1.bf16.msra.mxu0 0
      %4069 = vmatprep.subr.bf16.mxu0 0
      %4070 = vmatpush1.bf16.msra.mxu0 0
      %4071 = vmatprep.subr.bf16.mxu0 0
      %4072 = vmatpush1.bf16.msra.mxu0 0
      %4073 = vmatprep.subr.bf16.mxu0 0
      %4074 = vmatpush1.bf16.msra.mxu0 0
      %4075 = vmatprep.subr.bf16.mxu0 0
      %4076 = vmatpush1.bf16.msra.mxu0 0
      %4077 = vmatprep.subr.bf16.mxu0 0
      %4078 = vmatpush1.bf16.msra.mxu0 0
      %4079 = vmatprep.subr.bf16.mxu0 0
      %4080 = vmatpush1.bf16.msra.mxu0 0
      %4081 = vmatprep.subr.bf16.mxu0 0
      %4082 = vmatpush1.bf16.msra.mxu0 0
      %4083 = vmatprep.subr.bf16.mxu0 0
      %4084 = vmatpush1.bf16.msra.mxu0 0
      %4085 = vmatprep.mubr.bf16.mxu0 0
      %4086 = vmatmul.mubr.bf16.gmra.mrb[0].mxu0 %v4042
      %v4087 = vpop.f32.mrb[0].mxu0
      %v4088 = vadd.f32 0.0, %v4087
      %v4089 = vpop.f32.mrb[0].mxu0
      %v4090 = vpop.f32.mrb[0].mxu0
      %v4091 = vadd.f32 0.0, %v4090
      %v4092 = vpop.f32.mrb[0].mxu0
      %4093 = vmatprep.mubr.bf16.mxu0 0
      %4094 = vmatmul.mubr.bf16.gmra.mrb[0].mxu0 %v4045
      %v4095 = vpop.f32.mrb[0].mxu0
      %v4096 = vadd.f32 0.0, %v4095
      %v4097 = vpop.f32.mrb[0].mxu0
      %v4098 = vpop.f32.mrb[0].mxu0
      %v4099 = vadd.f32 0.0, %v4098
      %v4100 = vpop.f32.mrb[0].mxu0
      %4101 = vmatprep.mubr.bf16.mxu0 0
      %4102 = vmatmul.mubr.bf16.gmra.mrb[0].mxu0 %v4048
      %v4103 = vpop.f32.mrb[0].mxu0
      %v4104 = vadd.f32 0.0, %v4103
      %v4105 = vpop.f32.mrb[0].mxu0
      %v4106 = vpop.f32.mrb[0].mxu0
      %v4107 = vadd.f32 0.0, %v4106
      %v4108 = vpop.f32.mrb[0].mxu0
      %4109 = vmatprep.mubr.bf16.mxu0 0
      %4110 = vmatmul.mubr.bf16.gmra.mrb[0].mxu0 %v4051
      %v4111 = vpop.f32.mrb[0].mxu0
      %v4112 = vadd.f32 0.0, %v4111
      %v4113 = vpop.f32.mrb[0].mxu0
      %v4114 = vpop.f32.mrb[0].mxu0
      %v4115 = vadd.f32 0.0, %v4114
      %v4116 = vpop.f32.mrb[0].mxu0
      %4117 = vdwg.mxu0
      %v4119 = vsel %vm3150, %v3867, 0
      %v4122 = vsel %vm3150, %v3868, 0
      %v4125 = vsel %vm3150, %v3869, 0
      %v4128 = vsel %vm3150, %v3870, 0
      %4130 = vmatprep.subr.bf16.mxu0 0
      %4131 = vmatpush1.bf16.msra.mxu0 %v2418
      %4132 = vmatprep.subr.bf16.mxu0 0
      %4133 = vmatpush1.bf16.msra.mxu0 %v2419
      %4134 = vmatprep.subr.bf16.mxu0 0
      %4135 = vmatpush1.bf16.msra.mxu0 %v2420
      %4136 = vmatprep.subr.bf16.mxu0 0
      %4137 = vmatpush1.bf16.msra.mxu0 %v2421
      %4138 = vmatprep.subr.bf16.mxu0 0
      %4139 = vmatpush1.bf16.msra.mxu0 0
      %4140 = vmatprep.subr.bf16.mxu0 0
      %4141 = vmatpush1.bf16.msra.mxu0 0
      %4142 = vmatprep.subr.bf16.mxu0 0
      %4143 = vmatpush1.bf16.msra.mxu0 0
      %4144 = vmatprep.subr.bf16.mxu0 0
      %4145 = vmatpush1.bf16.msra.mxu0 0
      %4146 = vmatprep.subr.bf16.mxu0 0
      %4147 = vmatpush1.bf16.msra.mxu0 0
      %4148 = vmatprep.subr.bf16.mxu0 0
      %4149 = vmatpush1.bf16.msra.mxu0 0
      %4150 = vmatprep.subr.bf16.mxu0 0
      %4151 = vmatpush1.bf16.msra.mxu0 0
      %4152 = vmatprep.subr.bf16.mxu0 0
      %4153 = vmatpush1.bf16.msra.mxu0 0
      %4154 = vmatprep.subr.bf16.mxu0 0
      %4155 = vmatpush1.bf16.msra.mxu0 0
      %4156 = vmatprep.subr.bf16.mxu0 0
      %4157 = vmatpush1.bf16.msra.mxu0 0
      %4158 = vmatprep.subr.bf16.mxu0 0
      %4159 = vmatpush1.bf16.msra.mxu0 0
      %4160 = vmatprep.subr.bf16.mxu0 0
      %4161 = vmatpush1.bf16.msra.mxu0 0
      %4162 = vmatprep.mubr.bf16.mxu0 0
      %4163 = vmatmul.mubr.bf16.gmra.mrb[0].mxu0 %v4119
      %v4164 = vpop.f32.mrb[0].mxu0
      %v4165 = vadd.f32 0.0, %v4164
      %v4166 = vpop.f32.mrb[0].mxu0
      %v4167 = vpop.f32.mrb[0].mxu0
      %v4168 = vadd.f32 0.0, %v4167
      %v4169 = vpop.f32.mrb[0].mxu0
      %4170 = vmatprep.mubr.bf16.mxu0 0
      %4171 = vmatmul.mubr.bf16.gmra.mrb[0].mxu0 %v4122
      %v4172 = vpop.f32.mrb[0].mxu0
      %v4173 = vadd.f32 0.0, %v4172
      %v4174 = vpop.f32.mrb[0].mxu0
      %v4175 = vpop.f32.mrb[0].mxu0
      %v4176 = vadd.f32 0.0, %v4175
      %v4177 = vpop.f32.mrb[0].mxu0
      %4178 = vmatprep.mubr.bf16.mxu0 0
      %4179 = vmatmul.mubr.bf16.gmra.mrb[0].mxu0 %v4125
      %v4180 = vpop.f32.mrb[0].mxu0
      %v4181 = vadd.f32 0.0, %v4180
      %v4182 = vpop.f32.mrb[0].mxu0
      %v4183 = vpop.f32.mrb[0].mxu0
      %v4184 = vadd.f32 0.0, %v4183
      %v4185 = vpop.f32.mrb[0].mxu0
      %4186 = vmatprep.mubr.bf16.mxu0 0
      %4187 = vmatmul.mubr.bf16.gmra.mrb[0].mxu0 %v4128
      %v4188 = vpop.f32.mrb[0].mxu0
      %v4189 = vadd.f32 0.0, %v4188
      %v4190 = vpop.f32.mrb[0].mxu0
      %v4191 = vpop.f32.mrb[0].mxu0
      %v4192 = vadd.f32 0.0, %v4191
      %v4193 = vpop.f32.mrb[0].mxu0
      %4194 = vdwg.mxu0
      %v4196 = vsel %vm3150, %v3871, 0
      %v4199 = vsel %vm3150, %v3872, 0
      %v4202 = vsel %vm3150, %v3873, 0
      %v4205 = vsel %vm3150, %v3874, 0
      %4207 = vmatprep.subr.bf16.mxu0 0
      %4208 = vmatpush1.bf16.msra.mxu0 %v2422
      %4209 = vmatprep.subr.bf16.mxu0 0
      %4210 = vmatpush1.bf16.msra.mxu0 %v2423
      %4211 = vmatprep.subr.bf16.mxu0 0
      %4212 = vmatpush1.bf16.msra.mxu0 %v2424
      %4213 = vmatprep.subr.bf16.mxu0 0
      %4214 = vmatpush1.bf16.msra.mxu0 %v2425
      %4215 = vmatprep.subr.bf16.mxu0 0
      %4216 = vmatpush1.bf16.msra.mxu0 0
      %4217 = vmatprep.subr.bf16.mxu0 0
      %4218 = vmatpush1.bf16.msra.mxu0 0
      %4219 = vmatprep.subr.bf16.mxu0 0
      %4220 = vmatpush1.bf16.msra.mxu0 0
      %4221 = vmatprep.subr.bf16.mxu0 0
      %4222 = vmatpush1.bf16.msra.mxu0 0
      %4223 = vmatprep.subr.bf16.mxu0 0
      %4224 = vmatpush1.bf16.msra.mxu0 0
      %4225 = vmatprep.subr.bf16.mxu0 0
      %4226 = vmatpush1.bf16.msra.mxu0 0
      %4227 = vmatprep.subr.bf16.mxu0 0
      %4228 = vmatpush1.bf16.msra.mxu0 0
      %4229 = vmatprep.subr.bf16.mxu0 0
      %4230 = vmatpush1.bf16.msra.mxu0 0
      %4231 = vmatprep.subr.bf16.mxu0 0
      %4232 = vmatpush1.bf16.msra.mxu0 0
      %4233 = vmatprep.subr.bf16.mxu0 0
      %4234 = vmatpush1.bf16.msra.mxu0 0
      %4235 = vmatprep.subr.bf16.mxu0 0
      %4236 = vmatpush1.bf16.msra.mxu0 0
      %4237 = vmatprep.subr.bf16.mxu0 0
      %4238 = vmatpush1.bf16.msra.mxu0 0
      %4239 = vmatprep.mubr.bf16.mxu0 0
      %4240 = vmatmul.mubr.bf16.gmra.mrb[0].mxu0 %v4196
      %v4241 = vpop.f32.mrb[0].mxu0
      %v4242 = vadd.f32 0.0, %v4241
      %v4243 = vpop.f32.mrb[0].mxu0
      %v4244 = vpop.f32.mrb[0].mxu0
      %v4245 = vadd.f32 0.0, %v4244
      %v4246 = vpop.f32.mrb[0].mxu0
      %4247 = vmatprep.mubr.bf16.mxu0 0
      %4248 = vmatmul.mubr.bf16.gmra.mrb[0].mxu0 %v4199
      %v4249 = vpop.f32.mrb[0].mxu0
      %v4250 = vadd.f32 0.0, %v4249
      %v4251 = vpop.f32.mrb[0].mxu0
      %v4252 = vpop.f32.mrb[0].mxu0
      %v4253 = vadd.f32 0.0, %v4252
      %v4254 = vpop.f32.mrb[0].mxu0
      %4255 = vmatprep.mubr.bf16.mxu0 0
      %4256 = vmatmul.mubr.bf16.gmra.mrb[0].mxu0 %v4202
      %v4257 = vpop.f32.mrb[0].mxu0
      %v4258 = vadd.f32 0.0, %v4257
      %v4259 = vpop.f32.mrb[0].mxu0
      %v4260 = vpop.f32.mrb[0].mxu0
      %v4261 = vadd.f32 0.0, %v4260
      %v4262 = vpop.f32.mrb[0].mxu0
      %4263 = vmatprep.mubr.bf16.mxu0 0
      %4264 = vmatmul.mubr.bf16.gmra.mrb[0].mxu0 %v4205
      %v4265 = vpop.f32.mrb[0].mxu0
      %v4266 = vadd.f32 0.0, %v4265
      %v4267 = vpop.f32.mrb[0].mxu0
      %v4268 = vpop.f32.mrb[0].mxu0
      %v4269 = vadd.f32 0.0, %v4268
      %v4270 = vpop.f32.mrb[0].mxu0
      %4271 = vdwg.mxu0
      %v4273 = vsel %vm3150, %v3875, 0
      %v4276 = vsel %vm3150, %v3876, 0
      %v4279 = vsel %vm3150, %v3877, 0
      %v4282 = vsel %vm3150, %v3878, 0
      %4284 = vmatprep.subr.bf16.mxu0 0
      %4285 = vmatpush1.bf16.msra.mxu0 %v2426
      %4286 = vmatprep.subr.bf16.mxu0 0
      %4287 = vmatpush1.bf16.msra.mxu0 %v2427
      %4288 = vmatprep.subr.bf16.mxu0 0
      %4289 = vmatpush1.bf16.msra.mxu0 %v2428
      %4290 = vmatprep.subr.bf16.mxu0 0
      %4291 = vmatpush1.bf16.msra.mxu0 %v2429
      %4292 = vmatprep.subr.bf16.mxu0 0
      %4293 = vmatpush1.bf16.msra.mxu0 0
      %4294 = vmatprep.subr.bf16.mxu0 0
      %4295 = vmatpush1.bf16.msra.mxu0 0
      %4296 = vmatprep.subr.bf16.mxu0 0
      %4297 = vmatpush1.bf16.msra.mxu0 0
      %4298 = vmatprep.subr.bf16.mxu0 0
      %4299 = vmatpush1.bf16.msra.mxu0 0
      %4300 = vmatprep.subr.bf16.mxu0 0
      %4301 = vmatpush1.bf16.msra.mxu0 0
      %4302 = vmatprep.subr.bf16.mxu0 0
      %4303 = vmatpush1.bf16.msra.mxu0 0
      %4304 = vmatprep.subr.bf16.mxu0 0
      %4305 = vmatpush1.bf16.msra.mxu0 0
      %4306 = vmatprep.subr.bf16.mxu0 0
      %4307 = vmatpush1.bf16.msra.mxu0 0
      %4308 = vmatprep.subr.bf16.mxu0 0
      %4309 = vmatpush1.bf16.msra.mxu0 0
      %4310 = vmatprep.subr.bf16.mxu0 0
      %4311 = vmatpush1.bf16.msra.mxu0 0
      %4312 = vmatprep.subr.bf16.mxu0 0
      %4313 = vmatpush1.bf16.msra.mxu0 0
      %4314 = vmatprep.subr.bf16.mxu0 0
      %4315 = vmatpush1.bf16.msra.mxu0 0
      %4316 = vmatprep.mubr.bf16.mxu0 0
      %4317 = vmatmul.mubr.bf16.gmra.mrb[0].mxu0 %v4273
      %v4318 = vpop.f32.mrb[0].mxu0
      %v4319 = vadd.f32 0.0, %v4318
      %v4320 = vpop.f32.mrb[0].mxu0
      %v4321 = vpop.f32.mrb[0].mxu0
      %v4322 = vadd.f32 0.0, %v4321
      %v4323 = vpop.f32.mrb[0].mxu0
      %4324 = vmatprep.mubr.bf16.mxu0 0
      %4325 = vmatmul.mubr.bf16.gmra.mrb[0].mxu0 %v4276
      %v4326 = vpop.f32.mrb[0].mxu0
      %v4327 = vadd.f32 0.0, %v4326
      %v4328 = vpop.f32.mrb[0].mxu0
      %v4329 = vpop.f32.mrb[0].mxu0
      %v4330 = vadd.f32 0.0, %v4329
      %v4331 = vpop.f32.mrb[0].mxu0
      %4332 = vmatprep.mubr.bf16.mxu0 0
      %4333 = vmatmul.mubr.bf16.gmra.mrb[0].mxu0 %v4279
      %v4334 = vpop.f32.mrb[0].mxu0
      %v4335 = vadd.f32 0.0, %v4334
      %v4336 = vpop.f32.mrb[0].mxu0
      %v4337 = vpop.f32.mrb[0].mxu0
      %v4338 = vadd.f32 0.0, %v4337
      %v4339 = vpop.f32.mrb[0].mxu0
      %4340 = vmatprep.mubr.bf16.mxu0 0
      %4341 = vmatmul.mubr.bf16.gmra.mrb[0].mxu0 %v4282
      %v4342 = vpop.f32.mrb[0].mxu0
      %v4343 = vadd.f32 0.0, %v4342
      %v4344 = vpop.f32.mrb[0].mxu0
      %v4345 = vpop.f32.mrb[0].mxu0
      %v4346 = vadd.f32 0.0, %v4345
      %v4347 = vpop.f32.mrb[0].mxu0
      %4348 = vdwg.mxu0
      %v4350 = vsel %vm3150, %v3879, 0
      %v4353 = vsel %vm3150, %v3880, 0
      %v4356 = vsel %vm3150, %v3881, 0
      %v4359 = vsel %vm3150, %v3882, 0
      %4361 = vmatprep.subr.bf16.mxu0 0
      %4362 = vmatpush1.bf16.msra.mxu0 %v2430
      %4363 = vmatprep.subr.bf16.mxu0 0
      %4364 = vmatpush1.bf16.msra.mxu0 %v2431
      %4365 = vmatprep.subr.bf16.mxu0 0
      %4366 = vmatpush1.bf16.msra.mxu0 %v2432
      %4367 = vmatprep.subr.bf16.mxu0 0
      %4368 = vmatpush1.bf16.msra.mxu0 %v2433
      %4369 = vmatprep.subr.bf16.mxu0 0
      %4370 = vmatpush1.bf16.msra.mxu0 0
      %4371 = vmatprep.subr.bf16.mxu0 0
      %4372 = vmatpush1.bf16.msra.mxu0 0
      %4373 = vmatprep.subr.bf16.mxu0 0
      %4374 = vmatpush1.bf16.msra.mxu0 0
      %4375 = vmatprep.subr.bf16.mxu0 0
      %4376 = vmatpush1.bf16.msra.mxu0 0
      %4377 = vmatprep.subr.bf16.mxu0 0
      %4378 = vmatpush1.bf16.msra.mxu0 0
      %4379 = vmatprep.subr.bf16.mxu0 0
      %4380 = vmatpush1.bf16.msra.mxu0 0
      %4381 = vmatprep.subr.bf16.mxu0 0
      %4382 = vmatpush1.bf16.msra.mxu0 0
      %4383 = vmatprep.subr.bf16.mxu0 0
      %4384 = vmatpush1.bf16.msra.mxu0 0
      %4385 = vmatprep.subr.bf16.mxu0 0
      %4386 = vmatpush1.bf16.msra.mxu0 0
      %4387 = vmatprep.subr.bf16.mxu0 0
      %4388 = vmatpush1.bf16.msra.mxu0 0
      %4389 = vmatprep.subr.bf16.mxu0 0
      %4390 = vmatpush1.bf16.msra.mxu0 0
      %4391 = vmatprep.subr.bf16.mxu0 0
      %4392 = vmatpush1.bf16.msra.mxu0 0
      %4393 = vmatprep.mubr.bf16.mxu0 0
      %4394 = vmatmul.mubr.bf16.gmra.mrb[0].mxu0 %v4350
      %v4395 = vpop.f32.mrb[0].mxu0
      %v4396 = vadd.f32 0.0, %v4395
      %v4397 = vpop.f32.mrb[0].mxu0
      %v4398 = vpop.f32.mrb[0].mxu0
      %v4399 = vadd.f32 0.0, %v4398
      %v4400 = vpop.f32.mrb[0].mxu0
      %4401 = vmatprep.mubr.bf16.mxu0 0
      %4402 = vmatmul.mubr.bf16.gmra.mrb[0].mxu0 %v4353
      %v4403 = vpop.f32.mrb[0].mxu0
      %v4404 = vadd.f32 0.0, %v4403
      %v4405 = vpop.f32.mrb[0].mxu0
      %v4406 = vpop.f32.mrb[0].mxu0
      %v4407 = vadd.f32 0.0, %v4406
      %v4408 = vpop.f32.mrb[0].mxu0
      %4409 = vmatprep.mubr.bf16.mxu0 0
      %4410 = vmatmul.mubr.bf16.gmra.mrb[0].mxu0 %v4356
      %v4411 = vpop.f32.mrb[0].mxu0
      %v4412 = vadd.f32 0.0, %v4411
      %v4413 = vpop.f32.mrb[0].mxu0
      %v4414 = vpop.f32.mrb[0].mxu0
      %v4415 = vadd.f32 0.0, %v4414
      %v4416 = vpop.f32.mrb[0].mxu0
      %4417 = vmatprep.mubr.bf16.mxu0 0
      %4418 = vmatmul.mubr.bf16.gmra.mrb[0].mxu0 %v4359
      %v4419 = vpop.f32.mrb[0].mxu0
      %v4420 = vadd.f32 0.0, %v4419
      %v4421 = vpop.f32.mrb[0].mxu0
      %v4422 = vpop.f32.mrb[0].mxu0
      %v4423 = vadd.f32 0.0, %v4422
      %v4424 = vpop.f32.mrb[0].mxu0
      %4425 = vdwg.mxu0
      %v4427 = vsel %vm3150, %v3883, 0
      %v4430 = vsel %vm3150, %v3884, 0
      %v4433 = vsel %vm3150, %v3885, 0
      %v4436 = vsel %vm3150, %v3886, 0
      %4438 = vmatprep.subr.bf16.mxu0 0
      %4439 = vmatpush1.bf16.msra.mxu0 %v2434
      %4440 = vmatprep.subr.bf16.mxu0 0
      %4441 = vmatpush1.bf16.msra.mxu0 %v2435
      %4442 = vmatprep.subr.bf16.mxu0 0
      %4443 = vmatpush1.bf16.msra.mxu0 %v2436
      %4444 = vmatprep.subr.bf16.mxu0 0
      %4445 = vmatpush1.bf16.msra.mxu0 %v2437
      %4446 = vmatprep.subr.bf16.mxu0 0
      %4447 = vmatpush1.bf16.msra.mxu0 0
      %4448 = vmatprep.subr.bf16.mxu0 0
      %4449 = vmatpush1.bf16.msra.mxu0 0
      %4450 = vmatprep.subr.bf16.mxu0 0
      %4451 = vmatpush1.bf16.msra.mxu0 0
      %4452 = vmatprep.subr.bf16.mxu0 0
      %4453 = vmatpush1.bf16.msra.mxu0 0
      %4454 = vmatprep.subr.bf16.mxu0 0
      %4455 = vmatpush1.bf16.msra.mxu0 0
      %4456 = vmatprep.subr.bf16.mxu0 0
      %4457 = vmatpush1.bf16.msra.mxu0 0
      %4458 = vmatprep.subr.bf16.mxu0 0
      %4459 = vmatpush1.bf16.msra.mxu0 0
      %4460 = vmatprep.subr.bf16.mxu0 0
      %4461 = vmatpush1.bf16.msra.mxu0 0
      %4462 = vmatprep.subr.bf16.mxu0 0
      %4463 = vmatpush1.bf16.msra.mxu0 0
      %4464 = vmatprep.subr.bf16.mxu0 0
      %4465 = vmatpush1.bf16.msra.mxu0 0
      %4466 = vmatprep.subr.bf16.mxu0 0
      %4467 = vmatpush1.bf16.msra.mxu0 0
      %4468 = vmatprep.subr.bf16.mxu0 0
      %4469 = vmatpush1.bf16.msra.mxu0 0
      %4470 = vmatprep.mubr.bf16.mxu0 0
      %4471 = vmatmul.mubr.bf16.gmra.mrb[0].mxu0 %v4427
      %v4472 = vpop.f32.mrb[0].mxu0
      %v4473 = vadd.f32 0.0, %v4472
      %v4474 = vpop.f32.mrb[0].mxu0
      %v4475 = vpop.f32.mrb[0].mxu0
      %v4476 = vadd.f32 0.0, %v4475
      %v4477 = vpop.f32.mrb[0].mxu0
      %4478 = vmatprep.mubr.bf16.mxu0 0
      %4479 = vmatmul.mubr.bf16.gmra.mrb[0].mxu0 %v4430
      %v4480 = vpop.f32.mrb[0].mxu0
      %v4481 = vadd.f32 0.0, %v4480
      %v4482 = vpop.f32.mrb[0].mxu0
      %v4483 = vpop.f32.mrb[0].mxu0
      %v4484 = vadd.f32 0.0, %v4483
      %v4485 = vpop.f32.mrb[0].mxu0
      %4486 = vmatprep.mubr.bf16.mxu0 0
      %4487 = vmatmul.mubr.bf16.gmra.mrb[0].mxu0 %v4433
      %v4488 = vpop.f32.mrb[0].mxu0
      %v4489 = vadd.f32 0.0, %v4488
      %v4490 = vpop.f32.mrb[0].mxu0
      %v4491 = vpop.f32.mrb[0].mxu0
      %v4492 = vadd.f32 0.0, %v4491
      %v4493 = vpop.f32.mrb[0].mxu0
      %4494 = vmatprep.mubr.bf16.mxu0 0
      %4495 = vmatmul.mubr.bf16.gmra.mrb[0].mxu0 %v4436
      %v4496 = vpop.f32.mrb[0].mxu0
      %v4497 = vadd.f32 0.0, %v4496
      %v4498 = vpop.f32.mrb[0].mxu0
      %v4499 = vpop.f32.mrb[0].mxu0
      %v4500 = vadd.f32 0.0, %v4499
      %v4501 = vpop.f32.mrb[0].mxu0
      %4502 = vdwg.mxu0
      %v4503 = vpack.c.bf16 %v3937, %v3934
      %v4504 = vpack.c.bf16 %v3945, %v3942
      %v4505 = vpack.c.bf16 %v3953, %v3950
      %v4506 = vpack.c.bf16 %v3961, %v3958
      %v4507 = vpack.c.bf16 %v4014, %v4011
      %v4508 = vpack.c.bf16 %v4022, %v4019
      %v4509 = vpack.c.bf16 %v4030, %v4027
      %v4510 = vpack.c.bf16 %v4038, %v4035
      %v4511 = vpack.c.bf16 %v4091, %v4088
      %v4512 = vpack.c.bf16 %v4099, %v4096
      %v4513 = vpack.c.bf16 %v4107, %v4104
      %v4514 = vpack.c.bf16 %v4115, %v4112
      %v4515 = vpack.c.bf16 %v4168, %v4165
      %v4516 = vpack.c.bf16 %v4176, %v4173
      %v4517 = vpack.c.bf16 %v4184, %v4181
      %v4518 = vpack.c.bf16 %v4192, %v4189
      %v4519 = vpack.c.bf16 %v4245, %v4242
      %v4520 = vpack.c.bf16 %v4253, %v4250
      %v4521 = vpack.c.bf16 %v4261, %v4258
      %v4522 = vpack.c.bf16 %v4269, %v4266
      %v4523 = vpack.c.bf16 %v4322, %v4319
      %v4524 = vpack.c.bf16 %v4330, %v4327
      %v4525 = vpack.c.bf16 %v4338, %v4335
      %v4526 = vpack.c.bf16 %v4346, %v4343
      %v4527 = vpack.c.bf16 %v4399, %v4396
      %v4528 = vpack.c.bf16 %v4407, %v4404
      %v4529 = vpack.c.bf16 %v4415, %v4412
      %v4530 = vpack.c.bf16 %v4423, %v4420
      %v4531 = vpack.c.bf16 %v4476, %v4473
      %v4532 = vpack.c.bf16 %v4484, %v4481
      %v4533 = vpack.c.bf16 %v4492, %v4489
      %v4534 = vpack.c.bf16 %v4500, %v4497
      %v4535 = vld [vmem:[%s10] sm:$0xf]
      %v4536 = vld [vmem:[%s10 + $0x4] sm:$0xf]
      %v4537 = vld [vmem:[%s10 + $0x8] sm:$0xf]
      %v4538 = vld [vmem:[%s10 + $0xc] sm:$0xf]
      %v4539 = vld [vmem:[%s11] sm:$0x1]
      %v4541 = vlaneseq
      %v4542 = vshrl.u32 %v4541, 7
      %v4543 = vsub.s32 0, %v4542
      %v4544 = vrot.slane %v4539, %v4543
      %v4550 = vunpack.c.l.b16 %v4535
      %v4551 = vunpack.c.l.b16 %v4536
      %v4552 = vunpack.c.l.b16 %v4537
      %v4553 = vunpack.c.l.b16 %v4538
      %v4554 = vpack.c.b16 %v4551, %v4550
      %v4555 = vpack.c.b16 %v4553, %v4552
      %v4559 = vsel %vm487, %v4503, 0
      %v4562 = vsel %vm487, %v4504, 0
      %v4565 = vsel %vm487, %v4505, 0
      %v4568 = vsel %vm487, %v4506, 0
      %v4571 = vsel %vm487, %v4507, 0
      %v4574 = vsel %vm487, %v4508, 0
      %v4577 = vsel %vm487, %v4509, 0
      %v4580 = vsel %vm487, %v4510, 0
      %v4583 = vsel %vm487, %v4511, 0
      %v4586 = vsel %vm487, %v4512, 0
      %v4589 = vsel %vm487, %v4513, 0
      %v4592 = vsel %vm487, %v4514, 0
      %v4595 = vsel %vm487, %v4515, 0
      %v4598 = vsel %vm487, %v4516, 0
      %v4601 = vsel %vm487, %v4517, 0
      %v4604 = vsel %vm487, %v4518, 0
      %v4607 = vsel %vm487, %v4519, 0
      %v4610 = vsel %vm487, %v4520, 0
      %v4613 = vsel %vm487, %v4521, 0
      %v4616 = vsel %vm487, %v4522, 0
      %v4619 = vsel %vm487, %v4523, 0
      %v4622 = vsel %vm487, %v4524, 0
      %v4625 = vsel %vm487, %v4525, 0
      %v4628 = vsel %vm487, %v4526, 0
      %v4631 = vsel %vm487, %v4527, 0
      %v4634 = vsel %vm487, %v4528, 0
      %v4637 = vsel %vm487, %v4529, 0
      %v4640 = vsel %vm487, %v4530, 0
      %v4643 = vsel %vm487, %v4531, 0
      %v4646 = vsel %vm487, %v4532, 0
      %v4649 = vsel %vm487, %v4533, 0
      %v4652 = vsel %vm487, %v4534, 0
      %4654 = vmatprep.subr.bf16.mxu0 0
      %4655 = vmatpush1.bf16.msra.mxu0 %v4554
      %4656 = vmatprep.subr.bf16.mxu0 0
      %4657 = vmatpush1.bf16.msra.mxu0 %v4555
      %4658 = vmatprep.subr.bf16.mxu0 0
      %4659 = vmatpush1.bf16.msra.mxu0 0
      %4660 = vmatprep.subr.bf16.mxu0 0
      %4661 = vmatpush1.bf16.msra.mxu0 0
      %4662 = vmatprep.subr.bf16.mxu0 0
      %4663 = vmatpush1.bf16.msra.mxu0 0
      %4664 = vmatprep.subr.bf16.mxu0 0
      %4665 = vmatpush1.bf16.msra.mxu0 0
      %4666 = vmatprep.subr.bf16.mxu0 0
      %4667 = vmatpush1.bf16.msra.mxu0 0
      %4668 = vmatprep.subr.bf16.mxu0 0
      %4669 = vmatpush1.bf16.msra.mxu0 0
      %4670 = vmatprep.subr.bf16.mxu0 0
      %4671 = vmatpush1.bf16.msra.mxu0 0
      %4672 = vmatprep.subr.bf16.mxu0 0
      %4673 = vmatpush1.bf16.msra.mxu0 0
      %4674 = vmatprep.subr.bf16.mxu0 0
      %4675 = vmatpush1.bf16.msra.mxu0 0
      %4676 = vmatprep.subr.bf16.mxu0 0
      %4677 = vmatpush1.bf16.msra.mxu0 0
      %4678 = vmatprep.subr.bf16.mxu0 0
      %4679 = vmatpush1.bf16.msra.mxu0 0
      %4680 = vmatprep.subr.bf16.mxu0 0
      %4681 = vmatpush1.bf16.msra.mxu0 0
      %4682 = vmatprep.subr.bf16.mxu0 0
      %4683 = vmatpush1.bf16.msra.mxu0 0
      %4684 = vmatprep.subr.bf16.mxu0 0
      %4685 = vmatpush1.bf16.msra.mxu0 0
      %4686 = vmatprep.mubr.bf16.mxu0 0
      %4687 = vmatmul.mubr.bf16.gmra.mrb[0].mxu0 %v4559
      %v4688 = vpop.f32.mrb[0].mxu0
      %v4689 = vadd.f32 %v4544, %v4688
      %v4690 = vpop.f32.mrb[0].mxu0
      %v4691 = vpop.f32.mrb[0].mxu0
      %v4692 = vadd.f32 %v4544, %v4691
      %v4693 = vpop.f32.mrb[0].mxu0
      %4694 = vmatprep.mubr.bf16.mxu0 0
      %4695 = vmatmul.mubr.bf16.gmra.mrb[0].mxu0 %v4562
      %v4696 = vpop.f32.mrb[0].mxu0
      %v4697 = vadd.f32 %v4544, %v4696
      %v4698 = vpop.f32.mrb[0].mxu0
      %v4699 = vpop.f32.mrb[0].mxu0
      %v4700 = vadd.f32 %v4544, %v4699
      %v4701 = vpop.f32.mrb[0].mxu0
      %4702 = vmatprep.mubr.bf16.mxu0 0
      %4703 = vmatmul.mubr.bf16.gmra.mrb[0].mxu0 %v4565
      %v4704 = vpop.f32.mrb[0].mxu0
      %v4705 = vadd.f32 %v4544, %v4704
      %v4706 = vpop.f32.mrb[0].mxu0
      %v4707 = vpop.f32.mrb[0].mxu0
      %v4708 = vadd.f32 %v4544, %v4707
      %v4709 = vpop.f32.mrb[0].mxu0
      %4710 = vmatprep.mubr.bf16.mxu0 0
      %4711 = vmatmul.mubr.bf16.gmra.mrb[0].mxu0 %v4568
      %v4712 = vpop.f32.mrb[0].mxu0
      %v4713 = vadd.f32 %v4544, %v4712
      %v4714 = vpop.f32.mrb[0].mxu0
      %v4715 = vpop.f32.mrb[0].mxu0
      %v4716 = vadd.f32 %v4544, %v4715
      %v4717 = vpop.f32.mrb[0].mxu0
      %4718 = vmatprep.mubr.bf16.mxu0 0
      %4719 = vmatmul.mubr.bf16.gmra.mrb[0].mxu0 %v4571
      %v4720 = vpop.f32.mrb[0].mxu0
      %v4721 = vadd.f32 %v4544, %v4720
      %v4722 = vpop.f32.mrb[0].mxu0
      %v4723 = vpop.f32.mrb[0].mxu0
      %v4724 = vadd.f32 %v4544, %v4723
      %v4725 = vpop.f32.mrb[0].mxu0
      %4726 = vmatprep.mubr.bf16.mxu0 0
      %4727 = vmatmul.mubr.bf16.gmra.mrb[0].mxu0 %v4574
      %v4728 = vpop.f32.mrb[0].mxu0
      %v4729 = vadd.f32 %v4544, %v4728
      %v4730 = vpop.f32.mrb[0].mxu0
      %v4731 = vpop.f32.mrb[0].mxu0
      %v4732 = vadd.f32 %v4544, %v4731
      %v4733 = vpop.f32.mrb[0].mxu0
      %4734 = vmatprep.mubr.bf16.mxu0 0
      %4735 = vmatmul.mubr.bf16.gmra.mrb[0].mxu0 %v4577
      %v4736 = vpop.f32.mrb[0].mxu0
      %v4737 = vadd.f32 %v4544, %v4736
      %v4738 = vpop.f32.mrb[0].mxu0
      %v4739 = vpop.f32.mrb[0].mxu0
      %v4740 = vadd.f32 %v4544, %v4739
      %v4741 = vpop.f32.mrb[0].mxu0
      %4742 = vmatprep.mubr.bf16.mxu0 0
      %4743 = vmatmul.mubr.bf16.gmra.mrb[0].mxu0 %v4580
      %v4744 = vpop.f32.mrb[0].mxu0
      %v4745 = vadd.f32 %v4544, %v4744
      %v4746 = vpop.f32.mrb[0].mxu0
      %v4747 = vpop.f32.mrb[0].mxu0
      %v4748 = vadd.f32 %v4544, %v4747
      %v4749 = vpop.f32.mrb[0].mxu0
      %4750 = vmatprep.mubr.bf16.mxu0 0
      %4751 = vmatmul.mubr.bf16.gmra.mrb[0].mxu0 %v4583
      %v4752 = vpop.f32.mrb[0].mxu0
      %v4753 = vadd.f32 %v4544, %v4752
      %v4754 = vpop.f32.mrb[0].mxu0
      %v4755 = vpop.f32.mrb[0].mxu0
      %v4756 = vadd.f32 %v4544, %v4755
      %v4757 = vpop.f32.mrb[0].mxu0
      %4758 = vmatprep.mubr.bf16.mxu0 0
      %4759 = vmatmul.mubr.bf16.gmra.mrb[0].mxu0 %v4586
      %v4760 = vpop.f32.mrb[0].mxu0
      %v4761 = vadd.f32 %v4544, %v4760
      %v4762 = vpop.f32.mrb[0].mxu0
      %v4763 = vpop.f32.mrb[0].mxu0
      %v4764 = vadd.f32 %v4544, %v4763
      %v4765 = vpop.f32.mrb[0].mxu0
      %4766 = vmatprep.mubr.bf16.mxu0 0
      %4767 = vmatmul.mubr.bf16.gmra.mrb[0].mxu0 %v4589
      %v4768 = vpop.f32.mrb[0].mxu0
      %v4769 = vadd.f32 %v4544, %v4768
      %v4770 = vpop.f32.mrb[0].mxu0
      %v4771 = vpop.f32.mrb[0].mxu0
      %v4772 = vadd.f32 %v4544, %v4771
      %v4773 = vpop.f32.mrb[0].mxu0
      %4774 = vmatprep.mubr.bf16.mxu0 0
      %4775 = vmatmul.mubr.bf16.gmra.mrb[0].mxu0 %v4592
      %v4776 = vpop.f32.mrb[0].mxu0
      %v4777 = vadd.f32 %v4544, %v4776
      %v4778 = vpop.f32.mrb[0].mxu0
      %v4779 = vpop.f32.mrb[0].mxu0
      %v4780 = vadd.f32 %v4544, %v4779
      %v4781 = vpop.f32.mrb[0].mxu0
      %4782 = vmatprep.mubr.bf16.mxu0 0
      %4783 = vmatmul.mubr.bf16.gmra.mrb[0].mxu0 %v4595
      %v4784 = vpop.f32.mrb[0].mxu0
      %v4785 = vadd.f32 %v4544, %v4784
      %v4786 = vpop.f32.mrb[0].mxu0
      %v4787 = vpop.f32.mrb[0].mxu0
      %v4788 = vadd.f32 %v4544, %v4787
      %v4789 = vpop.f32.mrb[0].mxu0
      %4790 = vmatprep.mubr.bf16.mxu0 0
      %4791 = vmatmul.mubr.bf16.gmra.mrb[0].mxu0 %v4598
      %v4792 = vpop.f32.mrb[0].mxu0
      %v4793 = vadd.f32 %v4544, %v4792
      %v4794 = vpop.f32.mrb[0].mxu0
      %v4795 = vpop.f32.mrb[0].mxu0
      %v4796 = vadd.f32 %v4544, %v4795
      %v4797 = vpop.f32.mrb[0].mxu0
      %4798 = vmatprep.mubr.bf16.mxu0 0
      %4799 = vmatmul.mubr.bf16.gmra.mrb[0].mxu0 %v4601
      %v4800 = vpop.f32.mrb[0].mxu0
      %v4801 = vadd.f32 %v4544, %v4800
      %v4802 = vpop.f32.mrb[0].mxu0
      %v4803 = vpop.f32.mrb[0].mxu0
      %v4804 = vadd.f32 %v4544, %v4803
      %v4805 = vpop.f32.mrb[0].mxu0
      %4806 = vmatprep.mubr.bf16.mxu0 0
      %4807 = vmatmul.mubr.bf16.gmra.mrb[0].mxu0 %v4604
      %v4808 = vpop.f32.mrb[0].mxu0
      %v4809 = vadd.f32 %v4544, %v4808
      %v4810 = vpop.f32.mrb[0].mxu0
      %v4811 = vpop.f32.mrb[0].mxu0
      %v4812 = vadd.f32 %v4544, %v4811
      %v4813 = vpop.f32.mrb[0].mxu0
      %4814 = vmatprep.mubr.bf16.mxu0 0
      %4815 = vmatmul.mubr.bf16.gmra.mrb[0].mxu0 %v4607
      %v4816 = vpop.f32.mrb[0].mxu0
      %v4817 = vadd.f32 %v4544, %v4816
      %v4818 = vpop.f32.mrb[0].mxu0
      %v4819 = vpop.f32.mrb[0].mxu0
      %v4820 = vadd.f32 %v4544, %v4819
      %v4821 = vpop.f32.mrb[0].mxu0
      %4822 = vmatprep.mubr.bf16.mxu0 0
      %4823 = vmatmul.mubr.bf16.gmra.mrb[0].mxu0 %v4610
      %v4824 = vpop.f32.mrb[0].mxu0
      %v4825 = vadd.f32 %v4544, %v4824
      %v4826 = vpop.f32.mrb[0].mxu0
      %v4827 = vpop.f32.mrb[0].mxu0
      %v4828 = vadd.f32 %v4544, %v4827
      %v4829 = vpop.f32.mrb[0].mxu0
      %4830 = vmatprep.mubr.bf16.mxu0 0
      %4831 = vmatmul.mubr.bf16.gmra.mrb[0].mxu0 %v4613
      %v4832 = vpop.f32.mrb[0].mxu0
      %v4833 = vadd.f32 %v4544, %v4832
      %v4834 = vpop.f32.mrb[0].mxu0
      %v4835 = vpop.f32.mrb[0].mxu0
      %v4836 = vadd.f32 %v4544, %v4835
      %v4837 = vpop.f32.mrb[0].mxu0
      %4838 = vmatprep.mubr.bf16.mxu0 0
      %4839 = vmatmul.mubr.bf16.gmra.mrb[0].mxu0 %v4616
      %v4840 = vpop.f32.mrb[0].mxu0
      %v4841 = vadd.f32 %v4544, %v4840
      %v4842 = vpop.f32.mrb[0].mxu0
      %v4843 = vpop.f32.mrb[0].mxu0
      %v4844 = vadd.f32 %v4544, %v4843
      %v4845 = vpop.f32.mrb[0].mxu0
      %4846 = vmatprep.mubr.bf16.mxu0 0
      %4847 = vmatmul.mubr.bf16.gmra.mrb[0].mxu0 %v4619
      %v4848 = vpop.f32.mrb[0].mxu0
      %v4849 = vadd.f32 %v4544, %v4848
      %v4850 = vpop.f32.mrb[0].mxu0
      %v4851 = vpop.f32.mrb[0].mxu0
      %v4852 = vadd.f32 %v4544, %v4851
      %v4853 = vpop.f32.mrb[0].mxu0
      %4854 = vmatprep.mubr.bf16.mxu0 0
      %4855 = vmatmul.mubr.bf16.gmra.mrb[0].mxu0 %v4622
      %v4856 = vpop.f32.mrb[0].mxu0
      %v4857 = vadd.f32 %v4544, %v4856
      %v4858 = vpop.f32.mrb[0].mxu0
      %v4859 = vpop.f32.mrb[0].mxu0
      %v4860 = vadd.f32 %v4544, %v4859
      %v4861 = vpop.f32.mrb[0].mxu0
      %4862 = vmatprep.mubr.bf16.mxu0 0
      %4863 = vmatmul.mubr.bf16.gmra.mrb[0].mxu0 %v4625
      %v4864 = vpop.f32.mrb[0].mxu0
      %v4865 = vadd.f32 %v4544, %v4864
      %v4866 = vpop.f32.mrb[0].mxu0
      %v4867 = vpop.f32.mrb[0].mxu0
      %v4868 = vadd.f32 %v4544, %v4867
      %v4869 = vpop.f32.mrb[0].mxu0
      %4870 = vmatprep.mubr.bf16.mxu0 0
      %4871 = vmatmul.mubr.bf16.gmra.mrb[0].mxu0 %v4628
      %v4872 = vpop.f32.mrb[0].mxu0
      %v4873 = vadd.f32 %v4544, %v4872
      %v4874 = vpop.f32.mrb[0].mxu0
      %v4875 = vpop.f32.mrb[0].mxu0
      %v4876 = vadd.f32 %v4544, %v4875
      %v4877 = vpop.f32.mrb[0].mxu0
      %4878 = vmatprep.mubr.bf16.mxu0 0
      %4879 = vmatmul.mubr.bf16.gmra.mrb[0].mxu0 %v4631
      %v4880 = vpop.f32.mrb[0].mxu0
      %v4881 = vadd.f32 %v4544, %v4880
      %v4882 = vpop.f32.mrb[0].mxu0
      %v4883 = vpop.f32.mrb[0].mxu0
      %v4884 = vadd.f32 %v4544, %v4883
      %v4885 = vpop.f32.mrb[0].mxu0
      %4886 = vmatprep.mubr.bf16.mxu0 0
      %4887 = vmatmul.mubr.bf16.gmra.mrb[0].mxu0 %v4634
      %v4888 = vpop.f32.mrb[0].mxu0
      %v4889 = vadd.f32 %v4544, %v4888
      %v4890 = vpop.f32.mrb[0].mxu0
      %v4891 = vpop.f32.mrb[0].mxu0
      %v4892 = vadd.f32 %v4544, %v4891
      %v4893 = vpop.f32.mrb[0].mxu0
      %4894 = vmatprep.mubr.bf16.mxu0 0
      %4895 = vmatmul.mubr.bf16.gmra.mrb[0].mxu0 %v4637
      %v4896 = vpop.f32.mrb[0].mxu0
      %v4897 = vadd.f32 %v4544, %v4896
      %v4898 = vpop.f32.mrb[0].mxu0
      %v4899 = vpop.f32.mrb[0].mxu0
      %v4900 = vadd.f32 %v4544, %v4899
      %v4901 = vpop.f32.mrb[0].mxu0
      %4902 = vmatprep.mubr.bf16.mxu0 0
      %4903 = vmatmul.mubr.bf16.gmra.mrb[0].mxu0 %v4640
      %v4904 = vpop.f32.mrb[0].mxu0
      %v4905 = vadd.f32 %v4544, %v4904
      %v4906 = vpop.f32.mrb[0].mxu0
      %v4907 = vpop.f32.mrb[0].mxu0
      %v4908 = vadd.f32 %v4544, %v4907
      %v4909 = vpop.f32.mrb[0].mxu0
      %4910 = vmatprep.mubr.bf16.mxu0 0
      %4911 = vmatmul.mubr.bf16.gmra.mrb[0].mxu0 %v4643
      %v4912 = vpop.f32.mrb[0].mxu0
      %v4913 = vadd.f32 %v4544, %v4912
      %v4914 = vpop.f32.mrb[0].mxu0
      %v4915 = vpop.f32.mrb[0].mxu0
      %v4916 = vadd.f32 %v4544, %v4915
      %v4917 = vpop.f32.mrb[0].mxu0
      %4918 = vmatprep.mubr.bf16.mxu0 0
      %4919 = vmatmul.mubr.bf16.gmra.mrb[0].mxu0 %v4646
      %v4920 = vpop.f32.mrb[0].mxu0
      %v4921 = vadd.f32 %v4544, %v4920
      %v4922 = vpop.f32.mrb[0].mxu0
      %v4923 = vpop.f32.mrb[0].mxu0
      %v4924 = vadd.f32 %v4544, %v4923
      %v4925 = vpop.f32.mrb[0].mxu0
      %4926 = vmatprep.mubr.bf16.mxu0 0
      %4927 = vmatmul.mubr.bf16.gmra.mrb[0].mxu0 %v4649
      %v4928 = vpop.f32.mrb[0].mxu0
      %v4929 = vadd.f32 %v4544, %v4928
      %v4930 = vpop.f32.mrb[0].mxu0
      %v4931 = vpop.f32.mrb[0].mxu0
      %v4932 = vadd.f32 %v4544, %v4931
      %v4933 = vpop.f32.mrb[0].mxu0
      %4934 = vmatprep.mubr.bf16.mxu0 0
      %4935 = vmatmul.mubr.bf16.gmra.mrb[0].mxu0 %v4652
      %v4936 = vpop.f32.mrb[0].mxu0
      %v4937 = vadd.f32 %v4544, %v4936
      %v4938 = vpop.f32.mrb[0].mxu0
      %v4939 = vpop.f32.mrb[0].mxu0
      %v4940 = vadd.f32 %v4544, %v4939
      %v4941 = vpop.f32.mrb[0].mxu0
      %4942 = vdwg.mxu0
      %v4943 = vadd.f32 %v423, %v4689
      %v4944 = vadd.f32 %v424, %v4692
      %v4945 = vadd.f32 %v425, %v4697
      %v4946 = vadd.f32 %v426, %v4700
      %v4947 = vadd.f32 %v427, %v4705
      %v4948 = vadd.f32 %v428, %v4708
      %v4949 = vadd.f32 %v429, %v4713
      %v4950 = vadd.f32 %v430, %v4716
      %v4951 = vadd.f32 %v431, %v4721
      %v4952 = vadd.f32 %v432, %v4724
      %v4953 = vadd.f32 %v433, %v4729
      %v4954 = vadd.f32 %v434, %v4732
      %v4955 = vadd.f32 %v435, %v4737
      %v4956 = vadd.f32 %v436, %v4740
      %v4957 = vadd.f32 %v437, %v4745
      %v4958 = vadd.f32 %v438, %v4748
      %v4959 = vadd.f32 %v439, %v4753
      %v4960 = vadd.f32 %v440, %v4756
      %v4961 = vadd.f32 %v441, %v4761
      %v4962 = vadd.f32 %v442, %v4764
      %v4963 = vadd.f32 %v443, %v4769
      %v4964 = vadd.f32 %v444, %v4772
      %v4965 = vadd.f32 %v445, %v4777
      %v4966 = vadd.f32 %v446, %v4780
      %v4967 = vadd.f32 %v447, %v4785
      %v4968 = vadd.f32 %v448, %v4788
      %v4969 = vadd.f32 %v449, %v4793
      %v4970 = vadd.f32 %v450, %v4796
      %v4971 = vadd.f32 %v451, %v4801
      %v4972 = vadd.f32 %v452, %v4804
      %v4973 = vadd.f32 %v453, %v4809
      %v4974 = vadd.f32 %v454, %v4812
      %v4975 = vadd.f32 %v455, %v4817
      %v4976 = vadd.f32 %v456, %v4820
      %v4977 = vadd.f32 %v457, %v4825
      %v4978 = vadd.f32 %v458, %v4828
      %v4979 = vadd.f32 %v459, %v4833
      %v4980 = vadd.f32 %v460, %v4836
      %v4981 = vadd.f32 %v461, %v4841
      %v4982 = vadd.f32 %v462, %v4844
      %v4983 = vadd.f32 %v463, %v4849
      %v4984 = vadd.f32 %v464, %v4852
      %v4985 = vadd.f32 %v465, %v4857
      %v4986 = vadd.f32 %v466, %v4860
      %v4987 = vadd.f32 %v467, %v4865
      %v4988 = vadd.f32 %v468, %v4868
      %v4989 = vadd.f32 %v469, %v4873
      %v4990 = vadd.f32 %v470, %v4876
      %v4991 = vadd.f32 %v471, %v4881
      %v4992 = vadd.f32 %v472, %v4884
      %v4993 = vadd.f32 %v473, %v4889
      %v4994 = vadd.f32 %v474, %v4892
      %v4995 = vadd.f32 %v475, %v4897
      %v4996 = vadd.f32 %v476, %v4900
      %v4997 = vadd.f32 %v477, %v4905
      %v4998 = vadd.f32 %v478, %v4908
      %v4999 = vadd.f32 %v479, %v4913
      %v5000 = vadd.f32 %v480, %v4916
      %v5001 = vadd.f32 %v481, %v4921
      %v5002 = vadd.f32 %v482, %v4924
      %v5003 = vadd.f32 %v483, %v4929
      %v5004 = vadd.f32 %v484, %v4932
      %v5005 = vadd.f32 %v485, %v4937
      %v5006 = vadd.f32 %v486, %v4940
      %5007 = vst.msk [vmem:[%s420] sm:$0xff] %vm487, %v4943
      %5008 = vst.msk [vmem:[%s420 + $0x8] sm:$0xff] %vm487, %v4944
      %5009 = vst.msk [vmem:[%s420 + $0x10] sm:$0xff] %vm487, %v4945
      %5010 = vst.msk [vmem:[%s420 + $0x18] sm:$0xff] %vm487, %v4946
      %5011 = vst.msk [vmem:[%s420 + $0x20] sm:$0xff] %vm487, %v4947
      %5012 = vst.msk [vmem:[%s420 + $0x28] sm:$0xff] %vm487, %v4948
      %5013 = vst.msk [vmem:[%s420 + $0x30] sm:$0xff] %vm487, %v4949
      %5014 = vst.msk [vmem:[%s420 + $0x38] sm:$0xff] %vm487, %v4950
      %5015 = vst.msk [vmem:[%s420 + $0x40] sm:$0xff] %vm487, %v4951
      %5016 = vst.msk [vmem:[%s420 + $0x48] sm:$0xff] %vm487, %v4952
      %5017 = vst.msk [vmem:[%s420 + $0x50] sm:$0xff] %vm487, %v4953
      %5018 = vst.msk [vmem:[%s420 + $0x58] sm:$0xff] %vm487, %v4954
      %5019 = vst.msk [vmem:[%s420 + $0x60] sm:$0xff] %vm487, %v4955
      %5020 = vst.msk [vmem:[%s420 + $0x68] sm:$0xff] %vm487, %v4956
      %5021 = vst.msk [vmem:[%s420 + $0x70] sm:$0xff] %vm487, %v4957
      %5022 = vst.msk [vmem:[%s420 + $0x78] sm:$0xff] %vm487, %v4958
      %5023 = vst.msk [vmem:[%s420 + $0x80] sm:$0xff] %vm487, %v4959
      %5024 = vst.msk [vmem:[%s420 + $0x88] sm:$0xff] %vm487, %v4960
      %5025 = vst.msk [vmem:[%s420 + $0x90] sm:$0xff] %vm487, %v4961
      %5026 = vst.msk [vmem:[%s420 + $0x98] sm:$0xff] %vm487, %v4962
      %5027 = vst.msk [vmem:[%s420 + $0xa0] sm:$0xff] %vm487, %v4963
      %5028 = vst.msk [vmem:[%s420 + $0xa8] sm:$0xff] %vm487, %v4964
      %5029 = vst.msk [vmem:[%s420 + $0xb0] sm:$0xff] %vm487, %v4965
      %5030 = vst.msk [vmem:[%s420 + $0xb8] sm:$0xff] %vm487, %v4966
      %5031 = vst.msk [vmem:[%s420 + $0xc0] sm:$0xff] %vm487, %v4967
      %5032 = vst.msk [vmem:[%s420 + $0xc8] sm:$0xff] %vm487, %v4968
      %5033 = vst.msk [vmem:[%s420 + $0xd0] sm:$0xff] %vm487, %v4969
      %5034 = vst.msk [vmem:[%s420 + $0xd8] sm:$0xff] %vm487, %v4970
      %5035 = vst.msk [vmem:[%s420 + $0xe0] sm:$0xff] %vm487, %v4971
      %5036 = vst.msk [vmem:[%s420 + $0xe8] sm:$0xff] %vm487, %v4972
      %5037 = vst.msk [vmem:[%s420 + $0xf0] sm:$0xff] %vm487, %v4973
      %5038 = vst.msk [vmem:[%s420 + $0xf8] sm:$0xff] %vm487, %v4974
      %5039 = vst.msk [vmem:[%s420 + $0x100] sm:$0xff] %vm487, %v4975
      %5040 = vst.msk [vmem:[%s420 + $0x108] sm:$0xff] %vm487, %v4976
      %5041 = vst.msk [vmem:[%s420 + $0x110] sm:$0xff] %vm487, %v4977
      %5042 = vst.msk [vmem:[%s420 + $0x118] sm:$0xff] %vm487, %v4978
      %5043 = vst.msk [vmem:[%s420 + $0x120] sm:$0xff] %vm487, %v4979
      %5044 = vst.msk [vmem:[%s420 + $0x128] sm:$0xff] %vm487, %v4980
      %5045 = vst.msk [vmem:[%s420 + $0x130] sm:$0xff] %vm487, %v4981
      %5046 = vst.msk [vmem:[%s420 + $0x138] sm:$0xff] %vm487, %v4982
      %5047 = vst.msk [vmem:[%s420 + $0x140] sm:$0xff] %vm487, %v4983
      %5048 = vst.msk [vmem:[%s420 + $0x148] sm:$0xff] %vm487, %v4984
      %5049 = vst.msk [vmem:[%s420 + $0x150] sm:$0xff] %vm487, %v4985
      %5050 = vst.msk [vmem:[%s420 + $0x158] sm:$0xff] %vm487, %v4986
      %5051 = vst.msk [vmem:[%s420 + $0x160] sm:$0xff] %vm487, %v4987
      %5052 = vst.msk [vmem:[%s420 + $0x168] sm:$0xff] %vm487, %v4988
      %5053 = vst.msk [vmem:[%s420 + $0x170] sm:$0xff] %vm487, %v4989
      %5054 = vst.msk [vmem:[%s420 + $0x178] sm:$0xff] %vm487, %v4990
      %5055 = vst.msk [vmem:[%s420 + $0x180] sm:$0xff] %vm487, %v4991
      %5056 = vst.msk [vmem:[%s420 + $0x188] sm:$0xff] %vm487, %v4992
      %5057 = vst.msk [vmem:[%s420 + $0x190] sm:$0xff] %vm487, %v4993
      %5058 = vst.msk [vmem:[%s420 + $0x198] sm:$0xff] %vm487, %v4994
      %5059 = vst.msk [vmem:[%s420 + $0x1a0] sm:$0xff] %vm487, %v4995
      %5060 = vst.msk [vmem:[%s420 + $0x1a8] sm:$0xff] %vm487, %v4996
      %5061 = vst.msk [vmem:[%s420 + $0x1b0] sm:$0xff] %vm487, %v4997
      %5062 = vst.msk [vmem:[%s420 + $0x1b8] sm:$0xff] %vm487, %v4998
      %5063 = vst.msk [vmem:[%s420 + $0x1c0] sm:$0xff] %vm487, %v4999
      %5064 = vst.msk [vmem:[%s420 + $0x1c8] sm:$0xff] %vm487, %v5000
      %5065 = vst.msk [vmem:[%s420 + $0x1d0] sm:$0xff] %vm487, %v5001
      %5066 = vst.msk [vmem:[%s420 + $0x1d8] sm:$0xff] %vm487, %v5002
      %5067 = vst.msk [vmem:[%s420 + $0x1e0] sm:$0xff] %vm487, %v5003
      %5068 = vst.msk [vmem:[%s420 + $0x1e8] sm:$0xff] %vm487, %v5004
      %5069 = vst.msk [vmem:[%s420 + $0x1f0] sm:$0xff] %vm487, %v5005
      %5070 = vst.msk [vmem:[%s420 + $0x1f8] sm:$0xff] %vm487, %v5006
      %s5071 = smul.u32 8, %s23
      %p5072 = scmp.lt.s32.totalorder %s5071, 15
      %s5073 = scalar_select %p5072, %s5071, 15
      %s5074 = smul.addr %s5073, 8
      %s5075 = smul.addr %s5074, 8
      %s5076 = scalar_lea.vmem %s12, %s5075
      // Predicated region
      $region69: #{tpu_custom_call.1} parent=67 // pred_check
        %p5077 = pneg %p298
      $region70: #{tpu_custom_call.1} parent=67 // pred_check_branch
        %5079 = sbr.rel (%p5077) target = $region72
      $region71: #{tpu_custom_call.1} parent=67 // pred_region
        %s5080 = smul.u32 8, %s23
      $region72: #{tpu_custom_call.1} parent=67 // pred_fallthru
        _
    $region68: #{tpu_custom_call.1} parent=5 // pred_fallthru
      _
    %p5081 = scmp.le.s32.totalorder 2, %s18
    // Predicated region
    $region73: #{tpu_custom_call.1} parent=5 // pred_check
      %p5082 = pneg %p5081
    $region74: #{tpu_custom_call.1} parent=5 // pred_check_branch
      %5084 = sbr.rel (%p5082) target = $region76
    $region75: #{tpu_custom_call.1} parent=5 // pred_region
      %s5085 = ssub.s32 %s18, 2
      // Predicated region
      $region77: #{tpu_custom_call.1} parent=75 // pred_check
        %p5086 = pneg %p304
      $region78: #{tpu_custom_call.1} parent=75 // pred_check_branch
        %5088 = sbr.rel (%p5086) target = $region80
      $region79: #{tpu_custom_call.1} parent=75 // pred_region
        %s5089 = smul.u32 8, %s24
        %p5090 = scmp.lt.s32.totalorder %s5089, 15
        %s5091 = scalar_select %p5090, %s5089, 15
        %s5092 = smul.addr %s5091, 8
        %s5093 = smul.addr %s5092, 8
        %s5094 = scalar_lea.vmem %s12, %s5093
      $region80: #{tpu_custom_call.1} parent=75 // pred_fallthru
        _
    $region76: #{tpu_custom_call.1} parent=5 // pred_fallthru
      _
  $region6: #{tpu_custom_call.1} parent=0 // loop_footer
    %s22 = sadd.s32 1, %s18
  $region7: #{tpu_custom_call.1} parent=0 // loop_footer_branch
    %17 = sbr.rel target = $region3
  $region8: #{tpu_custom_call.1} parent=0 // loop_exit
    _

// kernel: tpu_custom_call.1
$region0: #{tpu_custom_call.1}
  #allocation0 [shape = 'u32[]', space=smem, size = 0x4, offset = 0x4, fixed_abs, tag = 'smem constant byte address 0x4 - core index']
  #allocation1 [shape = 'u32[144,128]{1,0:T(1,128)}', space=vmem, size = 0x12000, scoped, tag = 'internal scratch']
  %s0 = inlined_call_operand.vmem [shape: f32[16,64,32], index: 0, kind: input, shape index: {}]
  %s1 = inlined_call_operand.vmem [shape: f32[1,32], index: 1, kind: input, shape index: {}]
  %s2 = inlined_call_operand.vmem [shape: f32[1,32], index: 2, kind: input, shape index: {}]
  %s3 = inlined_call_operand.vmem [shape: f32[32,32], index: 3, kind: input, shape index: {}]
  %s4 = inlined_call_operand.vmem [shape: bf16[32,32], index: 4, kind: input, shape index: {}]
  %s5 = inlined_call_operand.vmem [shape: f32[1,32], index: 5, kind: input, shape index: {}]
  %s6 = inlined_call_operand.vmem [shape: bf16[32,32], index: 6, kind: input, shape index: {}]
  %s7 = inlined_call_operand.vmem [shape: f32[1,32], index: 7, kind: input, shape index: {}]
  %s8 = inlined_call_operand.vmem [shape: bf16[32,32], index: 8, kind: input, shape index: {}]
  %s9 = inlined_call_operand.vmem [shape: f32[1,32], index: 9, kind: input, shape index: {}]
  %s10 = inlined_call_operand.vmem [shape: bf16[32,32], index: 10, kind: input, shape index: {}]
  %s11 = inlined_call_operand.vmem [shape: f32[1,32], index: 11, kind: input, shape index: {}]
  %s12 = inlined_call_operand.vmem [shape: f32[16,64,32], index: 12, kind: output, shape index: {}]
  %s13 = sld [smem:[#allocation0]]
  $region81: #{tpu_custom_call.1} parent=0
    _
  %s15 = ssub.s32 1, %s13
  %s16 = scalar_select 0, %s15, %s13
  loop: start=0, step=1, limit=4
  $region2: #{tpu_custom_call.1} parent=0 // loop_pre_header
    _
  $region3: #{tpu_custom_call.1} parent=0 // loop_header
    %s18 = sphi 0, %s22
    %p19 = scmp.ge.s32.totalorder %s18, 4
    %s28 = sphi 0, %s30
    %s31 = sphi 0, %s28
    %s32 = sphi 0, %s31
    %s48 = sphi 0, %s32
    %s52 = sphi 0, %s52
    %s54 = sphi 0, %s52
    %s55 = sphi 0, %s54
    %s69 = sphi 0, %s55
    %s73 = sphi 0, %s73
    %s75 = sphi 0, %s73
    %s76 = sphi 0, %s75
    %s90 = sphi 0, %s76
    %s94 = sphi 0, %s94
    %s96 = sphi 0, %s94
    %s97 = sphi 0, %s96
    %s111 = sphi 0, %s97
    %s115 = sphi 0, %s115
    %s117 = sphi 0, %s115
    %s118 = sphi 0, %s117
    %s132 = sphi 0, %s118
    %s136 = sphi 0, %s136
    %s138 = sphi 0, %s136
    %s139 = sphi 0, %s138
    %s153 = sphi 0, %s139
    %s157 = sphi 0, %s157
    %s159 = sphi 0, %s157
    %s160 = sphi 0, %s159
    %s174 = sphi 0, %s160
    %s178 = sphi 0, %s178
    %s180 = sphi 0, %s178
    %s181 = sphi 0, %s180
    %s195 = sphi 0, %s181
    %s199 = sphi 0, %s199
    %s201 = sphi 0, %s199
    %s202 = sphi 0, %s201
    %s216 = sphi 0, %s202
    %s220 = sphi 0, %s220
    %s222 = sphi 0, %s220
    %s223 = sphi 0, %s222
    %s237 = sphi 0, %s223
    %s241 = sphi 0, %s241
    %s243 = sphi 0, %s241
    %s244 = sphi 0, %s243
    %s258 = sphi 0, %s244
    %s262 = sphi 0, %s262
    %s264 = sphi 0, %s262
    %s265 = sphi 0, %s264
    %s279 = sphi 0, %s265
    %s285 = sphi 0, %s287
    %s288 = sphi 0, %s285
    %s289 = sphi 0, %s288
    %s305 = sphi 0, %s289
  $region4: #{tpu_custom_call.1} parent=0 // loop_header_branch
    %21 = sbr.rel (%p19) target = $region8
  $region5: #{tpu_custom_call.1} parent=0 // loop_body
    %s23 = ssub.s32 %s18, 1
    %s24 = ssub.s32 %s18, 2
    %s25 = sadd.s32 %s18, 1
    %s26 = ssub.s32 %s18, %s25
    %p27 = scmp.eq.s32.totalorder %s26, 0
    %s29 = sadd.s32 %s28, 1
    %s30 = scalar_select %p27, %s28, %s29
    %p33 = pneg %p27
    %p34 = scmp.eq.s32.totalorder %s18, 1
    %p35 = por %p33, %p34
    %p36 = scmp.ne.s32.totalorder %s28, %s31
    %p37 = scmp.eq.s32.totalorder %s18, 0
    %p38 = por %p36, %p37
    %p39 = scmp.ne.s32.totalorder %s28, %s31
    %p40 = scmp.eq.s32.totalorder %s23, 1
    %p41 = por %p39, %p40
    %p42 = scmp.ne.s32.totalorder %s31, %s32
    %p43 = scmp.eq.s32.totalorder %s23, 0
    %p44 = por %p42, %p43
    %p45 = scmp.ne.s32.totalorder %s31, %s32
    %p46 = scmp.eq.s32.totalorder %s24, 1
    %p47 = por %p45, %p46
    %p49 = scmp.ne.s32.totalorder %s32, %s48
    %p50 = scmp.eq.s32.totalorder %s24, 0
    %p51 = por %p49, %p50
    %s53 = sadd.s32 %s52, 1
    %p56 = scmp.eq.s32.totalorder %s18, 1
    %p57 = scmp.ne.s32.totalorder %s52, %s54
    %p58 = scmp.eq.s32.totalorder %s18, 0
    %p59 = por %p57, %p58
    %p60 = scmp.ne.s32.totalorder %s52, %s54
    %p61 = scmp.eq.s32.totalorder %s23, 1
    %p62 = por %p60, %p61
    %p63 = scmp.ne.s32.totalorder %s54, %s55
    %p64 = scmp.eq.s32.totalorder %s23, 0
    %p65 = por %p63, %p64
    %p66 = scmp.ne.s32.totalorder %s54, %s55
    %p67 = scmp.eq.s32.totalorder %s24, 1
    %p68 = por %p66, %p67
    %p70 = scmp.ne.s32.totalorder %s55, %s69
    %p71 = scmp.eq.s32.totalorder %s24, 0
    %p72 = por %p70, %p71
    %s74 = sadd.s32 %s73, 1
    %p77 = scmp.eq.s32.totalorder %s18, 1
    %p78 = scmp.ne.s32.totalorder %s73, %s75
    %p79 = scmp.eq.s32.totalorder %s18, 0
    %p80 = por %p78, %p79
    %p81 = scmp.ne.s32.totalorder %s73, %s75
    %p82 = scmp.eq.s32.totalorder %s23, 1
    %p83 = por %p81, %p82
    %p84 = scmp.ne.s32.totalorder %s75, %s76
    %p85 = scmp.eq.s32.totalorder %s23, 0
    %p86 = por %p84, %p85
    %p87 = scmp.ne.s32.totalorder %s75, %s76
    %p88 = scmp.eq.s32.totalorder %s24, 1
    %p89 = por %p87, %p88
    %p91 = scmp.ne.s32.totalorder %s76, %s90
    %p92 = scmp.eq.s32.totalorder %s24, 0
    %p93 = por %p91, %p92
    %s95 = sadd.s32 %s94, 1
    %p98 = scmp.eq.s32.totalorder %s18, 1
    %p99 = scmp.ne.s32.totalorder %s94, %s96
    %p100 = scmp.eq.s32.totalorder %s18, 0
    %p101 = por %p99, %p100
    %p102 = scmp.ne.s32.totalorder %s94, %s96
    %p103 = scmp.eq.s32.totalorder %s23, 1
    %p104 = por %p102, %p103
    %p105 = scmp.ne.s32.totalorder %s96, %s97
    %p106 = scmp.eq.s32.totalorder %s23, 0
    %p107 = por %p105, %p106
    %p108 = scmp.ne.s32.totalorder %s96, %s97
    %p109 = scmp.eq.s32.totalorder %s24, 1
    %p110 = por %p108, %p109
    %p112 = scmp.ne.s32.totalorder %s97, %s111
    %p113 = scmp.eq.s32.totalorder %s24, 0
    %p114 = por %p112, %p113
    %s116 = sadd.s32 %s115, 1
    %p119 = scmp.eq.s32.totalorder %s18, 1
    %p120 = scmp.ne.s32.totalorder %s115, %s117
    %p121 = scmp.eq.s32.totalorder %s18, 0
    %p122 = por %p120, %p121
    %p123 = scmp.ne.s32.totalorder %s115, %s117
    %p124 = scmp.eq.s32.totalorder %s23, 1
    %p125 = por %p123, %p124
    %p126 = scmp.ne.s32.totalorder %s117, %s118
    %p127 = scmp.eq.s32.totalorder %s23, 0
    %p128 = por %p126, %p127
    %p129 = scmp.ne.s32.totalorder %s117, %s118
    %p130 = scmp.eq.s32.totalorder %s24, 1
    %p131 = por %p129, %p130
    %p133 = scmp.ne.s32.totalorder %s118, %s132
    %p134 = scmp.eq.s32.totalorder %s24, 0
    %p135 = por %p133, %p134
    %s137 = sadd.s32 %s136, 1
    %p140 = scmp.eq.s32.totalorder %s18, 1
    %p141 = scmp.ne.s32.totalorder %s136, %s138
    %p142 = scmp.eq.s32.totalorder %s18, 0
    %p143 = por %p141, %p142
    %p144 = scmp.ne.s32.totalorder %s136, %s138
    %p145 = scmp.eq.s32.totalorder %s23, 1
    %p146 = por %p144, %p145
    %p147 = scmp.ne.s32.totalorder %s138, %s139
    %p148 = scmp.eq.s32.totalorder %s23, 0
    %p149 = por %p147, %p148
    %p150 = scmp.ne.s32.totalorder %s138, %s139
    %p151 = scmp.eq.s32.totalorder %s24, 1
    %p152 = por %p150, %p151
    %p154 = scmp.ne.s32.totalorder %s139, %s153
    %p155 = scmp.eq.s32.totalorder %s24, 0
    %p156 = por %p154, %p155
    %s158 = sadd.s32 %s157, 1
    %p161 = scmp.eq.s32.totalorder %s18, 1
    %p162 = scmp.ne.s32.totalorder %s157, %s159
    %p163 = scmp.eq.s32.totalorder %s18, 0
    %p164 = por %p162, %p163
    %p165 = scmp.ne.s32.totalorder %s157, %s159
    %p166 = scmp.eq.s32.totalorder %s23, 1
    %p167 = por %p165, %p166
    %p168 = scmp.ne.s32.totalorder %s159, %s160
    %p169 = scmp.eq.s32.totalorder %s23, 0
    %p170 = por %p168, %p169
    %p171 = scmp.ne.s32.totalorder %s159, %s160
    %p172 = scmp.eq.s32.totalorder %s24, 1
    %p173 = por %p171, %p172
    %p175 = scmp.ne.s32.totalorder %s160, %s174
    %p176 = scmp.eq.s32.totalorder %s24, 0
    %p177 = por %p175, %p176
    %s179 = sadd.s32 %s178, 1
    %p182 = scmp.eq.s32.totalorder %s18, 1
    %p183 = scmp.ne.s32.totalorder %s178, %s180
    %p184 = scmp.eq.s32.totalorder %s18, 0
    %p185 = por %p183, %p184
    %p186 = scmp.ne.s32.totalorder %s178, %s180
    %p187 = scmp.eq.s32.totalorder %s23, 1
    %p188 = por %p186, %p187
    %p189 = scmp.ne.s32.totalorder %s180, %s181
    %p190 = scmp.eq.s32.totalorder %s23, 0
    %p191 = por %p189, %p190
    %p192 = scmp.ne.s32.totalorder %s180, %s181
    %p193 = scmp.eq.s32.totalorder %s24, 1
    %p194 = por %p192, %p193
    %p196 = scmp.ne.s32.totalorder %s181, %s195
    %p197 = scmp.eq.s32.totalorder %s24, 0
    %p198 = por %p196, %p197
    %s200 = sadd.s32 %s199, 1
    %p203 = scmp.eq.s32.totalorder %s18, 1
    %p204 = scmp.ne.s32.totalorder %s199, %s201
    %p205 = scmp.eq.s32.totalorder %s18, 0
    %p206 = por %p204, %p205
    %p207 = scmp.ne.s32.totalorder %s199, %s201
    %p208 = scmp.eq.s32.totalorder %s23, 1
    %p209 = por %p207, %p208
    %p210 = scmp.ne.s32.totalorder %s201, %s202
    %p211 = scmp.eq.s32.totalorder %s23, 0
    %p212 = por %p210, %p211
    %p213 = scmp.ne.s32.totalorder %s201, %s202
    %p214 = scmp.eq.s32.totalorder %s24, 1
    %p215 = por %p213, %p214
    %p217 = scmp.ne.s32.totalorder %s202, %s216
    %p218 = scmp.eq.s32.totalorder %s24, 0
    %p219 = por %p217, %p218
    %s221 = sadd.s32 %s220, 1
    %p224 = scmp.eq.s32.totalorder %s18, 1
    %p225 = scmp.ne.s32.totalorder %s220, %s222
    %p226 = scmp.eq.s32.totalorder %s18, 0
    %p227 = por %p225, %p226
    %p228 = scmp.ne.s32.totalorder %s220, %s222
    %p229 = scmp.eq.s32.totalorder %s23, 1
    %p230 = por %p228, %p229
    %p231 = scmp.ne.s32.totalorder %s222, %s223
    %p232 = scmp.eq.s32.totalorder %s23, 0
    %p233 = por %p231, %p232
    %p234 = scmp.ne.s32.totalorder %s222, %s223
    %p235 = scmp.eq.s32.totalorder %s24, 1
    %p236 = por %p234, %p235
    %p238 = scmp.ne.s32.totalorder %s223, %s237
    %p239 = scmp.eq.s32.totalorder %s24, 0
    %p240 = por %p238, %p239
    %s242 = sadd.s32 %s241, 1
    %p245 = scmp.eq.s32.totalorder %s18, 1
    %p246 = scmp.ne.s32.totalorder %s241, %s243
    %p247 = scmp.eq.s32.totalorder %s18, 0
    %p248 = por %p246, %p247
    %p249 = scmp.ne.s32.totalorder %s241, %s243
    %p250 = scmp.eq.s32.totalorder %s23, 1
    %p251 = por %p249, %p250
    %p252 = scmp.ne.s32.totalorder %s243, %s244
    %p253 = scmp.eq.s32.totalorder %s23, 0
    %p254 = por %p252, %p253
    %p255 = scmp.ne.s32.totalorder %s243, %s244
    %p256 = scmp.eq.s32.totalorder %s24, 1
    %p257 = por %p255, %p256
    %p259 = scmp.ne.s32.totalorder %s244, %s258
    %p260 = scmp.eq.s32.totalorder %s24, 0
    %p261 = por %p259, %p260
    %s263 = sadd.s32 %s262, 1
    %p266 = scmp.eq.s32.totalorder %s18, 1
    %p267 = scmp.ne.s32.totalorder %s262, %s264
    %p268 = scmp.eq.s32.totalorder %s18, 0
    %p269 = por %p267, %p268
    %p270 = scmp.ne.s32.totalorder %s262, %s264
    %p271 = scmp.eq.s32.totalorder %s23, 1
    %p272 = por %p270, %p271
    %p273 = scmp.ne.s32.totalorder %s264, %s265
    %p274 = scmp.eq.s32.totalorder %s23, 0
    %p275 = por %p273, %p274
    %p276 = scmp.ne.s32.totalorder %s264, %s265
    %p277 = scmp.eq.s32.totalorder %s24, 1
    %p278 = por %p276, %p277
    %p280 = scmp.ne.s32.totalorder %s265, %s279
    %p281 = scmp.eq.s32.totalorder %s24, 0
    %p282 = por %p280, %p281
    %s283 = ssub.s32 %s18, %s25
    %p284 = scmp.eq.s32.totalorder %s283, 0
    %s286 = sadd.s32 %s285, 1
    %s287 = scalar_select %p284, %s285, %s286
    %p290 = pneg %p284
    %p291 = scmp.eq.s32.totalorder %s18, 1
    %p292 = por %p290, %p291
    %p293 = scmp.ne.s32.totalorder %s285, %s288
    %p294 = scmp.eq.s32.totalorder %s18, 0
    %p295 = por %p293, %p294
    %p296 = scmp.ne.s32.totalorder %s285, %s288
    %p297 = scmp.eq.s32.totalorder %s23, 1
    %p298 = por %p296, %p297
    %p299 = scmp.ne.s32.totalorder %s288, %s289
    %p300 = scmp.eq.s32.totalorder %s23, 0
    %p301 = por %p299, %p300
    %p302 = scmp.ne.s32.totalorder %s288, %s289
    %p303 = scmp.eq.s32.totalorder %s24, 1
    %p304 = por %p302, %p303
    %p306 = scmp.ne.s32.totalorder %s289, %s305
    %p307 = scmp.eq.s32.totalorder %s24, 0
    %p308 = por %p306, %p307
    %p309 = scmp.le.s32.totalorder 1, %s18
    %p310 = scmp.lt.s32.totalorder %s18, 3
    %p311 = pnand %p309, %p310
    %p312 = pneg %p311
    // Predicated region
    $region9: #{tpu_custom_call.1} parent=5 // pred_check
      _
    $region10: #{tpu_custom_call.1} parent=5 // pred_check_branch
      %314 = sbr.rel (%p311) target = $region12
    $region11: #{tpu_custom_call.1} parent=5 // pred_region
      %s315 = ssub.s32 %s18, 1
      // Predicated region
      $region13: #{tpu_custom_call.1} parent=11 // pred_check
        %p316 = pneg %p65
      $region14: #{tpu_custom_call.1} parent=11 // pred_check_branch
        %318 = sbr.rel (%p316) target = $region16
      $region15: #{tpu_custom_call.1} parent=11 // pred_region
        _
      $region16: #{tpu_custom_call.1} parent=11 // pred_fallthru
        _
      // Predicated region
      $region17: #{tpu_custom_call.1} parent=11 // pred_check
        %p319 = pneg %p86
      $region18: #{tpu_custom_call.1} parent=11 // pred_check_branch
        %321 = sbr.rel (%p319) target = $region20
      $region19: #{tpu_custom_call.1} parent=11 // pred_region
        _
      $region20: #{tpu_custom_call.1} parent=11 // pred_fallthru
        _
      // Predicated region
      $region21: #{tpu_custom_call.1} parent=11 // pred_check
        %p322 = pneg %p107
      $region22: #{tpu_custom_call.1} parent=11 // pred_check_branch
        %324 = sbr.rel (%p322) target = $region24
      $region23: #{tpu_custom_call.1} parent=11 // pred_region
        _
      $region24: #{tpu_custom_call.1} parent=11 // pred_fallthru
        _
      // Predicated region
      $region25: #{tpu_custom_call.1} parent=11 // pred_check
        %p325 = pneg %p128
      $region26: #{tpu_custom_call.1} parent=11 // pred_check_branch
        %327 = sbr.rel (%p325) target = $region28
      $region27: #{tpu_custom_call.1} parent=11 // pred_region
        _
      $region28: #{tpu_custom_call.1} parent=11 // pred_fallthru
        _
      // Predicated region
      $region29: #{tpu_custom_call.1} parent=11 // pred_check
        %p328 = pneg %p149
      $region30: #{tpu_custom_call.1} parent=11 // pred_check_branch
        %330 = sbr.rel (%p328) target = $region32
      $region31: #{tpu_custom_call.1} parent=11 // pred_region
        _
      $region32: #{tpu_custom_call.1} parent=11 // pred_fallthru
        _
      // Predicated region
      $region33: #{tpu_custom_call.1} parent=11 // pred_check
        %p331 = pneg %p170
      $region34: #{tpu_custom_call.1} parent=11 // pred_check_branch
        %333 = sbr.rel (%p331) target = $region36
      $region35: #{tpu_custom_call.1} parent=11 // pred_region
        _
      $region36: #{tpu_custom_call.1} parent=11 // pred_fallthru
        _
      // Predicated region
      $region37: #{tpu_custom_call.1} parent=11 // pred_check
        %p334 = pneg %p191
      $region38: #{tpu_custom_call.1} parent=11 // pred_check_branch
        %336 = sbr.rel (%p334) target = $region40
      $region39: #{tpu_custom_call.1} parent=11 // pred_region
        _
      $region40: #{tpu_custom_call.1} parent=11 // pred_fallthru
        _
      // Predicated region
      $region41: #{tpu_custom_call.1} parent=11 // pred_check
        %p337 = pneg %p212
      $region42: #{tpu_custom_call.1} parent=11 // pred_check_branch
        %339 = sbr.rel (%p337) target = $region44
      $region43: #{tpu_custom_call.1} parent=11 // pred_region
        _
      $region44: #{tpu_custom_call.1} parent=11 // pred_fallthru
        _
      // Predicated region
      $region45: #{tpu_custom_call.1} parent=11 // pred_check
        %p340 = pneg %p233
      $region46: #{tpu_custom_call.1} parent=11 // pred_check_branch
        %342 = sbr.rel (%p340) target = $region48
      $region47: #{tpu_custom_call.1} parent=11 // pred_region
        _
      $region48: #{tpu_custom_call.1} parent=11 // pred_fallthru
        _
      // Predicated region
      $region49: #{tpu_custom_call.1} parent=11 // pred_check
        %p343 = pneg %p254
      $region50: #{tpu_custom_call.1} parent=11 // pred_check_branch
        %345 = sbr.rel (%p343) target = $region52
      $region51: #{tpu_custom_call.1} parent=11 // pred_region
        _
      $region52: #{tpu_custom_call.1} parent=11 // pred_fallthru
        _
      // Predicated region
      $region53: #{tpu_custom_call.1} parent=11 // pred_check
        %p346 = pneg %p275
      $region54: #{tpu_custom_call.1} parent=11 // pred_check_branch
        %348 = sbr.rel (%p346) target = $region56
      $region55: #{tpu_custom_call.1} parent=11 // pred_region
        _
      $region56: #{tpu_custom_call.1} parent=11 // pred_fallthru
        _
    $region12: #{tpu_custom_call.1} parent=5 // pred_fallthru
      _
    %p349 = scmp.lt.s32.totalorder %s18, 2
    // Predicated region
    $region57: #{tpu_custom_call.1} parent=5 // pred_check
      %p350 = pneg %p349
    $region58: #{tpu_custom_call.1} parent=5 // pred_check_branch
      %352 = sbr.rel (%p350) target = $region60
    $region59: #{tpu_custom_call.1} parent=5 // pred_region
      // Predicated region
      $region61: #{tpu_custom_call.1} parent=59 // pred_check
        %p353 = pneg %p38
      $region62: #{tpu_custom_call.1} parent=59 // pred_check_branch
        %355 = sbr.rel (%p353) target = $region64
      $region63: #{tpu_custom_call.1} parent=59 // pred_region
        %s356 = smul.u32 8, %s18
        %p357 = scmp.lt.s32.totalorder %s356, 15
        %s358 = scalar_select %p357, %s356, 15
        %s359 = smul.addr %s358, 8
        %s360 = smul.addr %s359, 8
        %s361 = scalar_lea.vmem %s0, %s360
        %s362 = smul.u32 8, %s18
      $region64: #{tpu_custom_call.1} parent=59 // pred_fallthru
        _
    $region60: #{tpu_custom_call.1} parent=5 // pred_fallthru
      _
    %p363 = scmp.le.s32.totalorder 1, %s18
    %p364 = scmp.lt.s32.totalorder %s18, 3
    %p365 = pnand %p363, %p364
    %p366 = pneg %p365
    // Predicated region
    $region65: #{tpu_custom_call.1} parent=5 // pred_check
      _
    $region66: #{tpu_custom_call.1} parent=5 // pred_check_branch
      %368 = sbr.rel (%p365) target = $region68
    $region67: #{tpu_custom_call.1} parent=5 // pred_region
      %s369 = ssub.s32 %s18, 1
      %s370 = smul.u32 8, %s23
      %p371 = scmp.lt.s32.totalorder %s370, 15
      %s372 = scalar_select %p371, %s370, 15
      %s373 = smul.addr %s372, 8
      %s374 = smul.addr %s373, 8
      %s375 = scalar_lea.vmem %s0, %s374
      %p376 = pneg %p44
      %p377 = pneg %p41
      %p378 = pneg %p65
      %p379 = pneg %p62
      %p380 = pneg %p86
      %p381 = pneg %p83
      %p382 = pneg %p107
      %p383 = pneg %p104
      %p384 = pneg %p128
      %p385 = pneg %p125
      %p386 = pneg %p149
      %p387 = pneg %p146
      %p388 = pneg %p170
      %p389 = pneg %p167
      %p390 = pneg %p191
      %p391 = pneg %p188
      %p392 = pneg %p212
      %p393 = pneg %p209
      %p394 = pneg %p233
      %p395 = pneg %p230
      %p396 = pneg %p254
      %p397 = pneg %p251
      %p398 = pneg %p275
      %p399 = pneg %p272
      %p400 = pneg %p301
      %p401 = pneg %p298
      %s402 = smul.u32 8, %s23
      %p403 = scmp.lt.s32.totalorder %s402, 15
      %s404 = scalar_select %p403, %s402, 15
      %s405 = smul.addr %s404, 8
      %s406 = smul.addr %s405, 8
      %s407 = scalar_lea.vmem %s12, %s406
      %s408 = smul.u32 8, %s23
      %p409 = scmp.lt.s32.totalorder %s408, 15
      %s410 = scalar_select %p409, %s408, 15
      %s411 = smul.addr %s410, 8
      %s412 = smul.addr %s411, 8
      %s413 = scalar_lea.vmem %s0, %s412
      %s414 = smul.u32 8, %s23
      %s415 = smul.u32 8, %s23
      %p416 = scmp.lt.s32.totalorder %s415, 15
      %s417 = scalar_select %p416, %s415, 15
      %s418 = smul.addr %s417, 8
      %s419 = smul.addr %s418, 8
      %s420 = scalar_lea.vmem %s12, %s419
      %s421 = smul.u32 8, %s23
      %v423 = vld [vmem:[%s413] sm:$0xff]
      %v424 = vld [vmem:[%s413 + $0x8] sm:$0xff]
      %v425 = vld [vmem:[%s413 + $0x10] sm:$0xff]
      %v426 = vld [vmem:[%s413 + $0x18] sm:$0xff]
      %v427 = vld [vmem:[%s413 + $0x20] sm:$0xff]
      %v428 = vld [vmem:[%s413 + $0x28] sm:$0xff]
      %v429 = vld [vmem:[%s413 + $0x30] sm:$0xff]
      %v430 = vld [vmem:[%s413 + $0x38] sm:$0xff]
      %v431 = vld [vmem:[%s413 + $0x40] sm:$0xff]
      %v432 = vld [vmem:[%s413 + $0x48] sm:$0xff]
      %v433 = vld [vmem:[%s413 + $0x50] sm:$0xff]
      %v434 = vld [vmem:[%s413 + $0x58] sm:$0xff]
      %v435 = vld [vmem:[%s413 + $0x60] sm:$0xff]
      %v436 = vld [vmem:[%s413 + $0x68] sm:$0xff]
      %v437 = vld [vmem:[%s413 + $0x70] sm:$0xff]
      %v438 = vld [vmem:[%s413 + $0x78] sm:$0xff]
      %v439 = vld [vmem:[%s413 + $0x80] sm:$0xff]
      %v440 = vld [vmem:[%s413 + $0x88] sm:$0xff]
      %v441 = vld [vmem:[%s413 + $0x90] sm:$0xff]
      %v442 = vld [vmem:[%s413 + $0x98] sm:$0xff]
      %v443 = vld [vmem:[%s413 + $0xa0] sm:$0xff]
      %v444 = vld [vmem:[%s413 + $0xa8] sm:$0xff]
      %v445 = vld [vmem:[%s413 + $0xb0] sm:$0xff]
      %v446 = vld [vmem:[%s413 + $0xb8] sm:$0xff]
      %v447 = vld [vmem:[%s413 + $0xc0] sm:$0xff]
      %v448 = vld [vmem:[%s413 + $0xc8] sm:$0xff]
      %v449 = vld [vmem:[%s413 + $0xd0] sm:$0xff]
      %v450 = vld [vmem:[%s413 + $0xd8] sm:$0xff]
      %v451 = vld [vmem:[%s413 + $0xe0] sm:$0xff]
      %v452 = vld [vmem:[%s413 + $0xe8] sm:$0xff]
      %v453 = vld [vmem:[%s413 + $0xf0] sm:$0xff]
      %v454 = vld [vmem:[%s413 + $0xf8] sm:$0xff]
      %v455 = vld [vmem:[%s413 + $0x100] sm:$0xff]
      %v456 = vld [vmem:[%s413 + $0x108] sm:$0xff]
      %v457 = vld [vmem:[%s413 + $0x110] sm:$0xff]
      %v458 = vld [vmem:[%s413 + $0x118] sm:$0xff]
      %v459 = vld [vmem:[%s413 + $0x120] sm:$0xff]
      %v460 = vld [vmem:[%s413 + $0x128] sm:$0xff]
      %v461 = vld [vmem:[%s413 + $0x130] sm:$0xff]
      %v462 = vld [vmem:[%s413 + $0x138] sm:$0xff]
      %v463 = vld [vmem:[%s413 + $0x140] sm:$0xff]
      %v464 = vld [vmem:[%s413 + $0x148] sm:$0xff]
      %v465 = vld [vmem:[%s413 + $0x150] sm:$0xff]
      %v466 = vld [vmem:[%s413 + $0x158] sm:$0xff]
      %v467 = vld [vmem:[%s413 + $0x160] sm:$0xff]
      %v468 = vld [vmem:[%s413 + $0x168] sm:$0xff]
      %v469 = vld [vmem:[%s413 + $0x170] sm:$0xff]
      %v470 = vld [vmem:[%s413 + $0x178] sm:$0xff]
      %v471 = vld [vmem:[%s413 + $0x180] sm:$0xff]
      %v472 = vld [vmem:[%s413 + $0x188] sm:$0xff]
      %v473 = vld [vmem:[%s413 + $0x190] sm:$0xff]
      %v474 = vld [vmem:[%s413 + $0x198] sm:$0xff]
      %v475 = vld [vmem:[%s413 + $0x1a0] sm:$0xff]
      %v476 = vld [vmem:[%s413 + $0x1a8] sm:$0xff]
      %v477 = vld [vmem:[%s413 + $0x1b0] sm:$0xff]
      %v478 = vld [vmem:[%s413 + $0x1b8] sm:$0xff]
      %v479 = vld [vmem:[%s413 + $0x1c0] sm:$0xff]
      %v480 = vld [vmem:[%s413 + $0x1c8] sm:$0xff]
      %v481 = vld [vmem:[%s413 + $0x1d0] sm:$0xff]
      %v482 = vld [vmem:[%s413 + $0x1d8] sm:$0xff]
      %v483 = vld [vmem:[%s413 + $0x1e0] sm:$0xff]
      %v484 = vld [vmem:[%s413 + $0x1e8] sm:$0xff]
      %v485 = vld [vmem:[%s413 + $0x1f0] sm:$0xff]
      %v486 = vld [vmem:[%s413 + $0x1f8] sm:$0xff]
      %vm487 = vcmask 261120
      %v488 = vsel %vm487, %v423, 0.0
      %v489 = vsel %vm487, %v424, 0.0
      %v490 = vadd.f32 %v488, %v489
      %v491 = vsel %vm487, %v425, 0.0
      %v492 = vadd.f32 %v490, %v491
      %v493 = vsel %vm487, %v426, 0.0
      %v494 = vadd.f32 %v492, %v493
      %v495 = vsel %vm487, %v427, 0.0
      %v496 = vadd.f32 %v494, %v495
      %v497 = vsel %vm487, %v428, 0.0
      %v498 = vadd.f32 %v496, %v497
      %v499 = vsel %vm487, %v429, 0.0
      %v500 = vadd.f32 %v498, %v499
      %v501 = vsel %vm487, %v430, 0.0
      %v502 = vadd.f32 %v500, %v501
      %v503 = vrot.slane %v502, 4
      %v504 = vadd.f32 %v502, %v503
      %v505 = vrot.slane %v504, 2
      %v506 = vadd.f32 %v504, %v505
      %v507 = vrot.slane %v506, 1
      %v508 = vadd.f32 %v506, %v507
      %v509 = vsel %vm487, %v431, 0.0
      %v510 = vsel %vm487, %v432, 0.0
      %v511 = vadd.f32 %v509, %v510
      %v512 = vsel %vm487, %v433, 0.0
      %v513 = vadd.f32 %v511, %v512
      %v514 = vsel %vm487, %v434, 0.0
      %v515 = vadd.f32 %v513, %v514
      %v516 = vsel %vm487, %v435, 0.0
      %v517 = vadd.f32 %v515, %v516
      %v518 = vsel %vm487, %v436, 0.0
      %v519 = vadd.f32 %v517, %v518
      %v520 = vsel %vm487, %v437, 0.0
      %v521 = vadd.f32 %v519, %v520
      %v522 = vsel %vm487, %v438, 0.0
      %v523 = vadd.f32 %v521, %v522
      %v524 = vrot.slane %v523, 4
      %v525 = vadd.f32 %v523, %v524
      %v526 = vrot.slane %v525, 2
      %v527 = vadd.f32 %v525, %v526
      %v528 = vrot.slane %v527, 1
      %v529 = vadd.f32 %v527, %v528
      %v530 = vsel %vm487, %v439, 0.0
      %v531 = vsel %vm487, %v440, 0.0
      %v532 = vadd.f32 %v530, %v531
      %v533 = vsel %vm487, %v441, 0.0
      %v534 = vadd.f32 %v532, %v533
      %v535 = vsel %vm487, %v442, 0.0
      %v536 = vadd.f32 %v534, %v535
      %v537 = vsel %vm487, %v443, 0.0
      %v538 = vadd.f32 %v536, %v537
      %v539 = vsel %vm487, %v444, 0.0
      %v540 = vadd.f32 %v538, %v539
      %v541 = vsel %vm487, %v445, 0.0
      %v542 = vadd.f32 %v540, %v541
      %v543 = vsel %vm487, %v446, 0.0
      %v544 = vadd.f32 %v542, %v543
      %v545 = vrot.slane %v544, 4
      %v546 = vadd.f32 %v544, %v545
      %v547 = vrot.slane %v546, 2
      %v548 = vadd.f32 %v546, %v547
      %v549 = vrot.slane %v548, 1
      %v550 = vadd.f32 %v548, %v549
      %v551 = vsel %vm487, %v447, 0.0
      %v552 = vsel %vm487, %v448, 0.0
      %v553 = vadd.f32 %v551, %v552
      %v554 = vsel %vm487, %v449, 0.0
      %v555 = vadd.f32 %v553, %v554
      %v556 = vsel %vm487, %v450, 0.0
      %v557 = vadd.f32 %v555, %v556
      %v558 = vsel %vm487, %v451, 0.0
      %v559 = vadd.f32 %v557, %v558
      %v560 = vsel %vm487, %v452, 0.0
      %v561 = vadd.f32 %v559, %v560
      %v562 = vsel %vm487, %v453, 0.0
      %v563 = vadd.f32 %v561, %v562
      %v564 = vsel %vm487, %v454, 0.0
      %v565 = vadd.f32 %v563, %v564
      %v566 = vrot.slane %v565, 4
      %v567 = vadd.f32 %v565, %v566
      %v568 = vrot.slane %v567, 2
      %v569 = vadd.f32 %v567, %v568
      %v570 = vrot.slane %v569, 1
      %v571 = vadd.f32 %v569, %v570
      %v572 = vsel %vm487, %v455, 0.0
      %v573 = vsel %vm487, %v456, 0.0
      %v574 = vadd.f32 %v572, %v573
      %v575 = vsel %vm487, %v457, 0.0
      %v576 = vadd.f32 %v574, %v575
      %v577 = vsel %vm487, %v458, 0.0
      %v578 = vadd.f32 %v576, %v577
      %v579 = vsel %vm487, %v459, 0.0
      %v580 = vadd.f32 %v578, %v579
      %v581 = vsel %vm487, %v460, 0.0
      %v582 = vadd.f32 %v580, %v581
      %v583 = vsel %vm487, %v461, 0.0
      %v584 = vadd.f32 %v582, %v583
      %v585 = vsel %vm487, %v462, 0.0
      %v586 = vadd.f32 %v584, %v585
      %v587 = vrot.slane %v586, 4
      %v588 = vadd.f32 %v586, %v587
      %v589 = vrot.slane %v588, 2
      %v590 = vadd.f32 %v588, %v589
      %v591 = vrot.slane %v590, 1
      %v592 = vadd.f32 %v590, %v591
      %v593 = vsel %vm487, %v463, 0.0
      %v594 = vsel %vm487, %v464, 0.0
      %v595 = vadd.f32 %v593, %v594
      %v596 = vsel %vm487, %v465, 0.0
      %v597 = vadd.f32 %v595, %v596
      %v598 = vsel %vm487, %v466, 0.0
      %v599 = vadd.f32 %v597, %v598
      %v600 = vsel %vm487, %v467, 0.0
      %v601 = vadd.f32 %v599, %v600
      %v602 = vsel %vm487, %v468, 0.0
      %v603 = vadd.f32 %v601, %v602
      %v604 = vsel %vm487, %v469, 0.0
      %v605 = vadd.f32 %v603, %v604
      %v606 = vsel %vm487, %v470, 0.0
      %v607 = vadd.f32 %v605, %v606
      %v608 = vrot.slane %v607, 4
      %v609 = vadd.f32 %v607, %v608
      %v610 = vrot.slane %v609, 2
      %v611 = vadd.f32 %v609, %v610
      %v612 = vrot.slane %v611, 1
      %v613 = vadd.f32 %v611, %v612
      %v614 = vsel %vm487, %v471, 0.0
      %v615 = vsel %vm487, %v472, 0.0
      %v616 = vadd.f32 %v614, %v615
      %v617 = vsel %vm487, %v473, 0.0
      %v618 = vadd.f32 %v616, %v617
      %v619 = vsel %vm487, %v474, 0.0
      %v620 = vadd.f32 %v618, %v619
      %v621 = vsel %vm487, %v475, 0.0
      %v622 = vadd.f32 %v620, %v621
      %v623 = vsel %vm487, %v476, 0.0
      %v624 = vadd.f32 %v622, %v623
      %v625 = vsel %vm487, %v477, 0.0
      %v626 = vadd.f32 %v624, %v625
      %v627 = vsel %vm487, %v478, 0.0
      %v628 = vadd.f32 %v626, %v627
      %v629 = vrot.slane %v628, 4
      %v630 = vadd.f32 %v628, %v629
      %v631 = vrot.slane %v630, 2
      %v632 = vadd.f32 %v630, %v631
      %v633 = vrot.slane %v632, 1
      %v634 = vadd.f32 %v632, %v633
      %v635 = vsel %vm487, %v479, 0.0
      %v636 = vsel %vm487, %v480, 0.0
      %v637 = vadd.f32 %v635, %v636
      %v638 = vsel %vm487, %v481, 0.0
      %v639 = vadd.f32 %v637, %v638
      %v640 = vsel %vm487, %v482, 0.0
      %v641 = vadd.f32 %v639, %v640
      %v642 = vsel %vm487, %v483, 0.0
      %v643 = vadd.f32 %v641, %v642
      %v644 = vsel %vm487, %v484, 0.0
      %v645 = vadd.f32 %v643, %v644
      %v646 = vsel %vm487, %v485, 0.0
      %v647 = vadd.f32 %v645, %v646
      %v648 = vsel %vm487, %v486, 0.0
      %v649 = vadd.f32 %v647, %v648
      %v650 = vrot.slane %v649, 4
      %v651 = vadd.f32 %v649, %v650
      %v652 = vrot.slane %v651, 2
      %v653 = vadd.f32 %v651, %v652
      %v654 = vrot.slane %v653, 1
      %v655 = vadd.f32 %v653, %v654
      %v656 = vmul.f32 %v508, 0.015625
      %v657 = vmul.f32 %v529, 0.015625
      %v658 = vmul.f32 %v550, 0.015625
      %v659 = vmul.f32 %v571, 0.015625
      %v660 = vmul.f32 %v592, 0.015625
      %v661 = vmul.f32 %v613, 0.015625
      %v662 = vmul.f32 %v634, 0.015625
      %v663 = vmul.f32 %v655, 0.015625
      %v664 = vmul.f32 %v423, %v423
      %v665 = vmul.f32 %v424, %v424
      %v666 = vmul.f32 %v425, %v425
      %v667 = vmul.f32 %v426, %v426
      %v668 = vmul.f32 %v427, %v427
      %v669 = vmul.f32 %v428, %v428
      %v670 = vmul.f32 %v429, %v429
      %v671 = vmul.f32 %v430, %v430
      %v672 = vmul.f32 %v431, %v431
      %v673 = vmul.f32 %v432, %v432
      %v674 = vmul.f32 %v433, %v433
      %v675 = vmul.f32 %v434, %v434
      %v676 = vmul.f32 %v435, %v435
      %v677 = vmul.f32 %v436, %v436
      %v678 = vmul.f32 %v437, %v437
      %v679 = vmul.f32 %v438, %v438
      %v680 = vmul.f32 %v439, %v439
      %v681 = vmul.f32 %v440, %v440
      %v682 = vmul.f32 %v441, %v441
      %v683 = vmul.f32 %v442, %v442
      %v684 = vmul.f32 %v443, %v443
      %v685 = vmul.f32 %v444, %v444
      %v686 = vmul.f32 %v445, %v445
      %v687 = vmul.f32 %v446, %v446
      %v688 = vmul.f32 %v447, %v447
      %v689 = vmul.f32 %v448, %v448
      %v690 = vmul.f32 %v449, %v449
      %v691 = vmul.f32 %v450, %v450
      %v692 = vmul.f32 %v451, %v451
      %v693 = vmul.f32 %v452, %v452
      %v694 = vmul.f32 %v453, %v453
      %v695 = vmul.f32 %v454, %v454
      %v696 = vmul.f32 %v455, %v455
      %v697 = vmul.f32 %v456, %v456
      %v698 = vmul.f32 %v457, %v457
      %v699 = vmul.f32 %v458, %v458
      %v700 = vmul.f32 %v459, %v459
      %v701 = vmul.f32 %v460, %v460
      %v702 = vmul.f32 %v461, %v461
      %v703 = vmul.f32 %v462, %v462
      %v704 = vmul.f32 %v463, %v463
      %v705 = vmul.f32 %v464, %v464
      %v706 = vmul.f32 %v465, %v465
      %v707 = vmul.f32 %v466, %v466
      %v708 = vmul.f32 %v467, %v467
      %v709 = vmul.f32 %v468, %v468
      %v710 = vmul.f32 %v469, %v469
      %v711 = vmul.f32 %v470, %v470
      %v712 = vmul.f32 %v471, %v471
      %v713 = vmul.f32 %v472, %v472
      %v714 = vmul.f32 %v473, %v473
      %v715 = vmul.f32 %v474, %v474
      %v716 = vmul.f32 %v475, %v475
      %v717 = vmul.f32 %v476, %v476
      %v718 = vmul.f32 %v477, %v477
      %v719 = vmul.f32 %v478, %v478
      %v720 = vmul.f32 %v479, %v479
      %v721 = vmul.f32 %v480, %v480
      %v722 = vmul.f32 %v481, %v481
      %v723 = vmul.f32 %v482, %v482
      %v724 = vmul.f32 %v483, %v483
      %v725 = vmul.f32 %v484, %v484
      %v726 = vmul.f32 %v485, %v485
      %v727 = vmul.f32 %v486, %v486
      %v728 = vsel %vm487, %v664, 0.0
      %v729 = vsel %vm487, %v665, 0.0
      %v730 = vadd.f32 %v728, %v729
      %v731 = vsel %vm487, %v666, 0.0
      %v732 = vadd.f32 %v730, %v731
      %v733 = vsel %vm487, %v667, 0.0
      %v734 = vadd.f32 %v732, %v733
      %v735 = vsel %vm487, %v668, 0.0
      %v736 = vadd.f32 %v734, %v735
      %v737 = vsel %vm487, %v669, 0.0
      %v738 = vadd.f32 %v736, %v737
      %v739 = vsel %vm487, %v670, 0.0
      %v740 = vadd.f32 %v738, %v739
      %v741 = vsel %vm487, %v671, 0.0
      %v742 = vadd.f32 %v740, %v741
      %v743 = vrot.slane %v742, 4
      %v744 = vadd.f32 %v742, %v743
      %v745 = vrot.slane %v744, 2
      %v746 = vadd.f32 %v744, %v745
      %v747 = vrot.slane %v746, 1
      %v748 = vadd.f32 %v746, %v747
      %v749 = vsel %vm487, %v672, 0.0
      %v750 = vsel %vm487, %v673, 0.0
      %v751 = vadd.f32 %v749, %v750
      %v752 = vsel %vm487, %v674, 0.0
      %v753 = vadd.f32 %v751, %v752
      %v754 = vsel %vm487, %v675, 0.0
      %v755 = vadd.f32 %v753, %v754
      %v756 = vsel %vm487, %v676, 0.0
      %v757 = vadd.f32 %v755, %v756
      %v758 = vsel %vm487, %v677, 0.0
      %v759 = vadd.f32 %v757, %v758
      %v760 = vsel %vm487, %v678, 0.0
      %v761 = vadd.f32 %v759, %v760
      %v762 = vsel %vm487, %v679, 0.0
      %v763 = vadd.f32 %v761, %v762
      %v764 = vrot.slane %v763, 4
      %v765 = vadd.f32 %v763, %v764
      %v766 = vrot.slane %v765, 2
      %v767 = vadd.f32 %v765, %v766
      %v768 = vrot.slane %v767, 1
      %v769 = vadd.f32 %v767, %v768
      %v770 = vsel %vm487, %v680, 0.0
      %v771 = vsel %vm487, %v681, 0.0
      %v772 = vadd.f32 %v770, %v771
      %v773 = vsel %vm487, %v682, 0.0
      %v774 = vadd.f32 %v772, %v773
      %v775 = vsel %vm487, %v683, 0.0
      %v776 = vadd.f32 %v774, %v775
      %v777 = vsel %vm487, %v684, 0.0
      %v778 = vadd.f32 %v776, %v777
      %v779 = vsel %vm487, %v685, 0.0
      %v780 = vadd.f32 %v778, %v779
      %v781 = vsel %vm487, %v686, 0.0
      %v782 = vadd.f32 %v780, %v781
      %v783 = vsel %vm487, %v687, 0.0
      %v784 = vadd.f32 %v782, %v783
      %v785 = vrot.slane %v784, 4
      %v786 = vadd.f32 %v784, %v785
      %v787 = vrot.slane %v786, 2
      %v788 = vadd.f32 %v786, %v787
      %v789 = vrot.slane %v788, 1
      %v790 = vadd.f32 %v788, %v789
      %v791 = vsel %vm487, %v688, 0.0
      %v792 = vsel %vm487, %v689, 0.0
      %v793 = vadd.f32 %v791, %v792
      %v794 = vsel %vm487, %v690, 0.0
      %v795 = vadd.f32 %v793, %v794
      %v796 = vsel %vm487, %v691, 0.0
      %v797 = vadd.f32 %v795, %v796
      %v798 = vsel %vm487, %v692, 0.0
      %v799 = vadd.f32 %v797, %v798
      %v800 = vsel %vm487, %v693, 0.0
      %v801 = vadd.f32 %v799, %v800
      %v802 = vsel %vm487, %v694, 0.0
      %v803 = vadd.f32 %v801, %v802
      %v804 = vsel %vm487, %v695, 0.0
      %v805 = vadd.f32 %v803, %v804
      %v806 = vrot.slane %v805, 4
      %v807 = vadd.f32 %v805, %v806
      %v808 = vrot.slane %v807, 2
      %v809 = vadd.f32 %v807, %v808
      %v810 = vrot.slane %v809, 1
      %v811 = vadd.f32 %v809, %v810
      %v812 = vsel %vm487, %v696, 0.0
      %v813 = vsel %vm487, %v697, 0.0
      %v814 = vadd.f32 %v812, %v813
      %v815 = vsel %vm487, %v698, 0.0
      %v816 = vadd.f32 %v814, %v815
      %v817 = vsel %vm487, %v699, 0.0
      %v818 = vadd.f32 %v816, %v817
      %v819 = vsel %vm487, %v700, 0.0
      %v820 = vadd.f32 %v818, %v819
      %v821 = vsel %vm487, %v701, 0.0
      %v822 = vadd.f32 %v820, %v821
      %v823 = vsel %vm487, %v702, 0.0
      %v824 = vadd.f32 %v822, %v823
      %v825 = vsel %vm487, %v703, 0.0
      %v826 = vadd.f32 %v824, %v825
      %v827 = vrot.slane %v826, 4
      %v828 = vadd.f32 %v826, %v827
      %v829 = vrot.slane %v828, 2
      %v830 = vadd.f32 %v828, %v829
      %v831 = vrot.slane %v830, 1
      %v832 = vadd.f32 %v830, %v831
      %v833 = vsel %vm487, %v704, 0.0
      %v834 = vsel %vm487, %v705, 0.0
      %v835 = vadd.f32 %v833, %v834
      %v836 = vsel %vm487, %v706, 0.0
      %v837 = vadd.f32 %v835, %v836
      %v838 = vsel %vm487, %v707, 0.0
      %v839 = vadd.f32 %v837, %v838
      %v840 = vsel %vm487, %v708, 0.0
      %v841 = vadd.f32 %v839, %v840
      %v842 = vsel %vm487, %v709, 0.0
      %v843 = vadd.f32 %v841, %v842
      %v844 = vsel %vm487, %v710, 0.0
      %v845 = vadd.f32 %v843, %v844
      %v846 = vsel %vm487, %v711, 0.0
      %v847 = vadd.f32 %v845, %v846
      %v848 = vrot.slane %v847, 4
      %v849 = vadd.f32 %v847, %v848
      %v850 = vrot.slane %v849, 2
      %v851 = vadd.f32 %v849, %v850
      %v852 = vrot.slane %v851, 1
      %v853 = vadd.f32 %v851, %v852
      %v854 = vsel %vm487, %v712, 0.0
      %v855 = vsel %vm487, %v713, 0.0
      %v856 = vadd.f32 %v854, %v855
      %v857 = vsel %vm487, %v714, 0.0
      %v858 = vadd.f32 %v856, %v857
      %v859 = vsel %vm487, %v715, 0.0
      %v860 = vadd.f32 %v858, %v859
      %v861 = vsel %vm487, %v716, 0.0
      %v862 = vadd.f32 %v860, %v861
      %v863 = vsel %vm487, %v717, 0.0
      %v864 = vadd.f32 %v862, %v863
      %v865 = vsel %vm487, %v718, 0.0
      %v866 = vadd.f32 %v864, %v865
      %v867 = vsel %vm487, %v719, 0.0
      %v868 = vadd.f32 %v866, %v867
      %v869 = vrot.slane %v868, 4
      %v870 = vadd.f32 %v868, %v869
      %v871 = vrot.slane %v870, 2
      %v872 = vadd.f32 %v870, %v871
      %v873 = vrot.slane %v872, 1
      %v874 = vadd.f32 %v872, %v873
      %v875 = vsel %vm487, %v720, 0.0
      %v876 = vsel %vm487, %v721, 0.0
      %v877 = vadd.f32 %v875, %v876
      %v878 = vsel %vm487, %v722, 0.0
      %v879 = vadd.f32 %v877, %v878
      %v880 = vsel %vm487, %v723, 0.0
      %v881 = vadd.f32 %v879, %v880
      %v882 = vsel %vm487, %v724, 0.0
      %v883 = vadd.f32 %v881, %v882
      %v884 = vsel %vm487, %v725, 0.0
      %v885 = vadd.f32 %v883, %v884
      %v886 = vsel %vm487, %v726, 0.0
      %v887 = vadd.f32 %v885, %v886
      %v888 = vsel %vm487, %v727, 0.0
      %v889 = vadd.f32 %v887, %v888
      %v890 = vrot.slane %v889, 4
      %v891 = vadd.f32 %v889, %v890
      %v892 = vrot.slane %v891, 2
      %v893 = vadd.f32 %v891, %v892
      %v894 = vrot.slane %v893, 1
      %v895 = vadd.f32 %v893, %v894
      %v896 = vmul.f32 %v748, 0.015625
      %v897 = vmul.f32 %v769, 0.015625
      %v898 = vmul.f32 %v790, 0.015625
      %v899 = vmul.f32 %v811, 0.015625
      %v900 = vmul.f32 %v832, 0.015625
      %v901 = vmul.f32 %v853, 0.015625
      %v902 = vmul.f32 %v874, 0.015625
      %v903 = vmul.f32 %v895, 0.015625
      %v904 = vmul.f32 %v656, %v656
      %v905 = vmul.f32 %v657, %v657
      %v906 = vmul.f32 %v658, %v658
      %v907 = vmul.f32 %v659, %v659
      %v908 = vmul.f32 %v660, %v660
      %v909 = vmul.f32 %v661, %v661
      %v910 = vmul.f32 %v662, %v662
      %v911 = vmul.f32 %v663, %v663
      %v912 = vsub.f32 %v896, %v904
      %v913 = vsub.f32 %v897, %v905
      %v914 = vsub.f32 %v898, %v906
      %v915 = vsub.f32 %v899, %v907
      %v916 = vsub.f32 %v900, %v908
      %v917 = vsub.f32 %v901, %v909
      %v918 = vsub.f32 %v902, %v910
      %v919 = vsub.f32 %v903, %v911
      %v920 = vmax.f32 %v912, 0.0
      %v921 = vmax.f32 %v913, 0.0
      %v922 = vmax.f32 %v914, 0.0
      %v923 = vmax.f32 %v915, 0.0
      %v924 = vmax.f32 %v916, 0.0
      %v925 = vmax.f32 %v917, 0.0
      %v926 = vmax.f32 %v918, 0.0
      %v927 = vmax.f32 %v919, 0.0
      %v928 = vsub.f32 %v423, %v656
      %v929 = vsub.f32 %v424, %v656
      %v930 = vsub.f32 %v425, %v656
      %v931 = vsub.f32 %v426, %v656
      %v932 = vsub.f32 %v427, %v656
      %v933 = vsub.f32 %v428, %v656
      %v934 = vsub.f32 %v429, %v656
      %v935 = vsub.f32 %v430, %v656
      %v936 = vsub.f32 %v431, %v657
      %v937 = vsub.f32 %v432, %v657
      %v938 = vsub.f32 %v433, %v657
      %v939 = vsub.f32 %v434, %v657
      %v940 = vsub.f32 %v435, %v657
      %v941 = vsub.f32 %v436, %v657
      %v942 = vsub.f32 %v437, %v657
      %v943 = vsub.f32 %v438, %v657
      %v944 = vsub.f32 %v439, %v658
      %v945 = vsub.f32 %v440, %v658
      %v946 = vsub.f32 %v441, %v658
      %v947 = vsub.f32 %v442, %v658
      %v948 = vsub.f32 %v443, %v658
      %v949 = vsub.f32 %v444, %v658
      %v950 = vsub.f32 %v445, %v658
      %v951 = vsub.f32 %v446, %v658
      %v952 = vsub.f32 %v447, %v659
      %v953 = vsub.f32 %v448, %v659
      %v954 = vsub.f32 %v449, %v659
      %v955 = vsub.f32 %v450, %v659
      %v956 = vsub.f32 %v451, %v659
      %v957 = vsub.f32 %v452, %v659
      %v958 = vsub.f32 %v453, %v659
      %v959 = vsub.f32 %v454, %v659
      %v960 = vsub.f32 %v455, %v660
      %v961 = vsub.f32 %v456, %v660
      %v962 = vsub.f32 %v457, %v660
      %v963 = vsub.f32 %v458, %v660
      %v964 = vsub.f32 %v459, %v660
      %v965 = vsub.f32 %v460, %v660
      %v966 = vsub.f32 %v461, %v660
      %v967 = vsub.f32 %v462, %v660
      %v968 = vsub.f32 %v463, %v661
      %v969 = vsub.f32 %v464, %v661
      %v970 = vsub.f32 %v465, %v661
      %v971 = vsub.f32 %v466, %v661
      %v972 = vsub.f32 %v467, %v661
      %v973 = vsub.f32 %v468, %v661
      %v974 = vsub.f32 %v469, %v661
      %v975 = vsub.f32 %v470, %v661
      %v976 = vsub.f32 %v471, %v662
      %v977 = vsub.f32 %v472, %v662
      %v978 = vsub.f32 %v473, %v662
      %v979 = vsub.f32 %v474, %v662
      %v980 = vsub.f32 %v475, %v662
      %v981 = vsub.f32 %v476, %v662
      %v982 = vsub.f32 %v477, %v662
      %v983 = vsub.f32 %v478, %v662
      %v984 = vsub.f32 %v479, %v663
      %v985 = vsub.f32 %v480, %v663
      %v986 = vsub.f32 %v481, %v663
      %v987 = vsub.f32 %v482, %v663
      %v988 = vsub.f32 %v483, %v663
      %v989 = vsub.f32 %v484, %v663
      %v990 = vsub.f32 %v485, %v663
      %v991 = vsub.f32 %v486, %v663
      %v992 = vadd.f32 %v920, 1e-06
      %v993 = vadd.f32 %v921, 1e-06
      %v994 = vadd.f32 %v922, 1e-06
      %v995 = vadd.f32 %v923, 1e-06
      %v996 = vadd.f32 %v924, 1e-06
      %v997 = vadd.f32 %v925, 1e-06
      %v998 = vadd.f32 %v926, 1e-06
      %v999 = vadd.f32 %v927, 1e-06
      %v1000 = vrsqrt.pop %v992
      %v1001 = vrsqrt.pop %v993
      %v1002 = vrsqrt.pop %v994
      %v1003 = vrsqrt.pop %v995
      %v1004 = vrsqrt.pop %v996
      %v1005 = vrsqrt.pop %v997
      %v1006 = vrsqrt.pop %v998
      %v1007 = vrsqrt.pop %v999
      %v1008 = vmul.f32 %v928, %v1000
      %v1009 = vmul.f32 %v929, %v1000
      %v1010 = vmul.f32 %v930, %v1000
      %v1011 = vmul.f32 %v931, %v1000
      %v1012 = vmul.f32 %v932, %v1000
      %v1013 = vmul.f32 %v933, %v1000
      %v1014 = vmul.f32 %v934, %v1000
      %v1015 = vmul.f32 %v935, %v1000
      %v1016 = vmul.f32 %v936, %v1001
      %v1017 = vmul.f32 %v937, %v1001
      %v1018 = vmul.f32 %v938, %v1001
      %v1019 = vmul.f32 %v939, %v1001
      %v1020 = vmul.f32 %v940, %v1001
      %v1021 = vmul.f32 %v941, %v1001
      %v1022 = vmul.f32 %v942, %v1001
      %v1023 = vmul.f32 %v943, %v1001
      %v1024 = vmul.f32 %v944, %v1002
      %v1025 = vmul.f32 %v945, %v1002
      %v1026 = vmul.f32 %v946, %v1002
      %v1027 = vmul.f32 %v947, %v1002
      %v1028 = vmul.f32 %v948, %v1002
      %v1029 = vmul.f32 %v949, %v1002
      %v1030 = vmul.f32 %v950, %v1002
      %v1031 = vmul.f32 %v951, %v1002
      %v1032 = vmul.f32 %v952, %v1003
      %v1033 = vmul.f32 %v953, %v1003
      %v1034 = vmul.f32 %v954, %v1003
      %v1035 = vmul.f32 %v955, %v1003
      %v1036 = vmul.f32 %v956, %v1003
      %v1037 = vmul.f32 %v957, %v1003
      %v1038 = vmul.f32 %v958, %v1003
      %v1039 = vmul.f32 %v959, %v1003
      %v1040 = vmul.f32 %v960, %v1004
      %v1041 = vmul.f32 %v961, %v1004
      %v1042 = vmul.f32 %v962, %v1004
      %v1043 = vmul.f32 %v963, %v1004
      %v1044 = vmul.f32 %v964, %v1004
      %v1045 = vmul.f32 %v965, %v1004
      %v1046 = vmul.f32 %v966, %v1004
      %v1047 = vmul.f32 %v967, %v1004
      %v1048 = vmul.f32 %v968, %v1005
      %v1049 = vmul.f32 %v969, %v1005
      %v1050 = vmul.f32 %v970, %v1005
      %v1051 = vmul.f32 %v971, %v1005
      %v1052 = vmul.f32 %v972, %v1005
      %v1053 = vmul.f32 %v973, %v1005
      %v1054 = vmul.f32 %v974, %v1005
      %v1055 = vmul.f32 %v975, %v1005
      %v1056 = vmul.f32 %v976, %v1006
      %v1057 = vmul.f32 %v977, %v1006
      %v1058 = vmul.f32 %v978, %v1006
      %v1059 = vmul.f32 %v979, %v1006
      %v1060 = vmul.f32 %v980, %v1006
      %v1061 = vmul.f32 %v981, %v1006
      %v1062 = vmul.f32 %v982, %v1006
      %v1063 = vmul.f32 %v983, %v1006
      %v1064 = vmul.f32 %v984, %v1007
      %v1065 = vmul.f32 %v985, %v1007
      %v1066 = vmul.f32 %v986, %v1007
      %v1067 = vmul.f32 %v987, %v1007
      %v1068 = vmul.f32 %v988, %v1007
      %v1069 = vmul.f32 %v989, %v1007
      %v1070 = vmul.f32 %v990, %v1007
      %v1071 = vmul.f32 %v991, %v1007
      %v1072 = vld [vmem:[%s1] sm:$0x1]
      %v1074 = vlaneseq
      %v1075 = vshrl.u32 %v1074, 7
      %v1076 = vsub.s32 0, %v1075
      %v1077 = vrot.slane %v1072, %v1076
      %v1079 = vmul.f32 %v1008, %v1077
      %v1080 = vmul.f32 %v1009, %v1077
      %v1081 = vmul.f32 %v1010, %v1077
      %v1082 = vmul.f32 %v1011, %v1077
      %v1083 = vmul.f32 %v1012, %v1077
      %v1084 = vmul.f32 %v1013, %v1077
      %v1085 = vmul.f32 %v1014, %v1077
      %v1086 = vmul.f32 %v1015, %v1077
      %v1087 = vmul.f32 %v1016, %v1077
      %v1088 = vmul.f32 %v1017, %v1077
      %v1089 = vmul.f32 %v1018, %v1077
      %v1090 = vmul.f32 %v1019, %v1077
      %v1091 = vmul.f32 %v1020, %v1077
      %v1092 = vmul.f32 %v1021, %v1077
      %v1093 = vmul.f32 %v1022, %v1077
      %v1094 = vmul.f32 %v1023, %v1077
      %v1095 = vmul.f32 %v1024, %v1077
      %v1096 = vmul.f32 %v1025, %v1077
      %v1097 = vmul.f32 %v1026, %v1077
      %v1098 = vmul.f32 %v1027, %v1077
      %v1099 = vmul.f32 %v1028, %v1077
      %v1100 = vmul.f32 %v1029, %v1077
      %v1101 = vmul.f32 %v1030, %v1077
      %v1102 = vmul.f32 %v1031, %v1077
      %v1103 = vmul.f32 %v1032, %v1077
      %v1104 = vmul.f32 %v1033, %v1077
      %v1105 = vmul.f32 %v1034, %v1077
      %v1106 = vmul.f32 %v1035, %v1077
      %v1107 = vmul.f32 %v1036, %v1077
      %v1108 = vmul.f32 %v1037, %v1077
      %v1109 = vmul.f32 %v1038, %v1077
      %v1110 = vmul.f32 %v1039, %v1077
      %v1111 = vmul.f32 %v1040, %v1077
      %v1112 = vmul.f32 %v1041, %v1077
      %v1113 = vmul.f32 %v1042, %v1077
      %v1114 = vmul.f32 %v1043, %v1077
      %v1115 = vmul.f32 %v1044, %v1077
      %v1116 = vmul.f32 %v1045, %v1077
      %v1117 = vmul.f32 %v1046, %v1077
      %v1118 = vmul.f32 %v1047, %v1077
      %v1119 = vmul.f32 %v1048, %v1077
      %v1120 = vmul.f32 %v1049, %v1077
      %v1121 = vmul.f32 %v1050, %v1077
      %v1122 = vmul.f32 %v1051, %v1077
      %v1123 = vmul.f32 %v1052, %v1077
      %v1124 = vmul.f32 %v1053, %v1077
      %v1125 = vmul.f32 %v1054, %v1077
      %v1126 = vmul.f32 %v1055, %v1077
      %v1127 = vmul.f32 %v1056, %v1077
      %v1128 = vmul.f32 %v1057, %v1077
      %v1129 = vmul.f32 %v1058, %v1077
      %v1130 = vmul.f32 %v1059, %v1077
      %v1131 = vmul.f32 %v1060, %v1077
      %v1132 = vmul.f32 %v1061, %v1077
      %v1133 = vmul.f32 %v1062, %v1077
      %v1134 = vmul.f32 %v1063, %v1077
      %v1135 = vmul.f32 %v1064, %v1077
      %v1136 = vmul.f32 %v1065, %v1077
      %v1137 = vmul.f32 %v1066, %v1077
      %v1138 = vmul.f32 %v1067, %v1077
      %v1139 = vmul.f32 %v1068, %v1077
      %v1140 = vmul.f32 %v1069, %v1077
      %v1141 = vmul.f32 %v1070, %v1077
      %v1142 = vmul.f32 %v1071, %v1077
      %v1143 = vld [vmem:[%s2] sm:$0x1]
      %v1145 = vlaneseq
      %v1146 = vshrl.u32 %v1145, 7
      %v1147 = vsub.s32 0, %v1146
      %v1148 = vrot.slane %v1143, %v1147
      %v1150 = vadd.f32 %v1079, %v1148
      %v1151 = vadd.f32 %v1080, %v1148
      %v1152 = vadd.f32 %v1081, %v1148
      %v1153 = vadd.f32 %v1082, %v1148
      %v1154 = vadd.f32 %v1083, %v1148
      %v1155 = vadd.f32 %v1084, %v1148
      %v1156 = vadd.f32 %v1085, %v1148
      %v1157 = vadd.f32 %v1086, %v1148
      %v1158 = vadd.f32 %v1087, %v1148
      %v1159 = vadd.f32 %v1088, %v1148
      %v1160 = vadd.f32 %v1089, %v1148
      %v1161 = vadd.f32 %v1090, %v1148
      %v1162 = vadd.f32 %v1091, %v1148
      %v1163 = vadd.f32 %v1092, %v1148
      %v1164 = vadd.f32 %v1093, %v1148
      %v1165 = vadd.f32 %v1094, %v1148
      %v1166 = vadd.f32 %v1095, %v1148
      %v1167 = vadd.f32 %v1096, %v1148
      %v1168 = vadd.f32 %v1097, %v1148
      %v1169 = vadd.f32 %v1098, %v1148
      %v1170 = vadd.f32 %v1099, %v1148
      %v1171 = vadd.f32 %v1100, %v1148
      %v1172 = vadd.f32 %v1101, %v1148
      %v1173 = vadd.f32 %v1102, %v1148
      %v1174 = vadd.f32 %v1103, %v1148
      %v1175 = vadd.f32 %v1104, %v1148
      %v1176 = vadd.f32 %v1105, %v1148
      %v1177 = vadd.f32 %v1106, %v1148
      %v1178 = vadd.f32 %v1107, %v1148
      %v1179 = vadd.f32 %v1108, %v1148
      %v1180 = vadd.f32 %v1109, %v1148
      %v1181 = vadd.f32 %v1110, %v1148
      %v1182 = vadd.f32 %v1111, %v1148
      %v1183 = vadd.f32 %v1112, %v1148
      %v1184 = vadd.f32 %v1113, %v1148
      %v1185 = vadd.f32 %v1114, %v1148
      %v1186 = vadd.f32 %v1115, %v1148
      %v1187 = vadd.f32 %v1116, %v1148
      %v1188 = vadd.f32 %v1117, %v1148
      %v1189 = vadd.f32 %v1118, %v1148
      %v1190 = vadd.f32 %v1119, %v1148
      %v1191 = vadd.f32 %v1120, %v1148
      %v1192 = vadd.f32 %v1121, %v1148
      %v1193 = vadd.f32 %v1122, %v1148
      %v1194 = vadd.f32 %v1123, %v1148
      %v1195 = vadd.f32 %v1124, %v1148
      %v1196 = vadd.f32 %v1125, %v1148
      %v1197 = vadd.f32 %v1126, %v1148
      %v1198 = vadd.f32 %v1127, %v1148
      %v1199 = vadd.f32 %v1128, %v1148
      %v1200 = vadd.f32 %v1129, %v1148
      %v1201 = vadd.f32 %v1130, %v1148
      %v1202 = vadd.f32 %v1131, %v1148
      %v1203 = vadd.f32 %v1132, %v1148
      %v1204 = vadd.f32 %v1133, %v1148
      %v1205 = vadd.f32 %v1134, %v1148
      %v1206 = vadd.f32 %v1135, %v1148
      %v1207 = vadd.f32 %v1136, %v1148
      %v1208 = vadd.f32 %v1137, %v1148
      %v1209 = vadd.f32 %v1138, %v1148
      %v1210 = vadd.f32 %v1139, %v1148
      %v1211 = vadd.f32 %v1140, %v1148
      %v1212 = vadd.f32 %v1141, %v1148
      %v1213 = vadd.f32 %v1142, %v1148
      %v1214 = vpack.c.bf16 %v1151, %v1150
      %v1215 = vpack.c.bf16 %v1153, %v1152
      %v1216 = vpack.c.bf16 %v1155, %v1154
      %v1217 = vpack.c.bf16 %v1157, %v1156
      %v1218 = vpack.c.bf16 %v1159, %v1158
      %v1219 = vpack.c.bf16 %v1161, %v1160
      %v1220 = vpack.c.bf16 %v1163, %v1162
      %v1221 = vpack.c.bf16 %v1165, %v1164
      %v1222 = vpack.c.bf16 %v1167, %v1166
      %v1223 = vpack.c.bf16 %v1169, %v1168
      %v1224 = vpack.c.bf16 %v1171, %v1170
      %v1225 = vpack.c.bf16 %v1173, %v1172
      %v1226 = vpack.c.bf16 %v1175, %v1174
      %v1227 = vpack.c.bf16 %v1177, %v1176
      %v1228 = vpack.c.bf16 %v1179, %v1178
      %v1229 = vpack.c.bf16 %v1181, %v1180
      %v1230 = vpack.c.bf16 %v1183, %v1182
      %v1231 = vpack.c.bf16 %v1185, %v1184
      %v1232 = vpack.c.bf16 %v1187, %v1186
      %v1233 = vpack.c.bf16 %v1189, %v1188
      %v1234 = vpack.c.bf16 %v1191, %v1190
      %v1235 = vpack.c.bf16 %v1193, %v1192
      %v1236 = vpack.c.bf16 %v1195, %v1194
      %v1237 = vpack.c.bf16 %v1197, %v1196
      %v1238 = vpack.c.bf16 %v1199, %v1198
      %v1239 = vpack.c.bf16 %v1201, %v1200
      %v1240 = vpack.c.bf16 %v1203, %v1202
      %v1241 = vpack.c.bf16 %v1205, %v1204
      %v1242 = vpack.c.bf16 %v1207, %v1206
      %v1243 = vpack.c.bf16 %v1209, %v1208
      %v1244 = vpack.c.bf16 %v1211, %v1210
      %v1245 = vpack.c.bf16 %v1213, %v1212
      %v1246 = vld [vmem:[%s4] sm:$0xf]
      %v1247 = vld [vmem:[%s4 + $0x4] sm:$0xf]
      %v1248 = vld [vmem:[%s4 + $0x8] sm:$0xf]
      %v1249 = vld [vmem:[%s4 + $0xc] sm:$0xf]
      %v1250 = vld [vmem:[%s5] sm:$0x1]
      %v1252 = vlaneseq
      %v1253 = vshrl.u32 %v1252, 7
      %v1254 = vsub.s32 0, %v1253
      %v1255 = vrot.slane %v1250, %v1254
      %v1261 = vunpack.c.l.b16 %v1246
      %v1262 = vunpack.c.l.b16 %v1247
      %v1263 = vunpack.c.l.b16 %v1248
      %v1264 = vunpack.c.l.b16 %v1249
      %v1265 = vpack.c.b16 %v1262, %v1261
      %v1266 = vpack.c.b16 %v1264, %v1263
      %v1270 = vsel %vm487, %v1214, 0
      %v1273 = vsel %vm487, %v1215, 0
      %v1276 = vsel %vm487, %v1216, 0
      %v1279 = vsel %vm487, %v1217, 0
      %v1282 = vsel %vm487, %v1218, 0
      %v1285 = vsel %vm487, %v1219, 0
      %v1288 = vsel %vm487, %v1220, 0
      %v1291 = vsel %vm487, %v1221, 0
      %v1294 = vsel %vm487, %v1222, 0
      %v1297 = vsel %vm487, %v1223, 0
      %v1300 = vsel %vm487, %v1224, 0
      %v1303 = vsel %vm487, %v1225, 0
      %v1306 = vsel %vm487, %v1226, 0
      %v1309 = vsel %vm487, %v1227, 0
      %v1312 = vsel %vm487, %v1228, 0
      %v1315 = vsel %vm487, %v1229, 0
      %v1318 = vsel %vm487, %v1230, 0
      %v1321 = vsel %vm487, %v1231, 0
      %v1324 = vsel %vm487, %v1232, 0
      %v1327 = vsel %vm487, %v1233, 0
      %v1330 = vsel %vm487, %v1234, 0
      %v1333 = vsel %vm487, %v1235, 0
      %v1336 = vsel %vm487, %v1236, 0
      %v1339 = vsel %vm487, %v1237, 0
      %v1342 = vsel %vm487, %v1238, 0
      %v1345 = vsel %vm487, %v1239, 0
      %v1348 = vsel %vm487, %v1240, 0
      %v1351 = vsel %vm487, %v1241, 0
      %v1354 = vsel %vm487, %v1242, 0
      %v1357 = vsel %vm487, %v1243, 0
      %v1360 = vsel %vm487, %v1244, 0
      %v1363 = vsel %vm487, %v1245, 0
      %1365 = vmatprep.subr.bf16.mxu0 0
      %1366 = vmatpush1.bf16.msra.mxu0 %v1265
      %1367 = vmatprep.subr.bf16.mxu0 0
      %1368 = vmatpush1.bf16.msra.mxu0 %v1266
      %1369 = vmatprep.subr.bf16.mxu0 0
      %1370 = vmatpush1.bf16.msra.mxu0 0
      %1371 = vmatprep.subr.bf16.mxu0 0
      %1372 = vmatpush1.bf16.msra.mxu0 0
      %1373 = vmatprep.subr.bf16.mxu0 0
      %1374 = vmatpush1.bf16.msra.mxu0 0
      %1375 = vmatprep.subr.bf16.mxu0 0
      %1376 = vmatpush1.bf16.msra.mxu0 0
      %1377 = vmatprep.subr.bf16.mxu0 0
      %1378 = vmatpush1.bf16.msra.mxu0 0
      %1379 = vmatprep.subr.bf16.mxu0 0
      %1380 = vmatpush1.bf16.msra.mxu0 0
      %1381 = vmatprep.subr.bf16.mxu0 0
      %1382 = vmatpush1.bf16.msra.mxu0 0
      %1383 = vmatprep.subr.bf16.mxu0 0
      %1384 = vmatpush1.bf16.msra.mxu0 0
      %1385 = vmatprep.subr.bf16.mxu0 0
      %1386 = vmatpush1.bf16.msra.mxu0 0
      %1387 = vmatprep.subr.bf16.mxu0 0
      %1388 = vmatpush1.bf16.msra.mxu0 0
      %1389 = vmatprep.subr.bf16.mxu0 0
      %1390 = vmatpush1.bf16.msra.mxu0 0
      %1391 = vmatprep.subr.bf16.mxu0 0
      %1392 = vmatpush1.bf16.msra.mxu0 0
      %1393 = vmatprep.subr.bf16.mxu0 0
      %1394 = vmatpush1.bf16.msra.mxu0 0
      %1395 = vmatprep.subr.bf16.mxu0 0
      %1396 = vmatpush1.bf16.msra.mxu0 0
      %1397 = vmatprep.mubr.bf16.mxu0 0
      %1398 = vmatmul.mubr.bf16.gmra.mrb[0].mxu0 %v1270
      %v1399 = vpop.f32.mrb[0].mxu0
      %v1400 = vadd.f32 %v1255, %v1399
      %v1401 = vpop.f32.mrb[0].mxu0
      %v1402 = vpop.f32.mrb[0].mxu0
      %v1403 = vadd.f32 %v1255, %v1402
      %v1404 = vpop.f32.mrb[0].mxu0
      %1405 = vmatprep.mubr.bf16.mxu0 0
      %1406 = vmatmul.mubr.bf16.gmra.mrb[0].mxu0 %v1273
      %v1407 = vpop.f32.mrb[0].mxu0
      %v1408 = vadd.f32 %v1255, %v1407
      %v1409 = vpop.f32.mrb[0].mxu0
      %v1410 = vpop.f32.mrb[0].mxu0
      %v1411 = vadd.f32 %v1255, %v1410
      %v1412 = vpop.f32.mrb[0].mxu0
      %1413 = vmatprep.mubr.bf16.mxu0 0
      %1414 = vmatmul.mubr.bf16.gmra.mrb[0].mxu0 %v1276
      %v1415 = vpop.f32.mrb[0].mxu0
      %v1416 = vadd.f32 %v1255, %v1415
      %v1417 = vpop.f32.mrb[0].mxu0
      %v1418 = vpop.f32.mrb[0].mxu0
      %v1419 = vadd.f32 %v1255, %v1418
      %v1420 = vpop.f32.mrb[0].mxu0
      %1421 = vmatprep.mubr.bf16.mxu0 0
      %1422 = vmatmul.mubr.bf16.gmra.mrb[0].mxu0 %v1279
      %v1423 = vpop.f32.mrb[0].mxu0
      %v1424 = vadd.f32 %v1255, %v1423
      %v1425 = vpop.f32.mrb[0].mxu0
      %v1426 = vpop.f32.mrb[0].mxu0
      %v1427 = vadd.f32 %v1255, %v1426
      %v1428 = vpop.f32.mrb[0].mxu0
      %1429 = vmatprep.mubr.bf16.mxu0 0
      %1430 = vmatmul.mubr.bf16.gmra.mrb[0].mxu0 %v1282
      %v1431 = vpop.f32.mrb[0].mxu0
      %v1432 = vadd.f32 %v1255, %v1431
      %v1433 = vpop.f32.mrb[0].mxu0
      %v1434 = vpop.f32.mrb[0].mxu0
      %v1435 = vadd.f32 %v1255, %v1434
      %v1436 = vpop.f32.mrb[0].mxu0
      %1437 = vmatprep.mubr.bf16.mxu0 0
      %1438 = vmatmul.mubr.bf16.gmra.mrb[0].mxu0 %v1285
      %v1439 = vpop.f32.mrb[0].mxu0
      %v1440 = vadd.f32 %v1255, %v1439
      %v1441 = vpop.f32.mrb[0].mxu0
      %v1442 = vpop.f32.mrb[0].mxu0
      %v1443 = vadd.f32 %v1255, %v1442
      %v1444 = vpop.f32.mrb[0].mxu0
      %1445 = vmatprep.mubr.bf16.mxu0 0
      %1446 = vmatmul.mubr.bf16.gmra.mrb[0].mxu0 %v1288
      %v1447 = vpop.f32.mrb[0].mxu0
      %v1448 = vadd.f32 %v1255, %v1447
      %v1449 = vpop.f32.mrb[0].mxu0
      %v1450 = vpop.f32.mrb[0].mxu0
      %v1451 = vadd.f32 %v1255, %v1450
      %v1452 = vpop.f32.mrb[0].mxu0
      %1453 = vmatprep.mubr.bf16.mxu0 0
      %1454 = vmatmul.mubr.bf16.gmra.mrb[0].mxu0 %v1291
      %v1455 = vpop.f32.mrb[0].mxu0
      %v1456 = vadd.f32 %v1255, %v1455
      %v1457 = vpop.f32.mrb[0].mxu0
      %v1458 = vpop.f32.mrb[0].mxu0
      %v1459 = vadd.f32 %v1255, %v1458
      %v1460 = vpop.f32.mrb[0].mxu0
      %1461 = vmatprep.mubr.bf16.mxu0 0
      %1462 = vmatmul.mubr.bf16.gmra.mrb[0].mxu0 %v1294
      %v1463 = vpop.f32.mrb[0].mxu0
      %v1464 = vadd.f32 %v1255, %v1463
      %v1465 = vpop.f32.mrb[0].mxu0
      %v1466 = vpop.f32.mrb[0].mxu0
      %v1467 = vadd.f32 %v1255, %v1466
      %v1468 = vpop.f32.mrb[0].mxu0
      %1469 = vmatprep.mubr.bf16.mxu0 0
      %1470 = vmatmul.mubr.bf16.gmra.mrb[0].mxu0 %v1297
      %v1471 = vpop.f32.mrb[0].mxu0
      %v1472 = vadd.f32 %v1255, %v1471
      %v1473 = vpop.f32.mrb[0].mxu0
      %v1474 = vpop.f32.mrb[0].mxu0
      %v1475 = vadd.f32 %v1255, %v1474
      %v1476 = vpop.f32.mrb[0].mxu0
      %1477 = vmatprep.mubr.bf16.mxu0 0
      %1478 = vmatmul.mubr.bf16.gmra.mrb[0].mxu0 %v1300
      %v1479 = vpop.f32.mrb[0].mxu0
      %v1480 = vadd.f32 %v1255, %v1479
      %v1481 = vpop.f32.mrb[0].mxu0
      %v1482 = vpop.f32.mrb[0].mxu0
      %v1483 = vadd.f32 %v1255, %v1482
      %v1484 = vpop.f32.mrb[0].mxu0
      %1485 = vmatprep.mubr.bf16.mxu0 0
      %1486 = vmatmul.mubr.bf16.gmra.mrb[0].mxu0 %v1303
      %v1487 = vpop.f32.mrb[0].mxu0
      %v1488 = vadd.f32 %v1255, %v1487
      %v1489 = vpop.f32.mrb[0].mxu0
      %v1490 = vpop.f32.mrb[0].mxu0
      %v1491 = vadd.f32 %v1255, %v1490
      %v1492 = vpop.f32.mrb[0].mxu0
      %1493 = vmatprep.mubr.bf16.mxu0 0
      %1494 = vmatmul.mubr.bf16.gmra.mrb[0].mxu0 %v1306
      %v1495 = vpop.f32.mrb[0].mxu0
      %v1496 = vadd.f32 %v1255, %v1495
      %v1497 = vpop.f32.mrb[0].mxu0
      %v1498 = vpop.f32.mrb[0].mxu0
      %v1499 = vadd.f32 %v1255, %v1498
      %v1500 = vpop.f32.mrb[0].mxu0
      %1501 = vmatprep.mubr.bf16.mxu0 0
      %1502 = vmatmul.mubr.bf16.gmra.mrb[0].mxu0 %v1309
      %v1503 = vpop.f32.mrb[0].mxu0
      %v1504 = vadd.f32 %v1255, %v1503
      %v1505 = vpop.f32.mrb[0].mxu0
      %v1506 = vpop.f32.mrb[0].mxu0
      %v1507 = vadd.f32 %v1255, %v1506
      %v1508 = vpop.f32.mrb[0].mxu0
      %1509 = vmatprep.mubr.bf16.mxu0 0
      %1510 = vmatmul.mubr.bf16.gmra.mrb[0].mxu0 %v1312
      %v1511 = vpop.f32.mrb[0].mxu0
      %v1512 = vadd.f32 %v1255, %v1511
      %v1513 = vpop.f32.mrb[0].mxu0
      %v1514 = vpop.f32.mrb[0].mxu0
      %v1515 = vadd.f32 %v1255, %v1514
      %v1516 = vpop.f32.mrb[0].mxu0
      %1517 = vmatprep.mubr.bf16.mxu0 0
      %1518 = vmatmul.mubr.bf16.gmra.mrb[0].mxu0 %v1315
      %v1519 = vpop.f32.mrb[0].mxu0
      %v1520 = vadd.f32 %v1255, %v1519
      %v1521 = vpop.f32.mrb[0].mxu0
      %v1522 = vpop.f32.mrb[0].mxu0
      %v1523 = vadd.f32 %v1255, %v1522
      %v1524 = vpop.f32.mrb[0].mxu0
      %1525 = vmatprep.mubr.bf16.mxu0 0
      %1526 = vmatmul.mubr.bf16.gmra.mrb[0].mxu0 %v1318
      %v1527 = vpop.f32.mrb[0].mxu0
      %v1528 = vadd.f32 %v1255, %v1527
      %v1529 = vpop.f32.mrb[0].mxu0
      %v1530 = vpop.f32.mrb[0].mxu0
      %v1531 = vadd.f32 %v1255, %v1530
      %v1532 = vpop.f32.mrb[0].mxu0
      %1533 = vmatprep.mubr.bf16.mxu0 0
      %1534 = vmatmul.mubr.bf16.gmra.mrb[0].mxu0 %v1321
      %v1535 = vpop.f32.mrb[0].mxu0
      %v1536 = vadd.f32 %v1255, %v1535
      %v1537 = vpop.f32.mrb[0].mxu0
      %v1538 = vpop.f32.mrb[0].mxu0
      %v1539 = vadd.f32 %v1255, %v1538
      %v1540 = vpop.f32.mrb[0].mxu0
      %1541 = vmatprep.mubr.bf16.mxu0 0
      %1542 = vmatmul.mubr.bf16.gmra.mrb[0].mxu0 %v1324
      %v1543 = vpop.f32.mrb[0].mxu0
      %v1544 = vadd.f32 %v1255, %v1543
      %v1545 = vpop.f32.mrb[0].mxu0
      %v1546 = vpop.f32.mrb[0].mxu0
      %v1547 = vadd.f32 %v1255, %v1546
      %v1548 = vpop.f32.mrb[0].mxu0
      %1549 = vmatprep.mubr.bf16.mxu0 0
      %1550 = vmatmul.mubr.bf16.gmra.mrb[0].mxu0 %v1327
      %v1551 = vpop.f32.mrb[0].mxu0
      %v1552 = vadd.f32 %v1255, %v1551
      %v1553 = vpop.f32.mrb[0].mxu0
      %v1554 = vpop.f32.mrb[0].mxu0
      %v1555 = vadd.f32 %v1255, %v1554
      %v1556 = vpop.f32.mrb[0].mxu0
      %1557 = vmatprep.mubr.bf16.mxu0 0
      %1558 = vmatmul.mubr.bf16.gmra.mrb[0].mxu0 %v1330
      %v1559 = vpop.f32.mrb[0].mxu0
      %v1560 = vadd.f32 %v1255, %v1559
      %v1561 = vpop.f32.mrb[0].mxu0
      %v1562 = vpop.f32.mrb[0].mxu0
      %v1563 = vadd.f32 %v1255, %v1562
      %v1564 = vpop.f32.mrb[0].mxu0
      %1565 = vmatprep.mubr.bf16.mxu0 0
      %1566 = vmatmul.mubr.bf16.gmra.mrb[0].mxu0 %v1333
      %v1567 = vpop.f32.mrb[0].mxu0
      %v1568 = vadd.f32 %v1255, %v1567
      %v1569 = vpop.f32.mrb[0].mxu0
      %v1570 = vpop.f32.mrb[0].mxu0
      %v1571 = vadd.f32 %v1255, %v1570
      %v1572 = vpop.f32.mrb[0].mxu0
      %1573 = vmatprep.mubr.bf16.mxu0 0
      %1574 = vmatmul.mubr.bf16.gmra.mrb[0].mxu0 %v1336
      %v1575 = vpop.f32.mrb[0].mxu0
      %v1576 = vadd.f32 %v1255, %v1575
      %v1577 = vpop.f32.mrb[0].mxu0
      %v1578 = vpop.f32.mrb[0].mxu0
      %v1579 = vadd.f32 %v1255, %v1578
      %v1580 = vpop.f32.mrb[0].mxu0
      %1581 = vmatprep.mubr.bf16.mxu0 0
      %1582 = vmatmul.mubr.bf16.gmra.mrb[0].mxu0 %v1339
      %v1583 = vpop.f32.mrb[0].mxu0
      %v1584 = vadd.f32 %v1255, %v1583
      %v1585 = vpop.f32.mrb[0].mxu0
      %v1586 = vpop.f32.mrb[0].mxu0
      %v1587 = vadd.f32 %v1255, %v1586
      %v1588 = vpop.f32.mrb[0].mxu0
      %1589 = vmatprep.mubr.bf16.mxu0 0
      %1590 = vmatmul.mubr.bf16.gmra.mrb[0].mxu0 %v1342
      %v1591 = vpop.f32.mrb[0].mxu0
      %v1592 = vadd.f32 %v1255, %v1591
      %v1593 = vpop.f32.mrb[0].mxu0
      %v1594 = vpop.f32.mrb[0].mxu0
      %v1595 = vadd.f32 %v1255, %v1594
      %v1596 = vpop.f32.mrb[0].mxu0
      %1597 = vmatprep.mubr.bf16.mxu0 0
      %1598 = vmatmul.mubr.bf16.gmra.mrb[0].mxu0 %v1345
      %v1599 = vpop.f32.mrb[0].mxu0
      %v1600 = vadd.f32 %v1255, %v1599
      %v1601 = vpop.f32.mrb[0].mxu0
      %v1602 = vpop.f32.mrb[0].mxu0
      %v1603 = vadd.f32 %v1255, %v1602
      %v1604 = vpop.f32.mrb[0].mxu0
      %1605 = vmatprep.mubr.bf16.mxu0 0
      %1606 = vmatmul.mubr.bf16.gmra.mrb[0].mxu0 %v1348
      %v1607 = vpop.f32.mrb[0].mxu0
      %v1608 = vadd.f32 %v1255, %v1607
      %v1609 = vpop.f32.mrb[0].mxu0
      %v1610 = vpop.f32.mrb[0].mxu0
      %v1611 = vadd.f32 %v1255, %v1610
      %v1612 = vpop.f32.mrb[0].mxu0
      %1613 = vmatprep.mubr.bf16.mxu0 0
      %1614 = vmatmul.mubr.bf16.gmra.mrb[0].mxu0 %v1351
      %v1615 = vpop.f32.mrb[0].mxu0
      %v1616 = vadd.f32 %v1255, %v1615
      %v1617 = vpop.f32.mrb[0].mxu0
      %v1618 = vpop.f32.mrb[0].mxu0
      %v1619 = vadd.f32 %v1255, %v1618
      %v1620 = vpop.f32.mrb[0].mxu0
      %1621 = vmatprep.mubr.bf16.mxu0 0
      %1622 = vmatmul.mubr.bf16.gmra.mrb[0].mxu0 %v1354
      %v1623 = vpop.f32.mrb[0].mxu0
      %v1624 = vadd.f32 %v1255, %v1623
      %v1625 = vpop.f32.mrb[0].mxu0
      %v1626 = vpop.f32.mrb[0].mxu0
      %v1627 = vadd.f32 %v1255, %v1626
      %v1628 = vpop.f32.mrb[0].mxu0
      %1629 = vmatprep.mubr.bf16.mxu0 0
      %1630 = vmatmul.mubr.bf16.gmra.mrb[0].mxu0 %v1357
      %v1631 = vpop.f32.mrb[0].mxu0
      %v1632 = vadd.f32 %v1255, %v1631
      %v1633 = vpop.f32.mrb[0].mxu0
      %v1634 = vpop.f32.mrb[0].mxu0
      %v1635 = vadd.f32 %v1255, %v1634
      %v1636 = vpop.f32.mrb[0].mxu0
      %1637 = vmatprep.mubr.bf16.mxu0 0
      %1638 = vmatmul.mubr.bf16.gmra.mrb[0].mxu0 %v1360
      %v1639 = vpop.f32.mrb[0].mxu0
      %v1640 = vadd.f32 %v1255, %v1639
      %v1641 = vpop.f32.mrb[0].mxu0
      %v1642 = vpop.f32.mrb[0].mxu0
      %v1643 = vadd.f32 %v1255, %v1642
      %v1644 = vpop.f32.mrb[0].mxu0
      %1645 = vmatprep.mubr.bf16.mxu0 0
      %1646 = vmatmul.mubr.bf16.gmra.mrb[0].mxu0 %v1363
      %v1647 = vpop.f32.mrb[0].mxu0
      %v1648 = vadd.f32 %v1255, %v1647
      %v1649 = vpop.f32.mrb[0].mxu0
      %v1650 = vpop.f32.mrb[0].mxu0
      %v1651 = vadd.f32 %v1255, %v1650
      %v1652 = vpop.f32.mrb[0].mxu0
      %1653 = vdwg.mxu0
      %v1654 = vld [vmem:[%s6] sm:$0xf]
      %v1655 = vld [vmem:[%s6 + $0x4] sm:$0xf]
      %v1656 = vld [vmem:[%s6 + $0x8] sm:$0xf]
      %v1657 = vld [vmem:[%s6 + $0xc] sm:$0xf]
      %v1658 = vld [vmem:[%s7] sm:$0x1]
      %v1660 = vlaneseq
      %v1661 = vshrl.u32 %v1660, 7
      %v1662 = vsub.s32 0, %v1661
      %v1663 = vrot.slane %v1658, %v1662
      %v1669 = vunpack.c.l.b16 %v1654
      %v1670 = vunpack.c.l.b16 %v1655
      %v1671 = vunpack.c.l.b16 %v1656
      %v1672 = vunpack.c.l.b16 %v1657
      %v1673 = vpack.c.b16 %v1670, %v1669
      %v1674 = vpack.c.b16 %v1672, %v1671
      %1677 = vmatprep.subr.bf16.mxu0 0
      %1678 = vmatpush1.bf16.msra.mxu0 %v1673
      %1679 = vmatprep.subr.bf16.mxu0 0
      %1680 = vmatpush1.bf16.msra.mxu0 %v1674
      %1681 = vmatprep.subr.bf16.mxu0 0
      %1682 = vmatpush1.bf16.msra.mxu0 0
      %1683 = vmatprep.subr.bf16.mxu0 0
      %1684 = vmatpush1.bf16.msra.mxu0 0
      %1685 = vmatprep.subr.bf16.mxu0 0
      %1686 = vmatpush1.bf16.msra.mxu0 0
      %1687 = vmatprep.subr.bf16.mxu0 0
      %1688 = vmatpush1.bf16.msra.mxu0 0
      %1689 = vmatprep.subr.bf16.mxu0 0
      %1690 = vmatpush1.bf16.msra.mxu0 0
      %1691 = vmatprep.subr.bf16.mxu0 0
      %1692 = vmatpush1.bf16.msra.mxu0 0
      %1693 = vmatprep.subr.bf16.mxu0 0
      %1694 = vmatpush1.bf16.msra.mxu0 0
      %1695 = vmatprep.subr.bf16.mxu0 0
      %1696 = vmatpush1.bf16.msra.mxu0 0
      %1697 = vmatprep.subr.bf16.mxu0 0
      %1698 = vmatpush1.bf16.msra.mxu0 0
      %1699 = vmatprep.subr.bf16.mxu0 0
      %1700 = vmatpush1.bf16.msra.mxu0 0
      %1701 = vmatprep.subr.bf16.mxu0 0
      %1702 = vmatpush1.bf16.msra.mxu0 0
      %1703 = vmatprep.subr.bf16.mxu0 0
      %1704 = vmatpush1.bf16.msra.mxu0 0
      %1705 = vmatprep.subr.bf16.mxu0 0
      %1706 = vmatpush1.bf16.msra.mxu0 0
      %1707 = vmatprep.subr.bf16.mxu0 0
      %1708 = vmatpush1.bf16.msra.mxu0 0
      %1709 = vmatprep.mubr.bf16.mxu0 0
      %1710 = vmatmul.mubr.bf16.gmra.mrb[0].mxu0 %v1270
      %v1711 = vpop.f32.mrb[0].mxu0
      %v1712 = vadd.f32 %v1663, %v1711
      %v1713 = vpop.f32.mrb[0].mxu0
      %v1714 = vpop.f32.mrb[0].mxu0
      %v1715 = vadd.f32 %v1663, %v1714
      %v1716 = vpop.f32.mrb[0].mxu0
      %1717 = vmatprep.mubr.bf16.mxu0 0
      %1718 = vmatmul.mubr.bf16.gmra.mrb[0].mxu0 %v1273
      %v1719 = vpop.f32.mrb[0].mxu0
      %v1720 = vadd.f32 %v1663, %v1719
      %v1721 = vpop.f32.mrb[0].mxu0
      %v1722 = vpop.f32.mrb[0].mxu0
      %v1723 = vadd.f32 %v1663, %v1722
      %v1724 = vpop.f32.mrb[0].mxu0
      %1725 = vmatprep.mubr.bf16.mxu0 0
      %1726 = vmatmul.mubr.bf16.gmra.mrb[0].mxu0 %v1276
      %v1727 = vpop.f32.mrb[0].mxu0
      %v1728 = vadd.f32 %v1663, %v1727
      %v1729 = vpop.f32.mrb[0].mxu0
      %v1730 = vpop.f32.mrb[0].mxu0
      %v1731 = vadd.f32 %v1663, %v1730
      %v1732 = vpop.f32.mrb[0].mxu0
      %1733 = vmatprep.mubr.bf16.mxu0 0
      %1734 = vmatmul.mubr.bf16.gmra.mrb[0].mxu0 %v1279
      %v1735 = vpop.f32.mrb[0].mxu0
      %v1736 = vadd.f32 %v1663, %v1735
      %v1737 = vpop.f32.mrb[0].mxu0
      %v1738 = vpop.f32.mrb[0].mxu0
      %v1739 = vadd.f32 %v1663, %v1738
      %v1740 = vpop.f32.mrb[0].mxu0
      %1741 = vmatprep.mubr.bf16.mxu0 0
      %1742 = vmatmul.mubr.bf16.gmra.mrb[0].mxu0 %v1282
      %v1743 = vpop.f32.mrb[0].mxu0
      %v1744 = vadd.f32 %v1663, %v1743
      %v1745 = vpop.f32.mrb[0].mxu0
      %v1746 = vpop.f32.mrb[0].mxu0
      %v1747 = vadd.f32 %v1663, %v1746
      %v1748 = vpop.f32.mrb[0].mxu0
      %1749 = vmatprep.mubr.bf16.mxu0 0
      %1750 = vmatmul.mubr.bf16.gmra.mrb[0].mxu0 %v1285
      %v1751 = vpop.f32.mrb[0].mxu0
      %v1752 = vadd.f32 %v1663, %v1751
      %v1753 = vpop.f32.mrb[0].mxu0
      %v1754 = vpop.f32.mrb[0].mxu0
      %v1755 = vadd.f32 %v1663, %v1754
      %v1756 = vpop.f32.mrb[0].mxu0
      %1757 = vmatprep.mubr.bf16.mxu0 0
      %1758 = vmatmul.mubr.bf16.gmra.mrb[0].mxu0 %v1288
      %v1759 = vpop.f32.mrb[0].mxu0
      %v1760 = vadd.f32 %v1663, %v1759
      %v1761 = vpop.f32.mrb[0].mxu0
      %v1762 = vpop.f32.mrb[0].mxu0
      %v1763 = vadd.f32 %v1663, %v1762
      %v1764 = vpop.f32.mrb[0].mxu0
      %1765 = vmatprep.mubr.bf16.mxu0 0
      %1766 = vmatmul.mubr.bf16.gmra.mrb[0].mxu0 %v1291
      %v1767 = vpop.f32.mrb[0].mxu0
      %v1768 = vadd.f32 %v1663, %v1767
      %v1769 = vpop.f32.mrb[0].mxu0
      %v1770 = vpop.f32.mrb[0].mxu0
      %v1771 = vadd.f32 %v1663, %v1770
      %v1772 = vpop.f32.mrb[0].mxu0
      %1773 = vmatprep.mubr.bf16.mxu0 0
      %1774 = vmatmul.mubr.bf16.gmra.mrb[0].mxu0 %v1294
      %v1775 = vpop.f32.mrb[0].mxu0
      %v1776 = vadd.f32 %v1663, %v1775
      %v1777 = vpop.f32.mrb[0].mxu0
      %v1778 = vpop.f32.mrb[0].mxu0
      %v1779 = vadd.f32 %v1663, %v1778
      %v1780 = vpop.f32.mrb[0].mxu0
      %1781 = vmatprep.mubr.bf16.mxu0 0
      %1782 = vmatmul.mubr.bf16.gmra.mrb[0].mxu0 %v1297
      %v1783 = vpop.f32.mrb[0].mxu0
      %v1784 = vadd.f32 %v1663, %v1783
      %v1785 = vpop.f32.mrb[0].mxu0
      %v1786 = vpop.f32.mrb[0].mxu0
      %v1787 = vadd.f32 %v1663, %v1786
      %v1788 = vpop.f32.mrb[0].mxu0
      %1789 = vmatprep.mubr.bf16.mxu0 0
      %1790 = vmatmul.mubr.bf16.gmra.mrb[0].mxu0 %v1300
      %v1791 = vpop.f32.mrb[0].mxu0
      %v1792 = vadd.f32 %v1663, %v1791
      %v1793 = vpop.f32.mrb[0].mxu0
      %v1794 = vpop.f32.mrb[0].mxu0
      %v1795 = vadd.f32 %v1663, %v1794
      %v1796 = vpop.f32.mrb[0].mxu0
      %1797 = vmatprep.mubr.bf16.mxu0 0
      %1798 = vmatmul.mubr.bf16.gmra.mrb[0].mxu0 %v1303
      %v1799 = vpop.f32.mrb[0].mxu0
      %v1800 = vadd.f32 %v1663, %v1799
      %v1801 = vpop.f32.mrb[0].mxu0
      %v1802 = vpop.f32.mrb[0].mxu0
      %v1803 = vadd.f32 %v1663, %v1802
      %v1804 = vpop.f32.mrb[0].mxu0
      %1805 = vmatprep.mubr.bf16.mxu0 0
      %1806 = vmatmul.mubr.bf16.gmra.mrb[0].mxu0 %v1306
      %v1807 = vpop.f32.mrb[0].mxu0
      %v1808 = vadd.f32 %v1663, %v1807
      %v1809 = vpop.f32.mrb[0].mxu0
      %v1810 = vpop.f32.mrb[0].mxu0
      %v1811 = vadd.f32 %v1663, %v1810
      %v1812 = vpop.f32.mrb[0].mxu0
      %1813 = vmatprep.mubr.bf16.mxu0 0
      %1814 = vmatmul.mubr.bf16.gmra.mrb[0].mxu0 %v1309
      %v1815 = vpop.f32.mrb[0].mxu0
      %v1816 = vadd.f32 %v1663, %v1815
      %v1817 = vpop.f32.mrb[0].mxu0
      %v1818 = vpop.f32.mrb[0].mxu0
      %v1819 = vadd.f32 %v1663, %v1818
      %v1820 = vpop.f32.mrb[0].mxu0
      %1821 = vmatprep.mubr.bf16.mxu0 0
      %1822 = vmatmul.mubr.bf16.gmra.mrb[0].mxu0 %v1312
      %v1823 = vpop.f32.mrb[0].mxu0
      %v1824 = vadd.f32 %v1663, %v1823
      %v1825 = vpop.f32.mrb[0].mxu0
      %v1826 = vpop.f32.mrb[0].mxu0
      %v1827 = vadd.f32 %v1663, %v1826
      %v1828 = vpop.f32.mrb[0].mxu0
      %1829 = vmatprep.mubr.bf16.mxu0 0
      %1830 = vmatmul.mubr.bf16.gmra.mrb[0].mxu0 %v1315
      %v1831 = vpop.f32.mrb[0].mxu0
      %v1832 = vadd.f32 %v1663, %v1831
      %v1833 = vpop.f32.mrb[0].mxu0
      %v1834 = vpop.f32.mrb[0].mxu0
      %v1835 = vadd.f32 %v1663, %v1834
      %v1836 = vpop.f32.mrb[0].mxu0
      %1837 = vmatprep.mubr.bf16.mxu0 0
      %1838 = vmatmul.mubr.bf16.gmra.mrb[0].mxu0 %v1318
      %v1839 = vpop.f32.mrb[0].mxu0
      %v1840 = vadd.f32 %v1663, %v1839
      %v1841 = vpop.f32.mrb[0].mxu0
      %v1842 = vpop.f32.mrb[0].mxu0
      %v1843 = vadd.f32 %v1663, %v1842
      %v1844 = vpop.f32.mrb[0].mxu0
      %1845 = vmatprep.mubr.bf16.mxu0 0
      %1846 = vmatmul.mubr.bf16.gmra.mrb[0].mxu0 %v1321
      %v1847 = vpop.f32.mrb[0].mxu0
      %v1848 = vadd.f32 %v1663, %v1847
      %v1849 = vpop.f32.mrb[0].mxu0
      %v1850 = vpop.f32.mrb[0].mxu0
      %v1851 = vadd.f32 %v1663, %v1850
      %v1852 = vpop.f32.mrb[0].mxu0
      %1853 = vmatprep.mubr.bf16.mxu0 0
      %1854 = vmatmul.mubr.bf16.gmra.mrb[0].mxu0 %v1324
      %v1855 = vpop.f32.mrb[0].mxu0
      %v1856 = vadd.f32 %v1663, %v1855
      %v1857 = vpop.f32.mrb[0].mxu0
      %v1858 = vpop.f32.mrb[0].mxu0
      %v1859 = vadd.f32 %v1663, %v1858
      %v1860 = vpop.f32.mrb[0].mxu0
      %1861 = vmatprep.mubr.bf16.mxu0 0
      %1862 = vmatmul.mubr.bf16.gmra.mrb[0].mxu0 %v1327
      %v1863 = vpop.f32.mrb[0].mxu0
      %v1864 = vadd.f32 %v1663, %v1863
      %v1865 = vpop.f32.mrb[0].mxu0
      %v1866 = vpop.f32.mrb[0].mxu0
      %v1867 = vadd.f32 %v1663, %v1866
      %v1868 = vpop.f32.mrb[0].mxu0
      %1869 = vmatprep.mubr.bf16.mxu0 0
      %1870 = vmatmul.mubr.bf16.gmra.mrb[0].mxu0 %v1330
      %v1871 = vpop.f32.mrb[0].mxu0
      %v1872 = vadd.f32 %v1663, %v1871
      %v1873 = vpop.f32.mrb[0].mxu0
      %v1874 = vpop.f32.mrb[0].mxu0
      %v1875 = vadd.f32 %v1663, %v1874
      %v1876 = vpop.f32.mrb[0].mxu0
      %1877 = vmatprep.mubr.bf16.mxu0 0
      %1878 = vmatmul.mubr.bf16.gmra.mrb[0].mxu0 %v1333
      %v1879 = vpop.f32.mrb[0].mxu0
      %v1880 = vadd.f32 %v1663, %v1879
      %v1881 = vpop.f32.mrb[0].mxu0
      %v1882 = vpop.f32.mrb[0].mxu0
      %v1883 = vadd.f32 %v1663, %v1882
      %v1884 = vpop.f32.mrb[0].mxu0
      %1885 = vmatprep.mubr.bf16.mxu0 0
      %1886 = vmatmul.mubr.bf16.gmra.mrb[0].mxu0 %v1336
      %v1887 = vpop.f32.mrb[0].mxu0
      %v1888 = vadd.f32 %v1663, %v1887
      %v1889 = vpop.f32.mrb[0].mxu0
      %v1890 = vpop.f32.mrb[0].mxu0
      %v1891 = vadd.f32 %v1663, %v1890
      %v1892 = vpop.f32.mrb[0].mxu0
      %1893 = vmatprep.mubr.bf16.mxu0 0
      %1894 = vmatmul.mubr.bf16.gmra.mrb[0].mxu0 %v1339
      %v1895 = vpop.f32.mrb[0].mxu0
      %v1896 = vadd.f32 %v1663, %v1895
      %v1897 = vpop.f32.mrb[0].mxu0
      %v1898 = vpop.f32.mrb[0].mxu0
      %v1899 = vadd.f32 %v1663, %v1898
      %v1900 = vpop.f32.mrb[0].mxu0
      %1901 = vmatprep.mubr.bf16.mxu0 0
      %1902 = vmatmul.mubr.bf16.gmra.mrb[0].mxu0 %v1342
      %v1903 = vpop.f32.mrb[0].mxu0
      %v1904 = vadd.f32 %v1663, %v1903
      %v1905 = vpop.f32.mrb[0].mxu0
      %v1906 = vpop.f32.mrb[0].mxu0
      %v1907 = vadd.f32 %v1663, %v1906
      %v1908 = vpop.f32.mrb[0].mxu0
      %1909 = vmatprep.mubr.bf16.mxu0 0
      %1910 = vmatmul.mubr.bf16.gmra.mrb[0].mxu0 %v1345
      %v1911 = vpop.f32.mrb[0].mxu0
      %v1912 = vadd.f32 %v1663, %v1911
      %v1913 = vpop.f32.mrb[0].mxu0
      %v1914 = vpop.f32.mrb[0].mxu0
      %v1915 = vadd.f32 %v1663, %v1914
      %v1916 = vpop.f32.mrb[0].mxu0
      %1917 = vmatprep.mubr.bf16.mxu0 0
      %1918 = vmatmul.mubr.bf16.gmra.mrb[0].mxu0 %v1348
      %v1919 = vpop.f32.mrb[0].mxu0
      %v1920 = vadd.f32 %v1663, %v1919
      %v1921 = vpop.f32.mrb[0].mxu0
      %v1922 = vpop.f32.mrb[0].mxu0
      %v1923 = vadd.f32 %v1663, %v1922
      %v1924 = vpop.f32.mrb[0].mxu0
      %1925 = vmatprep.mubr.bf16.mxu0 0
      %1926 = vmatmul.mubr.bf16.gmra.mrb[0].mxu0 %v1351
      %v1927 = vpop.f32.mrb[0].mxu0
      %v1928 = vadd.f32 %v1663, %v1927
      %v1929 = vpop.f32.mrb[0].mxu0
      %v1930 = vpop.f32.mrb[0].mxu0
      %v1931 = vadd.f32 %v1663, %v1930
      %v1932 = vpop.f32.mrb[0].mxu0
      %1933 = vmatprep.mubr.bf16.mxu0 0
      %1934 = vmatmul.mubr.bf16.gmra.mrb[0].mxu0 %v1354
      %v1935 = vpop.f32.mrb[0].mxu0
      %v1936 = vadd.f32 %v1663, %v1935
      %v1937 = vpop.f32.mrb[0].mxu0
      %v1938 = vpop.f32.mrb[0].mxu0
      %v1939 = vadd.f32 %v1663, %v1938
      %v1940 = vpop.f32.mrb[0].mxu0
      %1941 = vmatprep.mubr.bf16.mxu0 0
      %1942 = vmatmul.mubr.bf16.gmra.mrb[0].mxu0 %v1357
      %v1943 = vpop.f32.mrb[0].mxu0
      %v1944 = vadd.f32 %v1663, %v1943
      %v1945 = vpop.f32.mrb[0].mxu0
      %v1946 = vpop.f32.mrb[0].mxu0
      %v1947 = vadd.f32 %v1663, %v1946
      %v1948 = vpop.f32.mrb[0].mxu0
      %1949 = vmatprep.mubr.bf16.mxu0 0
      %1950 = vmatmul.mubr.bf16.gmra.mrb[0].mxu0 %v1360
      %v1951 = vpop.f32.mrb[0].mxu0
      %v1952 = vadd.f32 %v1663, %v1951
      %v1953 = vpop.f32.mrb[0].mxu0
      %v1954 = vpop.f32.mrb[0].mxu0
      %v1955 = vadd.f32 %v1663, %v1954
      %v1956 = vpop.f32.mrb[0].mxu0
      %1957 = vmatprep.mubr.bf16.mxu0 0
      %1958 = vmatmul.mubr.bf16.gmra.mrb[0].mxu0 %v1363
      %v1959 = vpop.f32.mrb[0].mxu0
      %v1960 = vadd.f32 %v1663, %v1959
      %v1961 = vpop.f32.mrb[0].mxu0
      %v1962 = vpop.f32.mrb[0].mxu0
      %v1963 = vadd.f32 %v1663, %v1962
      %v1964 = vpop.f32.mrb[0].mxu0
      %1965 = vdwg.mxu0
      %v1966 = vld [vmem:[%s8] sm:$0xf]
      %v1967 = vld [vmem:[%s8 + $0x4] sm:$0xf]
      %v1968 = vld [vmem:[%s8 + $0x8] sm:$0xf]
      %v1969 = vld [vmem:[%s8 + $0xc] sm:$0xf]
      %v1970 = vld [vmem:[%s9] sm:$0x1]
      %v1972 = vlaneseq
      %v1973 = vshrl.u32 %v1972, 7
      %v1974 = vsub.s32 0, %v1973
      %v1975 = vrot.slane %v1970, %v1974
      %v1981 = vunpack.c.l.b16 %v1966
      %v1982 = vunpack.c.l.b16 %v1967
      %v1983 = vunpack.c.l.b16 %v1968
      %v1984 = vunpack.c.l.b16 %v1969
      %v1985 = vpack.c.b16 %v1982, %v1981
      %v1986 = vpack.c.b16 %v1984, %v1983
      %1989 = vmatprep.subr.bf16.mxu0 0
      %1990 = vmatpush1.bf16.msra.mxu0 %v1985
      %1991 = vmatprep.subr.bf16.mxu0 0
      %1992 = vmatpush1.bf16.msra.mxu0 %v1986
      %1993 = vmatprep.subr.bf16.mxu0 0
      %1994 = vmatpush1.bf16.msra.mxu0 0
      %1995 = vmatprep.subr.bf16.mxu0 0
      %1996 = vmatpush1.bf16.msra.mxu0 0
      %1997 = vmatprep.subr.bf16.mxu0 0
      %1998 = vmatpush1.bf16.msra.mxu0 0
      %1999 = vmatprep.subr.bf16.mxu0 0
      %2000 = vmatpush1.bf16.msra.mxu0 0
      %2001 = vmatprep.subr.bf16.mxu0 0
      %2002 = vmatpush1.bf16.msra.mxu0 0
      %2003 = vmatprep.subr.bf16.mxu0 0
      %2004 = vmatpush1.bf16.msra.mxu0 0
      %2005 = vmatprep.subr.bf16.mxu0 0
      %2006 = vmatpush1.bf16.msra.mxu0 0
      %2007 = vmatprep.subr.bf16.mxu0 0
      %2008 = vmatpush1.bf16.msra.mxu0 0
      %2009 = vmatprep.subr.bf16.mxu0 0
      %2010 = vmatpush1.bf16.msra.mxu0 0
      %2011 = vmatprep.subr.bf16.mxu0 0
      %2012 = vmatpush1.bf16.msra.mxu0 0
      %2013 = vmatprep.subr.bf16.mxu0 0
      %2014 = vmatpush1.bf16.msra.mxu0 0
      %2015 = vmatprep.subr.bf16.mxu0 0
      %2016 = vmatpush1.bf16.msra.mxu0 0
      %2017 = vmatprep.subr.bf16.mxu0 0
      %2018 = vmatpush1.bf16.msra.mxu0 0
      %2019 = vmatprep.subr.bf16.mxu0 0
      %2020 = vmatpush1.bf16.msra.mxu0 0
      %2021 = vmatprep.mubr.bf16.mxu0 0
      %2022 = vmatmul.mubr.bf16.gmra.mrb[0].mxu0 %v1270
      %v2023 = vpop.f32.mrb[0].mxu0
      %v2024 = vadd.f32 %v1975, %v2023
      %v2025 = vpop.f32.mrb[0].mxu0
      %v2026 = vpop.f32.mrb[0].mxu0
      %v2027 = vadd.f32 %v1975, %v2026
      %v2028 = vpop.f32.mrb[0].mxu0
      %2029 = vmatprep.mubr.bf16.mxu0 0
      %2030 = vmatmul.mubr.bf16.gmra.mrb[0].mxu0 %v1273
      %v2031 = vpop.f32.mrb[0].mxu0
      %v2032 = vadd.f32 %v1975, %v2031
      %v2033 = vpop.f32.mrb[0].mxu0
      %v2034 = vpop.f32.mrb[0].mxu0
      %v2035 = vadd.f32 %v1975, %v2034
      %v2036 = vpop.f32.mrb[0].mxu0
      %2037 = vmatprep.mubr.bf16.mxu0 0
      %2038 = vmatmul.mubr.bf16.gmra.mrb[0].mxu0 %v1276
      %v2039 = vpop.f32.mrb[0].mxu0
      %v2040 = vadd.f32 %v1975, %v2039
      %v2041 = vpop.f32.mrb[0].mxu0
      %v2042 = vpop.f32.mrb[0].mxu0
      %v2043 = vadd.f32 %v1975, %v2042
      %v2044 = vpop.f32.mrb[0].mxu0
      %2045 = vmatprep.mubr.bf16.mxu0 0
      %2046 = vmatmul.mubr.bf16.gmra.mrb[0].mxu0 %v1279
      %v2047 = vpop.f32.mrb[0].mxu0
      %v2048 = vadd.f32 %v1975, %v2047
      %v2049 = vpop.f32.mrb[0].mxu0
      %v2050 = vpop.f32.mrb[0].mxu0
      %v2051 = vadd.f32 %v1975, %v2050
      %v2052 = vpop.f32.mrb[0].mxu0
      %2053 = vmatprep.mubr.bf16.mxu0 0
      %2054 = vmatmul.mubr.bf16.gmra.mrb[0].mxu0 %v1282
      %v2055 = vpop.f32.mrb[0].mxu0
      %v2056 = vadd.f32 %v1975, %v2055
      %v2057 = vpop.f32.mrb[0].mxu0
      %v2058 = vpop.f32.mrb[0].mxu0
      %v2059 = vadd.f32 %v1975, %v2058
      %v2060 = vpop.f32.mrb[0].mxu0
      %2061 = vmatprep.mubr.bf16.mxu0 0
      %2062 = vmatmul.mubr.bf16.gmra.mrb[0].mxu0 %v1285
      %v2063 = vpop.f32.mrb[0].mxu0
      %v2064 = vadd.f32 %v1975, %v2063
      %v2065 = vpop.f32.mrb[0].mxu0
      %v2066 = vpop.f32.mrb[0].mxu0
      %v2067 = vadd.f32 %v1975, %v2066
      %v2068 = vpop.f32.mrb[0].mxu0
      %2069 = vmatprep.mubr.bf16.mxu0 0
      %2070 = vmatmul.mubr.bf16.gmra.mrb[0].mxu0 %v1288
      %v2071 = vpop.f32.mrb[0].mxu0
      %v2072 = vadd.f32 %v1975, %v2071
      %v2073 = vpop.f32.mrb[0].mxu0
      %v2074 = vpop.f32.mrb[0].mxu0
      %v2075 = vadd.f32 %v1975, %v2074
      %v2076 = vpop.f32.mrb[0].mxu0
      %2077 = vmatprep.mubr.bf16.mxu0 0
      %2078 = vmatmul.mubr.bf16.gmra.mrb[0].mxu0 %v1291
      %v2079 = vpop.f32.mrb[0].mxu0
      %v2080 = vadd.f32 %v1975, %v2079
      %v2081 = vpop.f32.mrb[0].mxu0
      %v2082 = vpop.f32.mrb[0].mxu0
      %v2083 = vadd.f32 %v1975, %v2082
      %v2084 = vpop.f32.mrb[0].mxu0
      %2085 = vmatprep.mubr.bf16.mxu0 0
      %2086 = vmatmul.mubr.bf16.gmra.mrb[0].mxu0 %v1294
      %v2087 = vpop.f32.mrb[0].mxu0
      %v2088 = vadd.f32 %v1975, %v2087
      %v2089 = vpop.f32.mrb[0].mxu0
      %v2090 = vpop.f32.mrb[0].mxu0
      %v2091 = vadd.f32 %v1975, %v2090
      %v2092 = vpop.f32.mrb[0].mxu0
      %2093 = vmatprep.mubr.bf16.mxu0 0
      %2094 = vmatmul.mubr.bf16.gmra.mrb[0].mxu0 %v1297
      %v2095 = vpop.f32.mrb[0].mxu0
      %v2096 = vadd.f32 %v1975, %v2095
      %v2097 = vpop.f32.mrb[0].mxu0
      %v2098 = vpop.f32.mrb[0].mxu0
      %v2099 = vadd.f32 %v1975, %v2098
      %v2100 = vpop.f32.mrb[0].mxu0
      %2101 = vmatprep.mubr.bf16.mxu0 0
      %2102 = vmatmul.mubr.bf16.gmra.mrb[0].mxu0 %v1300
      %v2103 = vpop.f32.mrb[0].mxu0
      %v2104 = vadd.f32 %v1975, %v2103
      %v2105 = vpop.f32.mrb[0].mxu0
      %v2106 = vpop.f32.mrb[0].mxu0
      %v2107 = vadd.f32 %v1975, %v2106
      %v2108 = vpop.f32.mrb[0].mxu0
      %2109 = vmatprep.mubr.bf16.mxu0 0
      %2110 = vmatmul.mubr.bf16.gmra.mrb[0].mxu0 %v1303
      %v2111 = vpop.f32.mrb[0].mxu0
      %v2112 = vadd.f32 %v1975, %v2111
      %v2113 = vpop.f32.mrb[0].mxu0
      %v2114 = vpop.f32.mrb[0].mxu0
      %v2115 = vadd.f32 %v1975, %v2114
      %v2116 = vpop.f32.mrb[0].mxu0
      %2117 = vmatprep.mubr.bf16.mxu0 0
      %2118 = vmatmul.mubr.bf16.gmra.mrb[0].mxu0 %v1306
      %v2119 = vpop.f32.mrb[0].mxu0
      %v2120 = vadd.f32 %v1975, %v2119
      %v2121 = vpop.f32.mrb[0].mxu0
      %v2122 = vpop.f32.mrb[0].mxu0
      %v2123 = vadd.f32 %v1975, %v2122
      %v2124 = vpop.f32.mrb[0].mxu0
      %2125 = vmatprep.mubr.bf16.mxu0 0
      %2126 = vmatmul.mubr.bf16.gmra.mrb[0].mxu0 %v1309
      %v2127 = vpop.f32.mrb[0].mxu0
      %v2128 = vadd.f32 %v1975, %v2127
      %v2129 = vpop.f32.mrb[0].mxu0
      %v2130 = vpop.f32.mrb[0].mxu0
      %v2131 = vadd.f32 %v1975, %v2130
      %v2132 = vpop.f32.mrb[0].mxu0
      %2133 = vmatprep.mubr.bf16.mxu0 0
      %2134 = vmatmul.mubr.bf16.gmra.mrb[0].mxu0 %v1312
      %v2135 = vpop.f32.mrb[0].mxu0
      %v2136 = vadd.f32 %v1975, %v2135
      %v2137 = vpop.f32.mrb[0].mxu0
      %v2138 = vpop.f32.mrb[0].mxu0
      %v2139 = vadd.f32 %v1975, %v2138
      %v2140 = vpop.f32.mrb[0].mxu0
      %2141 = vmatprep.mubr.bf16.mxu0 0
      %2142 = vmatmul.mubr.bf16.gmra.mrb[0].mxu0 %v1315
      %v2143 = vpop.f32.mrb[0].mxu0
      %v2144 = vadd.f32 %v1975, %v2143
      %v2145 = vpop.f32.mrb[0].mxu0
      %v2146 = vpop.f32.mrb[0].mxu0
      %v2147 = vadd.f32 %v1975, %v2146
      %v2148 = vpop.f32.mrb[0].mxu0
      %2149 = vmatprep.mubr.bf16.mxu0 0
      %2150 = vmatmul.mubr.bf16.gmra.mrb[0].mxu0 %v1318
      %v2151 = vpop.f32.mrb[0].mxu0
      %v2152 = vadd.f32 %v1975, %v2151
      %v2153 = vpop.f32.mrb[0].mxu0
      %v2154 = vpop.f32.mrb[0].mxu0
      %v2155 = vadd.f32 %v1975, %v2154
      %v2156 = vpop.f32.mrb[0].mxu0
      %2157 = vmatprep.mubr.bf16.mxu0 0
      %2158 = vmatmul.mubr.bf16.gmra.mrb[0].mxu0 %v1321
      %v2159 = vpop.f32.mrb[0].mxu0
      %v2160 = vadd.f32 %v1975, %v2159
      %v2161 = vpop.f32.mrb[0].mxu0
      %v2162 = vpop.f32.mrb[0].mxu0
      %v2163 = vadd.f32 %v1975, %v2162
      %v2164 = vpop.f32.mrb[0].mxu0
      %2165 = vmatprep.mubr.bf16.mxu0 0
      %2166 = vmatmul.mubr.bf16.gmra.mrb[0].mxu0 %v1324
      %v2167 = vpop.f32.mrb[0].mxu0
      %v2168 = vadd.f32 %v1975, %v2167
      %v2169 = vpop.f32.mrb[0].mxu0
      %v2170 = vpop.f32.mrb[0].mxu0
      %v2171 = vadd.f32 %v1975, %v2170
      %v2172 = vpop.f32.mrb[0].mxu0
      %2173 = vmatprep.mubr.bf16.mxu0 0
      %2174 = vmatmul.mubr.bf16.gmra.mrb[0].mxu0 %v1327
      %v2175 = vpop.f32.mrb[0].mxu0
      %v2176 = vadd.f32 %v1975, %v2175
      %v2177 = vpop.f32.mrb[0].mxu0
      %v2178 = vpop.f32.mrb[0].mxu0
      %v2179 = vadd.f32 %v1975, %v2178
      %v2180 = vpop.f32.mrb[0].mxu0
      %2181 = vmatprep.mubr.bf16.mxu0 0
      %2182 = vmatmul.mubr.bf16.gmra.mrb[0].mxu0 %v1330
      %v2183 = vpop.f32.mrb[0].mxu0
      %v2184 = vadd.f32 %v1975, %v2183
      %v2185 = vpop.f32.mrb[0].mxu0
      %v2186 = vpop.f32.mrb[0].mxu0
      %v2187 = vadd.f32 %v1975, %v2186
      %v2188 = vpop.f32.mrb[0].mxu0
      %2189 = vmatprep.mubr.bf16.mxu0 0
      %2190 = vmatmul.mubr.bf16.gmra.mrb[0].mxu0 %v1333
      %v2191 = vpop.f32.mrb[0].mxu0
      %v2192 = vadd.f32 %v1975, %v2191
      %v2193 = vpop.f32.mrb[0].mxu0
      %v2194 = vpop.f32.mrb[0].mxu0
      %v2195 = vadd.f32 %v1975, %v2194
      %v2196 = vpop.f32.mrb[0].mxu0
      %2197 = vmatprep.mubr.bf16.mxu0 0
      %2198 = vmatmul.mubr.bf16.gmra.mrb[0].mxu0 %v1336
      %v2199 = vpop.f32.mrb[0].mxu0
      %v2200 = vadd.f32 %v1975, %v2199
      %v2201 = vpop.f32.mrb[0].mxu0
      %v2202 = vpop.f32.mrb[0].mxu0
      %v2203 = vadd.f32 %v1975, %v2202
      %v2204 = vpop.f32.mrb[0].mxu0
      %2205 = vmatprep.mubr.bf16.mxu0 0
      %2206 = vmatmul.mubr.bf16.gmra.mrb[0].mxu0 %v1339
      %v2207 = vpop.f32.mrb[0].mxu0
      %v2208 = vadd.f32 %v1975, %v2207
      %v2209 = vpop.f32.mrb[0].mxu0
      %v2210 = vpop.f32.mrb[0].mxu0
      %v2211 = vadd.f32 %v1975, %v2210
      %v2212 = vpop.f32.mrb[0].mxu0
      %2213 = vmatprep.mubr.bf16.mxu0 0
      %2214 = vmatmul.mubr.bf16.gmra.mrb[0].mxu0 %v1342
      %v2215 = vpop.f32.mrb[0].mxu0
      %v2216 = vadd.f32 %v1975, %v2215
      %v2217 = vpop.f32.mrb[0].mxu0
      %v2218 = vpop.f32.mrb[0].mxu0
      %v2219 = vadd.f32 %v1975, %v2218
      %v2220 = vpop.f32.mrb[0].mxu0
      %2221 = vmatprep.mubr.bf16.mxu0 0
      %2222 = vmatmul.mubr.bf16.gmra.mrb[0].mxu0 %v1345
      %v2223 = vpop.f32.mrb[0].mxu0
      %v2224 = vadd.f32 %v1975, %v2223
      %v2225 = vpop.f32.mrb[0].mxu0
      %v2226 = vpop.f32.mrb[0].mxu0
      %v2227 = vadd.f32 %v1975, %v2226
      %v2228 = vpop.f32.mrb[0].mxu0
      %2229 = vmatprep.mubr.bf16.mxu0 0
      %2230 = vmatmul.mubr.bf16.gmra.mrb[0].mxu0 %v1348
      %v2231 = vpop.f32.mrb[0].mxu0
      %v2232 = vadd.f32 %v1975, %v2231
      %v2233 = vpop.f32.mrb[0].mxu0
      %v2234 = vpop.f32.mrb[0].mxu0
      %v2235 = vadd.f32 %v1975, %v2234
      %v2236 = vpop.f32.mrb[0].mxu0
      %2237 = vmatprep.mubr.bf16.mxu0 0
      %2238 = vmatmul.mubr.bf16.gmra.mrb[0].mxu0 %v1351
      %v2239 = vpop.f32.mrb[0].mxu0
      %v2240 = vadd.f32 %v1975, %v2239
      %v2241 = vpop.f32.mrb[0].mxu0
      %v2242 = vpop.f32.mrb[0].mxu0
      %v2243 = vadd.f32 %v1975, %v2242
      %v2244 = vpop.f32.mrb[0].mxu0
      %2245 = vmatprep.mubr.bf16.mxu0 0
      %2246 = vmatmul.mubr.bf16.gmra.mrb[0].mxu0 %v1354
      %v2247 = vpop.f32.mrb[0].mxu0
      %v2248 = vadd.f32 %v1975, %v2247
      %v2249 = vpop.f32.mrb[0].mxu0
      %v2250 = vpop.f32.mrb[0].mxu0
      %v2251 = vadd.f32 %v1975, %v2250
      %v2252 = vpop.f32.mrb[0].mxu0
      %2253 = vmatprep.mubr.bf16.mxu0 0
      %2254 = vmatmul.mubr.bf16.gmra.mrb[0].mxu0 %v1357
      %v2255 = vpop.f32.mrb[0].mxu0
      %v2256 = vadd.f32 %v1975, %v2255
      %v2257 = vpop.f32.mrb[0].mxu0
      %v2258 = vpop.f32.mrb[0].mxu0
      %v2259 = vadd.f32 %v1975, %v2258
      %v2260 = vpop.f32.mrb[0].mxu0
      %2261 = vmatprep.mubr.bf16.mxu0 0
      %2262 = vmatmul.mubr.bf16.gmra.mrb[0].mxu0 %v1360
      %v2263 = vpop.f32.mrb[0].mxu0
      %v2264 = vadd.f32 %v1975, %v2263
      %v2265 = vpop.f32.mrb[0].mxu0
      %v2266 = vpop.f32.mrb[0].mxu0
      %v2267 = vadd.f32 %v1975, %v2266
      %v2268 = vpop.f32.mrb[0].mxu0
      %2269 = vmatprep.mubr.bf16.mxu0 0
      %2270 = vmatmul.mubr.bf16.gmra.mrb[0].mxu0 %v1363
      %v2271 = vpop.f32.mrb[0].mxu0
      %v2272 = vadd.f32 %v1975, %v2271
      %v2273 = vpop.f32.mrb[0].mxu0
      %v2274 = vpop.f32.mrb[0].mxu0
      %v2275 = vadd.f32 %v1975, %v2274
      %v2276 = vpop.f32.mrb[0].mxu0
      %2277 = vdwg.mxu0
      %v2278 = vmul.f32 %v1400, 0.17677669
      %v2279 = vmul.f32 %v1403, 0.17677669
      %v2280 = vmul.f32 %v1408, 0.17677669
      %v2281 = vmul.f32 %v1411, 0.17677669
      %v2282 = vmul.f32 %v1416, 0.17677669
      %v2283 = vmul.f32 %v1419, 0.17677669
      %v2284 = vmul.f32 %v1424, 0.17677669
      %v2285 = vmul.f32 %v1427, 0.17677669
      %v2286 = vmul.f32 %v1432, 0.17677669
      %v2287 = vmul.f32 %v1435, 0.17677669
      %v2288 = vmul.f32 %v1440, 0.17677669
      %v2289 = vmul.f32 %v1443, 0.17677669
      %v2290 = vmul.f32 %v1448, 0.17677669
      %v2291 = vmul.f32 %v1451, 0.17677669
      %v2292 = vmul.f32 %v1456, 0.17677669
      %v2293 = vmul.f32 %v1459, 0.17677669
      %v2294 = vmul.f32 %v1464, 0.17677669
      %v2295 = vmul.f32 %v1467, 0.17677669
      %v2296 = vmul.f32 %v1472, 0.17677669
      %v2297 = vmul.f32 %v1475, 0.17677669
      %v2298 = vmul.f32 %v1480, 0.17677669
      %v2299 = vmul.f32 %v1483, 0.17677669
      %v2300 = vmul.f32 %v1488, 0.17677669
      %v2301 = vmul.f32 %v1491, 0.17677669
      %v2302 = vmul.f32 %v1496, 0.17677669
      %v2303 = vmul.f32 %v1499, 0.17677669
      %v2304 = vmul.f32 %v1504, 0.17677669
      %v2305 = vmul.f32 %v1507, 0.17677669
      %v2306 = vmul.f32 %v1512, 0.17677669
      %v2307 = vmul.f32 %v1515, 0.17677669
      %v2308 = vmul.f32 %v1520, 0.17677669
      %v2309 = vmul.f32 %v1523, 0.17677669
      %v2310 = vmul.f32 %v1528, 0.17677669
      %v2311 = vmul.f32 %v1531, 0.17677669
      %v2312 = vmul.f32 %v1536, 0.17677669
      %v2313 = vmul.f32 %v1539, 0.17677669
      %v2314 = vmul.f32 %v1544, 0.17677669
      %v2315 = vmul.f32 %v1547, 0.17677669
      %v2316 = vmul.f32 %v1552, 0.17677669
      %v2317 = vmul.f32 %v1555, 0.17677669
      %v2318 = vmul.f32 %v1560, 0.17677669
      %v2319 = vmul.f32 %v1563, 0.17677669
      %v2320 = vmul.f32 %v1568, 0.17677669
      %v2321 = vmul.f32 %v1571, 0.17677669
      %v2322 = vmul.f32 %v1576, 0.17677669
      %v2323 = vmul.f32 %v1579, 0.17677669
      %v2324 = vmul.f32 %v1584, 0.17677669
      %v2325 = vmul.f32 %v1587, 0.17677669
      %v2326 = vmul.f32 %v1592, 0.17677669
      %v2327 = vmul.f32 %v1595, 0.17677669
      %v2328 = vmul.f32 %v1600, 0.17677669
      %v2329 = vmul.f32 %v1603, 0.17677669
      %v2330 = vmul.f32 %v1608, 0.17677669
      %v2331 = vmul.f32 %v1611, 0.17677669
      %v2332 = vmul.f32 %v1616, 0.17677669
      %v2333 = vmul.f32 %v1619, 0.17677669
      %v2334 = vmul.f32 %v1624, 0.17677669
      %v2335 = vmul.f32 %v1627, 0.17677669
      %v2336 = vmul.f32 %v1632, 0.17677669
      %v2337 = vmul.f32 %v1635, 0.17677669
      %v2338 = vmul.f32 %v1640, 0.17677669
      %v2339 = vmul.f32 %v1643, 0.17677669
      %v2340 = vmul.f32 %v1648, 0.17677669
      %v2341 = vmul.f32 %v1651, 0.17677669
      %v2342 = vpack.c.bf16 %v2279, %v2278
      %v2343 = vpack.c.bf16 %v2281, %v2280
      %v2344 = vpack.c.bf16 %v2283, %v2282
      %v2345 = vpack.c.bf16 %v2285, %v2284
      %v2346 = vpack.c.bf16 %v2287, %v2286
      %v2347 = vpack.c.bf16 %v2289, %v2288
      %v2348 = vpack.c.bf16 %v2291, %v2290
      %v2349 = vpack.c.bf16 %v2293, %v2292
      %v2350 = vpack.c.bf16 %v2295, %v2294
      %v2351 = vpack.c.bf16 %v2297, %v2296
      %v2352 = vpack.c.bf16 %v2299, %v2298
      %v2353 = vpack.c.bf16 %v2301, %v2300
      %v2354 = vpack.c.bf16 %v2303, %v2302
      %v2355 = vpack.c.bf16 %v2305, %v2304
      %v2356 = vpack.c.bf16 %v2307, %v2306
      %v2357 = vpack.c.bf16 %v2309, %v2308
      %v2358 = vpack.c.bf16 %v2311, %v2310
      %v2359 = vpack.c.bf16 %v2313, %v2312
      %v2360 = vpack.c.bf16 %v2315, %v2314
      %v2361 = vpack.c.bf16 %v2317, %v2316
      %v2362 = vpack.c.bf16 %v2319, %v2318
      %v2363 = vpack.c.bf16 %v2321, %v2320
      %v2364 = vpack.c.bf16 %v2323, %v2322
      %v2365 = vpack.c.bf16 %v2325, %v2324
      %v2366 = vpack.c.bf16 %v2327, %v2326
      %v2367 = vpack.c.bf16 %v2329, %v2328
      %v2368 = vpack.c.bf16 %v2331, %v2330
      %v2369 = vpack.c.bf16 %v2333, %v2332
      %v2370 = vpack.c.bf16 %v2335, %v2334
      %v2371 = vpack.c.bf16 %v2337, %v2336
      %v2372 = vpack.c.bf16 %v2339, %v2338
      %v2373 = vpack.c.bf16 %v2341, %v2340
      %v2374 = vpack.c.bf16 %v1715, %v1712
      %v2375 = vpack.c.bf16 %v1723, %v1720
      %v2376 = vpack.c.bf16 %v1731, %v1728
      %v2377 = vpack.c.bf16 %v1739, %v1736
      %v2378 = vpack.c.bf16 %v1747, %v1744
      %v2379 = vpack.c.bf16 %v1755, %v1752
      %v2380 = vpack.c.bf16 %v1763, %v1760
      %v2381 = vpack.c.bf16 %v1771, %v1768
      %v2382 = vpack.c.bf16 %v1779, %v1776
      %v2383 = vpack.c.bf16 %v1787, %v1784
      %v2384 = vpack.c.bf16 %v1795, %v1792
      %v2385 = vpack.c.bf16 %v1803, %v1800
      %v2386 = vpack.c.bf16 %v1811, %v1808
      %v2387 = vpack.c.bf16 %v1819, %v1816
      %v2388 = vpack.c.bf16 %v1827, %v1824
      %v2389 = vpack.c.bf16 %v1835, %v1832
      %v2390 = vpack.c.bf16 %v1843, %v1840
      %v2391 = vpack.c.bf16 %v1851, %v1848
      %v2392 = vpack.c.bf16 %v1859, %v1856
      %v2393 = vpack.c.bf16 %v1867, %v1864
      %v2394 = vpack.c.bf16 %v1875, %v1872
      %v2395 = vpack.c.bf16 %v1883, %v1880
      %v2396 = vpack.c.bf16 %v1891, %v1888
      %v2397 = vpack.c.bf16 %v1899, %v1896
      %v2398 = vpack.c.bf16 %v1907, %v1904
      %v2399 = vpack.c.bf16 %v1915, %v1912
      %v2400 = vpack.c.bf16 %v1923, %v1920
      %v2401 = vpack.c.bf16 %v1931, %v1928
      %v2402 = vpack.c.bf16 %v1939, %v1936
      %v2403 = vpack.c.bf16 %v1947, %v1944
      %v2404 = vpack.c.bf16 %v1955, %v1952
      %v2405 = vpack.c.bf16 %v1963, %v1960
      %v2406 = vpack.c.bf16 %v2027, %v2024
      %v2407 = vpack.c.bf16 %v2035, %v2032
      %v2408 = vpack.c.bf16 %v2043, %v2040
      %v2409 = vpack.c.bf16 %v2051, %v2048
      %v2410 = vpack.c.bf16 %v2059, %v2056
      %v2411 = vpack.c.bf16 %v2067, %v2064
      %v2412 = vpack.c.bf16 %v2075, %v2072
      %v2413 = vpack.c.bf16 %v2083, %v2080
      %v2414 = vpack.c.bf16 %v2091, %v2088
      %v2415 = vpack.c.bf16 %v2099, %v2096
      %v2416 = vpack.c.bf16 %v2107, %v2104
      %v2417 = vpack.c.bf16 %v2115, %v2112
      %v2418 = vpack.c.bf16 %v2123, %v2120
      %v2419 = vpack.c.bf16 %v2131, %v2128
      %v2420 = vpack.c.bf16 %v2139, %v2136
      %v2421 = vpack.c.bf16 %v2147, %v2144
      %v2422 = vpack.c.bf16 %v2155, %v2152
      %v2423 = vpack.c.bf16 %v2163, %v2160
      %v2424 = vpack.c.bf16 %v2171, %v2168
      %v2425 = vpack.c.bf16 %v2179, %v2176
      %v2426 = vpack.c.bf16 %v2187, %v2184
      %v2427 = vpack.c.bf16 %v2195, %v2192
      %v2428 = vpack.c.bf16 %v2203, %v2200
      %v2429 = vpack.c.bf16 %v2211, %v2208
      %v2430 = vpack.c.bf16 %v2219, %v2216
      %v2431 = vpack.c.bf16 %v2227, %v2224
      %v2432 = vpack.c.bf16 %v2235, %v2232
      %v2433 = vpack.c.bf16 %v2243, %v2240
      %v2434 = vpack.c.bf16 %v2251, %v2248
      %v2435 = vpack.c.bf16 %v2259, %v2256
      %v2436 = vpack.c.bf16 %v2267, %v2264
      %v2437 = vpack.c.bf16 %v2275, %v2272
      %v2439 = vsel %vm487, %v2342, 0
      %v2442 = vsel %vm487, %v2343, 0
      %v2445 = vsel %vm487, %v2344, 0
      %v2448 = vsel %vm487, %v2345, 0
      %v2451 = vsel %vm487, %v2374, 0
      %v2454 = vsel %vm487, %v2375, 0
      %v2457 = vsel %vm487, %v2376, 0
      %v2460 = vsel %vm487, %v2377, 0
      %2462 = vmatprep.subr.bf16.mxu0 0
      %2463 = vmatpush1.bf16.xpose.msra.mxu0 %v2451
      %2464 = vmatprep.subr.bf16.mxu0 0
      %2465 = vmatpush1.bf16.xpose.msra.mxu0 %v2454
      %2466 = vmatprep.subr.bf16.mxu0 0
      %2467 = vmatpush1.bf16.xpose.msra.mxu0 %v2457
      %2468 = vmatprep.subr.bf16.mxu0 0
      %2469 = vmatpush1.bf16.xpose.msra.mxu0 %v2460
      %2470 = vmatprep.subr.bf16.mxu0 0
      %2471 = vmatpush1.bf16.xpose.msra.mxu0 0
      %2472 = vmatprep.subr.bf16.mxu0 0
      %2473 = vmatpush1.bf16.xpose.msra.mxu0 0
      %2474 = vmatprep.subr.bf16.mxu0 0
      %2475 = vmatpush1.bf16.xpose.msra.mxu0 0
      %2476 = vmatprep.subr.bf16.mxu0 0
      %2477 = vmatpush1.bf16.xpose.msra.mxu0 0
      %2478 = vmatprep.subr.bf16.mxu0 0
      %2479 = vmatpush1.bf16.xpose.msra.mxu0 0
      %2480 = vmatprep.subr.bf16.mxu0 0
      %2481 = vmatpush1.bf16.xpose.msra.mxu0 0
      %2482 = vmatprep.subr.bf16.mxu0 0
      %2483 = vmatpush1.bf16.xpose.msra.mxu0 0
      %2484 = vmatprep.subr.bf16.mxu0 0
      %2485 = vmatpush1.bf16.xpose.msra.mxu0 0
      %2486 = vmatprep.subr.bf16.mxu0 0
      %2487 = vmatpush1.bf16.xpose.msra.mxu0 0
      %2488 = vmatprep.subr.bf16.mxu0 0
      %2489 = vmatpush1.bf16.xpose.msra.mxu0 0
      %2490 = vmatprep.subr.bf16.mxu0 0
      %2491 = vmatpush1.bf16.xpose.msra.mxu0 0
      %2492 = vmatprep.subr.bf16.mxu0 0
      %2493 = vmatpush1.bf16.xpose.msra.mxu0 0
      %2494 = vmatprep.mubr.bf16.mxu0 0
      %2495 = vmatmul.mubr.bf16.gmra.mrb[0].mxu0 %v2439
      %v2496 = vpop.f32.mrb[0].mxu0
      %v2497 = vadd.f32 0.0, %v2496
      %v2498 = vpop.f32.mrb[0].mxu0
      %v2499 = vpop.f32.mrb[0].mxu0
      %v2500 = vadd.f32 0.0, %v2499
      %v2501 = vpop.f32.mrb[0].mxu0
      %2502 = vmatprep.mubr.bf16.mxu0 0
      %2503 = vmatmul.mubr.bf16.gmra.mrb[0].mxu0 %v2442
      %v2504 = vpop.f32.mrb[0].mxu0
      %v2505 = vadd.f32 0.0, %v2504
      %v2506 = vpop.f32.mrb[0].mxu0
      %v2507 = vpop.f32.mrb[0].mxu0
      %v2508 = vadd.f32 0.0, %v2507
      %v2509 = vpop.f32.mrb[0].mxu0
      %2510 = vmatprep.mubr.bf16.mxu0 0
      %2511 = vmatmul.mubr.bf16.gmra.mrb[0].mxu0 %v2445
      %v2512 = vpop.f32.mrb[0].mxu0
      %v2513 = vadd.f32 0.0, %v2512
      %v2514 = vpop.f32.mrb[0].mxu0
      %v2515 = vpop.f32.mrb[0].mxu0
      %v2516 = vadd.f32 0.0, %v2515
      %v2517 = vpop.f32.mrb[0].mxu0
      %2518 = vmatprep.mubr.bf16.mxu0 0
      %2519 = vmatmul.mubr.bf16.gmra.mrb[0].mxu0 %v2448
      %v2520 = vpop.f32.mrb[0].mxu0
      %v2521 = vadd.f32 0.0, %v2520
      %v2522 = vpop.f32.mrb[0].mxu0
      %v2523 = vpop.f32.mrb[0].mxu0
      %v2524 = vadd.f32 0.0, %v2523
      %v2525 = vpop.f32.mrb[0].mxu0
      %2526 = vdwg.mxu0
      %v2528 = vsel %vm487, %v2346, 0
      %v2531 = vsel %vm487, %v2347, 0
      %v2534 = vsel %vm487, %v2348, 0
      %v2537 = vsel %vm487, %v2349, 0
      %v2540 = vsel %vm487, %v2378, 0
      %v2543 = vsel %vm487, %v2379, 0
      %v2546 = vsel %vm487, %v2380, 0
      %v2549 = vsel %vm487, %v2381, 0
      %2551 = vmatprep.subr.bf16.mxu0 0
      %2552 = vmatpush1.bf16.xpose.msra.mxu0 %v2540
      %2553 = vmatprep.subr.bf16.mxu0 0
      %2554 = vmatpush1.bf16.xpose.msra.mxu0 %v2543
      %2555 = vmatprep.subr.bf16.mxu0 0
      %2556 = vmatpush1.bf16.xpose.msra.mxu0 %v2546
      %2557 = vmatprep.subr.bf16.mxu0 0
      %2558 = vmatpush1.bf16.xpose.msra.mxu0 %v2549
      %2559 = vmatprep.subr.bf16.mxu0 0
      %2560 = vmatpush1.bf16.xpose.msra.mxu0 0
      %2561 = vmatprep.subr.bf16.mxu0 0
      %2562 = vmatpush1.bf16.xpose.msra.mxu0 0
      %2563 = vmatprep.subr.bf16.mxu0 0
      %2564 = vmatpush1.bf16.xpose.msra.mxu0 0
      %2565 = vmatprep.subr.bf16.mxu0 0
      %2566 = vmatpush1.bf16.xpose.msra.mxu0 0
      %2567 = vmatprep.subr.bf16.mxu0 0
      %2568 = vmatpush1.bf16.xpose.msra.mxu0 0
      %2569 = vmatprep.subr.bf16.mxu0 0
      %2570 = vmatpush1.bf16.xpose.msra.mxu0 0
      %2571 = vmatprep.subr.bf16.mxu0 0
      %2572 = vmatpush1.bf16.xpose.msra.mxu0 0
      %2573 = vmatprep.subr.bf16.mxu0 0
      %2574 = vmatpush1.bf16.xpose.msra.mxu0 0
      %2575 = vmatprep.subr.bf16.mxu0 0
      %2576 = vmatpush1.bf16.xpose.msra.mxu0 0
      %2577 = vmatprep.subr.bf16.mxu0 0
      %2578 = vmatpush1.bf16.xpose.msra.mxu0 0
      %2579 = vmatprep.subr.bf16.mxu0 0
      %2580 = vmatpush1.bf16.xpose.msra.mxu0 0
      %2581 = vmatprep.subr.bf16.mxu0 0
      %2582 = vmatpush1.bf16.xpose.msra.mxu0 0
      %2583 = vmatprep.mubr.bf16.mxu0 0
      %2584 = vmatmul.mubr.bf16.gmra.mrb[0].mxu0 %v2528
      %v2585 = vpop.f32.mrb[0].mxu0
      %v2586 = vadd.f32 0.0, %v2585
      %v2587 = vpop.f32.mrb[0].mxu0
      %v2588 = vpop.f32.mrb[0].mxu0
      %v2589 = vadd.f32 0.0, %v2588
      %v2590 = vpop.f32.mrb[0].mxu0
      %2591 = vmatprep.mubr.bf16.mxu0 0
      %2592 = vmatmul.mubr.bf16.gmra.mrb[0].mxu0 %v2531
      %v2593 = vpop.f32.mrb[0].mxu0
      %v2594 = vadd.f32 0.0, %v2593
      %v2595 = vpop.f32.mrb[0].mxu0
      %v2596 = vpop.f32.mrb[0].mxu0
      %v2597 = vadd.f32 0.0, %v2596
      %v2598 = vpop.f32.mrb[0].mxu0
      %2599 = vmatprep.mubr.bf16.mxu0 0
      %2600 = vmatmul.mubr.bf16.gmra.mrb[0].mxu0 %v2534
      %v2601 = vpop.f32.mrb[0].mxu0
      %v2602 = vadd.f32 0.0, %v2601
      %v2603 = vpop.f32.mrb[0].mxu0
      %v2604 = vpop.f32.mrb[0].mxu0
      %v2605 = vadd.f32 0.0, %v2604
      %v2606 = vpop.f32.mrb[0].mxu0
      %2607 = vmatprep.mubr.bf16.mxu0 0
      %2608 = vmatmul.mubr.bf16.gmra.mrb[0].mxu0 %v2537
      %v2609 = vpop.f32.mrb[0].mxu0
      %v2610 = vadd.f32 0.0, %v2609
      %v2611 = vpop.f32.mrb[0].mxu0
      %v2612 = vpop.f32.mrb[0].mxu0
      %v2613 = vadd.f32 0.0, %v2612
      %v2614 = vpop.f32.mrb[0].mxu0
      %2615 = vdwg.mxu0
      %v2617 = vsel %vm487, %v2350, 0
      %v2620 = vsel %vm487, %v2351, 0
      %v2623 = vsel %vm487, %v2352, 0
      %v2626 = vsel %vm487, %v2353, 0
      %v2629 = vsel %vm487, %v2382, 0
      %v2632 = vsel %vm487, %v2383, 0
      %v2635 = vsel %vm487, %v2384, 0
      %v2638 = vsel %vm487, %v2385, 0
      %2640 = vmatprep.subr.bf16.mxu0 0
      %2641 = vmatpush1.bf16.xpose.msra.mxu0 %v2629
      %2642 = vmatprep.subr.bf16.mxu0 0
      %2643 = vmatpush1.bf16.xpose.msra.mxu0 %v2632
      %2644 = vmatprep.subr.bf16.mxu0 0
      %2645 = vmatpush1.bf16.xpose.msra.mxu0 %v2635
      %2646 = vmatprep.subr.bf16.mxu0 0
      %2647 = vmatpush1.bf16.xpose.msra.mxu0 %v2638
      %2648 = vmatprep.subr.bf16.mxu0 0
      %2649 = vmatpush1.bf16.xpose.msra.mxu0 0
      %2650 = vmatprep.subr.bf16.mxu0 0
      %2651 = vmatpush1.bf16.xpose.msra.mxu0 0
      %2652 = vmatprep.subr.bf16.mxu0 0
      %2653 = vmatpush1.bf16.xpose.msra.mxu0 0
      %2654 = vmatprep.subr.bf16.mxu0 0
      %2655 = vmatpush1.bf16.xpose.msra.mxu0 0
      %2656 = vmatprep.subr.bf16.mxu0 0
      %2657 = vmatpush1.bf16.xpose.msra.mxu0 0
      %2658 = vmatprep.subr.bf16.mxu0 0
      %2659 = vmatpush1.bf16.xpose.msra.mxu0 0
      %2660 = vmatprep.subr.bf16.mxu0 0
      %2661 = vmatpush1.bf16.xpose.msra.mxu0 0
      %2662 = vmatprep.subr.bf16.mxu0 0
      %2663 = vmatpush1.bf16.xpose.msra.mxu0 0
      %2664 = vmatprep.subr.bf16.mxu0 0
      %2665 = vmatpush1.bf16.xpose.msra.mxu0 0
      %2666 = vmatprep.subr.bf16.mxu0 0
      %2667 = vmatpush1.bf16.xpose.msra.mxu0 0
      %2668 = vmatprep.subr.bf16.mxu0 0
      %2669 = vmatpush1.bf16.xpose.msra.mxu0 0
      %2670 = vmatprep.subr.bf16.mxu0 0
      %2671 = vmatpush1.bf16.xpose.msra.mxu0 0
      %2672 = vmatprep.mubr.bf16.mxu0 0
      %2673 = vmatmul.mubr.bf16.gmra.mrb[0].mxu0 %v2617
      %v2674 = vpop.f32.mrb[0].mxu0
      %v2675 = vadd.f32 0.0, %v2674
      %v2676 = vpop.f32.mrb[0].mxu0
      %v2677 = vpop.f32.mrb[0].mxu0
      %v2678 = vadd.f32 0.0, %v2677
      %v2679 = vpop.f32.mrb[0].mxu0
      %2680 = vmatprep.mubr.bf16.mxu0 0
      %2681 = vmatmul.mubr.bf16.gmra.mrb[0].mxu0 %v2620
      %v2682 = vpop.f32.mrb[0].mxu0
      %v2683 = vadd.f32 0.0, %v2682
      %v2684 = vpop.f32.mrb[0].mxu0
      %v2685 = vpop.f32.mrb[0].mxu0
      %v2686 = vadd.f32 0.0, %v2685
      %v2687 = vpop.f32.mrb[0].mxu0
      %2688 = vmatprep.mubr.bf16.mxu0 0
      %2689 = vmatmul.mubr.bf16.gmra.mrb[0].mxu0 %v2623
      %v2690 = vpop.f32.mrb[0].mxu0
      %v2691 = vadd.f32 0.0, %v2690
      %v2692 = vpop.f32.mrb[0].mxu0
      %v2693 = vpop.f32.mrb[0].mxu0
      %v2694 = vadd.f32 0.0, %v2693
      %v2695 = vpop.f32.mrb[0].mxu0
      %2696 = vmatprep.mubr.bf16.mxu0 0
      %2697 = vmatmul.mubr.bf16.gmra.mrb[0].mxu0 %v2626
      %v2698 = vpop.f32.mrb[0].mxu0
      %v2699 = vadd.f32 0.0, %v2698
      %v2700 = vpop.f32.mrb[0].mxu0
      %v2701 = vpop.f32.mrb[0].mxu0
      %v2702 = vadd.f32 0.0, %v2701
      %v2703 = vpop.f32.mrb[0].mxu0
      %2704 = vdwg.mxu0
      %v2706 = vsel %vm487, %v2354, 0
      %v2709 = vsel %vm487, %v2355, 0
      %v2712 = vsel %vm487, %v2356, 0
      %v2715 = vsel %vm487, %v2357, 0
      %v2718 = vsel %vm487, %v2386, 0
      %v2721 = vsel %vm487, %v2387, 0
      %v2724 = vsel %vm487, %v2388, 0
      %v2727 = vsel %vm487, %v2389, 0
      %2729 = vmatprep.subr.bf16.mxu0 0
      %2730 = vmatpush1.bf16.xpose.msra.mxu0 %v2718
      %2731 = vmatprep.subr.bf16.mxu0 0
      %2732 = vmatpush1.bf16.xpose.msra.mxu0 %v2721
      %2733 = vmatprep.subr.bf16.mxu0 0
      %2734 = vmatpush1.bf16.xpose.msra.mxu0 %v2724
      %2735 = vmatprep.subr.bf16.mxu0 0
      %2736 = vmatpush1.bf16.xpose.msra.mxu0 %v2727
      %2737 = vmatprep.subr.bf16.mxu0 0
      %2738 = vmatpush1.bf16.xpose.msra.mxu0 0
      %2739 = vmatprep.subr.bf16.mxu0 0
      %2740 = vmatpush1.bf16.xpose.msra.mxu0 0
      %2741 = vmatprep.subr.bf16.mxu0 0
      %2742 = vmatpush1.bf16.xpose.msra.mxu0 0
      %2743 = vmatprep.subr.bf16.mxu0 0
      %2744 = vmatpush1.bf16.xpose.msra.mxu0 0
      %2745 = vmatprep.subr.bf16.mxu0 0
      %2746 = vmatpush1.bf16.xpose.msra.mxu0 0
      %2747 = vmatprep.subr.bf16.mxu0 0
      %2748 = vmatpush1.bf16.xpose.msra.mxu0 0
      %2749 = vmatprep.subr.bf16.mxu0 0
      %2750 = vmatpush1.bf16.xpose.msra.mxu0 0
      %2751 = vmatprep.subr.bf16.mxu0 0
      %2752 = vmatpush1.bf16.xpose.msra.mxu0 0
      %2753 = vmatprep.subr.bf16.mxu0 0
      %2754 = vmatpush1.bf16.xpose.msra.mxu0 0
      %2755 = vmatprep.subr.bf16.mxu0 0
      %2756 = vmatpush1.bf16.xpose.msra.mxu0 0
      %2757 = vmatprep.subr.bf16.mxu0 0
      %2758 = vmatpush1.bf16.xpose.msra.mxu0 0
      %2759 = vmatprep.subr.bf16.mxu0 0
      %2760 = vmatpush1.bf16.xpose.msra.mxu0 0
      %2761 = vmatprep.mubr.bf16.mxu0 0
      %2762 = vmatmul.mubr.bf16.gmra.mrb[0].mxu0 %v2706
      %v2763 = vpop.f32.mrb[0].mxu0
      %v2764 = vadd.f32 0.0, %v2763
      %v2765 = vpop.f32.mrb[0].mxu0
      %v2766 = vpop.f32.mrb[0].mxu0
      %v2767 = vadd.f32 0.0, %v2766
      %v2768 = vpop.f32.mrb[0].mxu0
      %2769 = vmatprep.mubr.bf16.mxu0 0
      %2770 = vmatmul.mubr.bf16.gmra.mrb[0].mxu0 %v2709
      %v2771 = vpop.f32.mrb[0].mxu0
      %v2772 = vadd.f32 0.0, %v2771
      %v2773 = vpop.f32.mrb[0].mxu0
      %v2774 = vpop.f32.mrb[0].mxu0
      %v2775 = vadd.f32 0.0, %v2774
      %v2776 = vpop.f32.mrb[0].mxu0
      %2777 = vmatprep.mubr.bf16.mxu0 0
      %2778 = vmatmul.mubr.bf16.gmra.mrb[0].mxu0 %v2712
      %v2779 = vpop.f32.mrb[0].mxu0
      %v2780 = vadd.f32 0.0, %v2779
      %v2781 = vpop.f32.mrb[0].mxu0
      %v2782 = vpop.f32.mrb[0].mxu0
      %v2783 = vadd.f32 0.0, %v2782
      %v2784 = vpop.f32.mrb[0].mxu0
      %2785 = vmatprep.mubr.bf16.mxu0 0
      %2786 = vmatmul.mubr.bf16.gmra.mrb[0].mxu0 %v2715
      %v2787 = vpop.f32.mrb[0].mxu0
      %v2788 = vadd.f32 0.0, %v2787
      %v2789 = vpop.f32.mrb[0].mxu0
      %v2790 = vpop.f32.mrb[0].mxu0
      %v2791 = vadd.f32 0.0, %v2790
      %v2792 = vpop.f32.mrb[0].mxu0
      %2793 = vdwg.mxu0
      %v2795 = vsel %vm487, %v2358, 0
      %v2798 = vsel %vm487, %v2359, 0
      %v2801 = vsel %vm487, %v2360, 0
      %v2804 = vsel %vm487, %v2361, 0
      %v2807 = vsel %vm487, %v2390, 0
      %v2810 = vsel %vm487, %v2391, 0
      %v2813 = vsel %vm487, %v2392, 0
      %v2816 = vsel %vm487, %v2393, 0
      %2818 = vmatprep.subr.bf16.mxu0 0
      %2819 = vmatpush1.bf16.xpose.msra.mxu0 %v2807
      %2820 = vmatprep.subr.bf16.mxu0 0
      %2821 = vmatpush1.bf16.xpose.msra.mxu0 %v2810
      %2822 = vmatprep.subr.bf16.mxu0 0
      %2823 = vmatpush1.bf16.xpose.msra.mxu0 %v2813
      %2824 = vmatprep.subr.bf16.mxu0 0
      %2825 = vmatpush1.bf16.xpose.msra.mxu0 %v2816
      %2826 = vmatprep.subr.bf16.mxu0 0
      %2827 = vmatpush1.bf16.xpose.msra.mxu0 0
      %2828 = vmatprep.subr.bf16.mxu0 0
      %2829 = vmatpush1.bf16.xpose.msra.mxu0 0
      %2830 = vmatprep.subr.bf16.mxu0 0
      %2831 = vmatpush1.bf16.xpose.msra.mxu0 0
      %2832 = vmatprep.subr.bf16.mxu0 0
      %2833 = vmatpush1.bf16.xpose.msra.mxu0 0
      %2834 = vmatprep.subr.bf16.mxu0 0
      %2835 = vmatpush1.bf16.xpose.msra.mxu0 0
      %2836 = vmatprep.subr.bf16.mxu0 0
      %2837 = vmatpush1.bf16.xpose.msra.mxu0 0
      %2838 = vmatprep.subr.bf16.mxu0 0
      %2839 = vmatpush1.bf16.xpose.msra.mxu0 0
      %2840 = vmatprep.subr.bf16.mxu0 0
      %2841 = vmatpush1.bf16.xpose.msra.mxu0 0
      %2842 = vmatprep.subr.bf16.mxu0 0
      %2843 = vmatpush1.bf16.xpose.msra.mxu0 0
      %2844 = vmatprep.subr.bf16.mxu0 0
      %2845 = vmatpush1.bf16.xpose.msra.mxu0 0
      %2846 = vmatprep.subr.bf16.mxu0 0
      %2847 = vmatpush1.bf16.xpose.msra.mxu0 0
      %2848 = vmatprep.subr.bf16.mxu0 0
      %2849 = vmatpush1.bf16.xpose.msra.mxu0 0
      %2850 = vmatprep.mubr.bf16.mxu0 0
      %2851 = vmatmul.mubr.bf16.gmra.mrb[0].mxu0 %v2795
      %v2852 = vpop.f32.mrb[0].mxu0
      %v2853 = vadd.f32 0.0, %v2852
      %v2854 = vpop.f32.mrb[0].mxu0
      %v2855 = vpop.f32.mrb[0].mxu0
      %v2856 = vadd.f32 0.0, %v2855
      %v2857 = vpop.f32.mrb[0].mxu0
      %2858 = vmatprep.mubr.bf16.mxu0 0
      %2859 = vmatmul.mubr.bf16.gmra.mrb[0].mxu0 %v2798
      %v2860 = vpop.f32.mrb[0].mxu0
      %v2861 = vadd.f32 0.0, %v2860
      %v2862 = vpop.f32.mrb[0].mxu0
      %v2863 = vpop.f32.mrb[0].mxu0
      %v2864 = vadd.f32 0.0, %v2863
      %v2865 = vpop.f32.mrb[0].mxu0
      %2866 = vmatprep.mubr.bf16.mxu0 0
      %2867 = vmatmul.mubr.bf16.gmra.mrb[0].mxu0 %v2801
      %v2868 = vpop.f32.mrb[0].mxu0
      %v2869 = vadd.f32 0.0, %v2868
      %v2870 = vpop.f32.mrb[0].mxu0
      %v2871 = vpop.f32.mrb[0].mxu0
      %v2872 = vadd.f32 0.0, %v2871
      %v2873 = vpop.f32.mrb[0].mxu0
      %2874 = vmatprep.mubr.bf16.mxu0 0
      %2875 = vmatmul.mubr.bf16.gmra.mrb[0].mxu0 %v2804
      %v2876 = vpop.f32.mrb[0].mxu0
      %v2877 = vadd.f32 0.0, %v2876
      %v2878 = vpop.f32.mrb[0].mxu0
      %v2879 = vpop.f32.mrb[0].mxu0
      %v2880 = vadd.f32 0.0, %v2879
      %v2881 = vpop.f32.mrb[0].mxu0
      %2882 = vdwg.mxu0
      %v2884 = vsel %vm487, %v2362, 0
      %v2887 = vsel %vm487, %v2363, 0
      %v2890 = vsel %vm487, %v2364, 0
      %v2893 = vsel %vm487, %v2365, 0
      %v2896 = vsel %vm487, %v2394, 0
      %v2899 = vsel %vm487, %v2395, 0
      %v2902 = vsel %vm487, %v2396, 0
      %v2905 = vsel %vm487, %v2397, 0
      %2907 = vmatprep.subr.bf16.mxu0 0
      %2908 = vmatpush1.bf16.xpose.msra.mxu0 %v2896
      %2909 = vmatprep.subr.bf16.mxu0 0
      %2910 = vmatpush1.bf16.xpose.msra.mxu0 %v2899
      %2911 = vmatprep.subr.bf16.mxu0 0
      %2912 = vmatpush1.bf16.xpose.msra.mxu0 %v2902
      %2913 = vmatprep.subr.bf16.mxu0 0
      %2914 = vmatpush1.bf16.xpose.msra.mxu0 %v2905
      %2915 = vmatprep.subr.bf16.mxu0 0
      %2916 = vmatpush1.bf16.xpose.msra.mxu0 0
      %2917 = vmatprep.subr.bf16.mxu0 0
      %2918 = vmatpush1.bf16.xpose.msra.mxu0 0
      %2919 = vmatprep.subr.bf16.mxu0 0
      %2920 = vmatpush1.bf16.xpose.msra.mxu0 0
      %2921 = vmatprep.subr.bf16.mxu0 0
      %2922 = vmatpush1.bf16.xpose.msra.mxu0 0
      %2923 = vmatprep.subr.bf16.mxu0 0
      %2924 = vmatpush1.bf16.xpose.msra.mxu0 0
      %2925 = vmatprep.subr.bf16.mxu0 0
      %2926 = vmatpush1.bf16.xpose.msra.mxu0 0
      %2927 = vmatprep.subr.bf16.mxu0 0
      %2928 = vmatpush1.bf16.xpose.msra.mxu0 0
      %2929 = vmatprep.subr.bf16.mxu0 0
      %2930 = vmatpush1.bf16.xpose.msra.mxu0 0
      %2931 = vmatprep.subr.bf16.mxu0 0
      %2932 = vmatpush1.bf16.xpose.msra.mxu0 0
      %2933 = vmatprep.subr.bf16.mxu0 0
      %2934 = vmatpush1.bf16.xpose.msra.mxu0 0
      %2935 = vmatprep.subr.bf16.mxu0 0
      %2936 = vmatpush1.bf16.xpose.msra.mxu0 0
      %2937 = vmatprep.subr.bf16.mxu0 0
      %2938 = vmatpush1.bf16.xpose.msra.mxu0 0
      %2939 = vmatprep.mubr.bf16.mxu0 0
      %2940 = vmatmul.mubr.bf16.gmra.mrb[0].mxu0 %v2884
      %v2941 = vpop.f32.mrb[0].mxu0
      %v2942 = vadd.f32 0.0, %v2941
      %v2943 = vpop.f32.mrb[0].mxu0
      %v2944 = vpop.f32.mrb[0].mxu0
      %v2945 = vadd.f32 0.0, %v2944
      %v2946 = vpop.f32.mrb[0].mxu0
      %2947 = vmatprep.mubr.bf16.mxu0 0
      %2948 = vmatmul.mubr.bf16.gmra.mrb[0].mxu0 %v2887
      %v2949 = vpop.f32.mrb[0].mxu0
      %v2950 = vadd.f32 0.0, %v2949
      %v2951 = vpop.f32.mrb[0].mxu0
      %v2952 = vpop.f32.mrb[0].mxu0
      %v2953 = vadd.f32 0.0, %v2952
      %v2954 = vpop.f32.mrb[0].mxu0
      %2955 = vmatprep.mubr.bf16.mxu0 0
      %2956 = vmatmul.mubr.bf16.gmra.mrb[0].mxu0 %v2890
      %v2957 = vpop.f32.mrb[0].mxu0
      %v2958 = vadd.f32 0.0, %v2957
      %v2959 = vpop.f32.mrb[0].mxu0
      %v2960 = vpop.f32.mrb[0].mxu0
      %v2961 = vadd.f32 0.0, %v2960
      %v2962 = vpop.f32.mrb[0].mxu0
      %2963 = vmatprep.mubr.bf16.mxu0 0
      %2964 = vmatmul.mubr.bf16.gmra.mrb[0].mxu0 %v2893
      %v2965 = vpop.f32.mrb[0].mxu0
      %v2966 = vadd.f32 0.0, %v2965
      %v2967 = vpop.f32.mrb[0].mxu0
      %v2968 = vpop.f32.mrb[0].mxu0
      %v2969 = vadd.f32 0.0, %v2968
      %v2970 = vpop.f32.mrb[0].mxu0
      %2971 = vdwg.mxu0
      %v2973 = vsel %vm487, %v2366, 0
      %v2976 = vsel %vm487, %v2367, 0
      %v2979 = vsel %vm487, %v2368, 0
      %v2982 = vsel %vm487, %v2369, 0
      %v2985 = vsel %vm487, %v2398, 0
      %v2988 = vsel %vm487, %v2399, 0
      %v2991 = vsel %vm487, %v2400, 0
      %v2994 = vsel %vm487, %v2401, 0
      %2996 = vmatprep.subr.bf16.mxu0 0
      %2997 = vmatpush1.bf16.xpose.msra.mxu0 %v2985
      %2998 = vmatprep.subr.bf16.mxu0 0
      %2999 = vmatpush1.bf16.xpose.msra.mxu0 %v2988
      %3000 = vmatprep.subr.bf16.mxu0 0
      %3001 = vmatpush1.bf16.xpose.msra.mxu0 %v2991
      %3002 = vmatprep.subr.bf16.mxu0 0
      %3003 = vmatpush1.bf16.xpose.msra.mxu0 %v2994
      %3004 = vmatprep.subr.bf16.mxu0 0
      %3005 = vmatpush1.bf16.xpose.msra.mxu0 0
      %3006 = vmatprep.subr.bf16.mxu0 0
      %3007 = vmatpush1.bf16.xpose.msra.mxu0 0
      %3008 = vmatprep.subr.bf16.mxu0 0
      %3009 = vmatpush1.bf16.xpose.msra.mxu0 0
      %3010 = vmatprep.subr.bf16.mxu0 0
      %3011 = vmatpush1.bf16.xpose.msra.mxu0 0
      %3012 = vmatprep.subr.bf16.mxu0 0
      %3013 = vmatpush1.bf16.xpose.msra.mxu0 0
      %3014 = vmatprep.subr.bf16.mxu0 0
      %3015 = vmatpush1.bf16.xpose.msra.mxu0 0
      %3016 = vmatprep.subr.bf16.mxu0 0
      %3017 = vmatpush1.bf16.xpose.msra.mxu0 0
      %3018 = vmatprep.subr.bf16.mxu0 0
      %3019 = vmatpush1.bf16.xpose.msra.mxu0 0
      %3020 = vmatprep.subr.bf16.mxu0 0
      %3021 = vmatpush1.bf16.xpose.msra.mxu0 0
      %3022 = vmatprep.subr.bf16.mxu0 0
      %3023 = vmatpush1.bf16.xpose.msra.mxu0 0
      %3024 = vmatprep.subr.bf16.mxu0 0
      %3025 = vmatpush1.bf16.xpose.msra.mxu0 0
      %3026 = vmatprep.subr.bf16.mxu0 0
      %3027 = vmatpush1.bf16.xpose.msra.mxu0 0
      %3028 = vmatprep.mubr.bf16.mxu0 0
      %3029 = vmatmul.mubr.bf16.gmra.mrb[0].mxu0 %v2973
      %v3030 = vpop.f32.mrb[0].mxu0
      %v3031 = vadd.f32 0.0, %v3030
      %v3032 = vpop.f32.mrb[0].mxu0
      %v3033 = vpop.f32.mrb[0].mxu0
      %v3034 = vadd.f32 0.0, %v3033
      %v3035 = vpop.f32.mrb[0].mxu0
      %3036 = vmatprep.mubr.bf16.mxu0 0
      %3037 = vmatmul.mubr.bf16.gmra.mrb[0].mxu0 %v2976
      %v3038 = vpop.f32.mrb[0].mxu0
      %v3039 = vadd.f32 0.0, %v3038
      %v3040 = vpop.f32.mrb[0].mxu0
      %v3041 = vpop.f32.mrb[0].mxu0
      %v3042 = vadd.f32 0.0, %v3041
      %v3043 = vpop.f32.mrb[0].mxu0
      %3044 = vmatprep.mubr.bf16.mxu0 0
      %3045 = vmatmul.mubr.bf16.gmra.mrb[0].mxu0 %v2979
      %v3046 = vpop.f32.mrb[0].mxu0
      %v3047 = vadd.f32 0.0, %v3046
      %v3048 = vpop.f32.mrb[0].mxu0
      %v3049 = vpop.f32.mrb[0].mxu0
      %v3050 = vadd.f32 0.0, %v3049
      %v3051 = vpop.f32.mrb[0].mxu0
      %3052 = vmatprep.mubr.bf16.mxu0 0
      %3053 = vmatmul.mubr.bf16.gmra.mrb[0].mxu0 %v2982
      %v3054 = vpop.f32.mrb[0].mxu0
      %v3055 = vadd.f32 0.0, %v3054
      %v3056 = vpop.f32.mrb[0].mxu0
      %v3057 = vpop.f32.mrb[0].mxu0
      %v3058 = vadd.f32 0.0, %v3057
      %v3059 = vpop.f32.mrb[0].mxu0
      %3060 = vdwg.mxu0
      %v3062 = vsel %vm487, %v2370, 0
      %v3065 = vsel %vm487, %v2371, 0
      %v3068 = vsel %vm487, %v2372, 0
      %v3071 = vsel %vm487, %v2373, 0
      %v3074 = vsel %vm487, %v2402, 0
      %v3077 = vsel %vm487, %v2403, 0
      %v3080 = vsel %vm487, %v2404, 0
      %v3083 = vsel %vm487, %v2405, 0
      %3085 = vmatprep.subr.bf16.mxu0 0
      %3086 = vmatpush1.bf16.xpose.msra.mxu0 %v3074
      %3087 = vmatprep.subr.bf16.mxu0 0
      %3088 = vmatpush1.bf16.xpose.msra.mxu0 %v3077
      %3089 = vmatprep.subr.bf16.mxu0 0
      %3090 = vmatpush1.bf16.xpose.msra.mxu0 %v3080
      %3091 = vmatprep.subr.bf16.mxu0 0
      %3092 = vmatpush1.bf16.xpose.msra.mxu0 %v3083
      %3093 = vmatprep.subr.bf16.mxu0 0
      %3094 = vmatpush1.bf16.xpose.msra.mxu0 0
      %3095 = vmatprep.subr.bf16.mxu0 0
      %3096 = vmatpush1.bf16.xpose.msra.mxu0 0
      %3097 = vmatprep.subr.bf16.mxu0 0
      %3098 = vmatpush1.bf16.xpose.msra.mxu0 0
      %3099 = vmatprep.subr.bf16.mxu0 0
      %3100 = vmatpush1.bf16.xpose.msra.mxu0 0
      %3101 = vmatprep.subr.bf16.mxu0 0
      %3102 = vmatpush1.bf16.xpose.msra.mxu0 0
      %3103 = vmatprep.subr.bf16.mxu0 0
      %3104 = vmatpush1.bf16.xpose.msra.mxu0 0
      %3105 = vmatprep.subr.bf16.mxu0 0
      %3106 = vmatpush1.bf16.xpose.msra.mxu0 0
      %3107 = vmatprep.subr.bf16.mxu0 0
      %3108 = vmatpush1.bf16.xpose.msra.mxu0 0
      %3109 = vmatprep.subr.bf16.mxu0 0
      %3110 = vmatpush1.bf16.xpose.msra.mxu0 0
      %3111 = vmatprep.subr.bf16.mxu0 0
      %3112 = vmatpush1.bf16.xpose.msra.mxu0 0
      %3113 = vmatprep.subr.bf16.mxu0 0
      %3114 = vmatpush1.bf16.xpose.msra.mxu0 0
      %3115 = vmatprep.subr.bf16.mxu0 0
      %3116 = vmatpush1.bf16.xpose.msra.mxu0 0
      %3117 = vmatprep.mubr.bf16.mxu0 0
      %3118 = vmatmul.mubr.bf16.gmra.mrb[0].mxu0 %v3062
      %v3119 = vpop.f32.mrb[0].mxu0
      %v3120 = vadd.f32 0.0, %v3119
      %v3121 = vpop.f32.mrb[0].mxu0
      %v3122 = vpop.f32.mrb[0].mxu0
      %v3123 = vadd.f32 0.0, %v3122
      %v3124 = vpop.f32.mrb[0].mxu0
      %3125 = vmatprep.mubr.bf16.mxu0 0
      %3126 = vmatmul.mubr.bf16.gmra.mrb[0].mxu0 %v3065
      %v3127 = vpop.f32.mrb[0].mxu0
      %v3128 = vadd.f32 0.0, %v3127
      %v3129 = vpop.f32.mrb[0].mxu0
      %v3130 = vpop.f32.mrb[0].mxu0
      %v3131 = vadd.f32 0.0, %v3130
      %v3132 = vpop.f32.mrb[0].mxu0
      %3133 = vmatprep.mubr.bf16.mxu0 0
      %3134 = vmatmul.mubr.bf16.gmra.mrb[0].mxu0 %v3068
      %v3135 = vpop.f32.mrb[0].mxu0
      %v3136 = vadd.f32 0.0, %v3135
      %v3137 = vpop.f32.mrb[0].mxu0
      %v3138 = vpop.f32.mrb[0].mxu0
      %v3139 = vadd.f32 0.0, %v3138
      %v3140 = vpop.f32.mrb[0].mxu0
      %3141 = vmatprep.mubr.bf16.mxu0 0
      %3142 = vmatmul.mubr.bf16.gmra.mrb[0].mxu0 %v3071
      %v3143 = vpop.f32.mrb[0].mxu0
      %v3144 = vadd.f32 0.0, %v3143
      %v3145 = vpop.f32.mrb[0].mxu0
      %v3146 = vpop.f32.mrb[0].mxu0
      %v3147 = vadd.f32 0.0, %v3146
      %v3148 = vpop.f32.mrb[0].mxu0
      %3149 = vdwg.mxu0
      %vm3150 = vcmask 523264
      %v3151 = vsel %vm3150, %v2497, -inf
      %3152 = vmax.xlane.f32.xlu0 %v3151
      %v3153 = vpop.xlane.xlu0 %3152
      %v3154 = vsel %vm3150, %v2500, -inf
      %3155 = vmax.xlane.f32.xlu0 %v3154
      %v3156 = vpop.xlane.xlu0 %3155
      %v3157 = vsel %vm3150, %v2505, -inf
      %3158 = vmax.xlane.f32.xlu0 %v3157
      %v3159 = vpop.xlane.xlu0 %3158
      %v3160 = vsel %vm3150, %v2508, -inf
      %3161 = vmax.xlane.f32.xlu0 %v3160
      %v3162 = vpop.xlane.xlu0 %3161
      %v3163 = vsel %vm3150, %v2513, -inf
      %3164 = vmax.xlane.f32.xlu0 %v3163
      %v3165 = vpop.xlane.xlu0 %3164
      %v3166 = vsel %vm3150, %v2516, -inf
      %3167 = vmax.xlane.f32.xlu0 %v3166
      %v3168 = vpop.xlane.xlu0 %3167
      %v3169 = vsel %vm3150, %v2521, -inf
      %3170 = vmax.xlane.f32.xlu0 %v3169
      %v3171 = vpop.xlane.xlu0 %3170
      %v3172 = vsel %vm3150, %v2524, -inf
      %3173 = vmax.xlane.f32.xlu0 %v3172
      %v3174 = vpop.xlane.xlu0 %3173
      %v3175 = vsel %vm3150, %v2586, -inf
      %3176 = vmax.xlane.f32.xlu0 %v3175
      %v3177 = vpop.xlane.xlu0 %3176
      %v3178 = vsel %vm3150, %v2589, -inf
      %3179 = vmax.xlane.f32.xlu0 %v3178
      %v3180 = vpop.xlane.xlu0 %3179
      %v3181 = vsel %vm3150, %v2594, -inf
      %3182 = vmax.xlane.f32.xlu0 %v3181
      %v3183 = vpop.xlane.xlu0 %3182
      %v3184 = vsel %vm3150, %v2597, -inf
      %3185 = vmax.xlane.f32.xlu0 %v3184
      %v3186 = vpop.xlane.xlu0 %3185
      %v3187 = vsel %vm3150, %v2602, -inf
      %3188 = vmax.xlane.f32.xlu0 %v3187
      %v3189 = vpop.xlane.xlu0 %3188
      %v3190 = vsel %vm3150, %v2605, -inf
      %3191 = vmax.xlane.f32.xlu0 %v3190
      %v3192 = vpop.xlane.xlu0 %3191
      %v3193 = vsel %vm3150, %v2610, -inf
      %3194 = vmax.xlane.f32.xlu0 %v3193
      %v3195 = vpop.xlane.xlu0 %3194
      %v3196 = vsel %vm3150, %v2613, -inf
      %3197 = vmax.xlane.f32.xlu0 %v3196
      %v3198 = vpop.xlane.xlu0 %3197
      %v3199 = vsel %vm3150, %v2675, -inf
      %3200 = vmax.xlane.f32.xlu0 %v3199
      %v3201 = vpop.xlane.xlu0 %3200
      %v3202 = vsel %vm3150, %v2678, -inf
      %3203 = vmax.xlane.f32.xlu0 %v3202
      %v3204 = vpop.xlane.xlu0 %3203
      %v3205 = vsel %vm3150, %v2683, -inf
      %3206 = vmax.xlane.f32.xlu0 %v3205
      %v3207 = vpop.xlane.xlu0 %3206
      %v3208 = vsel %vm3150, %v2686, -inf
      %3209 = vmax.xlane.f32.xlu0 %v3208
      %v3210 = vpop.xlane.xlu0 %3209
      %v3211 = vsel %vm3150, %v2691, -inf
      %3212 = vmax.xlane.f32.xlu0 %v3211
      %v3213 = vpop.xlane.xlu0 %3212
      %v3214 = vsel %vm3150, %v2694, -inf
      %3215 = vmax.xlane.f32.xlu0 %v3214
      %v3216 = vpop.xlane.xlu0 %3215
      %v3217 = vsel %vm3150, %v2699, -inf
      %3218 = vmax.xlane.f32.xlu0 %v3217
      %v3219 = vpop.xlane.xlu0 %3218
      %v3220 = vsel %vm3150, %v2702, -inf
      %3221 = vmax.xlane.f32.xlu0 %v3220
      %v3222 = vpop.xlane.xlu0 %3221
      %v3223 = vsel %vm3150, %v2764, -inf
      %3224 = vmax.xlane.f32.xlu0 %v3223
      %v3225 = vpop.xlane.xlu0 %3224
      %v3226 = vsel %vm3150, %v2767, -inf
      %3227 = vmax.xlane.f32.xlu0 %v3226
      %v3228 = vpop.xlane.xlu0 %3227
      %v3229 = vsel %vm3150, %v2772, -inf
      %3230 = vmax.xlane.f32.xlu0 %v3229
      %v3231 = vpop.xlane.xlu0 %3230
      %v3232 = vsel %vm3150, %v2775, -inf
      %3233 = vmax.xlane.f32.xlu0 %v3232
      %v3234 = vpop.xlane.xlu0 %3233
      %v3235 = vsel %vm3150, %v2780, -inf
      %3236 = vmax.xlane.f32.xlu0 %v3235
      %v3237 = vpop.xlane.xlu0 %3236
      %v3238 = vsel %vm3150, %v2783, -inf
      %3239 = vmax.xlane.f32.xlu0 %v3238
      %v3240 = vpop.xlane.xlu0 %3239
      %v3241 = vsel %vm3150, %v2788, -inf
      %3242 = vmax.xlane.f32.xlu0 %v3241
      %v3243 = vpop.xlane.xlu0 %3242
      %v3244 = vsel %vm3150, %v2791, -inf
      %3245 = vmax.xlane.f32.xlu0 %v3244
      %v3246 = vpop.xlane.xlu0 %3245
      %v3247 = vsel %vm3150, %v2853, -inf
      %3248 = vmax.xlane.f32.xlu0 %v3247
      %v3249 = vpop.xlane.xlu0 %3248
      %v3250 = vsel %vm3150, %v2856, -inf
      %3251 = vmax.xlane.f32.xlu0 %v3250
      %v3252 = vpop.xlane.xlu0 %3251
      %v3253 = vsel %vm3150, %v2861, -inf
      %3254 = vmax.xlane.f32.xlu0 %v3253
      %v3255 = vpop.xlane.xlu0 %3254
      %v3256 = vsel %vm3150, %v2864, -inf
      %3257 = vmax.xlane.f32.xlu0 %v3256
      %v3258 = vpop.xlane.xlu0 %3257
      %v3259 = vsel %vm3150, %v2869, -inf
      %3260 = vmax.xlane.f32.xlu0 %v3259
      %v3261 = vpop.xlane.xlu0 %3260
      %v3262 = vsel %vm3150, %v2872, -inf
      %3263 = vmax.xlane.f32.xlu0 %v3262
      %v3264 = vpop.xlane.xlu0 %3263
      %v3265 = vsel %vm3150, %v2877, -inf
      %3266 = vmax.xlane.f32.xlu0 %v3265
      %v3267 = vpop.xlane.xlu0 %3266
      %v3268 = vsel %vm3150, %v2880, -inf
      %3269 = vmax.xlane.f32.xlu0 %v3268
      %v3270 = vpop.xlane.xlu0 %3269
      %v3271 = vsel %vm3150, %v2942, -inf
      %3272 = vmax.xlane.f32.xlu0 %v3271
      %v3273 = vpop.xlane.xlu0 %3272
      %v3274 = vsel %vm3150, %v2945, -inf
      %3275 = vmax.xlane.f32.xlu0 %v3274
      %v3276 = vpop.xlane.xlu0 %3275
      %v3277 = vsel %vm3150, %v2950, -inf
      %3278 = vmax.xlane.f32.xlu0 %v3277
      %v3279 = vpop.xlane.xlu0 %3278
      %v3280 = vsel %vm3150, %v2953, -inf
      %3281 = vmax.xlane.f32.xlu0 %v3280
      %v3282 = vpop.xlane.xlu0 %3281
      %v3283 = vsel %vm3150, %v2958, -inf
      %3284 = vmax.xlane.f32.xlu0 %v3283
      %v3285 = vpop.xlane.xlu0 %3284
      %v3286 = vsel %vm3150, %v2961, -inf
      %3287 = vmax.xlane.f32.xlu0 %v3286
      %v3288 = vpop.xlane.xlu0 %3287
      %v3289 = vsel %vm3150, %v2966, -inf
      %3290 = vmax.xlane.f32.xlu0 %v3289
      %v3291 = vpop.xlane.xlu0 %3290
      %v3292 = vsel %vm3150, %v2969, -inf
      %3293 = vmax.xlane.f32.xlu0 %v3292
      %v3294 = vpop.xlane.xlu0 %3293
      %v3295 = vsel %vm3150, %v3031, -inf
      %3296 = vmax.xlane.f32.xlu0 %v3295
      %v3297 = vpop.xlane.xlu0 %3296
      %v3298 = vsel %vm3150, %v3034, -inf
      %3299 = vmax.xlane.f32.xlu0 %v3298
      %v3300 = vpop.xlane.xlu0 %3299
      %v3301 = vsel %vm3150, %v3039, -inf
      %3302 = vmax.xlane.f32.xlu0 %v3301
      %v3303 = vpop.xlane.xlu0 %3302
      %v3304 = vsel %vm3150, %v3042, -inf
      %3305 = vmax.xlane.f32.xlu0 %v3304
      %v3306 = vpop.xlane.xlu0 %3305
      %v3307 = vsel %vm3150, %v3047, -inf
      %3308 = vmax.xlane.f32.xlu0 %v3307
      %v3309 = vpop.xlane.xlu0 %3308
      %v3310 = vsel %vm3150, %v3050, -inf
      %3311 = vmax.xlane.f32.xlu0 %v3310
      %v3312 = vpop.xlane.xlu0 %3311
      %v3313 = vsel %vm3150, %v3055, -inf
      %3314 = vmax.xlane.f32.xlu0 %v3313
      %v3315 = vpop.xlane.xlu0 %3314
      %v3316 = vsel %vm3150, %v3058, -inf
      %3317 = vmax.xlane.f32.xlu0 %v3316
      %v3318 = vpop.xlane.xlu0 %3317
      %v3319 = vsel %vm3150, %v3120, -inf
      %3320 = vmax.xlane.f32.xlu0 %v3319
      %v3321 = vpop.xlane.xlu0 %3320
      %v3322 = vsel %vm3150, %v3123, -inf
      %3323 = vmax.xlane.f32.xlu0 %v3322
      %v3324 = vpop.xlane.xlu0 %3323
      %v3325 = vsel %vm3150, %v3128, -inf
      %3326 = vmax.xlane.f32.xlu0 %v3325
      %v3327 = vpop.xlane.xlu0 %3326
      %v3328 = vsel %vm3150, %v3131, -inf
      %3329 = vmax.xlane.f32.xlu0 %v3328
      %v3330 = vpop.xlane.xlu0 %3329
      %v3331 = vsel %vm3150, %v3136, -inf
      %3332 = vmax.xlane.f32.xlu0 %v3331
      %v3333 = vpop.xlane.xlu0 %3332
      %v3334 = vsel %vm3150, %v3139, -inf
      %3335 = vmax.xlane.f32.xlu0 %v3334
      %v3336 = vpop.xlane.xlu0 %3335
      %v3337 = vsel %vm3150, %v3144, -inf
      %3338 = vmax.xlane.f32.xlu0 %v3337
      %v3339 = vpop.xlane.xlu0 %3338
      %v3340 = vsel %vm3150, %v3147, -inf
      %3341 = vmax.xlane.f32.xlu0 %v3340
      %v3342 = vpop.xlane.xlu0 %3341
      %v3343 = vsub.f32 %v2497, %v3153
      %v3344 = vsub.f32 %v2500, %v3156
      %v3345 = vsub.f32 %v2505, %v3159
      %v3346 = vsub.f32 %v2508, %v3162
      %v3347 = vsub.f32 %v2513, %v3165
      %v3348 = vsub.f32 %v2516, %v3168
      %v3349 = vsub.f32 %v2521, %v3171
      %v3350 = vsub.f32 %v2524, %v3174
      %v3351 = vsub.f32 %v2586, %v3177
      %v3352 = vsub.f32 %v2589, %v3180
      %v3353 = vsub.f32 %v2594, %v3183
      %v3354 = vsub.f32 %v2597, %v3186
      %v3355 = vsub.f32 %v2602, %v3189
      %v3356 = vsub.f32 %v2605, %v3192
      %v3357 = vsub.f32 %v2610, %v3195
      %v3358 = vsub.f32 %v2613, %v3198
      %v3359 = vsub.f32 %v2675, %v3201
      %v3360 = vsub.f32 %v2678, %v3204
      %v3361 = vsub.f32 %v2683, %v3207
      %v3362 = vsub.f32 %v2686, %v3210
      %v3363 = vsub.f32 %v2691, %v3213
      %v3364 = vsub.f32 %v2694, %v3216
      %v3365 = vsub.f32 %v2699, %v3219
      %v3366 = vsub.f32 %v2702, %v3222
      %v3367 = vsub.f32 %v2764, %v3225
      %v3368 = vsub.f32 %v2767, %v3228
      %v3369 = vsub.f32 %v2772, %v3231
      %v3370 = vsub.f32 %v2775, %v3234
      %v3371 = vsub.f32 %v2780, %v3237
      %v3372 = vsub.f32 %v2783, %v3240
      %v3373 = vsub.f32 %v2788, %v3243
      %v3374 = vsub.f32 %v2791, %v3246
      %v3375 = vsub.f32 %v2853, %v3249
      %v3376 = vsub.f32 %v2856, %v3252
      %v3377 = vsub.f32 %v2861, %v3255
      %v3378 = vsub.f32 %v2864, %v3258
      %v3379 = vsub.f32 %v2869, %v3261
      %v3380 = vsub.f32 %v2872, %v3264
      %v3381 = vsub.f32 %v2877, %v3267
      %v3382 = vsub.f32 %v2880, %v3270
      %v3383 = vsub.f32 %v2942, %v3273
      %v3384 = vsub.f32 %v2945, %v3276
      %v3385 = vsub.f32 %v2950, %v3279
      %v3386 = vsub.f32 %v2953, %v3282
      %v3387 = vsub.f32 %v2958, %v3285
      %v3388 = vsub.f32 %v2961, %v3288
      %v3389 = vsub.f32 %v2966, %v3291
      %v3390 = vsub.f32 %v2969, %v3294
      %v3391 = vsub.f32 %v3031, %v3297
      %v3392 = vsub.f32 %v3034, %v3300
      %v3393 = vsub.f32 %v3039, %v3303
      %v3394 = vsub.f32 %v3042, %v3306
      %v3395 = vsub.f32 %v3047, %v3309
      %v3396 = vsub.f32 %v3050, %v3312
      %v3397 = vsub.f32 %v3055, %v3315
      %v3398 = vsub.f32 %v3058, %v3318
      %v3399 = vsub.f32 %v3120, %v3321
      %v3400 = vsub.f32 %v3123, %v3324
      %v3401 = vsub.f32 %v3128, %v3327
      %v3402 = vsub.f32 %v3131, %v3330
      %v3403 = vsub.f32 %v3136, %v3333
      %v3404 = vsub.f32 %v3139, %v3336
      %v3405 = vsub.f32 %v3144, %v3339
      %v3406 = vsub.f32 %v3147, %v3342
      %v3407 = vmul.f32 %v3343, 1.442695
      %v3408 = vpow.pop %v3407
      %v3409 = vmul.f32 %v3344, 1.442695
      %v3410 = vpow.pop %v3409
      %v3411 = vmul.f32 %v3345, 1.442695
      %v3412 = vpow.pop %v3411
      %v3413 = vmul.f32 %v3346, 1.442695
      %v3414 = vpow.pop %v3413
      %v3415 = vmul.f32 %v3347, 1.442695
      %v3416 = vpow.pop %v3415
      %v3417 = vmul.f32 %v3348, 1.442695
      %v3418 = vpow.pop %v3417
      %v3419 = vmul.f32 %v3349, 1.442695
      %v3420 = vpow.pop %v3419
      %v3421 = vmul.f32 %v3350, 1.442695
      %v3422 = vpow.pop %v3421
      %v3423 = vmul.f32 %v3351, 1.442695
      %v3424 = vpow.pop %v3423
      %v3425 = vmul.f32 %v3352, 1.442695
      %v3426 = vpow.pop %v3425
      %v3427 = vmul.f32 %v3353, 1.442695
      %v3428 = vpow.pop %v3427
      %v3429 = vmul.f32 %v3354, 1.442695
      %v3430 = vpow.pop %v3429
      %v3431 = vmul.f32 %v3355, 1.442695
      %v3432 = vpow.pop %v3431
      %v3433 = vmul.f32 %v3356, 1.442695
      %v3434 = vpow.pop %v3433
      %v3435 = vmul.f32 %v3357, 1.442695
      %v3436 = vpow.pop %v3435
      %v3437 = vmul.f32 %v3358, 1.442695
      %v3438 = vpow.pop %v3437
      %v3439 = vmul.f32 %v3359, 1.442695
      %v3440 = vpow.pop %v3439
      %v3441 = vmul.f32 %v3360, 1.442695
      %v3442 = vpow.pop %v3441
      %v3443 = vmul.f32 %v3361, 1.442695
      %v3444 = vpow.pop %v3443
      %v3445 = vmul.f32 %v3362, 1.442695
      %v3446 = vpow.pop %v3445
      %v3447 = vmul.f32 %v3363, 1.442695
      %v3448 = vpow.pop %v3447
      %v3449 = vmul.f32 %v3364, 1.442695
      %v3450 = vpow.pop %v3449
      %v3451 = vmul.f32 %v3365, 1.442695
      %v3452 = vpow.pop %v3451
      %v3453 = vmul.f32 %v3366, 1.442695
      %v3454 = vpow.pop %v3453
      %v3455 = vmul.f32 %v3367, 1.442695
      %v3456 = vpow.pop %v3455
      %v3457 = vmul.f32 %v3368, 1.442695
      %v3458 = vpow.pop %v3457
      %v3459 = vmul.f32 %v3369, 1.442695
      %v3460 = vpow.pop %v3459
      %v3461 = vmul.f32 %v3370, 1.442695
      %v3462 = vpow.pop %v3461
      %v3463 = vmul.f32 %v3371, 1.442695
      %v3464 = vpow.pop %v3463
      %v3465 = vmul.f32 %v3372, 1.442695
      %v3466 = vpow.pop %v3465
      %v3467 = vmul.f32 %v3373, 1.442695
      %v3468 = vpow.pop %v3467
      %v3469 = vmul.f32 %v3374, 1.442695
      %v3470 = vpow.pop %v3469
      %v3471 = vmul.f32 %v3375, 1.442695
      %v3472 = vpow.pop %v3471
      %v3473 = vmul.f32 %v3376, 1.442695
      %v3474 = vpow.pop %v3473
      %v3475 = vmul.f32 %v3377, 1.442695
      %v3476 = vpow.pop %v3475
      %v3477 = vmul.f32 %v3378, 1.442695
      %v3478 = vpow.pop %v3477
      %v3479 = vmul.f32 %v3379, 1.442695
      %v3480 = vpow.pop %v3479
      %v3481 = vmul.f32 %v3380, 1.442695
      %v3482 = vpow.pop %v3481
      %v3483 = vmul.f32 %v3381, 1.442695
      %v3484 = vpow.pop %v3483
      %v3485 = vmul.f32 %v3382, 1.442695
      %v3486 = vpow.pop %v3485
      %v3487 = vmul.f32 %v3383, 1.442695
      %v3488 = vpow.pop %v3487
      %v3489 = vmul.f32 %v3384, 1.442695
      %v3490 = vpow.pop %v3489
      %v3491 = vmul.f32 %v3385, 1.442695
      %v3492 = vpow.pop %v3491
      %v3493 = vmul.f32 %v3386, 1.442695
      %v3494 = vpow.pop %v3493
      %v3495 = vmul.f32 %v3387, 1.442695
      %v3496 = vpow.pop %v3495
      %v3497 = vmul.f32 %v3388, 1.442695
      %v3498 = vpow.pop %v3497
      %v3499 = vmul.f32 %v3389, 1.442695
      %v3500 = vpow.pop %v3499
      %v3501 = vmul.f32 %v3390, 1.442695
      %v3502 = vpow.pop %v3501
      %v3503 = vmul.f32 %v3391, 1.442695
      %v3504 = vpow.pop %v3503
      %v3505 = vmul.f32 %v3392, 1.442695
      %v3506 = vpow.pop %v3505
      %v3507 = vmul.f32 %v3393, 1.442695
      %v3508 = vpow.pop %v3507
      %v3509 = vmul.f32 %v3394, 1.442695
      %v3510 = vpow.pop %v3509
      %v3511 = vmul.f32 %v3395, 1.442695
      %v3512 = vpow.pop %v3511
      %v3513 = vmul.f32 %v3396, 1.442695
      %v3514 = vpow.pop %v3513
      %v3515 = vmul.f32 %v3397, 1.442695
      %v3516 = vpow.pop %v3515
      %v3517 = vmul.f32 %v3398, 1.442695
      %v3518 = vpow.pop %v3517
      %v3519 = vmul.f32 %v3399, 1.442695
      %v3520 = vpow.pop %v3519
      %v3521 = vmul.f32 %v3400, 1.442695
      %v3522 = vpow.pop %v3521
      %v3523 = vmul.f32 %v3401, 1.442695
      %v3524 = vpow.pop %v3523
      %v3525 = vmul.f32 %v3402, 1.442695
      %v3526 = vpow.pop %v3525
      %v3527 = vmul.f32 %v3403, 1.442695
      %v3528 = vpow.pop %v3527
      %v3529 = vmul.f32 %v3404, 1.442695
      %v3530 = vpow.pop %v3529
      %v3531 = vmul.f32 %v3405, 1.442695
      %v3532 = vpow.pop %v3531
      %v3533 = vmul.f32 %v3406, 1.442695
      %v3534 = vpow.pop %v3533
      %v3535 = vsel %vm3150, %v3408, 0.0
      %3536 = vadd.xlane.f32.xlu0 %v3535
      %v3537 = vpop.xlane.xlu0 %3536
      %v3538 = vsel %vm3150, %v3410, 0.0
      %3539 = vadd.xlane.f32.xlu0 %v3538
      %v3540 = vpop.xlane.xlu0 %3539
      %v3541 = vsel %vm3150, %v3412, 0.0
      %3542 = vadd.xlane.f32.xlu0 %v3541
      %v3543 = vpop.xlane.xlu0 %3542
      %v3544 = vsel %vm3150, %v3414, 0.0
      %3545 = vadd.xlane.f32.xlu0 %v3544
      %v3546 = vpop.xlane.xlu0 %3545
      %v3547 = vsel %vm3150, %v3416, 0.0
      %3548 = vadd.xlane.f32.xlu0 %v3547
      %v3549 = vpop.xlane.xlu0 %3548
      %v3550 = vsel %vm3150, %v3418, 0.0
      %3551 = vadd.xlane.f32.xlu0 %v3550
      %v3552 = vpop.xlane.xlu0 %3551
      %v3553 = vsel %vm3150, %v3420, 0.0
      %3554 = vadd.xlane.f32.xlu0 %v3553
      %v3555 = vpop.xlane.xlu0 %3554
      %v3556 = vsel %vm3150, %v3422, 0.0
      %3557 = vadd.xlane.f32.xlu0 %v3556
      %v3558 = vpop.xlane.xlu0 %3557
      %v3559 = vsel %vm3150, %v3424, 0.0
      %3560 = vadd.xlane.f32.xlu0 %v3559
      %v3561 = vpop.xlane.xlu0 %3560
      %v3562 = vsel %vm3150, %v3426, 0.0
      %3563 = vadd.xlane.f32.xlu0 %v3562
      %v3564 = vpop.xlane.xlu0 %3563
      %v3565 = vsel %vm3150, %v3428, 0.0
      %3566 = vadd.xlane.f32.xlu0 %v3565
      %v3567 = vpop.xlane.xlu0 %3566
      %v3568 = vsel %vm3150, %v3430, 0.0
      %3569 = vadd.xlane.f32.xlu0 %v3568
      %v3570 = vpop.xlane.xlu0 %3569
      %v3571 = vsel %vm3150, %v3432, 0.0
      %3572 = vadd.xlane.f32.xlu0 %v3571
      %v3573 = vpop.xlane.xlu0 %3572
      %v3574 = vsel %vm3150, %v3434, 0.0
      %3575 = vadd.xlane.f32.xlu0 %v3574
      %v3576 = vpop.xlane.xlu0 %3575
      %v3577 = vsel %vm3150, %v3436, 0.0
      %3578 = vadd.xlane.f32.xlu0 %v3577
      %v3579 = vpop.xlane.xlu0 %3578
      %v3580 = vsel %vm3150, %v3438, 0.0
      %3581 = vadd.xlane.f32.xlu0 %v3580
      %v3582 = vpop.xlane.xlu0 %3581
      %v3583 = vsel %vm3150, %v3440, 0.0
      %3584 = vadd.xlane.f32.xlu0 %v3583
      %v3585 = vpop.xlane.xlu0 %3584
      %v3586 = vsel %vm3150, %v3442, 0.0
      %3587 = vadd.xlane.f32.xlu0 %v3586
      %v3588 = vpop.xlane.xlu0 %3587
      %v3589 = vsel %vm3150, %v3444, 0.0
      %3590 = vadd.xlane.f32.xlu0 %v3589
      %v3591 = vpop.xlane.xlu0 %3590
      %v3592 = vsel %vm3150, %v3446, 0.0
      %3593 = vadd.xlane.f32.xlu0 %v3592
      %v3594 = vpop.xlane.xlu0 %3593
      %v3595 = vsel %vm3150, %v3448, 0.0
      %3596 = vadd.xlane.f32.xlu0 %v3595
      %v3597 = vpop.xlane.xlu0 %3596
      %v3598 = vsel %vm3150, %v3450, 0.0
      %3599 = vadd.xlane.f32.xlu0 %v3598
      %v3600 = vpop.xlane.xlu0 %3599
      %v3601 = vsel %vm3150, %v3452, 0.0
      %3602 = vadd.xlane.f32.xlu0 %v3601
      %v3603 = vpop.xlane.xlu0 %3602
      %v3604 = vsel %vm3150, %v3454, 0.0
      %3605 = vadd.xlane.f32.xlu0 %v3604
      %v3606 = vpop.xlane.xlu0 %3605
      %v3607 = vsel %vm3150, %v3456, 0.0
      %3608 = vadd.xlane.f32.xlu0 %v3607
      %v3609 = vpop.xlane.xlu0 %3608
      %v3610 = vsel %vm3150, %v3458, 0.0
      %3611 = vadd.xlane.f32.xlu0 %v3610
      %v3612 = vpop.xlane.xlu0 %3611
      %v3613 = vsel %vm3150, %v3460, 0.0
      %3614 = vadd.xlane.f32.xlu0 %v3613
      %v3615 = vpop.xlane.xlu0 %3614
      %v3616 = vsel %vm3150, %v3462, 0.0
      %3617 = vadd.xlane.f32.xlu0 %v3616
      %v3618 = vpop.xlane.xlu0 %3617
      %v3619 = vsel %vm3150, %v3464, 0.0
      %3620 = vadd.xlane.f32.xlu0 %v3619
      %v3621 = vpop.xlane.xlu0 %3620
      %v3622 = vsel %vm3150, %v3466, 0.0
      %3623 = vadd.xlane.f32.xlu0 %v3622
      %v3624 = vpop.xlane.xlu0 %3623
      %v3625 = vsel %vm3150, %v3468, 0.0
      %3626 = vadd.xlane.f32.xlu0 %v3625
      %v3627 = vpop.xlane.xlu0 %3626
      %v3628 = vsel %vm3150, %v3470, 0.0
      %3629 = vadd.xlane.f32.xlu0 %v3628
      %v3630 = vpop.xlane.xlu0 %3629
      %v3631 = vsel %vm3150, %v3472, 0.0
      %3632 = vadd.xlane.f32.xlu0 %v3631
      %v3633 = vpop.xlane.xlu0 %3632
      %v3634 = vsel %vm3150, %v3474, 0.0
      %3635 = vadd.xlane.f32.xlu0 %v3634
      %v3636 = vpop.xlane.xlu0 %3635
      %v3637 = vsel %vm3150, %v3476, 0.0
      %3638 = vadd.xlane.f32.xlu0 %v3637
      %v3639 = vpop.xlane.xlu0 %3638
      %v3640 = vsel %vm3150, %v3478, 0.0
      %3641 = vadd.xlane.f32.xlu0 %v3640
      %v3642 = vpop.xlane.xlu0 %3641
      %v3643 = vsel %vm3150, %v3480, 0.0
      %3644 = vadd.xlane.f32.xlu0 %v3643
      %v3645 = vpop.xlane.xlu0 %3644
      %v3646 = vsel %vm3150, %v3482, 0.0
      %3647 = vadd.xlane.f32.xlu0 %v3646
      %v3648 = vpop.xlane.xlu0 %3647
      %v3649 = vsel %vm3150, %v3484, 0.0
      %3650 = vadd.xlane.f32.xlu0 %v3649
      %v3651 = vpop.xlane.xlu0 %3650
      %v3652 = vsel %vm3150, %v3486, 0.0
      %3653 = vadd.xlane.f32.xlu0 %v3652
      %v3654 = vpop.xlane.xlu0 %3653
      %v3655 = vsel %vm3150, %v3488, 0.0
      %3656 = vadd.xlane.f32.xlu0 %v3655
      %v3657 = vpop.xlane.xlu0 %3656
      %v3658 = vsel %vm3150, %v3490, 0.0
      %3659 = vadd.xlane.f32.xlu0 %v3658
      %v3660 = vpop.xlane.xlu0 %3659
      %v3661 = vsel %vm3150, %v3492, 0.0
      %3662 = vadd.xlane.f32.xlu0 %v3661
      %v3663 = vpop.xlane.xlu0 %3662
      %v3664 = vsel %vm3150, %v3494, 0.0
      %3665 = vadd.xlane.f32.xlu0 %v3664
      %v3666 = vpop.xlane.xlu0 %3665
      %v3667 = vsel %vm3150, %v3496, 0.0
      %3668 = vadd.xlane.f32.xlu0 %v3667
      %v3669 = vpop.xlane.xlu0 %3668
      %v3670 = vsel %vm3150, %v3498, 0.0
      %3671 = vadd.xlane.f32.xlu0 %v3670
      %v3672 = vpop.xlane.xlu0 %3671
      %v3673 = vsel %vm3150, %v3500, 0.0
      %3674 = vadd.xlane.f32.xlu0 %v3673
      %v3675 = vpop.xlane.xlu0 %3674
      %v3676 = vsel %vm3150, %v3502, 0.0
      %3677 = vadd.xlane.f32.xlu0 %v3676
      %v3678 = vpop.xlane.xlu0 %3677
      %v3679 = vsel %vm3150, %v3504, 0.0
      %3680 = vadd.xlane.f32.xlu0 %v3679
      %v3681 = vpop.xlane.xlu0 %3680
      %v3682 = vsel %vm3150, %v3506, 0.0
      %3683 = vadd.xlane.f32.xlu0 %v3682
      %v3684 = vpop.xlane.xlu0 %3683
      %v3685 = vsel %vm3150, %v3508, 0.0
      %3686 = vadd.xlane.f32.xlu0 %v3685
      %v3687 = vpop.xlane.xlu0 %3686
      %v3688 = vsel %vm3150, %v3510, 0.0
      %3689 = vadd.xlane.f32.xlu0 %v3688
      %v3690 = vpop.xlane.xlu0 %3689
      %v3691 = vsel %vm3150, %v3512, 0.0
      %3692 = vadd.xlane.f32.xlu0 %v3691
      %v3693 = vpop.xlane.xlu0 %3692
      %v3694 = vsel %vm3150, %v3514, 0.0
      %3695 = vadd.xlane.f32.xlu0 %v3694
      %v3696 = vpop.xlane.xlu0 %3695
      %v3697 = vsel %vm3150, %v3516, 0.0
      %3698 = vadd.xlane.f32.xlu0 %v3697
      %v3699 = vpop.xlane.xlu0 %3698
      %v3700 = vsel %vm3150, %v3518, 0.0
      %3701 = vadd.xlane.f32.xlu0 %v3700
      %v3702 = vpop.xlane.xlu0 %3701
      %v3703 = vsel %vm3150, %v3520, 0.0
      %3704 = vadd.xlane.f32.xlu0 %v3703
      %v3705 = vpop.xlane.xlu0 %3704
      %v3706 = vsel %vm3150, %v3522, 0.0
      %3707 = vadd.xlane.f32.xlu0 %v3706
      %v3708 = vpop.xlane.xlu0 %3707
      %v3709 = vsel %vm3150, %v3524, 0.0
      %3710 = vadd.xlane.f32.xlu0 %v3709
      %v3711 = vpop.xlane.xlu0 %3710
      %v3712 = vsel %vm3150, %v3526, 0.0
      %3713 = vadd.xlane.f32.xlu0 %v3712
      %v3714 = vpop.xlane.xlu0 %3713
      %v3715 = vsel %vm3150, %v3528, 0.0
      %3716 = vadd.xlane.f32.xlu0 %v3715
      %v3717 = vpop.xlane.xlu0 %3716
      %v3718 = vsel %vm3150, %v3530, 0.0
      %3719 = vadd.xlane.f32.xlu0 %v3718
      %v3720 = vpop.xlane.xlu0 %3719
      %v3721 = vsel %vm3150, %v3532, 0.0
      %3722 = vadd.xlane.f32.xlu0 %v3721
      %v3723 = vpop.xlane.xlu0 %3722
      %v3724 = vsel %vm3150, %v3534, 0.0
      %3725 = vadd.xlane.f32.xlu0 %v3724
      %v3726 = vpop.xlane.xlu0 %3725
      %v3727 = vrcp.pop %v3537
      %v3728 = vrcp.pop %v3540
      %v3729 = vrcp.pop %v3543
      %v3730 = vrcp.pop %v3546
      %v3731 = vrcp.pop %v3549
      %v3732 = vrcp.pop %v3552
      %v3733 = vrcp.pop %v3555
      %v3734 = vrcp.pop %v3558
      %v3735 = vrcp.pop %v3561
      %v3736 = vrcp.pop %v3564
      %v3737 = vrcp.pop %v3567
      %v3738 = vrcp.pop %v3570
      %v3739 = vrcp.pop %v3573
      %v3740 = vrcp.pop %v3576
      %v3741 = vrcp.pop %v3579
      %v3742 = vrcp.pop %v3582
      %v3743 = vrcp.pop %v3585
      %v3744 = vrcp.pop %v3588
      %v3745 = vrcp.pop %v3591
      %v3746 = vrcp.pop %v3594
      %v3747 = vrcp.pop %v3597
      %v3748 = vrcp.pop %v3600
      %v3749 = vrcp.pop %v3603
      %v3750 = vrcp.pop %v3606
      %v3751 = vrcp.pop %v3609
      %v3752 = vrcp.pop %v3612
      %v3753 = vrcp.pop %v3615
      %v3754 = vrcp.pop %v3618
      %v3755 = vrcp.pop %v3621
      %v3756 = vrcp.pop %v3624
      %v3757 = vrcp.pop %v3627
      %v3758 = vrcp.pop %v3630
      %v3759 = vrcp.pop %v3633
      %v3760 = vrcp.pop %v3636
      %v3761 = vrcp.pop %v3639
      %v3762 = vrcp.pop %v3642
      %v3763 = vrcp.pop %v3645
      %v3764 = vrcp.pop %v3648
      %v3765 = vrcp.pop %v3651
      %v3766 = vrcp.pop %v3654
      %v3767 = vrcp.pop %v3657
      %v3768 = vrcp.pop %v3660
      %v3769 = vrcp.pop %v3663
      %v3770 = vrcp.pop %v3666
      %v3771 = vrcp.pop %v3669
      %v3772 = vrcp.pop %v3672
      %v3773 = vrcp.pop %v3675
      %v3774 = vrcp.pop %v3678
      %v3775 = vrcp.pop %v3681
      %v3776 = vrcp.pop %v3684
      %v3777 = vrcp.pop %v3687
      %v3778 = vrcp.pop %v3690
      %v3779 = vrcp.pop %v3693
      %v3780 = vrcp.pop %v3696
      %v3781 = vrcp.pop %v3699
      %v3782 = vrcp.pop %v3702
      %v3783 = vrcp.pop %v3705
      %v3784 = vrcp.pop %v3708
      %v3785 = vrcp.pop %v3711
      %v3786 = vrcp.pop %v3714
      %v3787 = vrcp.pop %v3717
      %v3788 = vrcp.pop %v3720
      %v3789 = vrcp.pop %v3723
      %v3790 = vrcp.pop %v3726
      %v3791 = vmul.f32 %v3408, %v3727
      %v3792 = vmul.f32 %v3410, %v3728
      %v3793 = vmul.f32 %v3412, %v3729
      %v3794 = vmul.f32 %v3414, %v3730
      %v3795 = vmul.f32 %v3416, %v3731
      %v3796 = vmul.f32 %v3418, %v3732
      %v3797 = vmul.f32 %v3420, %v3733
      %v3798 = vmul.f32 %v3422, %v3734
      %v3799 = vmul.f32 %v3424, %v3735
      %v3800 = vmul.f32 %v3426, %v3736
      %v3801 = vmul.f32 %v3428, %v3737
      %v3802 = vmul.f32 %v3430, %v3738
      %v3803 = vmul.f32 %v3432, %v3739
      %v3804 = vmul.f32 %v3434, %v3740
      %v3805 = vmul.f32 %v3436, %v3741
      %v3806 = vmul.f32 %v3438, %v3742
      %v3807 = vmul.f32 %v3440, %v3743
      %v3808 = vmul.f32 %v3442, %v3744
      %v3809 = vmul.f32 %v3444, %v3745
      %v3810 = vmul.f32 %v3446, %v3746
      %v3811 = vmul.f32 %v3448, %v3747
      %v3812 = vmul.f32 %v3450, %v3748
      %v3813 = vmul.f32 %v3452, %v3749
      %v3814 = vmul.f32 %v3454, %v3750
      %v3815 = vmul.f32 %v3456, %v3751
      %v3816 = vmul.f32 %v3458, %v3752
      %v3817 = vmul.f32 %v3460, %v3753
      %v3818 = vmul.f32 %v3462, %v3754
      %v3819 = vmul.f32 %v3464, %v3755
      %v3820 = vmul.f32 %v3466, %v3756
      %v3821 = vmul.f32 %v3468, %v3757
      %v3822 = vmul.f32 %v3470, %v3758
      %v3823 = vmul.f32 %v3472, %v3759
      %v3824 = vmul.f32 %v3474, %v3760
      %v3825 = vmul.f32 %v3476, %v3761
      %v3826 = vmul.f32 %v3478, %v3762
      %v3827 = vmul.f32 %v3480, %v3763
      %v3828 = vmul.f32 %v3482, %v3764
      %v3829 = vmul.f32 %v3484, %v3765
      %v3830 = vmul.f32 %v3486, %v3766
      %v3831 = vmul.f32 %v3488, %v3767
      %v3832 = vmul.f32 %v3490, %v3768
      %v3833 = vmul.f32 %v3492, %v3769
      %v3834 = vmul.f32 %v3494, %v3770
      %v3835 = vmul.f32 %v3496, %v3771
      %v3836 = vmul.f32 %v3498, %v3772
      %v3837 = vmul.f32 %v3500, %v3773
      %v3838 = vmul.f32 %v3502, %v3774
      %v3839 = vmul.f32 %v3504, %v3775
      %v3840 = vmul.f32 %v3506, %v3776
      %v3841 = vmul.f32 %v3508, %v3777
      %v3842 = vmul.f32 %v3510, %v3778
      %v3843 = vmul.f32 %v3512, %v3779
      %v3844 = vmul.f32 %v3514, %v3780
      %v3845 = vmul.f32 %v3516, %v3781
      %v3846 = vmul.f32 %v3518, %v3782
      %v3847 = vmul.f32 %v3520, %v3783
      %v3848 = vmul.f32 %v3522, %v3784
      %v3849 = vmul.f32 %v3524, %v3785
      %v3850 = vmul.f32 %v3526, %v3786
      %v3851 = vmul.f32 %v3528, %v3787
      %v3852 = vmul.f32 %v3530, %v3788
      %v3853 = vmul.f32 %v3532, %v3789
      %v3854 = vmul.f32 %v3534, %v3790
      %v3855 = vpack.c.bf16 %v3792, %v3791
      %v3856 = vpack.c.bf16 %v3794, %v3793
      %v3857 = vpack.c.bf16 %v3796, %v3795
      %v3858 = vpack.c.bf16 %v3798, %v3797
      %v3859 = vpack.c.bf16 %v3800, %v3799
      %v3860 = vpack.c.bf16 %v3802, %v3801
      %v3861 = vpack.c.bf16 %v3804, %v3803
      %v3862 = vpack.c.bf16 %v3806, %v3805
      %v3863 = vpack.c.bf16 %v3808, %v3807
      %v3864 = vpack.c.bf16 %v3810, %v3809
      %v3865 = vpack.c.bf16 %v3812, %v3811
      %v3866 = vpack.c.bf16 %v3814, %v3813
      %v3867 = vpack.c.bf16 %v3816, %v3815
      %v3868 = vpack.c.bf16 %v3818, %v3817
      %v3869 = vpack.c.bf16 %v3820, %v3819
      %v3870 = vpack.c.bf16 %v3822, %v3821
      %v3871 = vpack.c.bf16 %v3824, %v3823
      %v3872 = vpack.c.bf16 %v3826, %v3825
      %v3873 = vpack.c.bf16 %v3828, %v3827
      %v3874 = vpack.c.bf16 %v3830, %v3829
      %v3875 = vpack.c.bf16 %v3832, %v3831
      %v3876 = vpack.c.bf16 %v3834, %v3833
      %v3877 = vpack.c.bf16 %v3836, %v3835
      %v3878 = vpack.c.bf16 %v3838, %v3837
      %v3879 = vpack.c.bf16 %v3840, %v3839
      %v3880 = vpack.c.bf16 %v3842, %v3841
      %v3881 = vpack.c.bf16 %v3844, %v3843
      %v3882 = vpack.c.bf16 %v3846, %v3845
      %v3883 = vpack.c.bf16 %v3848, %v3847
      %v3884 = vpack.c.bf16 %v3850, %v3849
      %v3885 = vpack.c.bf16 %v3852, %v3851
      %v3886 = vpack.c.bf16 %v3854, %v3853
      %v3888 = vsel %vm3150, %v3855, 0
      %v3891 = vsel %vm3150, %v3856, 0
      %v3894 = vsel %vm3150, %v3857, 0
      %v3897 = vsel %vm3150, %v3858, 0
      %3899 = vmatprep.subr.bf16.mxu0 0
      %3900 = vmatpush1.bf16.msra.mxu0 %v2406
      %3901 = vmatprep.subr.bf16.mxu0 0
      %3902 = vmatpush1.bf16.msra.mxu0 %v2407
      %3903 = vmatprep.subr.bf16.mxu0 0
      %3904 = vmatpush1.bf16.msra.mxu0 %v2408
      %3905 = vmatprep.subr.bf16.mxu0 0
      %3906 = vmatpush1.bf16.msra.mxu0 %v2409
      %3907 = vmatprep.subr.bf16.mxu0 0
      %3908 = vmatpush1.bf16.msra.mxu0 0
      %3909 = vmatprep.subr.bf16.mxu0 0
      %3910 = vmatpush1.bf16.msra.mxu0 0
      %3911 = vmatprep.subr.bf16.mxu0 0
      %3912 = vmatpush1.bf16.msra.mxu0 0
      %3913 = vmatprep.subr.bf16.mxu0 0
      %3914 = vmatpush1.bf16.msra.mxu0 0
      %3915 = vmatprep.subr.bf16.mxu0 0
      %3916 = vmatpush1.bf16.msra.mxu0 0
      %3917 = vmatprep.subr.bf16.mxu0 0
      %3918 = vmatpush1.bf16.msra.mxu0 0
      %3919 = vmatprep.subr.bf16.mxu0 0
      %3920 = vmatpush1.bf16.msra.mxu0 0
      %3921 = vmatprep.subr.bf16.mxu0 0
      %3922 = vmatpush1.bf16.msra.mxu0 0
      %3923 = vmatprep.subr.bf16.mxu0 0
      %3924 = vmatpush1.bf16.msra.mxu0 0
      %3925 = vmatprep.subr.bf16.mxu0 0
      %3926 = vmatpush1.bf16.msra.mxu0 0
      %3927 = vmatprep.subr.bf16.mxu0 0
      %3928 = vmatpush1.bf16.msra.mxu0 0
      %3929 = vmatprep.subr.bf16.mxu0 0
      %3930 = vmatpush1.bf16.msra.mxu0 0
      %3931 = vmatprep.mubr.bf16.mxu0 0
      %3932 = vmatmul.mubr.bf16.gmra.mrb[0].mxu0 %v3888
      %v3933 = vpop.f32.mrb[0].mxu0
      %v3934 = vadd.f32 0.0, %v3933
      %v3935 = vpop.f32.mrb[0].mxu0
      %v3936 = vpop.f32.mrb[0].mxu0
      %v3937 = vadd.f32 0.0, %v3936
      %v3938 = vpop.f32.mrb[0].mxu0
      %3939 = vmatprep.mubr.bf16.mxu0 0
      %3940 = vmatmul.mubr.bf16.gmra.mrb[0].mxu0 %v3891
      %v3941 = vpop.f32.mrb[0].mxu0
      %v3942 = vadd.f32 0.0, %v3941
      %v3943 = vpop.f32.mrb[0].mxu0
      %v3944 = vpop.f32.mrb[0].mxu0
      %v3945 = vadd.f32 0.0, %v3944
      %v3946 = vpop.f32.mrb[0].mxu0
      %3947 = vmatprep.mubr.bf16.mxu0 0
      %3948 = vmatmul.mubr.bf16.gmra.mrb[0].mxu0 %v3894
      %v3949 = vpop.f32.mrb[0].mxu0
      %v3950 = vadd.f32 0.0, %v3949
      %v3951 = vpop.f32.mrb[0].mxu0
      %v3952 = vpop.f32.mrb[0].mxu0
      %v3953 = vadd.f32 0.0, %v3952
      %v3954 = vpop.f32.mrb[0].mxu0
      %3955 = vmatprep.mubr.bf16.mxu0 0
      %3956 = vmatmul.mubr.bf16.gmra.mrb[0].mxu0 %v3897
      %v3957 = vpop.f32.mrb[0].mxu0
      %v3958 = vadd.f32 0.0, %v3957
      %v3959 = vpop.f32.mrb[0].mxu0
      %v3960 = vpop.f32.mrb[0].mxu0
      %v3961 = vadd.f32 0.0, %v3960
      %v3962 = vpop.f32.mrb[0].mxu0
      %3963 = vdwg.mxu0
      %v3965 = vsel %vm3150, %v3859, 0
      %v3968 = vsel %vm3150, %v3860, 0
      %v3971 = vsel %vm3150, %v3861, 0
      %v3974 = vsel %vm3150, %v3862, 0
      %3976 = vmatprep.subr.bf16.mxu0 0
      %3977 = vmatpush1.bf16.msra.mxu0 %v2410
      %3978 = vmatprep.subr.bf16.mxu0 0
      %3979 = vmatpush1.bf16.msra.mxu0 %v2411
      %3980 = vmatprep.subr.bf16.mxu0 0
      %3981 = vmatpush1.bf16.msra.mxu0 %v2412
      %3982 = vmatprep.subr.bf16.mxu0 0
      %3983 = vmatpush1.bf16.msra.mxu0 %v2413
      %3984 = vmatprep.subr.bf16.mxu0 0
      %3985 = vmatpush1.bf16.msra.mxu0 0
      %3986 = vmatprep.subr.bf16.mxu0 0
      %3987 = vmatpush1.bf16.msra.mxu0 0
      %3988 = vmatprep.subr.bf16.mxu0 0
      %3989 = vmatpush1.bf16.msra.mxu0 0
      %3990 = vmatprep.subr.bf16.mxu0 0
      %3991 = vmatpush1.bf16.msra.mxu0 0
      %3992 = vmatprep.subr.bf16.mxu0 0
      %3993 = vmatpush1.bf16.msra.mxu0 0
      %3994 = vmatprep.subr.bf16.mxu0 0
      %3995 = vmatpush1.bf16.msra.mxu0 0
      %3996 = vmatprep.subr.bf16.mxu0 0
      %3997 = vmatpush1.bf16.msra.mxu0 0
      %3998 = vmatprep.subr.bf16.mxu0 0
      %3999 = vmatpush1.bf16.msra.mxu0 0
      %4000 = vmatprep.subr.bf16.mxu0 0
      %4001 = vmatpush1.bf16.msra.mxu0 0
      %4002 = vmatprep.subr.bf16.mxu0 0
      %4003 = vmatpush1.bf16.msra.mxu0 0
      %4004 = vmatprep.subr.bf16.mxu0 0
      %4005 = vmatpush1.bf16.msra.mxu0 0
      %4006 = vmatprep.subr.bf16.mxu0 0
      %4007 = vmatpush1.bf16.msra.mxu0 0
      %4008 = vmatprep.mubr.bf16.mxu0 0
      %4009 = vmatmul.mubr.bf16.gmra.mrb[0].mxu0 %v3965
      %v4010 = vpop.f32.mrb[0].mxu0
      %v4011 = vadd.f32 0.0, %v4010
      %v4012 = vpop.f32.mrb[0].mxu0
      %v4013 = vpop.f32.mrb[0].mxu0
      %v4014 = vadd.f32 0.0, %v4013
      %v4015 = vpop.f32.mrb[0].mxu0
      %4016 = vmatprep.mubr.bf16.mxu0 0
      %4017 = vmatmul.mubr.bf16.gmra.mrb[0].mxu0 %v3968
      %v4018 = vpop.f32.mrb[0].mxu0
      %v4019 = vadd.f32 0.0, %v4018
      %v4020 = vpop.f32.mrb[0].mxu0
      %v4021 = vpop.f32.mrb[0].mxu0
      %v4022 = vadd.f32 0.0, %v4021
      %v4023 = vpop.f32.mrb[0].mxu0
      %4024 = vmatprep.mubr.bf16.mxu0 0
      %4025 = vmatmul.mubr.bf16.gmra.mrb[0].mxu0 %v3971
      %v4026 = vpop.f32.mrb[0].mxu0
      %v4027 = vadd.f32 0.0, %v4026
      %v4028 = vpop.f32.mrb[0].mxu0
      %v4029 = vpop.f32.mrb[0].mxu0
      %v4030 = vadd.f32 0.0, %v4029
      %v4031 = vpop.f32.mrb[0].mxu0
      %4032 = vmatprep.mubr.bf16.mxu0 0
      %4033 = vmatmul.mubr.bf16.gmra.mrb[0].mxu0 %v3974
      %v4034 = vpop.f32.mrb[0].mxu0
      %v4035 = vadd.f32 0.0, %v4034
      %v4036 = vpop.f32.mrb[0].mxu0
      %v4037 = vpop.f32.mrb[0].mxu0
      %v4038 = vadd.f32 0.0, %v4037
      %v4039 = vpop.f32.mrb[0].mxu0
      %4040 = vdwg.mxu0
      %v4042 = vsel %vm3150, %v3863, 0
      %v4045 = vsel %vm3150, %v3864, 0
      %v4048 = vsel %vm3150, %v3865, 0
      %v4051 = vsel %vm3150, %v3866, 0
      %4053 = vmatprep.subr.bf16.mxu0 0
      %4054 = vmatpush1.bf16.msra.mxu0 %v2414
      %4055 = vmatprep.subr.bf16.mxu0 0
      %4056 = vmatpush1.bf16.msra.mxu0 %v2415
      %4057 = vmatprep.subr.bf16.mxu0 0
      %4058 = vmatpush1.bf16.msra.mxu0 %v2416
      %4059 = vmatprep.subr.bf16.mxu0 0
      %4060 = vmatpush1.bf16.msra.mxu0 %v2417
      %4061 = vmatprep.subr.bf16.mxu0 0
      %4062 = vmatpush1.bf16.msra.mxu0 0
      %4063 = vmatprep.subr.bf16.mxu0 0
      %4064 = vmatpush1.bf16.msra.mxu0 0
      %4065 = vmatprep.subr.bf16.mxu0 0
      %4066 = vmatpush1.bf16.msra.mxu0 0
      %4067 = vmatprep.subr.bf16.mxu0 0
      %4068 = vmatpush1.bf16.msra.mxu0 0
      %4069 = vmatprep.subr.bf16.mxu0 0
      %4070 = vmatpush1.bf16.msra.mxu0 0
      %4071 = vmatprep.subr.bf16.mxu0 0
      %4072 = vmatpush1.bf16.msra.mxu0 0
      %4073 = vmatprep.subr.bf16.mxu0 0
      %4074 = vmatpush1.bf16.msra.mxu0 0
      %4075 = vmatprep.subr.bf16.mxu0 0
      %4076 = vmatpush1.bf16.msra.mxu0 0
      %4077 = vmatprep.subr.bf16.mxu0 0
      %4078 = vmatpush1.bf16.msra.mxu0 0
      %4079 = vmatprep.subr.bf16.mxu0 0
      %4080 = vmatpush1.bf16.msra.mxu0 0
      %4081 = vmatprep.subr.bf16.mxu0 0
      %4082 = vmatpush1.bf16.msra.mxu0 0
      %4083 = vmatprep.subr.bf16.mxu0 0
      %4084 = vmatpush1.bf16.msra.mxu0 0
      %4085 = vmatprep.mubr.bf16.mxu0 0
      %4086 = vmatmul.mubr.bf16.gmra.mrb[0].mxu0 %v4042
      %v4087 = vpop.f32.mrb[0].mxu0
      %v4088 = vadd.f32 0.0, %v4087
      %v4089 = vpop.f32.mrb[0].mxu0
      %v4090 = vpop.f32.mrb[0].mxu0
      %v4091 = vadd.f32 0.0, %v4090
      %v4092 = vpop.f32.mrb[0].mxu0
      %4093 = vmatprep.mubr.bf16.mxu0 0
      %4094 = vmatmul.mubr.bf16.gmra.mrb[0].mxu0 %v4045
      %v4095 = vpop.f32.mrb[0].mxu0
      %v4096 = vadd.f32 0.0, %v4095
      %v4097 = vpop.f32.mrb[0].mxu0
      %v4098 = vpop.f32.mrb[0].mxu0
      %v4099 = vadd.f32 0.0, %v4098
      %v4100 = vpop.f32.mrb[0].mxu0
      %4101 = vmatprep.mubr.bf16.mxu0 0
      %4102 = vmatmul.mubr.bf16.gmra.mrb[0].mxu0 %v4048
      %v4103 = vpop.f32.mrb[0].mxu0
      %v4104 = vadd.f32 0.0, %v4103
      %v4105 = vpop.f32.mrb[0].mxu0
      %v4106 = vpop.f32.mrb[0].mxu0
      %v4107 = vadd.f32 0.0, %v4106
      %v4108 = vpop.f32.mrb[0].mxu0
      %4109 = vmatprep.mubr.bf16.mxu0 0
      %4110 = vmatmul.mubr.bf16.gmra.mrb[0].mxu0 %v4051
      %v4111 = vpop.f32.mrb[0].mxu0
      %v4112 = vadd.f32 0.0, %v4111
      %v4113 = vpop.f32.mrb[0].mxu0
      %v4114 = vpop.f32.mrb[0].mxu0
      %v4115 = vadd.f32 0.0, %v4114
      %v4116 = vpop.f32.mrb[0].mxu0
      %4117 = vdwg.mxu0
      %v4119 = vsel %vm3150, %v3867, 0
      %v4122 = vsel %vm3150, %v3868, 0
      %v4125 = vsel %vm3150, %v3869, 0
      %v4128 = vsel %vm3150, %v3870, 0
      %4130 = vmatprep.subr.bf16.mxu0 0
      %4131 = vmatpush1.bf16.msra.mxu0 %v2418
      %4132 = vmatprep.subr.bf16.mxu0 0
      %4133 = vmatpush1.bf16.msra.mxu0 %v2419
      %4134 = vmatprep.subr.bf16.mxu0 0
      %4135 = vmatpush1.bf16.msra.mxu0 %v2420
      %4136 = vmatprep.subr.bf16.mxu0 0
      %4137 = vmatpush1.bf16.msra.mxu0 %v2421
      %4138 = vmatprep.subr.bf16.mxu0 0
      %4139 = vmatpush1.bf16.msra.mxu0 0
      %4140 = vmatprep.subr.bf16.mxu0 0
      %4141 = vmatpush1.bf16.msra.mxu0 0
      %4142 = vmatprep.subr.bf16.mxu0 0
      %4143 = vmatpush1.bf16.msra.mxu0 0
      %4144 = vmatprep.subr.bf16.mxu0 0
      %4145 = vmatpush1.bf16.msra.mxu0 0
      %4146 = vmatprep.subr.bf16.mxu0 0
      %4147 = vmatpush1.bf16.msra.mxu0 0
      %4148 = vmatprep.subr.bf16.mxu0 0
      %4149 = vmatpush1.bf16.msra.mxu0 0
      %4150 = vmatprep.subr.bf16.mxu0 0
      %4151 = vmatpush1.bf16.msra.mxu0 0
      %4152 = vmatprep.subr.bf16.mxu0 0
      %4153 = vmatpush1.bf16.msra.mxu0 0
      %4154 = vmatprep.subr.bf16.mxu0 0
      %4155 = vmatpush1.bf16.msra.mxu0 0
      %4156 = vmatprep.subr.bf16.mxu0 0
      %4157 = vmatpush1.bf16.msra.mxu0 0
      %4158 = vmatprep.subr.bf16.mxu0 0
      %4159 = vmatpush1.bf16.msra.mxu0 0
      %4160 = vmatprep.subr.bf16.mxu0 0
      %4161 = vmatpush1.bf16.msra.mxu0 0
      %4162 = vmatprep.mubr.bf16.mxu0 0
      %4163 = vmatmul.mubr.bf16.gmra.mrb[0].mxu0 %v4119
      %v4164 = vpop.f32.mrb[0].mxu0
      %v4165 = vadd.f32 0.0, %v4164
      %v4166 = vpop.f32.mrb[0].mxu0
      %v4167 = vpop.f32.mrb[0].mxu0
      %v4168 = vadd.f32 0.0, %v4167
      %v4169 = vpop.f32.mrb[0].mxu0
      %4170 = vmatprep.mubr.bf16.mxu0 0
      %4171 = vmatmul.mubr.bf16.gmra.mrb[0].mxu0 %v4122
      %v4172 = vpop.f32.mrb[0].mxu0
      %v4173 = vadd.f32 0.0, %v4172
      %v4174 = vpop.f32.mrb[0].mxu0
      %v4175 = vpop.f32.mrb[0].mxu0
      %v4176 = vadd.f32 0.0, %v4175
      %v4177 = vpop.f32.mrb[0].mxu0
      %4178 = vmatprep.mubr.bf16.mxu0 0
      %4179 = vmatmul.mubr.bf16.gmra.mrb[0].mxu0 %v4125
      %v4180 = vpop.f32.mrb[0].mxu0
      %v4181 = vadd.f32 0.0, %v4180
      %v4182 = vpop.f32.mrb[0].mxu0
      %v4183 = vpop.f32.mrb[0].mxu0
      %v4184 = vadd.f32 0.0, %v4183
      %v4185 = vpop.f32.mrb[0].mxu0
      %4186 = vmatprep.mubr.bf16.mxu0 0
      %4187 = vmatmul.mubr.bf16.gmra.mrb[0].mxu0 %v4128
      %v4188 = vpop.f32.mrb[0].mxu0
      %v4189 = vadd.f32 0.0, %v4188
      %v4190 = vpop.f32.mrb[0].mxu0
      %v4191 = vpop.f32.mrb[0].mxu0
      %v4192 = vadd.f32 0.0, %v4191
      %v4193 = vpop.f32.mrb[0].mxu0
      %4194 = vdwg.mxu0
      %v4196 = vsel %vm3150, %v3871, 0
      %v4199 = vsel %vm3150, %v3872, 0
      %v4202 = vsel %vm3150, %v3873, 0
      %v4205 = vsel %vm3150, %v3874, 0
      %4207 = vmatprep.subr.bf16.mxu0 0
      %4208 = vmatpush1.bf16.msra.mxu0 %v2422
      %4209 = vmatprep.subr.bf16.mxu0 0
      %4210 = vmatpush1.bf16.msra.mxu0 %v2423
      %4211 = vmatprep.subr.bf16.mxu0 0
      %4212 = vmatpush1.bf16.msra.mxu0 %v2424
      %4213 = vmatprep.subr.bf16.mxu0 0
      %4214 = vmatpush1.bf16.msra.mxu0 %v2425
      %4215 = vmatprep.subr.bf16.mxu0 0
      %4216 = vmatpush1.bf16.msra.mxu0 0
      %4217 = vmatprep.subr.bf16.mxu0 0
      %4218 = vmatpush1.bf16.msra.mxu0 0
      %4219 = vmatprep.subr.bf16.mxu0 0
      %4220 = vmatpush1.bf16.msra.mxu0 0
      %4221 = vmatprep.subr.bf16.mxu0 0
      %4222 = vmatpush1.bf16.msra.mxu0 0
      %4223 = vmatprep.subr.bf16.mxu0 0
      %4224 = vmatpush1.bf16.msra.mxu0 0
      %4225 = vmatprep.subr.bf16.mxu0 0
      %4226 = vmatpush1.bf16.msra.mxu0 0
      %4227 = vmatprep.subr.bf16.mxu0 0
      %4228 = vmatpush1.bf16.msra.mxu0 0
      %4229 = vmatprep.subr.bf16.mxu0 0
      %4230 = vmatpush1.bf16.msra.mxu0 0
      %4231 = vmatprep.subr.bf16.mxu0 0
      %4232 = vmatpush1.bf16.msra.mxu0 0
      %4233 = vmatprep.subr.bf16.mxu0 0
      %4234 = vmatpush1.bf16.msra.mxu0 0
      %4235 = vmatprep.subr.bf16.mxu0 0
      %4236 = vmatpush1.bf16.msra.mxu0 0
      %4237 = vmatprep.subr.bf16.mxu0 0
      %4238 = vmatpush1.bf16.msra.mxu0 0
      %4239 = vmatprep.mubr.bf16.mxu0 0
      %4240 = vmatmul.mubr.bf16.gmra.mrb[0].mxu0 %v4196
      %v4241 = vpop.f32.mrb[0].mxu0
      %v4242 = vadd.f32 0.0, %v4241
      %v4243 = vpop.f32.mrb[0].mxu0
      %v4244 = vpop.f32.mrb[0].mxu0
      %v4245 = vadd.f32 0.0, %v4244
      %v4246 = vpop.f32.mrb[0].mxu0
      %4247 = vmatprep.mubr.bf16.mxu0 0
      %4248 = vmatmul.mubr.bf16.gmra.mrb[0].mxu0 %v4199
      %v4249 = vpop.f32.mrb[0].mxu0
      %v4250 = vadd.f32 0.0, %v4249
      %v4251 = vpop.f32.mrb[0].mxu0
      %v4252 = vpop.f32.mrb[0].mxu0
      %v4253 = vadd.f32 0.0, %v4252
      %v4254 = vpop.f32.mrb[0].mxu0
      %4255 = vmatprep.mubr.bf16.mxu0 0
      %4256 = vmatmul.mubr.bf16.gmra.mrb[0].mxu0 %v4202
      %v4257 = vpop.f32.mrb[0].mxu0
      %v4258 = vadd.f32 0.0, %v4257
      %v4259 = vpop.f32.mrb[0].mxu0
      %v4260 = vpop.f32.mrb[0].mxu0
      %v4261 = vadd.f32 0.0, %v4260
      %v4262 = vpop.f32.mrb[0].mxu0
      %4263 = vmatprep.mubr.bf16.mxu0 0
      %4264 = vmatmul.mubr.bf16.gmra.mrb[0].mxu0 %v4205
      %v4265 = vpop.f32.mrb[0].mxu0
      %v4266 = vadd.f32 0.0, %v4265
      %v4267 = vpop.f32.mrb[0].mxu0
      %v4268 = vpop.f32.mrb[0].mxu0
      %v4269 = vadd.f32 0.0, %v4268
      %v4270 = vpop.f32.mrb[0].mxu0
      %4271 = vdwg.mxu0
      %v4273 = vsel %vm3150, %v3875, 0
      %v4276 = vsel %vm3150, %v3876, 0
      %v4279 = vsel %vm3150, %v3877, 0
      %v4282 = vsel %vm3150, %v3878, 0
      %4284 = vmatprep.subr.bf16.mxu0 0
      %4285 = vmatpush1.bf16.msra.mxu0 %v2426
      %4286 = vmatprep.subr.bf16.mxu0 0
      %4287 = vmatpush1.bf16.msra.mxu0 %v2427
      %4288 = vmatprep.subr.bf16.mxu0 0
      %4289 = vmatpush1.bf16.msra.mxu0 %v2428
      %4290 = vmatprep.subr.bf16.mxu0 0
      %4291 = vmatpush1.bf16.msra.mxu0 %v2429
      %4292 = vmatprep.subr.bf16.mxu0 0
      %4293 = vmatpush1.bf16.msra.mxu0 0
      %4294 = vmatprep.subr.bf16.mxu0 0
      %4295 = vmatpush1.bf16.msra.mxu0 0
      %4296 = vmatprep.subr.bf16.mxu0 0
      %4297 = vmatpush1.bf16.msra.mxu0 0
      %4298 = vmatprep.subr.bf16.mxu0 0
      %4299 = vmatpush1.bf16.msra.mxu0 0
      %4300 = vmatprep.subr.bf16.mxu0 0
      %4301 = vmatpush1.bf16.msra.mxu0 0
      %4302 = vmatprep.subr.bf16.mxu0 0
      %4303 = vmatpush1.bf16.msra.mxu0 0
      %4304 = vmatprep.subr.bf16.mxu0 0
      %4305 = vmatpush1.bf16.msra.mxu0 0
      %4306 = vmatprep.subr.bf16.mxu0 0
      %4307 = vmatpush1.bf16.msra.mxu0 0
      %4308 = vmatprep.subr.bf16.mxu0 0
      %4309 = vmatpush1.bf16.msra.mxu0 0
      %4310 = vmatprep.subr.bf16.mxu0 0
      %4311 = vmatpush1.bf16.msra.mxu0 0
      %4312 = vmatprep.subr.bf16.mxu0 0
      %4313 = vmatpush1.bf16.msra.mxu0 0
      %4314 = vmatprep.subr.bf16.mxu0 0
      %4315 = vmatpush1.bf16.msra.mxu0 0
      %4316 = vmatprep.mubr.bf16.mxu0 0
      %4317 = vmatmul.mubr.bf16.gmra.mrb[0].mxu0 %v4273
      %v4318 = vpop.f32.mrb[0].mxu0
      %v4319 = vadd.f32 0.0, %v4318
      %v4320 = vpop.f32.mrb[0].mxu0
      %v4321 = vpop.f32.mrb[0].mxu0
      %v4322 = vadd.f32 0.0, %v4321
      %v4323 = vpop.f32.mrb[0].mxu0
      %4324 = vmatprep.mubr.bf16.mxu0 0
      %4325 = vmatmul.mubr.bf16.gmra.mrb[0].mxu0 %v4276
      %v4326 = vpop.f32.mrb[0].mxu0
      %v4327 = vadd.f32 0.0, %v4326
      %v4328 = vpop.f32.mrb[0].mxu0
      %v4329 = vpop.f32.mrb[0].mxu0
      %v4330 = vadd.f32 0.0, %v4329
      %v4331 = vpop.f32.mrb[0].mxu0
      %4332 = vmatprep.mubr.bf16.mxu0 0
      %4333 = vmatmul.mubr.bf16.gmra.mrb[0].mxu0 %v4279
      %v4334 = vpop.f32.mrb[0].mxu0
      %v4335 = vadd.f32 0.0, %v4334
      %v4336 = vpop.f32.mrb[0].mxu0
      %v4337 = vpop.f32.mrb[0].mxu0
      %v4338 = vadd.f32 0.0, %v4337
      %v4339 = vpop.f32.mrb[0].mxu0
      %4340 = vmatprep.mubr.bf16.mxu0 0
      %4341 = vmatmul.mubr.bf16.gmra.mrb[0].mxu0 %v4282
      %v4342 = vpop.f32.mrb[0].mxu0
      %v4343 = vadd.f32 0.0, %v4342
      %v4344 = vpop.f32.mrb[0].mxu0
      %v4345 = vpop.f32.mrb[0].mxu0
      %v4346 = vadd.f32 0.0, %v4345
      %v4347 = vpop.f32.mrb[0].mxu0
      %4348 = vdwg.mxu0
      %v4350 = vsel %vm3150, %v3879, 0
      %v4353 = vsel %vm3150, %v3880, 0
      %v4356 = vsel %vm3150, %v3881, 0
      %v4359 = vsel %vm3150, %v3882, 0
      %4361 = vmatprep.subr.bf16.mxu0 0
      %4362 = vmatpush1.bf16.msra.mxu0 %v2430
      %4363 = vmatprep.subr.bf16.mxu0 0
      %4364 = vmatpush1.bf16.msra.mxu0 %v2431
      %4365 = vmatprep.subr.bf16.mxu0 0
      %4366 = vmatpush1.bf16.msra.mxu0 %v2432
      %4367 = vmatprep.subr.bf16.mxu0 0
      %4368 = vmatpush1.bf16.msra.mxu0 %v2433
      %4369 = vmatprep.subr.bf16.mxu0 0
      %4370 = vmatpush1.bf16.msra.mxu0 0
      %4371 = vmatprep.subr.bf16.mxu0 0
      %4372 = vmatpush1.bf16.msra.mxu0 0
      %4373 = vmatprep.subr.bf16.mxu0 0
      %4374 = vmatpush1.bf16.msra.mxu0 0
      %4375 = vmatprep.subr.bf16.mxu0 0
      %4376 = vmatpush1.bf16.msra.mxu0 0
      %4377 = vmatprep.subr.bf16.mxu0 0
      %4378 = vmatpush1.bf16.msra.mxu0 0
      %4379 = vmatprep.subr.bf16.mxu0 0
      %4380 = vmatpush1.bf16.msra.mxu0 0
      %4381 = vmatprep.subr.bf16.mxu0 0
      %4382 = vmatpush1.bf16.msra.mxu0 0
      %4383 = vmatprep.subr.bf16.mxu0 0
      %4384 = vmatpush1.bf16.msra.mxu0 0
      %4385 = vmatprep.subr.bf16.mxu0 0
      %4386 = vmatpush1.bf16.msra.mxu0 0
      %4387 = vmatprep.subr.bf16.mxu0 0
      %4388 = vmatpush1.bf16.msra.mxu0 0
      %4389 = vmatprep.subr.bf16.mxu0 0
      %4390 = vmatpush1.bf16.msra.mxu0 0
      %4391 = vmatprep.subr.bf16.mxu0 0
      %4392 = vmatpush1.bf16.msra.mxu0 0
      %4393 = vmatprep.mubr.bf16.mxu0 0
      %4394 = vmatmul.mubr.bf16.gmra.mrb[0].mxu0 %v4350
      %v4395 = vpop.f32.mrb[0].mxu0
      %v4396 = vadd.f32 0.0, %v4395
      %v4397 = vpop.f32.mrb[0].mxu0
      %v4398 = vpop.f32.mrb[0].mxu0
      %v4399 = vadd.f32 0.0, %v4398
      %v4400 = vpop.f32.mrb[0].mxu0
      %4401 = vmatprep.mubr.bf16.mxu0 0
      %4402 = vmatmul.mubr.bf16.gmra.mrb[0].mxu0 %v4353
      %v4403 = vpop.f32.mrb[0].mxu0
      %v4404 = vadd.f32 0.0, %v4403
      %v4405 = vpop.f32.mrb[0].mxu0
      %v4406 = vpop.f32.mrb[0].mxu0
      %v4407 = vadd.f32 0.0, %v4406
      %v4408 = vpop.f32.mrb[0].mxu0
      %4409 = vmatprep.mubr.bf16.mxu0 0
      %4410 = vmatmul.mubr.bf16.gmra.mrb[0].mxu0 %v4356
      %v4411 = vpop.f32.mrb[0].mxu0
      %v4412 = vadd.f32 0.0, %v4411
      %v4413 = vpop.f32.mrb[0].mxu0
      %v4414 = vpop.f32.mrb[0].mxu0
      %v4415 = vadd.f32 0.0, %v4414
      %v4416 = vpop.f32.mrb[0].mxu0
      %4417 = vmatprep.mubr.bf16.mxu0 0
      %4418 = vmatmul.mubr.bf16.gmra.mrb[0].mxu0 %v4359
      %v4419 = vpop.f32.mrb[0].mxu0
      %v4420 = vadd.f32 0.0, %v4419
      %v4421 = vpop.f32.mrb[0].mxu0
      %v4422 = vpop.f32.mrb[0].mxu0
      %v4423 = vadd.f32 0.0, %v4422
      %v4424 = vpop.f32.mrb[0].mxu0
      %4425 = vdwg.mxu0
      %v4427 = vsel %vm3150, %v3883, 0
      %v4430 = vsel %vm3150, %v3884, 0
      %v4433 = vsel %vm3150, %v3885, 0
      %v4436 = vsel %vm3150, %v3886, 0
      %4438 = vmatprep.subr.bf16.mxu0 0
      %4439 = vmatpush1.bf16.msra.mxu0 %v2434
      %4440 = vmatprep.subr.bf16.mxu0 0
      %4441 = vmatpush1.bf16.msra.mxu0 %v2435
      %4442 = vmatprep.subr.bf16.mxu0 0
      %4443 = vmatpush1.bf16.msra.mxu0 %v2436
      %4444 = vmatprep.subr.bf16.mxu0 0
      %4445 = vmatpush1.bf16.msra.mxu0 %v2437
      %4446 = vmatprep.subr.bf16.mxu0 0
      %4447 = vmatpush1.bf16.msra.mxu0 0
      %4448 = vmatprep.subr.bf16.mxu0 0
      %4449 = vmatpush1.bf16.msra.mxu0 0
      %4450 = vmatprep.subr.bf16.mxu0 0
      %4451 = vmatpush1.bf16.msra.mxu0 0
      %4452 = vmatprep.subr.bf16.mxu0 0
      %4453 = vmatpush1.bf16.msra.mxu0 0
      %4454 = vmatprep.subr.bf16.mxu0 0
      %4455 = vmatpush1.bf16.msra.mxu0 0
      %4456 = vmatprep.subr.bf16.mxu0 0
      %4457 = vmatpush1.bf16.msra.mxu0 0
      %4458 = vmatprep.subr.bf16.mxu0 0
      %4459 = vmatpush1.bf16.msra.mxu0 0
      %4460 = vmatprep.subr.bf16.mxu0 0
      %4461 = vmatpush1.bf16.msra.mxu0 0
      %4462 = vmatprep.subr.bf16.mxu0 0
      %4463 = vmatpush1.bf16.msra.mxu0 0
      %4464 = vmatprep.subr.bf16.mxu0 0
      %4465 = vmatpush1.bf16.msra.mxu0 0
      %4466 = vmatprep.subr.bf16.mxu0 0
      %4467 = vmatpush1.bf16.msra.mxu0 0
      %4468 = vmatprep.subr.bf16.mxu0 0
      %4469 = vmatpush1.bf16.msra.mxu0 0
      %4470 = vmatprep.mubr.bf16.mxu0 0
      %4471 = vmatmul.mubr.bf16.gmra.mrb[0].mxu0 %v4427
      %v4472 = vpop.f32.mrb[0].mxu0
      %v4473 = vadd.f32 0.0, %v4472
      %v4474 = vpop.f32.mrb[0].mxu0
      %v4475 = vpop.f32.mrb[0].mxu0
      %v4476 = vadd.f32 0.0, %v4475
      %v4477 = vpop.f32.mrb[0].mxu0
      %4478 = vmatprep.mubr.bf16.mxu0 0
      %4479 = vmatmul.mubr.bf16.gmra.mrb[0].mxu0 %v4430
      %v4480 = vpop.f32.mrb[0].mxu0
      %v4481 = vadd.f32 0.0, %v4480
      %v4482 = vpop.f32.mrb[0].mxu0
      %v4483 = vpop.f32.mrb[0].mxu0
      %v4484 = vadd.f32 0.0, %v4483
      %v4485 = vpop.f32.mrb[0].mxu0
      %4486 = vmatprep.mubr.bf16.mxu0 0
      %4487 = vmatmul.mubr.bf16.gmra.mrb[0].mxu0 %v4433
      %v4488 = vpop.f32.mrb[0].mxu0
      %v4489 = vadd.f32 0.0, %v4488
      %v4490 = vpop.f32.mrb[0].mxu0
      %v4491 = vpop.f32.mrb[0].mxu0
      %v4492 = vadd.f32 0.0, %v4491
      %v4493 = vpop.f32.mrb[0].mxu0
      %4494 = vmatprep.mubr.bf16.mxu0 0
      %4495 = vmatmul.mubr.bf16.gmra.mrb[0].mxu0 %v4436
      %v4496 = vpop.f32.mrb[0].mxu0
      %v4497 = vadd.f32 0.0, %v4496
      %v4498 = vpop.f32.mrb[0].mxu0
      %v4499 = vpop.f32.mrb[0].mxu0
      %v4500 = vadd.f32 0.0, %v4499
      %v4501 = vpop.f32.mrb[0].mxu0
      %4502 = vdwg.mxu0
      %v4503 = vpack.c.bf16 %v3937, %v3934
      %v4504 = vpack.c.bf16 %v3945, %v3942
      %v4505 = vpack.c.bf16 %v3953, %v3950
      %v4506 = vpack.c.bf16 %v3961, %v3958
      %v4507 = vpack.c.bf16 %v4014, %v4011
      %v4508 = vpack.c.bf16 %v4022, %v4019
      %v4509 = vpack.c.bf16 %v4030, %v4027
      %v4510 = vpack.c.bf16 %v4038, %v4035
      %v4511 = vpack.c.bf16 %v4091, %v4088
      %v4512 = vpack.c.bf16 %v4099, %v4096
      %v4513 = vpack.c.bf16 %v4107, %v4104
      %v4514 = vpack.c.bf16 %v4115, %v4112
      %v4515 = vpack.c.bf16 %v4168, %v4165
      %v4516 = vpack.c.bf16 %v4176, %v4173
      %v4517 = vpack.c.bf16 %v4184, %v4181
      %v4518 = vpack.c.bf16 %v4192, %v4189
      %v4519 = vpack.c.bf16 %v4245, %v4242
      %v4520 = vpack.c.bf16 %v4253, %v4250
      %v4521 = vpack.c.bf16 %v4261, %v4258
      %v4522 = vpack.c.bf16 %v4269, %v4266
      %v4523 = vpack.c.bf16 %v4322, %v4319
      %v4524 = vpack.c.bf16 %v4330, %v4327
      %v4525 = vpack.c.bf16 %v4338, %v4335
      %v4526 = vpack.c.bf16 %v4346, %v4343
      %v4527 = vpack.c.bf16 %v4399, %v4396
      %v4528 = vpack.c.bf16 %v4407, %v4404
      %v4529 = vpack.c.bf16 %v4415, %v4412
      %v4530 = vpack.c.bf16 %v4423, %v4420
      %v4531 = vpack.c.bf16 %v4476, %v4473
      %v4532 = vpack.c.bf16 %v4484, %v4481
      %v4533 = vpack.c.bf16 %v4492, %v4489
      %v4534 = vpack.c.bf16 %v4500, %v4497
      %v4535 = vld [vmem:[%s10] sm:$0xf]
      %v4536 = vld [vmem:[%s10 + $0x4] sm:$0xf]
      %v4537 = vld [vmem:[%s10 + $0x8] sm:$0xf]
      %v4538 = vld [vmem:[%s10 + $0xc] sm:$0xf]
      %v4539 = vld [vmem:[%s11] sm:$0x1]
      %v4541 = vlaneseq
      %v4542 = vshrl.u32 %v4541, 7
      %v4543 = vsub.s32 0, %v4542
      %v4544 = vrot.slane %v4539, %v4543
      %v4550 = vunpack.c.l.b16 %v4535
      %v4551 = vunpack.c.l.b16 %v4536
      %v4552 = vunpack.c.l.b16 %v4537
      %v4553 = vunpack.c.l.b16 %v4538
      %v4554 = vpack.c.b16 %v4551, %v4550
      %v4555 = vpack.c.b16 %v4553, %v4552
      %v4559 = vsel %vm487, %v4503, 0
      %v4562 = vsel %vm487, %v4504, 0
      %v4565 = vsel %vm487, %v4505, 0
      %v4568 = vsel %vm487, %v4506, 0
      %v4571 = vsel %vm487, %v4507, 0
      %v4574 = vsel %vm487, %v4508, 0
      %v4577 = vsel %vm487, %v4509, 0
      %v4580 = vsel %vm487, %v4510, 0
      %v4583 = vsel %vm487, %v4511, 0
      %v4586 = vsel %vm487, %v4512, 0
      %v4589 = vsel %vm487, %v4513, 0
      %v4592 = vsel %vm487, %v4514, 0
      %v4595 = vsel %vm487, %v4515, 0
      %v4598 = vsel %vm487, %v4516, 0
      %v4601 = vsel %vm487, %v4517, 0
      %v4604 = vsel %vm487, %v4518, 0
      %v4607 = vsel %vm487, %v4519, 0
      %v4610 = vsel %vm487, %v4520, 0
      %v4613 = vsel %vm487, %v4521, 0
      %v4616 = vsel %vm487, %v4522, 0
      %v4619 = vsel %vm487, %v4523, 0
      %v4622 = vsel %vm487, %v4524, 0
      %v4625 = vsel %vm487, %v4525, 0
      %v4628 = vsel %vm487, %v4526, 0
      %v4631 = vsel %vm487, %v4527, 0
      %v4634 = vsel %vm487, %v4528, 0
      %v4637 = vsel %vm487, %v4529, 0
      %v4640 = vsel %vm487, %v4530, 0
      %v4643 = vsel %vm487, %v4531, 0
      %v4646 = vsel %vm487, %v4532, 0
      %v4649 = vsel %vm487, %v4533, 0
      %v4652 = vsel %vm487, %v4534, 0
      %4654 = vmatprep.subr.bf16.mxu0 0
      %4655 = vmatpush1.bf16.msra.mxu0 %v4554
      %4656 = vmatprep.subr.bf16.mxu0 0
      %4657 = vmatpush1.bf16.msra.mxu0 %v4555
      %4658 = vmatprep.subr.bf16.mxu0 0
      %4659 = vmatpush1.bf16.msra.mxu0 0
      %4660 = vmatprep.subr.bf16.mxu0 0
      %4661 = vmatpush1.bf16.msra.mxu0 0
      %4662 = vmatprep.subr.bf16.mxu0 0
      %4663 = vmatpush1.bf16.msra.mxu0 0
      %4664 = vmatprep.subr.bf16.mxu0 0
      %4665 = vmatpush1.bf16.msra.mxu0 0
      %4666 = vmatprep.subr.bf16.mxu0 0
      %4667 = vmatpush1.bf16.msra.mxu0 0
      %4668 = vmatprep.subr.bf16.mxu0 0
      %4669 = vmatpush1.bf16.msra.mxu0 0
      %4670 = vmatprep.subr.bf16.mxu0 0
      %4671 = vmatpush1.bf16.msra.mxu0 0
      %4672 = vmatprep.subr.bf16.mxu0 0
      %4673 = vmatpush1.bf16.msra.mxu0 0
      %4674 = vmatprep.subr.bf16.mxu0 0
      %4675 = vmatpush1.bf16.msra.mxu0 0
      %4676 = vmatprep.subr.bf16.mxu0 0
      %4677 = vmatpush1.bf16.msra.mxu0 0
      %4678 = vmatprep.subr.bf16.mxu0 0
      %4679 = vmatpush1.bf16.msra.mxu0 0
      %4680 = vmatprep.subr.bf16.mxu0 0
      %4681 = vmatpush1.bf16.msra.mxu0 0
      %4682 = vmatprep.subr.bf16.mxu0 0
      %4683 = vmatpush1.bf16.msra.mxu0 0
      %4684 = vmatprep.subr.bf16.mxu0 0
      %4685 = vmatpush1.bf16.msra.mxu0 0
      %4686 = vmatprep.mubr.bf16.mxu0 0
      %4687 = vmatmul.mubr.bf16.gmra.mrb[0].mxu0 %v4559
      %v4688 = vpop.f32.mrb[0].mxu0
      %v4689 = vadd.f32 %v4544, %v4688
      %v4690 = vpop.f32.mrb[0].mxu0
      %v4691 = vpop.f32.mrb[0].mxu0
      %v4692 = vadd.f32 %v4544, %v4691
      %v4693 = vpop.f32.mrb[0].mxu0
      %4694 = vmatprep.mubr.bf16.mxu0 0
      %4695 = vmatmul.mubr.bf16.gmra.mrb[0].mxu0 %v4562
      %v4696 = vpop.f32.mrb[0].mxu0
      %v4697 = vadd.f32 %v4544, %v4696
      %v4698 = vpop.f32.mrb[0].mxu0
      %v4699 = vpop.f32.mrb[0].mxu0
      %v4700 = vadd.f32 %v4544, %v4699
      %v4701 = vpop.f32.mrb[0].mxu0
      %4702 = vmatprep.mubr.bf16.mxu0 0
      %4703 = vmatmul.mubr.bf16.gmra.mrb[0].mxu0 %v4565
      %v4704 = vpop.f32.mrb[0].mxu0
      %v4705 = vadd.f32 %v4544, %v4704
      %v4706 = vpop.f32.mrb[0].mxu0
      %v4707 = vpop.f32.mrb[0].mxu0
      %v4708 = vadd.f32 %v4544, %v4707
      %v4709 = vpop.f32.mrb[0].mxu0
      %4710 = vmatprep.mubr.bf16.mxu0 0
      %4711 = vmatmul.mubr.bf16.gmra.mrb[0].mxu0 %v4568
      %v4712 = vpop.f32.mrb[0].mxu0
      %v4713 = vadd.f32 %v4544, %v4712
      %v4714 = vpop.f32.mrb[0].mxu0
      %v4715 = vpop.f32.mrb[0].mxu0
      %v4716 = vadd.f32 %v4544, %v4715
      %v4717 = vpop.f32.mrb[0].mxu0
      %4718 = vmatprep.mubr.bf16.mxu0 0
      %4719 = vmatmul.mubr.bf16.gmra.mrb[0].mxu0 %v4571
      %v4720 = vpop.f32.mrb[0].mxu0
      %v4721 = vadd.f32 %v4544, %v4720
      %v4722 = vpop.f32.mrb[0].mxu0
      %v4723 = vpop.f32.mrb[0].mxu0
      %v4724 = vadd.f32 %v4544, %v4723
      %v4725 = vpop.f32.mrb[0].mxu0
      %4726 = vmatprep.mubr.bf16.mxu0 0
      %4727 = vmatmul.mubr.bf16.gmra.mrb[0].mxu0 %v4574
      %v4728 = vpop.f32.mrb[0].mxu0
      %v4729 = vadd.f32 %v4544, %v4728
      %v4730 = vpop.f32.mrb[0].mxu0
      %v4731 = vpop.f32.mrb[0].mxu0
      %v4732 = vadd.f32 %v4544, %v4731
      %v4733 = vpop.f32.mrb[0].mxu0
      %4734 = vmatprep.mubr.bf16.mxu0 0
      %4735 = vmatmul.mubr.bf16.gmra.mrb[0].mxu0 %v4577
      %v4736 = vpop.f32.mrb[0].mxu0
      %v4737 = vadd.f32 %v4544, %v4736
      %v4738 = vpop.f32.mrb[0].mxu0
      %v4739 = vpop.f32.mrb[0].mxu0
      %v4740 = vadd.f32 %v4544, %v4739
      %v4741 = vpop.f32.mrb[0].mxu0
      %4742 = vmatprep.mubr.bf16.mxu0 0
      %4743 = vmatmul.mubr.bf16.gmra.mrb[0].mxu0 %v4580
      %v4744 = vpop.f32.mrb[0].mxu0
      %v4745 = vadd.f32 %v4544, %v4744
      %v4746 = vpop.f32.mrb[0].mxu0
      %v4747 = vpop.f32.mrb[0].mxu0
      %v4748 = vadd.f32 %v4544, %v4747
      %v4749 = vpop.f32.mrb[0].mxu0
      %4750 = vmatprep.mubr.bf16.mxu0 0
      %4751 = vmatmul.mubr.bf16.gmra.mrb[0].mxu0 %v4583
      %v4752 = vpop.f32.mrb[0].mxu0
      %v4753 = vadd.f32 %v4544, %v4752
      %v4754 = vpop.f32.mrb[0].mxu0
      %v4755 = vpop.f32.mrb[0].mxu0
      %v4756 = vadd.f32 %v4544, %v4755
      %v4757 = vpop.f32.mrb[0].mxu0
      %4758 = vmatprep.mubr.bf16.mxu0 0
      %4759 = vmatmul.mubr.bf16.gmra.mrb[0].mxu0 %v4586
      %v4760 = vpop.f32.mrb[0].mxu0
      %v4761 = vadd.f32 %v4544, %v4760
      %v4762 = vpop.f32.mrb[0].mxu0
      %v4763 = vpop.f32.mrb[0].mxu0
      %v4764 = vadd.f32 %v4544, %v4763
      %v4765 = vpop.f32.mrb[0].mxu0
      %4766 = vmatprep.mubr.bf16.mxu0 0
      %4767 = vmatmul.mubr.bf16.gmra.mrb[0].mxu0 %v4589
      %v4768 = vpop.f32.mrb[0].mxu0
      %v4769 = vadd.f32 %v4544, %v4768
      %v4770 = vpop.f32.mrb[0].mxu0
      %v4771 = vpop.f32.mrb[0].mxu0
      %v4772 = vadd.f32 %v4544, %v4771
      %v4773 = vpop.f32.mrb[0].mxu0
      %4774 = vmatprep.mubr.bf16.mxu0 0
      %4775 = vmatmul.mubr.bf16.gmra.mrb[0].mxu0 %v4592
      %v4776 = vpop.f32.mrb[0].mxu0
      %v4777 = vadd.f32 %v4544, %v4776
      %v4778 = vpop.f32.mrb[0].mxu0
      %v4779 = vpop.f32.mrb[0].mxu0
      %v4780 = vadd.f32 %v4544, %v4779
      %v4781 = vpop.f32.mrb[0].mxu0
      %4782 = vmatprep.mubr.bf16.mxu0 0
      %4783 = vmatmul.mubr.bf16.gmra.mrb[0].mxu0 %v4595
      %v4784 = vpop.f32.mrb[0].mxu0
      %v4785 = vadd.f32 %v4544, %v4784
      %v4786 = vpop.f32.mrb[0].mxu0
      %v4787 = vpop.f32.mrb[0].mxu0
      %v4788 = vadd.f32 %v4544, %v4787
      %v4789 = vpop.f32.mrb[0].mxu0
      %4790 = vmatprep.mubr.bf16.mxu0 0
      %4791 = vmatmul.mubr.bf16.gmra.mrb[0].mxu0 %v4598
      %v4792 = vpop.f32.mrb[0].mxu0
      %v4793 = vadd.f32 %v4544, %v4792
      %v4794 = vpop.f32.mrb[0].mxu0
      %v4795 = vpop.f32.mrb[0].mxu0
      %v4796 = vadd.f32 %v4544, %v4795
      %v4797 = vpop.f32.mrb[0].mxu0
      %4798 = vmatprep.mubr.bf16.mxu0 0
      %4799 = vmatmul.mubr.bf16.gmra.mrb[0].mxu0 %v4601
      %v4800 = vpop.f32.mrb[0].mxu0
      %v4801 = vadd.f32 %v4544, %v4800
      %v4802 = vpop.f32.mrb[0].mxu0
      %v4803 = vpop.f32.mrb[0].mxu0
      %v4804 = vadd.f32 %v4544, %v4803
      %v4805 = vpop.f32.mrb[0].mxu0
      %4806 = vmatprep.mubr.bf16.mxu0 0
      %4807 = vmatmul.mubr.bf16.gmra.mrb[0].mxu0 %v4604
      %v4808 = vpop.f32.mrb[0].mxu0
      %v4809 = vadd.f32 %v4544, %v4808
      %v4810 = vpop.f32.mrb[0].mxu0
      %v4811 = vpop.f32.mrb[0].mxu0
      %v4812 = vadd.f32 %v4544, %v4811
      %v4813 = vpop.f32.mrb[0].mxu0
      %4814 = vmatprep.mubr.bf16.mxu0 0
      %4815 = vmatmul.mubr.bf16.gmra.mrb[0].mxu0 %v4607
      %v4816 = vpop.f32.mrb[0].mxu0
      %v4817 = vadd.f32 %v4544, %v4816
      %v4818 = vpop.f32.mrb[0].mxu0
      %v4819 = vpop.f32.mrb[0].mxu0
      %v4820 = vadd.f32 %v4544, %v4819
      %v4821 = vpop.f32.mrb[0].mxu0
      %4822 = vmatprep.mubr.bf16.mxu0 0
      %4823 = vmatmul.mubr.bf16.gmra.mrb[0].mxu0 %v4610
      %v4824 = vpop.f32.mrb[0].mxu0
      %v4825 = vadd.f32 %v4544, %v4824
      %v4826 = vpop.f32.mrb[0].mxu0
      %v4827 = vpop.f32.mrb[0].mxu0
      %v4828 = vadd.f32 %v4544, %v4827
      %v4829 = vpop.f32.mrb[0].mxu0
      %4830 = vmatprep.mubr.bf16.mxu0 0
      %4831 = vmatmul.mubr.bf16.gmra.mrb[0].mxu0 %v4613
      %v4832 = vpop.f32.mrb[0].mxu0
      %v4833 = vadd.f32 %v4544, %v4832
      %v4834 = vpop.f32.mrb[0].mxu0
      %v4835 = vpop.f32.mrb[0].mxu0
      %v4836 = vadd.f32 %v4544, %v4835
      %v4837 = vpop.f32.mrb[0].mxu0
      %4838 = vmatprep.mubr.bf16.mxu0 0
      %4839 = vmatmul.mubr.bf16.gmra.mrb[0].mxu0 %v4616
      %v4840 = vpop.f32.mrb[0].mxu0
      %v4841 = vadd.f32 %v4544, %v4840
      %v4842 = vpop.f32.mrb[0].mxu0
      %v4843 = vpop.f32.mrb[0].mxu0
      %v4844 = vadd.f32 %v4544, %v4843
      %v4845 = vpop.f32.mrb[0].mxu0
      %4846 = vmatprep.mubr.bf16.mxu0 0
      %4847 = vmatmul.mubr.bf16.gmra.mrb[0].mxu0 %v4619
      %v4848 = vpop.f32.mrb[0].mxu0
      %v4849 = vadd.f32 %v4544, %v4848
      %v4850 = vpop.f32.mrb[0].mxu0
      %v4851 = vpop.f32.mrb[0].mxu0
      %v4852 = vadd.f32 %v4544, %v4851
      %v4853 = vpop.f32.mrb[0].mxu0
      %4854 = vmatprep.mubr.bf16.mxu0 0
      %4855 = vmatmul.mubr.bf16.gmra.mrb[0].mxu0 %v4622
      %v4856 = vpop.f32.mrb[0].mxu0
      %v4857 = vadd.f32 %v4544, %v4856
      %v4858 = vpop.f32.mrb[0].mxu0
      %v4859 = vpop.f32.mrb[0].mxu0
      %v4860 = vadd.f32 %v4544, %v4859
      %v4861 = vpop.f32.mrb[0].mxu0
      %4862 = vmatprep.mubr.bf16.mxu0 0
      %4863 = vmatmul.mubr.bf16.gmra.mrb[0].mxu0 %v4625
      %v4864 = vpop.f32.mrb[0].mxu0
      %v4865 = vadd.f32 %v4544, %v4864
      %v4866 = vpop.f32.mrb[0].mxu0
      %v4867 = vpop.f32.mrb[0].mxu0
      %v4868 = vadd.f32 %v4544, %v4867
      %v4869 = vpop.f32.mrb[0].mxu0
      %4870 = vmatprep.mubr.bf16.mxu0 0
      %4871 = vmatmul.mubr.bf16.gmra.mrb[0].mxu0 %v4628
      %v4872 = vpop.f32.mrb[0].mxu0
      %v4873 = vadd.f32 %v4544, %v4872
      %v4874 = vpop.f32.mrb[0].mxu0
      %v4875 = vpop.f32.mrb[0].mxu0
      %v4876 = vadd.f32 %v4544, %v4875
      %v4877 = vpop.f32.mrb[0].mxu0
      %4878 = vmatprep.mubr.bf16.mxu0 0
      %4879 = vmatmul.mubr.bf16.gmra.mrb[0].mxu0 %v4631
      %v4880 = vpop.f32.mrb[0].mxu0
      %v4881 = vadd.f32 %v4544, %v4880
      %v4882 = vpop.f32.mrb[0].mxu0
      %v4883 = vpop.f32.mrb[0].mxu0
      %v4884 = vadd.f32 %v4544, %v4883
      %v4885 = vpop.f32.mrb[0].mxu0
      %4886 = vmatprep.mubr.bf16.mxu0 0
      %4887 = vmatmul.mubr.bf16.gmra.mrb[0].mxu0 %v4634
      %v4888 = vpop.f32.mrb[0].mxu0
      %v4889 = vadd.f32 %v4544, %v4888
      %v4890 = vpop.f32.mrb[0].mxu0
      %v4891 = vpop.f32.mrb[0].mxu0
      %v4892 = vadd.f32 %v4544, %v4891
      %v4893 = vpop.f32.mrb[0].mxu0
      %4894 = vmatprep.mubr.bf16.mxu0 0
      %4895 = vmatmul.mubr.bf16.gmra.mrb[0].mxu0 %v4637
      %v4896 = vpop.f32.mrb[0].mxu0
      %v4897 = vadd.f32 %v4544, %v4896
      %v4898 = vpop.f32.mrb[0].mxu0
      %v4899 = vpop.f32.mrb[0].mxu0
      %v4900 = vadd.f32 %v4544, %v4899
      %v4901 = vpop.f32.mrb[0].mxu0
      %4902 = vmatprep.mubr.bf16.mxu0 0
      %4903 = vmatmul.mubr.bf16.gmra.mrb[0].mxu0 %v4640
      %v4904 = vpop.f32.mrb[0].mxu0
      %v4905 = vadd.f32 %v4544, %v4904
      %v4906 = vpop.f32.mrb[0].mxu0
      %v4907 = vpop.f32.mrb[0].mxu0
      %v4908 = vadd.f32 %v4544, %v4907
      %v4909 = vpop.f32.mrb[0].mxu0
      %4910 = vmatprep.mubr.bf16.mxu0 0
      %4911 = vmatmul.mubr.bf16.gmra.mrb[0].mxu0 %v4643
      %v4912 = vpop.f32.mrb[0].mxu0
      %v4913 = vadd.f32 %v4544, %v4912
      %v4914 = vpop.f32.mrb[0].mxu0
      %v4915 = vpop.f32.mrb[0].mxu0
      %v4916 = vadd.f32 %v4544, %v4915
      %v4917 = vpop.f32.mrb[0].mxu0
      %4918 = vmatprep.mubr.bf16.mxu0 0
      %4919 = vmatmul.mubr.bf16.gmra.mrb[0].mxu0 %v4646
      %v4920 = vpop.f32.mrb[0].mxu0
      %v4921 = vadd.f32 %v4544, %v4920
      %v4922 = vpop.f32.mrb[0].mxu0
      %v4923 = vpop.f32.mrb[0].mxu0
      %v4924 = vadd.f32 %v4544, %v4923
      %v4925 = vpop.f32.mrb[0].mxu0
      %4926 = vmatprep.mubr.bf16.mxu0 0
      %4927 = vmatmul.mubr.bf16.gmra.mrb[0].mxu0 %v4649
      %v4928 = vpop.f32.mrb[0].mxu0
      %v4929 = vadd.f32 %v4544, %v4928
      %v4930 = vpop.f32.mrb[0].mxu0
      %v4931 = vpop.f32.mrb[0].mxu0
      %v4932 = vadd.f32 %v4544, %v4931
      %v4933 = vpop.f32.mrb[0].mxu0
      %4934 = vmatprep.mubr.bf16.mxu0 0
      %4935 = vmatmul.mubr.bf16.gmra.mrb[0].mxu0 %v4652
      %v4936 = vpop.f32.mrb[0].mxu0
      %v4937 = vadd.f32 %v4544, %v4936
      %v4938 = vpop.f32.mrb[0].mxu0
      %v4939 = vpop.f32.mrb[0].mxu0
      %v4940 = vadd.f32 %v4544, %v4939
      %v4941 = vpop.f32.mrb[0].mxu0
      %4942 = vdwg.mxu0
      %v4943 = vadd.f32 %v423, %v4689
      %v4944 = vadd.f32 %v424, %v4692
      %v4945 = vadd.f32 %v425, %v4697
      %v4946 = vadd.f32 %v426, %v4700
      %v4947 = vadd.f32 %v427, %v4705
      %v4948 = vadd.f32 %v428, %v4708
      %v4949 = vadd.f32 %v429, %v4713
      %v4950 = vadd.f32 %v430, %v4716
      %v4951 = vadd.f32 %v431, %v4721
      %v4952 = vadd.f32 %v432, %v4724
      %v4953 = vadd.f32 %v433, %v4729
      %v4954 = vadd.f32 %v434, %v4732
      %v4955 = vadd.f32 %v435, %v4737
      %v4956 = vadd.f32 %v436, %v4740
      %v4957 = vadd.f32 %v437, %v4745
      %v4958 = vadd.f32 %v438, %v4748
      %v4959 = vadd.f32 %v439, %v4753
      %v4960 = vadd.f32 %v440, %v4756
      %v4961 = vadd.f32 %v441, %v4761
      %v4962 = vadd.f32 %v442, %v4764
      %v4963 = vadd.f32 %v443, %v4769
      %v4964 = vadd.f32 %v444, %v4772
      %v4965 = vadd.f32 %v445, %v4777
      %v4966 = vadd.f32 %v446, %v4780
      %v4967 = vadd.f32 %v447, %v4785
      %v4968 = vadd.f32 %v448, %v4788
      %v4969 = vadd.f32 %v449, %v4793
      %v4970 = vadd.f32 %v450, %v4796
      %v4971 = vadd.f32 %v451, %v4801
      %v4972 = vadd.f32 %v452, %v4804
      %v4973 = vadd.f32 %v453, %v4809
      %v4974 = vadd.f32 %v454, %v4812
      %v4975 = vadd.f32 %v455, %v4817
      %v4976 = vadd.f32 %v456, %v4820
      %v4977 = vadd.f32 %v457, %v4825
      %v4978 = vadd.f32 %v458, %v4828
      %v4979 = vadd.f32 %v459, %v4833
      %v4980 = vadd.f32 %v460, %v4836
      %v4981 = vadd.f32 %v461, %v4841
      %v4982 = vadd.f32 %v462, %v4844
      %v4983 = vadd.f32 %v463, %v4849
      %v4984 = vadd.f32 %v464, %v4852
      %v4985 = vadd.f32 %v465, %v4857
      %v4986 = vadd.f32 %v466, %v4860
      %v4987 = vadd.f32 %v467, %v4865
      %v4988 = vadd.f32 %v468, %v4868
      %v4989 = vadd.f32 %v469, %v4873
      %v4990 = vadd.f32 %v470, %v4876
      %v4991 = vadd.f32 %v471, %v4881
      %v4992 = vadd.f32 %v472, %v4884
      %v4993 = vadd.f32 %v473, %v4889
      %v4994 = vadd.f32 %v474, %v4892
      %v4995 = vadd.f32 %v475, %v4897
      %v4996 = vadd.f32 %v476, %v4900
      %v4997 = vadd.f32 %v477, %v4905
      %v4998 = vadd.f32 %v478, %v4908
      %v4999 = vadd.f32 %v479, %v4913
      %v5000 = vadd.f32 %v480, %v4916
      %v5001 = vadd.f32 %v481, %v4921
      %v5002 = vadd.f32 %v482, %v4924
      %v5003 = vadd.f32 %v483, %v4929
      %v5004 = vadd.f32 %v484, %v4932
      %v5005 = vadd.f32 %v485, %v4937
      %v5006 = vadd.f32 %v486, %v4940
      %5007 = vst.msk [vmem:[%s420] sm:$0xff] %vm487, %v4943
      %5008 = vst.msk [vmem:[%s420 + $0x8] sm:$0xff] %vm487, %v4944
      %5009 = vst.msk [vmem:[%s420 + $0x10] sm:$0xff] %vm487, %v4945
      %5010 = vst.msk [vmem:[%s420 + $0x18] sm:$0xff] %vm487, %v4946
      %5011 = vst.msk [vmem:[%s420 + $0x20] sm:$0xff] %vm487, %v4947
      %5012 = vst.msk [vmem:[%s420 + $0x28] sm:$0xff] %vm487, %v4948
      %5013 = vst.msk [vmem:[%s420 + $0x30] sm:$0xff] %vm487, %v4949
      %5014 = vst.msk [vmem:[%s420 + $0x38] sm:$0xff] %vm487, %v4950
      %5015 = vst.msk [vmem:[%s420 + $0x40] sm:$0xff] %vm487, %v4951
      %5016 = vst.msk [vmem:[%s420 + $0x48] sm:$0xff] %vm487, %v4952
      %5017 = vst.msk [vmem:[%s420 + $0x50] sm:$0xff] %vm487, %v4953
      %5018 = vst.msk [vmem:[%s420 + $0x58] sm:$0xff] %vm487, %v4954
      %5019 = vst.msk [vmem:[%s420 + $0x60] sm:$0xff] %vm487, %v4955
      %5020 = vst.msk [vmem:[%s420 + $0x68] sm:$0xff] %vm487, %v4956
      %5021 = vst.msk [vmem:[%s420 + $0x70] sm:$0xff] %vm487, %v4957
      %5022 = vst.msk [vmem:[%s420 + $0x78] sm:$0xff] %vm487, %v4958
      %5023 = vst.msk [vmem:[%s420 + $0x80] sm:$0xff] %vm487, %v4959
      %5024 = vst.msk [vmem:[%s420 + $0x88] sm:$0xff] %vm487, %v4960
      %5025 = vst.msk [vmem:[%s420 + $0x90] sm:$0xff] %vm487, %v4961
      %5026 = vst.msk [vmem:[%s420 + $0x98] sm:$0xff] %vm487, %v4962
      %5027 = vst.msk [vmem:[%s420 + $0xa0] sm:$0xff] %vm487, %v4963
      %5028 = vst.msk [vmem:[%s420 + $0xa8] sm:$0xff] %vm487, %v4964
      %5029 = vst.msk [vmem:[%s420 + $0xb0] sm:$0xff] %vm487, %v4965
      %5030 = vst.msk [vmem:[%s420 + $0xb8] sm:$0xff] %vm487, %v4966
      %5031 = vst.msk [vmem:[%s420 + $0xc0] sm:$0xff] %vm487, %v4967
      %5032 = vst.msk [vmem:[%s420 + $0xc8] sm:$0xff] %vm487, %v4968
      %5033 = vst.msk [vmem:[%s420 + $0xd0] sm:$0xff] %vm487, %v4969
      %5034 = vst.msk [vmem:[%s420 + $0xd8] sm:$0xff] %vm487, %v4970
      %5035 = vst.msk [vmem:[%s420 + $0xe0] sm:$0xff] %vm487, %v4971
      %5036 = vst.msk [vmem:[%s420 + $0xe8] sm:$0xff] %vm487, %v4972
      %5037 = vst.msk [vmem:[%s420 + $0xf0] sm:$0xff] %vm487, %v4973
      %5038 = vst.msk [vmem:[%s420 + $0xf8] sm:$0xff] %vm487, %v4974
      %5039 = vst.msk [vmem:[%s420 + $0x100] sm:$0xff] %vm487, %v4975
      %5040 = vst.msk [vmem:[%s420 + $0x108] sm:$0xff] %vm487, %v4976
      %5041 = vst.msk [vmem:[%s420 + $0x110] sm:$0xff] %vm487, %v4977
      %5042 = vst.msk [vmem:[%s420 + $0x118] sm:$0xff] %vm487, %v4978
      %5043 = vst.msk [vmem:[%s420 + $0x120] sm:$0xff] %vm487, %v4979
      %5044 = vst.msk [vmem:[%s420 + $0x128] sm:$0xff] %vm487, %v4980
      %5045 = vst.msk [vmem:[%s420 + $0x130] sm:$0xff] %vm487, %v4981
      %5046 = vst.msk [vmem:[%s420 + $0x138] sm:$0xff] %vm487, %v4982
      %5047 = vst.msk [vmem:[%s420 + $0x140] sm:$0xff] %vm487, %v4983
      %5048 = vst.msk [vmem:[%s420 + $0x148] sm:$0xff] %vm487, %v4984
      %5049 = vst.msk [vmem:[%s420 + $0x150] sm:$0xff] %vm487, %v4985
      %5050 = vst.msk [vmem:[%s420 + $0x158] sm:$0xff] %vm487, %v4986
      %5051 = vst.msk [vmem:[%s420 + $0x160] sm:$0xff] %vm487, %v4987
      %5052 = vst.msk [vmem:[%s420 + $0x168] sm:$0xff] %vm487, %v4988
      %5053 = vst.msk [vmem:[%s420 + $0x170] sm:$0xff] %vm487, %v4989
      %5054 = vst.msk [vmem:[%s420 + $0x178] sm:$0xff] %vm487, %v4990
      %5055 = vst.msk [vmem:[%s420 + $0x180] sm:$0xff] %vm487, %v4991
      %5056 = vst.msk [vmem:[%s420 + $0x188] sm:$0xff] %vm487, %v4992
      %5057 = vst.msk [vmem:[%s420 + $0x190] sm:$0xff] %vm487, %v4993
      %5058 = vst.msk [vmem:[%s420 + $0x198] sm:$0xff] %vm487, %v4994
      %5059 = vst.msk [vmem:[%s420 + $0x1a0] sm:$0xff] %vm487, %v4995
      %5060 = vst.msk [vmem:[%s420 + $0x1a8] sm:$0xff] %vm487, %v4996
      %5061 = vst.msk [vmem:[%s420 + $0x1b0] sm:$0xff] %vm487, %v4997
      %5062 = vst.msk [vmem:[%s420 + $0x1b8] sm:$0xff] %vm487, %v4998
      %5063 = vst.msk [vmem:[%s420 + $0x1c0] sm:$0xff] %vm487, %v4999
      %5064 = vst.msk [vmem:[%s420 + $0x1c8] sm:$0xff] %vm487, %v5000
      %5065 = vst.msk [vmem:[%s420 + $0x1d0] sm:$0xff] %vm487, %v5001
      %5066 = vst.msk [vmem:[%s420 + $0x1d8] sm:$0xff] %vm487, %v5002
      %5067 = vst.msk [vmem:[%s420 + $0x1e0] sm:$0xff] %vm487, %v5003
      %5068 = vst.msk [vmem:[%s420 + $0x1e8] sm:$0xff] %vm487, %v5004
      %5069 = vst.msk [vmem:[%s420 + $0x1f0] sm:$0xff] %vm487, %v5005
      %5070 = vst.msk [vmem:[%s420 + $0x1f8] sm:$0xff] %vm487, %v5006
      %s5071 = smul.u32 8, %s23
      %p5072 = scmp.lt.s32.totalorder %s5071, 15
      %s5073 = scalar_select %p5072, %s5071, 15
      %s5074 = smul.addr %s5073, 8
      %s5075 = smul.addr %s5074, 8
      %s5076 = scalar_lea.vmem %s12, %s5075
      // Predicated region
      $region69: #{tpu_custom_call.1} parent=67 // pred_check
        %p5077 = pneg %p298
      $region70: #{tpu_custom_call.1} parent=67 // pred_check_branch
        %5079 = sbr.rel (%p5077) target = $region72
      $region71: #{tpu_custom_call.1} parent=67 // pred_region
        %s5080 = smul.u32 8, %s23
      $region72: #{tpu_custom_call.1} parent=67 // pred_fallthru
        _
    $region68: #{tpu_custom_call.1} parent=5 // pred_fallthru
      _
    %p5081 = scmp.le.s32.totalorder 2, %s18
    // Predicated region
    $region73: #{tpu_custom_call.1} parent=5 // pred_check
      %p5082 = pneg %p5081
    $region74: #{tpu_custom_call.1} parent=5 // pred_check_branch
      %5084 = sbr.rel (%p5082) target = $region76
    $region75: #{tpu_custom_call.1} parent=5 // pred_region
      %s5085 = ssub.s32 %s18, 2
      // Predicated region
      $region77: #{tpu_custom_call.1} parent=75 // pred_check
        %p5086 = pneg %p304
      $region78: #{tpu_custom_call.1} parent=75 // pred_check_branch
        %5088 = sbr.rel (%p5086) target = $region80
      $region79: #{tpu_custom_call.1} parent=75 // pred_region
        %s5089 = smul.u32 8, %s24
        %p5090 = scmp.lt.s32.totalorder %s5089, 15
        %s5091 = scalar_select %p5090, %s5089, 15
        %s5092 = smul.addr %s5091, 8
        %s5093 = smul.addr %s5092, 8
        %s5094 = scalar_lea.vmem %s12, %s5093
      $region80: #{tpu_custom_call.1} parent=75 // pred_fallthru
        _
    $region76: #{tpu_custom_call.1} parent=5 // pred_fallthru
      _
  $region6: #{tpu_custom_call.1} parent=0 // loop_footer
    %s22 = sadd.s32 1, %s18
  $region7: #{tpu_custom_call.1} parent=0 // loop_footer_branch
    %17 = sbr.rel target = $region3
  $region8: #{tpu_custom_call.1} parent=0 // loop_exit
    _

</llo_original>
